<compile_context>
chip_gen: v5e
topology: v5e:2x2
jax: 0.10.0
libtpu: 0.0.40
codegen_flags: <defaults>
</compile_context>

<pallas_src>
import functools

import jax
import jax.numpy as jnp
from jax.experimental import pallas as pl
from jax.experimental.pallas import tpu as pltpu

EPS = 1e-5
MXU_DTYPE = jnp.bfloat16   # matmul-operand dtype; accumulation stays f32


# ----------------------------------------------------------------------------
# Pallas kernels
# ----------------------------------------------------------------------------
def linear_bn_relu_kernel(x_ref, w_ref, b_ref, g_ref, beta_ref, o_ref):
    # x: (B, Din), w: (Din, TN) feature tile, b/g/beta: (1, TN) f32.
    y = jnp.dot(x_ref[...], w_ref[...], preferred_element_type=jnp.float32)
    y = y + b_ref[...]
    # BatchNorm1d (training mode): per-feature batch statistics, biased var.
    mean = jnp.mean(y, axis=0, keepdims=True)
    var = jnp.mean(jnp.square(y - mean), axis=0, keepdims=True)
    z = (y - mean) * (jax.lax.rsqrt(var + EPS) * g_ref[...]) + beta_ref[...]
    o_ref[...] = jnp.maximum(z, 0.0).astype(o_ref.dtype)


def deconv_bn_relu_kernel(x_ref, w_ref, b_ref, g_ref, beta_ref, o_ref, *, C):
    # Phase-packed ConvTranspose + BN2d + ReLU.
    #   x9: (M, K) bf16   (M = B*H*W rows, K = 9*Cin tap-packed)
    #   w9: (K, 4*C) bf16 (columns ordered (ph, pw, c))
    #   b : (1, 4*C) f32, g/beta: (1, C) f32.
    acc = jnp.dot(x_ref[...], w_ref[...], preferred_element_type=jnp.float32)
    acc = acc + b_ref[...]
    m = acc.shape[0]

    def fold(v):  # (1, 4C) -> (1, C): sum the 4 phase groups per channel
        return v[:, 0:C] + v[:, C:2 * C] + v[:, 2 * C:3 * C] + v[:, 3 * C:4 * C]

    n = 4.0 * m  # BN2d population per channel = B*(2H)*(2W) = 4*M
    mean = fold(jnp.sum(acc, axis=0, keepdims=True)) / n           # (1, C)
    mean4 = jnp.concatenate([mean, mean, mean, mean], axis=1)      # (1, 4C)
    d = acc - mean4
    var = fold(jnp.sum(d * d, axis=0, keepdims=True)) / n          # (1, C)
    scale = g_ref[...] * jax.lax.rsqrt(var + EPS)                  # (1, C)
    scale4 = jnp.concatenate([scale, scale, scale, scale], axis=1)
    beta4 = jnp.concatenate([beta_ref[...]] * 4, axis=1)
    o_ref[...] = jnp.maximum(d * scale4 + beta4, 0.0).astype(o_ref.dtype)


def deconv_tanh_kernel(x_ref, w_ref, b_ref, o_ref):
    acc = jnp.dot(x_ref[...], w_ref[...], preferred_element_type=jnp.float32)
    o_ref[...] = jnp.tanh(acc + b_ref[...]).astype(o_ref.dtype)


# ----------------------------------------------------------------------------
# Pallas wrappers
# ----------------------------------------------------------------------------
def linear_bn_relu(x, w, b, g, beta, tn, out_dtype=jnp.float32):
    """x:(B,Din) @ w:(Din,F) + b, then BN1d (batch stats) + ReLU, tiled over F."""
    B, Din = x.shape
    F = w.shape[1]
    assert F % tn == 0
    return pl.pallas_call(
        linear_bn_relu_kernel,
        out_shape=jax.ShapeDtypeStruct((B, F), out_dtype),
        grid=(F // tn,),
        in_specs=[
            pl.BlockSpec((B, Din), lambda j: (0, 0)),
            pl.BlockSpec((Din, tn), lambda j: (0, j)),
            pl.BlockSpec((1, tn), lambda j: (0, j)),
            pl.BlockSpec((1, tn), lambda j: (0, j)),
            pl.BlockSpec((1, tn), lambda j: (0, j)),
        ],
        out_specs=pl.BlockSpec((B, tn), lambda j: (0, j)),
        compiler_params=pltpu.CompilerParams(dimension_semantics=("parallel",)),
    )(x, w, b, g, beta)


def deconv_bn_relu(x9, w9, b4, g, beta, C, out_dtype=jnp.float32):
    """Single fused (M,K)@(K,4C) matmul + BN2d + ReLU.  BN needs global stats,
    so this runs as one resident block (a few hundred KiB here)."""
    # TODO(synk): for much larger B/input_size, split into a parallel matmul
    # pass with partial BN sums plus a small normalize pass (uses both v7x
    # TensorCores) instead of one resident block.
    M = x9.shape[0]
    N = w9.shape[1]
    return pl.pallas_call(
        functools.partial(deconv_bn_relu_kernel, C=C),
        out_shape=jax.ShapeDtypeStruct((M, N), out_dtype),
        in_specs=[pl.BlockSpec(memory_space=pltpu.MemorySpace.VMEM)] * 5,
        out_specs=pl.BlockSpec(memory_space=pltpu.MemorySpace.VMEM),
    )(x9, w9, b4, g, beta)


def deconv_tanh(x9, w9, b4, tm=128):
    """Row-tiled (M,K)@(K,N) matmul + tanh; rows are independent -> parallel."""
    M, K = x9.shape
    N = w9.shape[1]
    if M % tm != 0:
        tm = M
    return pl.pallas_call(
        deconv_tanh_kernel,
        out_shape=jax.ShapeDtypeStruct((M, N), jnp.float32),
        grid=(M // tm,),
        in_specs=[
            pl.BlockSpec((tm, K), lambda i: (i, 0)),
            pl.BlockSpec((K, N), lambda i: (0, 0)),
            pl.BlockSpec((1, N), lambda i: (0, 0)),
        ],
        out_specs=pl.BlockSpec((tm, N), lambda i: (i, 0)),
        compiler_params=pltpu.CompilerParams(dimension_semantics=("parallel",)),
    )(x9, w9, b4)


# ----------------------------------------------------------------------------
# Trace-time / XLA glue: phase decomposition of ConvTranspose2d(k=4, s=2, p=1)
# ----------------------------------------------------------------------------
# out[2i+ph, 2j+pw] = sum_{window offsets} x_pad1[i+oh, j+ow] @ W[:, :, kh, kw]
# with the (phase -> {window offset: kernel tap}) map below.  Each output
# phase is a 2x2 stride-1 conv of the ORIGINAL input (no zero insertion).
_KMAP = {0: {0: 3, 1: 1}, 1: {1: 2, 2: 0}}


def make_x9(x_nhwc, dtype):
    """Pack the 3x3 neighborhood along channels: (B,H,W,C) -> (B*H*W, 9*C)."""
    B, H, W, C = x_nhwc.shape
    xp = jnp.pad(x_nhwc, ((0, 0), (1, 1), (1, 1), (0, 0)))
    taps = [xp[:, oh:oh + H, ow:ow + W, :] for oh in range(3) for ow in range(3)]
    x9 = jnp.concatenate(taps, axis=-1)                    # (B, H, W, 9C)
    return x9.reshape(B * H * W, 9 * C).astype(dtype)


def make_w9_b4(w_pt, b, cp):
    """(Cin,Cout,4,4) ConvT weight -> (9*Cin, 4*cp) tap/phase matrix, (1,4*cp) bias.
    Unused taps / padded channels are zero (cp >= Cout, 4*cp % 128 == 0)."""
    cin, cout = w_pt.shape[0], w_pt.shape[1]
    w9 = jnp.zeros((9, cin, 2, 2, cp), jnp.float32)
    for ph in range(2):
        for pw in range(2):
            for oh, kh in _KMAP[ph].items():
                for ow, kw in _KMAP[pw].items():
                    w9 = w9.at[oh * 3 + ow, :, ph, pw, :cout].set(w_pt[:, :, kh, kw])
    b4 = jnp.zeros((2, 2, cp), jnp.float32).at[:, :, :cout].set(b)
    return w9.reshape(9 * cin, 4 * cp), b4.reshape(1, 4 * cp)


def pad_k_to_128(x9, w9):
    k = x9.shape[1]
    kp = ((k + 127) // 128) * 128
    if kp != k:
        x9 = jnp.pad(x9, ((0, 0), (0, kp - k)))
        w9 = jnp.pad(w9, ((0, kp - k), (0, 0)))
    return x9, w9


def phase_unshuffle(y, B, H, W, cp):
    """(B*H*W, 4*cp) phase-packed -> (B, 2H, 2W, cp) interleaved output."""
    y = y.reshape(B, H, W, 2, 2, cp).transpose(0, 1, 3, 2, 4, 5)
    return y.reshape(B, 2 * H, 2 * W, cp)


# ----------------------------------------------------------------------------
# Forward pass
# ----------------------------------------------------------------------------
def cign_generator_forward(labels, noise, p, input_size):
    B = labels.shape[0]
    s4 = input_size // 4
    F2 = 128 * s4 * s4

    # cat(labels, noise) -> Linear(., 1024) -> BN1d -> ReLU  (single F block).
    # Output stored in bf16 (it is only consumed as an MXU operand).
    x = jnp.concatenate([labels, noise], axis=1).astype(jnp.float32)
    din = x.shape[1]
    din_pad = ((din + 127) // 128) * 128
    x = jnp.pad(x, ((0, 0), (0, din_pad - din)))
    w1k = jnp.pad(p['w1'].T, ((0, din_pad - din), (0, 0)))       # (din_pad, 1024)
    h = linear_bn_relu(x, w1k, p['b1'][None], p['g1'][None], p['be1'][None],
                       tn=1024, out_dtype=MXU_DTYPE)

    # Linear(1024, F2) -> BN1d -> ReLU.  Output columns pre-permuted to NHWC
    # order (free weight permutation at trace time) so the view + transpose
    # before the deconvs is a free reshape.  bf16 operands, f32 acc / BN math.
    w2k = (p['w2'].T.reshape(1024, 128, s4, s4).transpose(0, 2, 3, 1)
           .reshape(1024, F2)).astype(MXU_DTYPE)

    def nhwc_feat(v):
        return v.reshape(128, s4, s4).transpose(1, 2, 0).reshape(F2)

    tn = 512 if F2 % 512 == 0 else F2
    h = linear_bn_relu(h, w2k, nhwc_feat(p['b2'])[None],
                       nhwc_feat(p['g2'])[None], nhwc_feat(p['be2'])[None],
                       tn=tn, out_dtype=MXU_DTYPE)
    h = h.reshape(B, s4, s4, 128)                                # already NHWC

    # ConvTranspose2d(128, 64, 4, 2, 1) + BN2d + ReLU (phase-packed, fused)
    C1 = p['wd1'].shape[1]                                       # 64
    x9 = make_x9(h, MXU_DTYPE)                                   # (B*s4*s4, 9*128)
    w9, b4 = make_w9_b4(p['wd1'], p['bd1'], C1)
    x9, w9 = pad_k_to_128(x9, w9.astype(MXU_DTYPE))
    y = deconv_bn_relu(x9, w9, b4, p['gd1'][None], p['bed1'][None], C1,
                       out_dtype=MXU_DTYPE)
    h = phase_unshuffle(y, B, s4, s4, C1)                        # (B, 2s4, 2s4, 64)

    # ConvTranspose2d(64, output_dim, 4, 2, 1) + Tanh (phase-packed, fused)
    cout = p['wd2'].shape[1]
    cp = ((cout + 31) // 32) * 32                                # 4*cp % 128 == 0
    x9 = make_x9(h, MXU_DTYPE)                                   # (B*(2s4)^2, 9*64)
    w9, b4 = make_w9_b4(p['wd2'], p['bd2'], cp)
    x9, w9 = pad_k_to_128(x9, w9.astype(MXU_DTYPE))
    y = deconv_tanh(x9, w9, b4)
    img = phase_unshuffle(y, B, 2 * s4, 2 * s4, cp)[:, :, :, :cout]
    return img.transpose(0, 3, 1, 2)                             # NCHW


# ----------------------------------------------------------------------------
# Deterministic parameter init (PyTorch-shaped tensors)
# ----------------------------------------------------------------------------
def init_params(key, z_dim, class_num, output_dim, input_size):
    s4 = input_size // 4
    f2 = 128 * s4 * s4
    din = z_dim + class_num
    ks = jax.random.split(key, 14)

    def nrm(k, shape, scale=0.05):
        return scale * jax.random.normal(k, shape, jnp.float32)

    return dict(
        w1=nrm(ks[0], (1024, din)), b1=nrm(ks[1], (1024,)),
        g1=1.0 + nrm(ks[2], (1024,)), be1=nrm(ks[3], (1024,)),
        w2=nrm(ks[4], (f2, 1024)), b2=nrm(ks[5], (f2,)),
        g2=1.0 + nrm(ks[6], (f2,)), be2=nrm(ks[7], (f2,)),
        wd1=nrm(ks[8], (128, 64, 4, 4)), bd1=nrm(ks[9], (64,)),
        gd1=1.0 + nrm(ks[10], (64,)), bed1=nrm(ks[11], (64,)),
        wd2=nrm(ks[12], (64, output_dim, 4, 4)), bd2=nrm(ks[13], (output_dim,)),
    )


# ----------------------------------------------------------------------------
# Pure-JAX reference (same math + same matmul dtype policy) for sanity check
# ----------------------------------------------------------------------------
def reference_forward(labels, noise, p, input_size):
    B = labels.shape[0]
    s4 = input_size // 4
    x = jnp.concatenate([labels, noise], axis=1).astype(jnp.float32)

    def lin_bn_relu(x, w, b, g, be):
        y = jnp.dot(x, w.T, preferred_element_type=jnp.float32) + b
        m = y.mean(0, keepdims=True)
        v = jnp.mean(jnp.square(y - m), axis=0, keepdims=True)
        return jnp.maximum((y - m) * jax.lax.rsqrt(v + EPS) * g + be, 0.0)

    h = lin_bn_relu(x, p['w1'], p['b1'], p['g1'], p['be1'])
    h = lin_bn_relu(h.astype(MXU_DTYPE), p['w2'].astype(MXU_DTYPE),
                    p['b2'], p['g2'], p['be2'])
    h = h.reshape(B, 128, s4, s4).transpose(0, 2, 3, 1)

    def convT(x_nhwc, w_pt, b):  # PyTorch ConvTranspose2d(k=4, s=2, p=1)
        w_eff = jnp.transpose(w_pt[:, :, ::-1, ::-1], (2, 3, 0, 1))  # HWIO
        y = jax.lax.conv_general_dilated(
            x_nhwc.astype(MXU_DTYPE), w_eff.astype(MXU_DTYPE),
            window_strides=(1, 1), padding=((2, 2), (2, 2)),
            lhs_dilation=(2, 2), dimension_numbers=('NHWC', 'HWIO', 'NHWC'),
            preferred_element_type=jnp.float32)
        return y + b

    h = convT(h, p['wd1'], p['bd1'])
    m = h.mean(axis=(0, 1, 2), keepdims=True)
    v = jnp.mean(jnp.square(h - m), axis=(0, 1, 2), keepdims=True)
    h = jnp.maximum((h - m) * jax.lax.rsqrt(v + EPS) * p['gd1'] + p['bed1'], 0.0)
    img = jnp.tanh(convT(h, p['wd2'], p['bd2']))
    return img.transpose(0, 3, 1, 2)


# ----------------------------------------------------------------------------
if __name__ == "__main__":
    # Small shapes consistent with the module: CIGNGenerator(z_dim=32,
    # class_num=5, output_dim=3, input_size=16), batch=8.
    z_dim, class_num, output_dim, input_size = 32, 5, 3, 16
    B = 8

    key = jax.random.PRNGKey(0)
    kp, kl, kn = jax.random.split(key, 3)
    params = init_params(kp, z_dim, class_num, output_dim, input_size)

    label_idx = jax.random.randint(kl, (B,), 0, class_num)
    labels = jax.nn.one_hot(label_idx, class_num, dtype=jnp.float32)  # (B, 5)
    noise = jax.random.normal(kn, (B, z_dim), jnp.float32)            # (B, 32)

    fwd = jax.jit(lambda l, n, p: cign_generator_forward(l, n, p, input_size))
    img = jax.block_until_ready(fwd(labels, noise, params))

    assert img.shape == (B, output_dim, input_size, input_size), img.shape

    ref = reference_forward(labels, noise, params, input_size)
    err = float(jnp.max(jnp.abs(img - ref)))
    assert err < 2e-2, f"max abs err too large: {err}"

    print("KERNEL_OK")
</pallas_src>

<mosaic_0001>
module attributes {stable_mosaic.version = 11 : i64} {
  func.func @linear_bn_relu_kernel(%arg0: i32, %arg1: memref<8x128xf32, #tpu.memory_space<vmem>>, %arg2: memref<128x1024xf32, #tpu.memory_space<vmem>>, %arg3: memref<1x1024xf32, #tpu.memory_space<vmem>>, %arg4: memref<1x1024xf32, #tpu.memory_space<vmem>>, %arg5: memref<1x1024xf32, #tpu.memory_space<vmem>>, %arg6: memref<8x1024xbf16, #tpu.memory_space<vmem>>) attributes {dimension_semantics = [#tpu.dimension_semantics<parallel>], iteration_bounds = array<i64: 1>, scalar_prefetch = 0 : i64, scratch_operands = 0 : i64, tpu.core_type = #tpu.core_type<tc>, window_params = [{pipeline_mode = #tpu.pipeline_mode<synchronous>, transform_indices = @transform_0, window_bounds = array<i64: 8, 128>}, {transform_indices = @transform_1, window_bounds = array<i64: 128, 1024>}, {transform_indices = @transform_2, window_bounds = array<i64: 1, 1024>}, {transform_indices = @transform_3, window_bounds = array<i64: 1, 1024>}, {transform_indices = @transform_4, window_bounds = array<i64: 1, 1024>}, {transform_indices = @transform_5, window_bounds = array<i64: 8, 1024>}]} {
    %c0 = arith.constant 0 : index
    %c0_0 = arith.constant 0 : index
    %0 = vector.load %arg1[%c0, %c0_0] : memref<8x128xf32, #tpu.memory_space<vmem>>, vector<8x128xf32>
    %c0_1 = arith.constant 0 : index
    %c0_2 = arith.constant 0 : index
    %1 = vector.load %arg2[%c0_1, %c0_2] : memref<128x1024xf32, #tpu.memory_space<vmem>>, vector<128x1024xf32>
    %cst = arith.constant dense<0.000000e+00> : vector<8x1024xf32>
    %2 = tpu.matmul %0, %1, %cst {dimension_numbers = #tpu.dot_dimension_numbers<[1], [0], [0], [1], [0, 0, 1, 1], [], []>} : vector<8x128xf32>, vector<128x1024xf32>, vector<8x1024xf32> -> vector<8x1024xf32>
    %c0_3 = arith.constant 0 : index
    %c0_4 = arith.constant 0 : index
    %3 = vector.load %arg3[%c0_3, %c0_4] : memref<1x1024xf32, #tpu.memory_space<vmem>>, vector<1x1024xf32>
    %4 = vector.broadcast %3 : vector<1x1024xf32> to vector<8x1024xf32>
    %5 = arith.addf %2, %4 : vector<8x1024xf32>
    %cst_5 = arith.constant dense<0.000000e+00> : vector<1024xf32>
    %6 = vector.multi_reduction <add>, %5, %cst_5 [0] : vector<8x1024xf32> to vector<1024xf32>
    %7 = vector.shape_cast %6 : vector<1024xf32> to vector<1x1024xf32>
    %cst_6 = arith.constant 8.000000e+00 : f32
    %8 = vector.broadcast %cst_6 : f32 to vector<1x1024xf32>
    %9 = arith.divf %7, %8 : vector<1x1024xf32>
    %10 = vector.broadcast %9 : vector<1x1024xf32> to vector<8x1024xf32>
    %11 = arith.subf %5, %10 : vector<8x1024xf32>
    %12 = arith.mulf %11, %11 : vector<8x1024xf32>
    %cst_7 = arith.constant dense<0.000000e+00> : vector<1024xf32>
    %13 = vector.multi_reduction <add>, %12, %cst_7 [0] : vector<8x1024xf32> to vector<1024xf32>
    %14 = vector.shape_cast %13 : vector<1024xf32> to vector<1x1024xf32>
    %cst_8 = arith.constant 8.000000e+00 : f32
    %15 = vector.broadcast %cst_8 : f32 to vector<1x1024xf32>
    %16 = arith.divf %14, %15 : vector<1x1024xf32>
    %17 = vector.broadcast %9 : vector<1x1024xf32> to vector<8x1024xf32>
    %18 = arith.subf %5, %17 : vector<8x1024xf32>
    %cst_9 = arith.constant 9.99999974E-6 : f32
    %19 = vector.broadcast %cst_9 : f32 to vector<1x1024xf32>
    %20 = arith.addf %16, %19 : vector<1x1024xf32>
    %21 = math.rsqrt %20 : vector<1x1024xf32>
    %c0_10 = arith.constant 0 : index
    %c0_11 = arith.constant 0 : index
    %22 = vector.load %arg4[%c0_10, %c0_11] : memref<1x1024xf32, #tpu.memory_space<vmem>>, vector<1x1024xf32>
    %23 = arith.mulf %21, %22 : vector<1x1024xf32>
    %24 = vector.broadcast %23 : vector<1x1024xf32> to vector<8x1024xf32>
    %25 = arith.mulf %18, %24 : vector<8x1024xf32>
    %c0_12 = arith.constant 0 : index
    %c0_13 = arith.constant 0 : index
    %26 = vector.load %arg5[%c0_12, %c0_13] : memref<1x1024xf32, #tpu.memory_space<vmem>>, vector<1x1024xf32>
    %27 = vector.broadcast %26 : vector<1x1024xf32> to vector<8x1024xf32>
    %28 = arith.addf %25, %27 : vector<8x1024xf32>
    %cst_14 = arith.constant 0.000000e+00 : f32
    %29 = vector.broadcast %cst_14 : f32 to vector<8x1024xf32>
    %30 = arith.maximumf %28, %29 : vector<8x1024xf32>
    %31 = arith.truncf %30 : vector<8x1024xf32> to vector<8x1024xbf16>
    %c0_15 = arith.constant 0 : index
    %c0_16 = arith.constant 0 : index
    %32 = vector.load %arg6[%c0_15, %c0_16] : memref<8x1024xbf16, #tpu.memory_space<vmem>>, vector<8x1024xbf16>
    tpu.vector_store %arg6[%c0_15, %c0_16], %31 {strides = array<i32>} : memref<8x1024xbf16, #tpu.memory_space<vmem>>, vector<8x1024xbf16>,
    return
  }
  func.func @transform_0(%arg0: i32) -> (i32, i32) {
    %c0_i32 = arith.constant 0 : i32
    %c0_i32_0 = arith.constant 0 : i32
    %c0_i32_1 = arith.constant 0 : i32
    return %c0_i32, %c0_i32_0 : i32, i32
  }
  func.func @transform_1(%arg0: i32) -> (i32, i32) {
    %c0_i32 = arith.constant 0 : i32
    %c0_i32_0 = arith.constant 0 : i32
    return %c0_i32, %arg0 : i32, i32
  }
  func.func @transform_2(%arg0: i32) -> (i32, i32) {
    %c0_i32 = arith.constant 0 : i32
    %c0_i32_0 = arith.constant 0 : i32
    return %c0_i32, %arg0 : i32, i32
  }
  func.func @transform_3(%arg0: i32) -> (i32, i32) {
    %c0_i32 = arith.constant 0 : i32
    %c0_i32_0 = arith.constant 0 : i32
    return %c0_i32, %arg0 : i32, i32
  }
  func.func @transform_4(%arg0: i32) -> (i32, i32) {
    %c0_i32 = arith.constant 0 : i32
    %c0_i32_0 = arith.constant 0 : i32
    return %c0_i32, %arg0 : i32, i32
  }
  func.func @transform_5(%arg0: i32) -> (i32, i32) {
    %c0_i32 = arith.constant 0 : i32
    %c0_i32_0 = arith.constant 0 : i32
    return %c0_i32, %arg0 : i32, i32
  }
}

module attributes {stable_mosaic.version = 11 : i64} {
  func.func @linear_bn_relu_kernel(%arg0: i32, %arg1: memref<8x1024xbf16, #tpu.memory_space<vmem>>, %arg2: memref<1024x512xbf16, #tpu.memory_space<vmem>>, %arg3: memref<1x512xf32, #tpu.memory_space<vmem>>, %arg4: memref<1x512xf32, #tpu.memory_space<vmem>>, %arg5: memref<1x512xf32, #tpu.memory_space<vmem>>, %arg6: memref<8x512xbf16, #tpu.memory_space<vmem>>) attributes {dimension_semantics = [#tpu.dimension_semantics<parallel>], iteration_bounds = array<i64: 4>, scalar_prefetch = 0 : i64, scratch_operands = 0 : i64, tpu.core_type = #tpu.core_type<tc>, window_params = [{pipeline_mode = #tpu.pipeline_mode<synchronous>, transform_indices = @transform_0, window_bounds = array<i64: 8, 1024>}, {transform_indices = @transform_1, window_bounds = array<i64: 1024, 512>}, {transform_indices = @transform_2, window_bounds = array<i64: 1, 512>}, {transform_indices = @transform_3, window_bounds = array<i64: 1, 512>}, {transform_indices = @transform_4, window_bounds = array<i64: 1, 512>}, {transform_indices = @transform_5, window_bounds = array<i64: 8, 512>}]} {
    %c0 = arith.constant 0 : index
    %c0_0 = arith.constant 0 : index
    %0 = vector.load %arg1[%c0, %c0_0] : memref<8x1024xbf16, #tpu.memory_space<vmem>>, vector<8x1024xbf16>
    %c0_1 = arith.constant 0 : index
    %c0_2 = arith.constant 0 : index
    %1 = vector.load %arg2[%c0_1, %c0_2] : memref<1024x512xbf16, #tpu.memory_space<vmem>>, vector<1024x512xbf16>
    %cst = arith.constant dense<0.000000e+00> : vector<8x512xf32>
    %2 = tpu.matmul %0, %1, %cst {dimension_numbers = #tpu.dot_dimension_numbers<[1], [0], [0], [1], [0, 0, 1, 1], [], []>} : vector<8x1024xbf16>, vector<1024x512xbf16>, vector<8x512xf32> -> vector<8x512xf32>
    %c0_3 = arith.constant 0 : index
    %c0_4 = arith.constant 0 : index
    %3 = vector.load %arg3[%c0_3, %c0_4] : memref<1x512xf32, #tpu.memory_space<vmem>>, vector<1x512xf32>
    %4 = vector.broadcast %3 : vector<1x512xf32> to vector<8x512xf32>
    %5 = arith.addf %2, %4 : vector<8x512xf32>
    %cst_5 = arith.constant dense<0.000000e+00> : vector<512xf32>
    %6 = vector.multi_reduction <add>, %5, %cst_5 [0] : vector<8x512xf32> to vector<512xf32>
    %7 = vector.shape_cast %6 : vector<512xf32> to vector<1x512xf32>
    %cst_6 = arith.constant 8.000000e+00 : f32
    %8 = vector.broadcast %cst_6 : f32 to vector<1x512xf32>
    %9 = arith.divf %7, %8 : vector<1x512xf32>
    %10 = vector.broadcast %9 : vector<1x512xf32> to vector<8x512xf32>
    %11 = arith.subf %5, %10 : vector<8x512xf32>
    %12 = arith.mulf %11, %11 : vector<8x512xf32>
    %cst_7 = arith.constant dense<0.000000e+00> : vector<512xf32>
    %13 = vector.multi_reduction <add>, %12, %cst_7 [0] : vector<8x512xf32> to vector<512xf32>
    %14 = vector.shape_cast %13 : vector<512xf32> to vector<1x512xf32>
    %cst_8 = arith.constant 8.000000e+00 : f32
    %15 = vector.broadcast %cst_8 : f32 to vector<1x512xf32>
    %16 = arith.divf %14, %15 : vector<1x512xf32>
    %17 = vector.broadcast %9 : vector<1x512xf32> to vector<8x512xf32>
    %18 = arith.subf %5, %17 : vector<8x512xf32>
    %cst_9 = arith.constant 9.99999974E-6 : f32
    %19 = vector.broadcast %cst_9 : f32 to vector<1x512xf32>
    %20 = arith.addf %16, %19 : vector<1x512xf32>
    %21 = math.rsqrt %20 : vector<1x512xf32>
    %c0_10 = arith.constant 0 : index
    %c0_11 = arith.constant 0 : index
    %22 = vector.load %arg4[%c0_10, %c0_11] : memref<1x512xf32, #tpu.memory_space<vmem>>, vector<1x512xf32>
    %23 = arith.mulf %21, %22 : vector<1x512xf32>
    %24 = vector.broadcast %23 : vector<1x512xf32> to vector<8x512xf32>
    %25 = arith.mulf %18, %24 : vector<8x512xf32>
    %c0_12 = arith.constant 0 : index
    %c0_13 = arith.constant 0 : index
    %26 = vector.load %arg5[%c0_12, %c0_13] : memref<1x512xf32, #tpu.memory_space<vmem>>, vector<1x512xf32>
    %27 = vector.broadcast %26 : vector<1x512xf32> to vector<8x512xf32>
    %28 = arith.addf %25, %27 : vector<8x512xf32>
    %cst_14 = arith.constant 0.000000e+00 : f32
    %29 = vector.broadcast %cst_14 : f32 to vector<8x512xf32>
    %30 = arith.maximumf %28, %29 : vector<8x512xf32>
    %31 = arith.truncf %30 : vector<8x512xf32> to vector<8x512xbf16>
    %c0_15 = arith.constant 0 : index
    %c0_16 = arith.constant 0 : index
    %32 = vector.load %arg6[%c0_15, %c0_16] : memref<8x512xbf16, #tpu.memory_space<vmem>>, vector<8x512xbf16>
    tpu.vector_store %arg6[%c0_15, %c0_16], %31 {strides = array<i32>} : memref<8x512xbf16, #tpu.memory_space<vmem>>, vector<8x512xbf16>,
    return
  }
  func.func @transform_0(%arg0: i32) -> (i32, i32) {
    %c0_i32 = arith.constant 0 : i32
    %c0_i32_0 = arith.constant 0 : i32
    %c0_i32_1 = arith.constant 0 : i32
    return %c0_i32, %c0_i32_0 : i32, i32
  }
  func.func @transform_1(%arg0: i32) -> (i32, i32) {
    %c0_i32 = arith.constant 0 : i32
    %c0_i32_0 = arith.constant 0 : i32
    return %c0_i32, %arg0 : i32, i32
  }
  func.func @transform_2(%arg0: i32) -> (i32, i32) {
    %c0_i32 = arith.constant 0 : i32
    %c0_i32_0 = arith.constant 0 : i32
    return %c0_i32, %arg0 : i32, i32
  }
  func.func @transform_3(%arg0: i32) -> (i32, i32) {
    %c0_i32 = arith.constant 0 : i32
    %c0_i32_0 = arith.constant 0 : i32
    return %c0_i32, %arg0 : i32, i32
  }
  func.func @transform_4(%arg0: i32) -> (i32, i32) {
    %c0_i32 = arith.constant 0 : i32
    %c0_i32_0 = arith.constant 0 : i32
    return %c0_i32, %arg0 : i32, i32
  }
  func.func @transform_5(%arg0: i32) -> (i32, i32) {
    %c0_i32 = arith.constant 0 : i32
    %c0_i32_0 = arith.constant 0 : i32
    return %c0_i32, %arg0 : i32, i32
  }
}

module attributes {stable_mosaic.version = 11 : i64} {
  func.func @deconv_bn_relu_kernel(%arg0: memref<128x1152xbf16, #tpu.memory_space<vmem>>, %arg1: memref<1152x256xbf16, #tpu.memory_space<vmem>>, %arg2: memref<1x256xf32, #tpu.memory_space<vmem>>, %arg3: memref<1x64xf32, #tpu.memory_space<vmem>>, %arg4: memref<1x64xf32, #tpu.memory_space<vmem>>, %arg5: memref<128x256xbf16, #tpu.memory_space<vmem>>) attributes {dimension_semantics = [], scalar_prefetch = 0 : i64, scratch_operands = 0 : i64, tpu.core_type = #tpu.core_type<tc>} {
    %c0 = arith.constant 0 : index
    %c0_0 = arith.constant 0 : index
    %0 = vector.load %arg0[%c0, %c0_0] : memref<128x1152xbf16, #tpu.memory_space<vmem>>, vector<128x1152xbf16>
    %c0_1 = arith.constant 0 : index
    %c0_2 = arith.constant 0 : index
    %1 = vector.load %arg1[%c0_1, %c0_2] : memref<1152x256xbf16, #tpu.memory_space<vmem>>, vector<1152x256xbf16>
    %cst = arith.constant dense<0.000000e+00> : vector<128x256xf32>
    %2 = tpu.matmul %0, %1, %cst {dimension_numbers = #tpu.dot_dimension_numbers<[1], [0], [0], [1], [0, 0, 1, 1], [], []>} : vector<128x1152xbf16>, vector<1152x256xbf16>, vector<128x256xf32> -> vector<128x256xf32>
    %c0_3 = arith.constant 0 : index
    %c0_4 = arith.constant 0 : index
    %3 = vector.load %arg2[%c0_3, %c0_4] : memref<1x256xf32, #tpu.memory_space<vmem>>, vector<1x256xf32>
    %4 = vector.broadcast %3 : vector<1x256xf32> to vector<128x256xf32>
    %5 = arith.addf %2, %4 : vector<128x256xf32>
    %cst_5 = arith.constant dense<0.000000e+00> : vector<256xf32>
    %6 = vector.multi_reduction <add>, %5, %cst_5 [0] : vector<128x256xf32> to vector<256xf32>
    %7 = vector.shape_cast %6 : vector<256xf32> to vector<1x256xf32>
    %8 = vector.extract_strided_slice %7 {offsets = [0, 0], sizes = [1, 64], strides = [1, 1]} : vector<1x256xf32> to vector<1x64xf32>
    %9 = vector.extract_strided_slice %7 {offsets = [0, 64], sizes = [1, 64], strides = [1, 1]} : vector<1x256xf32> to vector<1x64xf32>
    %10 = arith.addf %8, %9 : vector<1x64xf32>
    %11 = vector.extract_strided_slice %7 {offsets = [0, 128], sizes = [1, 64], strides = [1, 1]} : vector<1x256xf32> to vector<1x64xf32>
    %12 = arith.addf %10, %11 : vector<1x64xf32>
    %13 = vector.extract_strided_slice %7 {offsets = [0, 192], sizes = [1, 64], strides = [1, 1]} : vector<1x256xf32> to vector<1x64xf32>
    %14 = arith.addf %12, %13 : vector<1x64xf32>
    %cst_6 = arith.constant 5.120000e+02 : f32
    %15 = vector.broadcast %cst_6 : f32 to vector<1x64xf32>
    %16 = arith.divf %14, %15 : vector<1x64xf32>
    %17 = tpu.concatenate %16, %16, %16, %16 in 1 : vector<1x64xf32>, vector<1x64xf32>, vector<1x64xf32>, vector<1x64xf32> -> vector<1x256xf32>
    %18 = vector.broadcast %17 : vector<1x256xf32> to vector<128x256xf32>
    %19 = arith.subf %5, %18 : vector<128x256xf32>
    %20 = arith.mulf %19, %19 : vector<128x256xf32>
    %cst_7 = arith.constant dense<0.000000e+00> : vector<256xf32>
    %21 = vector.multi_reduction <add>, %20, %cst_7 [0] : vector<128x256xf32> to vector<256xf32>
    %22 = vector.shape_cast %21 : vector<256xf32> to vector<1x256xf32>
    %23 = vector.extract_strided_slice %22 {offsets = [0, 0], sizes = [1, 64], strides = [1, 1]} : vector<1x256xf32> to vector<1x64xf32>
    %24 = vector.extract_strided_slice %22 {offsets = [0, 64], sizes = [1, 64], strides = [1, 1]} : vector<1x256xf32> to vector<1x64xf32>
    %25 = arith.addf %23, %24 : vector<1x64xf32>
    %26 = vector.extract_strided_slice %22 {offsets = [0, 128], sizes = [1, 64], strides = [1, 1]} : vector<1x256xf32> to vector<1x64xf32>
    %27 = arith.addf %25, %26 : vector<1x64xf32>
    %28 = vector.extract_strided_slice %22 {offsets = [0, 192], sizes = [1, 64], strides = [1, 1]} : vector<1x256xf32> to vector<1x64xf32>
    %29 = arith.addf %27, %28 : vector<1x64xf32>
    %cst_8 = arith.constant 5.120000e+02 : f32
    %30 = vector.broadcast %cst_8 : f32 to vector<1x64xf32>
    %31 = arith.divf %29, %30 : vector<1x64xf32>
    %c0_9 = arith.constant 0 : index
    %c0_10 = arith.constant 0 : index
    %32 = vector.load %arg3[%c0_9, %c0_10] : memref<1x64xf32, #tpu.memory_space<vmem>>, vector<1x64xf32>
    %cst_11 = arith.constant 9.99999974E-6 : f32
    %33 = vector.broadcast %cst_11 : f32 to vector<1x64xf32>
    %34 = arith.addf %31, %33 : vector<1x64xf32>
    %35 = math.rsqrt %34 : vector<1x64xf32>
    %36 = arith.mulf %32, %35 : vector<1x64xf32>
    %37 = tpu.concatenate %36, %36, %36, %36 in 1 : vector<1x64xf32>, vector<1x64xf32>, vector<1x64xf32>, vector<1x64xf32> -> vector<1x256xf32>
    %c0_12 = arith.constant 0 : index
    %c0_13 = arith.constant 0 : index
    %38 = vector.load %arg4[%c0_12, %c0_13] : memref<1x64xf32, #tpu.memory_space<vmem>>, vector<1x64xf32>
    %39 = tpu.concatenate %38, %38, %38, %38 in 1 : vector<1x64xf32>, vector<1x64xf32>, vector<1x64xf32>, vector<1x64xf32> -> vector<1x256xf32>
    %40 = vector.broadcast %37 : vector<1x256xf32> to vector<128x256xf32>
    %41 = arith.mulf %19, %40 : vector<128x256xf32>
    %42 = vector.broadcast %39 : vector<1x256xf32> to vector<128x256xf32>
    %43 = arith.addf %41, %42 : vector<128x256xf32>
    %cst_14 = arith.constant 0.000000e+00 : f32
    %44 = vector.broadcast %cst_14 : f32 to vector<128x256xf32>
    %45 = arith.maximumf %43, %44 : vector<128x256xf32>
    %46 = arith.truncf %45 : vector<128x256xf32> to vector<128x256xbf16>
    %c0_15 = arith.constant 0 : index
    %c0_16 = arith.constant 0 : index
    %47 = vector.load %arg5[%c0_15, %c0_16] : memref<128x256xbf16, #tpu.memory_space<vmem>>, vector<128x256xbf16>
    tpu.vector_store %arg5[%c0_15, %c0_16], %46 {strides = array<i32>} : memref<128x256xbf16, #tpu.memory_space<vmem>>, vector<128x256xbf16>,
    return
  }
}

module attributes {stable_mosaic.version = 11 : i64} {
  func.func @deconv_tanh_kernel(%arg0: i32, %arg1: memref<128x640xbf16, #tpu.memory_space<vmem>>, %arg2: memref<640x128xbf16, #tpu.memory_space<vmem>>, %arg3: memref<1x128xf32, #tpu.memory_space<vmem>>, %arg4: memref<128x128xf32, #tpu.memory_space<vmem>>) attributes {dimension_semantics = [#tpu.dimension_semantics<parallel>], iteration_bounds = array<i64: 4>, scalar_prefetch = 0 : i64, scratch_operands = 0 : i64, tpu.core_type = #tpu.core_type<tc>, window_params = [{transform_indices = @transform_0, window_bounds = array<i64: 128, 640>}, {pipeline_mode = #tpu.pipeline_mode<synchronous>, transform_indices = @transform_1, window_bounds = array<i64: 640, 128>}, {pipeline_mode = #tpu.pipeline_mode<synchronous>, transform_indices = @transform_2, window_bounds = array<i64: 1, 128>}, {transform_indices = @transform_3, window_bounds = array<i64: 128, 128>}]} {
    %c0 = arith.constant 0 : index
    %c0_0 = arith.constant 0 : index
    %0 = vector.load %arg1[%c0, %c0_0] : memref<128x640xbf16, #tpu.memory_space<vmem>>, vector<128x640xbf16>
    %c0_1 = arith.constant 0 : index
    %c0_2 = arith.constant 0 : index
    %1 = vector.load %arg2[%c0_1, %c0_2] : memref<640x128xbf16, #tpu.memory_space<vmem>>, vector<640x128xbf16>
    %cst = arith.constant dense<0.000000e+00> : vector<128x128xf32>
    %2 = tpu.matmul %0, %1, %cst {dimension_numbers = #tpu.dot_dimension_numbers<[1], [0], [0], [1], [0, 0, 1, 1], [], []>} : vector<128x640xbf16>, vector<640x128xbf16>, vector<128x128xf32> -> vector<128x128xf32>
    %c0_3 = arith.constant 0 : index
    %c0_4 = arith.constant 0 : index
    %3 = vector.load %arg3[%c0_3, %c0_4] : memref<1x128xf32, #tpu.memory_space<vmem>>, vector<1x128xf32>
    %4 = vector.broadcast %3 : vector<1x128xf32> to vector<128x128xf32>
    %5 = arith.addf %2, %4 : vector<128x128xf32>
    %6 = math.tanh %5 : vector<128x128xf32>
    %c0_5 = arith.constant 0 : index
    %c0_6 = arith.constant 0 : index
    %7 = vector.load %arg4[%c0_5, %c0_6] : memref<128x128xf32, #tpu.memory_space<vmem>>, vector<128x128xf32>
    tpu.vector_store %arg4[%c0_5, %c0_6], %6 {strides = array<i32>} : memref<128x128xf32, #tpu.memory_space<vmem>>, vector<128x128xf32>,
    return
  }
  func.func @transform_0(%arg0: i32) -> (i32, i32) {
    %c0_i32 = arith.constant 0 : i32
    %c0_i32_0 = arith.constant 0 : i32
    return %arg0, %c0_i32 : i32, i32
  }
  func.func @transform_1(%arg0: i32) -> (i32, i32) {
    %c0_i32 = arith.constant 0 : i32
    %c0_i32_0 = arith.constant 0 : i32
    %c0_i32_1 = arith.constant 0 : i32
    return %c0_i32, %c0_i32_0 : i32, i32
  }
  func.func @transform_2(%arg0: i32) -> (i32, i32) {
    %c0_i32 = arith.constant 0 : i32
    %c0_i32_0 = arith.constant 0 : i32
    %c0_i32_1 = arith.constant 0 : i32
    return %c0_i32, %c0_i32_0 : i32, i32
  }
  func.func @transform_3(%arg0: i32) -> (i32, i32) {
    %c0_i32 = arith.constant 0 : i32
    %c0_i32_0 = arith.constant 0 : i32
    return %arg0, %c0_i32 : i32, i32
  }
}

</mosaic_0001>

<llo_original>
// kernel: _lambda_.4
$region0: #{_lambda_.4}
  #allocation0 [shape = 'u32[]', space=smem, size = 0x4, offset = 0x4, fixed_abs, tag = 'smem constant byte address 0x4 - core index']
  #allocation1 [shape = 'u32[72,128]{1,0:T(1,128)}', space=vmem, size = 0x9000, scoped, tag = 'internal scratch']
  %s0 = inlined_call_operand.vmem [shape: f32[8,128], index: 0, kind: input, shape index: {}]
  %s1 = inlined_call_operand.vmem [shape: f32[128,1024], index: 1, kind: input, shape index: {}]
  %s2 = inlined_call_operand.hbm [shape: f32[1,1024], index: 2, kind: input, shape index: {}]
  %s3 = inlined_call_operand.hbm [shape: f32[1,1024], index: 3, kind: input, shape index: {}]
  %s4 = inlined_call_operand.hbm [shape: f32[1,1024], index: 4, kind: input, shape index: {}]
  %s5 = inlined_call_operand.vmem [shape: bf16[8,1024], index: 5, kind: output, shape index: {}]
  %s6 = sld [smem:[#allocation0]]
  $region42: #{_lambda_.4} parent=0
    _
  %s8 = ssub.s32 1, %s6
  %s9 = scalar_select 0, %s8, %s6
  $region1: #{_lambda_.4} parent=0
    #allocation2 [shape = 'u8[4096]{0}', space=vmem, size = 0x1000, scoped, tag = 'input window, operand 2, single buffered']
    #allocation3 [shape = 's32[1]{0}', space=sflag, size = 0x4, scoped, tag = 'scoped memory for _lambda_.4']
    #allocation4 [shape = 'u8[4096]{0}', space=vmem, size = 0x1000, scoped, tag = 'input window, operand 3, single buffered']
    #allocation5 [shape = 's32[1]{0}', space=sflag, size = 0x4, scoped, tag = 'scoped memory for _lambda_.4']
    #allocation6 [shape = 'u8[4096]{0}', space=vmem, size = 0x1000, scoped, tag = 'input window, operand 4, single buffered']
    %10 = vsyncpa [#allocation3], 0
    %11 = vsyncpa [#allocation5], 0
    // Predicated region
    $region2: #{_lambda_.4} parent=1 // pred_check
      _
    $region3: #{_lambda_.4} parent=1 // pred_check_branch
      %13 = sbr.rel (0) target = $region5
    $region4: #{_lambda_.4} parent=1 // pred_region
      _
    $region5: #{_lambda_.4} parent=1 // pred_fallthru
      _
    // Predicated region
    $region6: #{_lambda_.4} parent=1 // pred_check
      _
    $region7: #{_lambda_.4} parent=1 // pred_check_branch
      %15 = sbr.rel (0) target = $region9
    $region8: #{_lambda_.4} parent=1 // pred_region
      _
    $region9: #{_lambda_.4} parent=1 // pred_fallthru
      _
    // Predicated region
    $region10: #{_lambda_.4} parent=1 // pred_check
      _
    $region11: #{_lambda_.4} parent=1 // pred_check_branch
      %17 = sbr.rel (0) target = $region13
    $region12: #{_lambda_.4} parent=1 // pred_region
      %19 = vsyncadd [#allocation3], 0
      %s21 = sshll.u32 %s2, 4
      %s22 = int_to_ptr.hbm [resolvable:$true] %s21
      %s23 = sshll.u32 [#allocation2], 4
      %s24 = int_to_ptr.vmem [resolvable:$true] %s23
      %26 = dma.hbm_to_vmem [thread:$0]  %s22, 128, %s24, [#allocation3]
    $region13: #{_lambda_.4} parent=1 // pred_fallthru
      _
    // Predicated region
    $region14: #{_lambda_.4} parent=1 // pred_check
      _
    $region15: #{_lambda_.4} parent=1 // pred_check_branch
      %28 = sbr.rel (0) target = $region17
    $region16: #{_lambda_.4} parent=1 // pred_region
      %30 = vsyncadd [#allocation5], 0
      %s32 = sshll.u32 %s3, 4
      %s33 = int_to_ptr.hbm [resolvable:$true] %s32
      %s34 = sshll.u32 [#allocation4], 4
      %s35 = int_to_ptr.vmem [resolvable:$true] %s34
      %37 = dma.hbm_to_vmem [thread:$0]  %s33, 128, %s35, [#allocation5]
    $region17: #{_lambda_.4} parent=1 // pred_fallthru
      _
    // Predicated region
    $region18: #{_lambda_.4} parent=1 // pred_check
      _
    $region19: #{_lambda_.4} parent=1 // pred_check_branch
      %39 = sbr.rel (0) target = $region21
    $region20: #{_lambda_.4} parent=1 // pred_region
      %41 = vsyncadd [#allocation5], 0
      %s43 = sshll.u32 %s4, 4
      %s44 = int_to_ptr.hbm [resolvable:$true] %s43
      %s45 = sshll.u32 [#allocation6], 4
      %s46 = int_to_ptr.vmem [resolvable:$true] %s45
      %48 = dma.hbm_to_vmem [thread:$0]  %s44, 128, %s46, [#allocation5]
    $region21: #{_lambda_.4} parent=1 // pred_fallthru
      _
    // Predicated region
    $region22: #{_lambda_.4} parent=1 // pred_check
      _
    $region23: #{_lambda_.4} parent=1 // pred_check_branch
      %50 = sbr.rel (0) target = $region25
    $region24: #{_lambda_.4} parent=1 // pred_region
      %52 = dma.done [#allocation3], 128
    $region25: #{_lambda_.4} parent=1 // pred_fallthru
      _
    // Predicated region
    $region26: #{_lambda_.4} parent=1 // pred_check
      _
    $region27: #{_lambda_.4} parent=1 // pred_check_branch
      %54 = sbr.rel (0) target = $region29
    $region28: #{_lambda_.4} parent=1 // pred_region
      %56 = dma.done [#allocation5], 128
    $region29: #{_lambda_.4} parent=1 // pred_fallthru
      _
    // Predicated region
    $region30: #{_lambda_.4} parent=1 // pred_check
      _
    $region31: #{_lambda_.4} parent=1 // pred_check_branch
      %58 = sbr.rel (0) target = $region33
    $region32: #{_lambda_.4} parent=1 // pred_region
      %60 = dma.done [#allocation5], 128
    $region33: #{_lambda_.4} parent=1 // pred_fallthru
      _
    %v61 = vld [vmem:[%s0] sm:$0xff]
    %v62 = vld [vmem:[%s1] sm:$0xff]
    %v63 = vld [vmem:[%s1 + $0x8] sm:$0xff]
    %v64 = vld [vmem:[%s1 + $0x10] sm:$0xff]
    %v65 = vld [vmem:[%s1 + $0x18] sm:$0xff]
    %v66 = vld [vmem:[%s1 + $0x20] sm:$0xff]
    %v67 = vld [vmem:[%s1 + $0x28] sm:$0xff]
    %v68 = vld [vmem:[%s1 + $0x30] sm:$0xff]
    %v69 = vld [vmem:[%s1 + $0x38] sm:$0xff]
    %v70 = vld [vmem:[%s1 + $0x40] sm:$0xff]
    %v71 = vld [vmem:[%s1 + $0x48] sm:$0xff]
    %v72 = vld [vmem:[%s1 + $0x50] sm:$0xff]
    %v73 = vld [vmem:[%s1 + $0x58] sm:$0xff]
    %v74 = vld [vmem:[%s1 + $0x60] sm:$0xff]
    %v75 = vld [vmem:[%s1 + $0x68] sm:$0xff]
    %v76 = vld [vmem:[%s1 + $0x70] sm:$0xff]
    %v77 = vld [vmem:[%s1 + $0x78] sm:$0xff]
    %v78 = vld [vmem:[%s1 + $0x80] sm:$0xff]
    %v79 = vld [vmem:[%s1 + $0x88] sm:$0xff]
    %v80 = vld [vmem:[%s1 + $0x90] sm:$0xff]
    %v81 = vld [vmem:[%s1 + $0x98] sm:$0xff]
    %v82 = vld [vmem:[%s1 + $0xa0] sm:$0xff]
    %v83 = vld [vmem:[%s1 + $0xa8] sm:$0xff]
    %v84 = vld [vmem:[%s1 + $0xb0] sm:$0xff]
    %v85 = vld [vmem:[%s1 + $0xb8] sm:$0xff]
    %v86 = vld [vmem:[%s1 + $0xc0] sm:$0xff]
    %v87 = vld [vmem:[%s1 + $0xc8] sm:$0xff]
    %v88 = vld [vmem:[%s1 + $0xd0] sm:$0xff]
    %v89 = vld [vmem:[%s1 + $0xd8] sm:$0xff]
    %v90 = vld [vmem:[%s1 + $0xe0] sm:$0xff]
    %v91 = vld [vmem:[%s1 + $0xe8] sm:$0xff]
    %v92 = vld [vmem:[%s1 + $0xf0] sm:$0xff]
    %v93 = vld [vmem:[%s1 + $0xf8] sm:$0xff]
    %v94 = vld [vmem:[%s1 + $0x100] sm:$0xff]
    %v95 = vld [vmem:[%s1 + $0x108] sm:$0xff]
    %v96 = vld [vmem:[%s1 + $0x110] sm:$0xff]
    %v97 = vld [vmem:[%s1 + $0x118] sm:$0xff]
    %v98 = vld [vmem:[%s1 + $0x120] sm:$0xff]
    %v99 = vld [vmem:[%s1 + $0x128] sm:$0xff]
    %v100 = vld [vmem:[%s1 + $0x130] sm:$0xff]
    %v101 = vld [vmem:[%s1 + $0x138] sm:$0xff]
    %v102 = vld [vmem:[%s1 + $0x140] sm:$0xff]
    %v103 = vld [vmem:[%s1 + $0x148] sm:$0xff]
    %v104 = vld [vmem:[%s1 + $0x150] sm:$0xff]
    %v105 = vld [vmem:[%s1 + $0x158] sm:$0xff]
    %v106 = vld [vmem:[%s1 + $0x160] sm:$0xff]
    %v107 = vld [vmem:[%s1 + $0x168] sm:$0xff]
    %v108 = vld [vmem:[%s1 + $0x170] sm:$0xff]
    %v109 = vld [vmem:[%s1 + $0x178] sm:$0xff]
    %v110 = vld [vmem:[%s1 + $0x180] sm:$0xff]
    %v111 = vld [vmem:[%s1 + $0x188] sm:$0xff]
    %v112 = vld [vmem:[%s1 + $0x190] sm:$0xff]
    %v113 = vld [vmem:[%s1 + $0x198] sm:$0xff]
    %v114 = vld [vmem:[%s1 + $0x1a0] sm:$0xff]
    %v115 = vld [vmem:[%s1 + $0x1a8] sm:$0xff]
    %v116 = vld [vmem:[%s1 + $0x1b0] sm:$0xff]
    %v117 = vld [vmem:[%s1 + $0x1b8] sm:$0xff]
    %v118 = vld [vmem:[%s1 + $0x1c0] sm:$0xff]
    %v119 = vld [vmem:[%s1 + $0x1c8] sm:$0xff]
    %v120 = vld [vmem:[%s1 + $0x1d0] sm:$0xff]
    %v121 = vld [vmem:[%s1 + $0x1d8] sm:$0xff]
    %v122 = vld [vmem:[%s1 + $0x1e0] sm:$0xff]
    %v123 = vld [vmem:[%s1 + $0x1e8] sm:$0xff]
    %v124 = vld [vmem:[%s1 + $0x1f0] sm:$0xff]
    %v125 = vld [vmem:[%s1 + $0x1f8] sm:$0xff]
    %v126 = vld [vmem:[%s1 + $0x200] sm:$0xff]
    %v127 = vld [vmem:[%s1 + $0x208] sm:$0xff]
    %v128 = vld [vmem:[%s1 + $0x210] sm:$0xff]
    %v129 = vld [vmem:[%s1 + $0x218] sm:$0xff]
    %v130 = vld [vmem:[%s1 + $0x220] sm:$0xff]
    %v131 = vld [vmem:[%s1 + $0x228] sm:$0xff]
    %v132 = vld [vmem:[%s1 + $0x230] sm:$0xff]
    %v133 = vld [vmem:[%s1 + $0x238] sm:$0xff]
    %v134 = vld [vmem:[%s1 + $0x240] sm:$0xff]
    %v135 = vld [vmem:[%s1 + $0x248] sm:$0xff]
    %v136 = vld [vmem:[%s1 + $0x250] sm:$0xff]
    %v137 = vld [vmem:[%s1 + $0x258] sm:$0xff]
    %v138 = vld [vmem:[%s1 + $0x260] sm:$0xff]
    %v139 = vld [vmem:[%s1 + $0x268] sm:$0xff]
    %v140 = vld [vmem:[%s1 + $0x270] sm:$0xff]
    %v141 = vld [vmem:[%s1 + $0x278] sm:$0xff]
    %v142 = vld [vmem:[%s1 + $0x280] sm:$0xff]
    %v143 = vld [vmem:[%s1 + $0x288] sm:$0xff]
    %v144 = vld [vmem:[%s1 + $0x290] sm:$0xff]
    %v145 = vld [vmem:[%s1 + $0x298] sm:$0xff]
    %v146 = vld [vmem:[%s1 + $0x2a0] sm:$0xff]
    %v147 = vld [vmem:[%s1 + $0x2a8] sm:$0xff]
    %v148 = vld [vmem:[%s1 + $0x2b0] sm:$0xff]
    %v149 = vld [vmem:[%s1 + $0x2b8] sm:$0xff]
    %v150 = vld [vmem:[%s1 + $0x2c0] sm:$0xff]
    %v151 = vld [vmem:[%s1 + $0x2c8] sm:$0xff]
    %v152 = vld [vmem:[%s1 + $0x2d0] sm:$0xff]
    %v153 = vld [vmem:[%s1 + $0x2d8] sm:$0xff]
    %v154 = vld [vmem:[%s1 + $0x2e0] sm:$0xff]
    %v155 = vld [vmem:[%s1 + $0x2e8] sm:$0xff]
    %v156 = vld [vmem:[%s1 + $0x2f0] sm:$0xff]
    %v157 = vld [vmem:[%s1 + $0x2f8] sm:$0xff]
    %v158 = vld [vmem:[%s1 + $0x300] sm:$0xff]
    %v159 = vld [vmem:[%s1 + $0x308] sm:$0xff]
    %v160 = vld [vmem:[%s1 + $0x310] sm:$0xff]
    %v161 = vld [vmem:[%s1 + $0x318] sm:$0xff]
    %v162 = vld [vmem:[%s1 + $0x320] sm:$0xff]
    %v163 = vld [vmem:[%s1 + $0x328] sm:$0xff]
    %v164 = vld [vmem:[%s1 + $0x330] sm:$0xff]
    %v165 = vld [vmem:[%s1 + $0x338] sm:$0xff]
    %v166 = vld [vmem:[%s1 + $0x340] sm:$0xff]
    %v167 = vld [vmem:[%s1 + $0x348] sm:$0xff]
    %v168 = vld [vmem:[%s1 + $0x350] sm:$0xff]
    %v169 = vld [vmem:[%s1 + $0x358] sm:$0xff]
    %v170 = vld [vmem:[%s1 + $0x360] sm:$0xff]
    %v171 = vld [vmem:[%s1 + $0x368] sm:$0xff]
    %v172 = vld [vmem:[%s1 + $0x370] sm:$0xff]
    %v173 = vld [vmem:[%s1 + $0x378] sm:$0xff]
    %v174 = vld [vmem:[%s1 + $0x380] sm:$0xff]
    %v175 = vld [vmem:[%s1 + $0x388] sm:$0xff]
    %v176 = vld [vmem:[%s1 + $0x390] sm:$0xff]
    %v177 = vld [vmem:[%s1 + $0x398] sm:$0xff]
    %v178 = vld [vmem:[%s1 + $0x3a0] sm:$0xff]
    %v179 = vld [vmem:[%s1 + $0x3a8] sm:$0xff]
    %v180 = vld [vmem:[%s1 + $0x3b0] sm:$0xff]
    %v181 = vld [vmem:[%s1 + $0x3b8] sm:$0xff]
    %v182 = vld [vmem:[%s1 + $0x3c0] sm:$0xff]
    %v183 = vld [vmem:[%s1 + $0x3c8] sm:$0xff]
    %v184 = vld [vmem:[%s1 + $0x3d0] sm:$0xff]
    %v185 = vld [vmem:[%s1 + $0x3d8] sm:$0xff]
    %v186 = vld [vmem:[%s1 + $0x3e0] sm:$0xff]
    %v187 = vld [vmem:[%s1 + $0x3e8] sm:$0xff]
    %v188 = vld [vmem:[%s1 + $0x3f0] sm:$0xff]
    %v189 = vld [vmem:[%s1 + $0x3f8] sm:$0xff]
    %v190 = vld [vmem:[#allocation2] sm:$0xff]
    %v192 = vperm.slane %v190, 0
    %v193 = vperm.slane %v190, 1
    %v194 = vperm.slane %v190, 2
    %v195 = vperm.slane %v190, 3
    %v196 = vperm.slane %v190, 4
    %v197 = vperm.slane %v190, 5
    %v198 = vperm.slane %v190, 6
    %v199 = vperm.slane %v190, 7
    %208 = vmatpush.msra.mxu0 %v182
    %209 = vmatpush.msra.mxu0 %v174
    %210 = vmatpush.msra.mxu0 %v166
    %211 = vmatpush.msra.mxu0 %v158
    %212 = vmatpush.msra.mxu0 %v150
    %213 = vmatpush.msra.mxu0 %v142
    %214 = vmatpush.msra.mxu0 %v134
    %215 = vmatpush.msra.mxu0 %v126
    %216 = vmatpush.msra.mxu0 %v118
    %217 = vmatpush.msra.mxu0 %v110
    %218 = vmatpush.msra.mxu0 %v102
    %219 = vmatpush.msra.mxu0 %v94
    %220 = vmatpush.msra.mxu0 %v86
    %221 = vmatpush.msra.mxu0 %v78
    %222 = vmatpush.msra.mxu0 %v70
    %223 = vmatpush.msra.mxu0 %v62
    %224 = vmatmul.f32.gmra.mxu0 %v61
    %v225 = vpop.f32.mrf.mxu0
    %v226 = vadd.f32 %v192, %v225
    %227 = vdwg.mxu0
    %228 = vmatpush.msra.mxu0 %v183
    %229 = vmatpush.msra.mxu0 %v175
    %230 = vmatpush.msra.mxu0 %v167
    %231 = vmatpush.msra.mxu0 %v159
    %232 = vmatpush.msra.mxu0 %v151
    %233 = vmatpush.msra.mxu0 %v143
    %234 = vmatpush.msra.mxu0 %v135
    %235 = vmatpush.msra.mxu0 %v127
    %236 = vmatpush.msra.mxu0 %v119
    %237 = vmatpush.msra.mxu0 %v111
    %238 = vmatpush.msra.mxu0 %v103
    %239 = vmatpush.msra.mxu0 %v95
    %240 = vmatpush.msra.mxu0 %v87
    %241 = vmatpush.msra.mxu0 %v79
    %242 = vmatpush.msra.mxu0 %v71
    %243 = vmatpush.msra.mxu0 %v63
    %244 = vmatmul.f32.gmra.mxu0 %v61
    %v245 = vpop.f32.mrf.mxu0
    %v246 = vadd.f32 %v193, %v245
    %247 = vdwg.mxu0
    %248 = vmatpush.msra.mxu0 %v184
    %249 = vmatpush.msra.mxu0 %v176
    %250 = vmatpush.msra.mxu0 %v168
    %251 = vmatpush.msra.mxu0 %v160
    %252 = vmatpush.msra.mxu0 %v152
    %253 = vmatpush.msra.mxu0 %v144
    %254 = vmatpush.msra.mxu0 %v136
    %255 = vmatpush.msra.mxu0 %v128
    %256 = vmatpush.msra.mxu0 %v120
    %257 = vmatpush.msra.mxu0 %v112
    %258 = vmatpush.msra.mxu0 %v104
    %259 = vmatpush.msra.mxu0 %v96
    %260 = vmatpush.msra.mxu0 %v88
    %261 = vmatpush.msra.mxu0 %v80
    %262 = vmatpush.msra.mxu0 %v72
    %263 = vmatpush.msra.mxu0 %v64
    %264 = vmatmul.f32.gmra.mxu0 %v61
    %v265 = vpop.f32.mrf.mxu0
    %v266 = vadd.f32 %v194, %v265
    %267 = vdwg.mxu0
    %268 = vmatpush.msra.mxu0 %v185
    %269 = vmatpush.msra.mxu0 %v177
    %270 = vmatpush.msra.mxu0 %v169
    %271 = vmatpush.msra.mxu0 %v161
    %272 = vmatpush.msra.mxu0 %v153
    %273 = vmatpush.msra.mxu0 %v145
    %274 = vmatpush.msra.mxu0 %v137
    %275 = vmatpush.msra.mxu0 %v129
    %276 = vmatpush.msra.mxu0 %v121
    %277 = vmatpush.msra.mxu0 %v113
    %278 = vmatpush.msra.mxu0 %v105
    %279 = vmatpush.msra.mxu0 %v97
    %280 = vmatpush.msra.mxu0 %v89
    %281 = vmatpush.msra.mxu0 %v81
    %282 = vmatpush.msra.mxu0 %v73
    %283 = vmatpush.msra.mxu0 %v65
    %284 = vmatmul.f32.gmra.mxu0 %v61
    %v285 = vpop.f32.mrf.mxu0
    %v286 = vadd.f32 %v195, %v285
    %287 = vdwg.mxu0
    %288 = vmatpush.msra.mxu0 %v186
    %289 = vmatpush.msra.mxu0 %v178
    %290 = vmatpush.msra.mxu0 %v170
    %291 = vmatpush.msra.mxu0 %v162
    %292 = vmatpush.msra.mxu0 %v154
    %293 = vmatpush.msra.mxu0 %v146
    %294 = vmatpush.msra.mxu0 %v138
    %295 = vmatpush.msra.mxu0 %v130
    %296 = vmatpush.msra.mxu0 %v122
    %297 = vmatpush.msra.mxu0 %v114
    %298 = vmatpush.msra.mxu0 %v106
    %299 = vmatpush.msra.mxu0 %v98
    %300 = vmatpush.msra.mxu0 %v90
    %301 = vmatpush.msra.mxu0 %v82
    %302 = vmatpush.msra.mxu0 %v74
    %303 = vmatpush.msra.mxu0 %v66
    %304 = vmatmul.f32.gmra.mxu0 %v61
    %v305 = vpop.f32.mrf.mxu0
    %v306 = vadd.f32 %v196, %v305
    %307 = vdwg.mxu0
    %308 = vmatpush.msra.mxu0 %v187
    %309 = vmatpush.msra.mxu0 %v179
    %310 = vmatpush.msra.mxu0 %v171
    %311 = vmatpush.msra.mxu0 %v163
    %312 = vmatpush.msra.mxu0 %v155
    %313 = vmatpush.msra.mxu0 %v147
    %314 = vmatpush.msra.mxu0 %v139
    %315 = vmatpush.msra.mxu0 %v131
    %316 = vmatpush.msra.mxu0 %v123
    %317 = vmatpush.msra.mxu0 %v115
    %318 = vmatpush.msra.mxu0 %v107
    %319 = vmatpush.msra.mxu0 %v99
    %320 = vmatpush.msra.mxu0 %v91
    %321 = vmatpush.msra.mxu0 %v83
    %322 = vmatpush.msra.mxu0 %v75
    %323 = vmatpush.msra.mxu0 %v67
    %324 = vmatmul.f32.gmra.mxu0 %v61
    %v325 = vpop.f32.mrf.mxu0
    %v326 = vadd.f32 %v197, %v325
    %327 = vdwg.mxu0
    %328 = vmatpush.msra.mxu0 %v188
    %329 = vmatpush.msra.mxu0 %v180
    %330 = vmatpush.msra.mxu0 %v172
    %331 = vmatpush.msra.mxu0 %v164
    %332 = vmatpush.msra.mxu0 %v156
    %333 = vmatpush.msra.mxu0 %v148
    %334 = vmatpush.msra.mxu0 %v140
    %335 = vmatpush.msra.mxu0 %v132
    %336 = vmatpush.msra.mxu0 %v124
    %337 = vmatpush.msra.mxu0 %v116
    %338 = vmatpush.msra.mxu0 %v108
    %339 = vmatpush.msra.mxu0 %v100
    %340 = vmatpush.msra.mxu0 %v92
    %341 = vmatpush.msra.mxu0 %v84
    %342 = vmatpush.msra.mxu0 %v76
    %343 = vmatpush.msra.mxu0 %v68
    %344 = vmatmul.f32.gmra.mxu0 %v61
    %v345 = vpop.f32.mrf.mxu0
    %v346 = vadd.f32 %v198, %v345
    %347 = vdwg.mxu0
    %348 = vmatpush.msra.mxu0 %v189
    %349 = vmatpush.msra.mxu0 %v181
    %350 = vmatpush.msra.mxu0 %v173
    %351 = vmatpush.msra.mxu0 %v165
    %352 = vmatpush.msra.mxu0 %v157
    %353 = vmatpush.msra.mxu0 %v149
    %354 = vmatpush.msra.mxu0 %v141
    %355 = vmatpush.msra.mxu0 %v133
    %356 = vmatpush.msra.mxu0 %v125
    %357 = vmatpush.msra.mxu0 %v117
    %358 = vmatpush.msra.mxu0 %v109
    %359 = vmatpush.msra.mxu0 %v101
    %360 = vmatpush.msra.mxu0 %v93
    %361 = vmatpush.msra.mxu0 %v85
    %362 = vmatpush.msra.mxu0 %v77
    %363 = vmatpush.msra.mxu0 %v69
    %364 = vmatmul.f32.gmra.mxu0 %v61
    %v365 = vpop.f32.mrf.mxu0
    %v366 = vadd.f32 %v199, %v365
    %367 = vdwg.mxu0
    %v368 = vrot.slane %v226, 4
    %v369 = vadd.f32 %v226, %v368
    %v370 = vrot.slane %v369, 2
    %v371 = vadd.f32 %v369, %v370
    %v372 = vrot.slane %v371, 1
    %v373 = vadd.f32 %v371, %v372
    %v374 = vrot.slane %v246, 4
    %v375 = vadd.f32 %v246, %v374
    %v376 = vrot.slane %v375, 2
    %v377 = vadd.f32 %v375, %v376
    %v378 = vrot.slane %v377, 1
    %v379 = vadd.f32 %v377, %v378
    %v380 = vrot.slane %v266, 4
    %v381 = vadd.f32 %v266, %v380
    %v382 = vrot.slane %v381, 2
    %v383 = vadd.f32 %v381, %v382
    %v384 = vrot.slane %v383, 1
    %v385 = vadd.f32 %v383, %v384
    %v386 = vrot.slane %v286, 4
    %v387 = vadd.f32 %v286, %v386
    %v388 = vrot.slane %v387, 2
    %v389 = vadd.f32 %v387, %v388
    %v390 = vrot.slane %v389, 1
    %v391 = vadd.f32 %v389, %v390
    %v392 = vrot.slane %v306, 4
    %v393 = vadd.f32 %v306, %v392
    %v394 = vrot.slane %v393, 2
    %v395 = vadd.f32 %v393, %v394
    %v396 = vrot.slane %v395, 1
    %v397 = vadd.f32 %v395, %v396
    %v398 = vrot.slane %v326, 4
    %v399 = vadd.f32 %v326, %v398
    %v400 = vrot.slane %v399, 2
    %v401 = vadd.f32 %v399, %v400
    %v402 = vrot.slane %v401, 1
    %v403 = vadd.f32 %v401, %v402
    %v404 = vrot.slane %v346, 4
    %v405 = vadd.f32 %v346, %v404
    %v406 = vrot.slane %v405, 2
    %v407 = vadd.f32 %v405, %v406
    %v408 = vrot.slane %v407, 1
    %v409 = vadd.f32 %v407, %v408
    %v410 = vrot.slane %v366, 4
    %v411 = vadd.f32 %v366, %v410
    %v412 = vrot.slane %v411, 2
    %v413 = vadd.f32 %v411, %v412
    %v414 = vrot.slane %v413, 1
    %v415 = vadd.f32 %v413, %v414
    %v416 = vrcp.pop 8.0
    %v417 = vmul.f32 8.0, %v416
    %v418 = vsub.f32 1.0, %v417
    %v419 = vmul.f32 %v416, %v418
    %v420 = vadd.f32 %v416, %v419
    %vm421 = vweird.f32 %v416
    %v422 = vsel %vm421, %v416, %v420
    %v423 = vmul.f32 %v373, %v422
    %v424 = vmul.f32 %v379, %v422
    %v425 = vmul.f32 %v385, %v422
    %v426 = vmul.f32 %v391, %v422
    %v427 = vmul.f32 %v397, %v422
    %v428 = vmul.f32 %v403, %v422
    %v429 = vmul.f32 %v409, %v422
    %v430 = vmul.f32 %v415, %v422
    %v431 = vsub.f32 %v226, %v423
    %v432 = vsub.f32 %v246, %v424
    %v433 = vsub.f32 %v266, %v425
    %v434 = vsub.f32 %v286, %v426
    %v435 = vsub.f32 %v306, %v427
    %v436 = vsub.f32 %v326, %v428
    %v437 = vsub.f32 %v346, %v429
    %v438 = vsub.f32 %v366, %v430
    %v439 = vmul.f32 %v431, %v431
    %v440 = vmul.f32 %v432, %v432
    %v441 = vmul.f32 %v433, %v433
    %v442 = vmul.f32 %v434, %v434
    %v443 = vmul.f32 %v435, %v435
    %v444 = vmul.f32 %v436, %v436
    %v445 = vmul.f32 %v437, %v437
    %v446 = vmul.f32 %v438, %v438
    %v447 = vrot.slane %v439, 4
    %v448 = vadd.f32 %v439, %v447
    %v449 = vrot.slane %v448, 2
    %v450 = vadd.f32 %v448, %v449
    %v451 = vrot.slane %v450, 1
    %v452 = vadd.f32 %v450, %v451
    %v453 = vrot.slane %v440, 4
    %v454 = vadd.f32 %v440, %v453
    %v455 = vrot.slane %v454, 2
    %v456 = vadd.f32 %v454, %v455
    %v457 = vrot.slane %v456, 1
    %v458 = vadd.f32 %v456, %v457
    %v459 = vrot.slane %v441, 4
    %v460 = vadd.f32 %v441, %v459
    %v461 = vrot.slane %v460, 2
    %v462 = vadd.f32 %v460, %v461
    %v463 = vrot.slane %v462, 1
    %v464 = vadd.f32 %v462, %v463
    %v465 = vrot.slane %v442, 4
    %v466 = vadd.f32 %v442, %v465
    %v467 = vrot.slane %v466, 2
    %v468 = vadd.f32 %v466, %v467
    %v469 = vrot.slane %v468, 1
    %v470 = vadd.f32 %v468, %v469
    %v471 = vrot.slane %v443, 4
    %v472 = vadd.f32 %v443, %v471
    %v473 = vrot.slane %v472, 2
    %v474 = vadd.f32 %v472, %v473
    %v475 = vrot.slane %v474, 1
    %v476 = vadd.f32 %v474, %v475
    %v477 = vrot.slane %v444, 4
    %v478 = vadd.f32 %v444, %v477
    %v479 = vrot.slane %v478, 2
    %v480 = vadd.f32 %v478, %v479
    %v481 = vrot.slane %v480, 1
    %v482 = vadd.f32 %v480, %v481
    %v483 = vrot.slane %v445, 4
    %v484 = vadd.f32 %v445, %v483
    %v485 = vrot.slane %v484, 2
    %v486 = vadd.f32 %v484, %v485
    %v487 = vrot.slane %v486, 1
    %v488 = vadd.f32 %v486, %v487
    %v489 = vrot.slane %v446, 4
    %v490 = vadd.f32 %v446, %v489
    %v491 = vrot.slane %v490, 2
    %v492 = vadd.f32 %v490, %v491
    %v493 = vrot.slane %v492, 1
    %v494 = vadd.f32 %v492, %v493
    %v495 = vmul.f32 %v452, %v422
    %v496 = vmul.f32 %v458, %v422
    %v497 = vmul.f32 %v464, %v422
    %v498 = vmul.f32 %v470, %v422
    %v499 = vmul.f32 %v476, %v422
    %v500 = vmul.f32 %v482, %v422
    %v501 = vmul.f32 %v488, %v422
    %v502 = vmul.f32 %v494, %v422
    %v503 = vadd.f32 %v495, 1e-05
    %v504 = vadd.f32 %v496, 1e-05
    %v505 = vadd.f32 %v497, 1e-05
    %v506 = vadd.f32 %v498, 1e-05
    %v507 = vadd.f32 %v499, 1e-05
    %v508 = vadd.f32 %v500, 1e-05
    %v509 = vadd.f32 %v501, 1e-05
    %v510 = vadd.f32 %v502, 1e-05
    %v511 = vrsqrt.pop %v503
    %v512 = vmul.f32 %v511, %v503
    %v513 = vmul.f32 %v512, %v511
    %v514 = vmul.f32 0.5, %v513
    %v515 = vsub.f32 1.5, %v514
    %v516 = vmul.f32 %v511, %v515
    %vm517 = vweird.f32 %v503
    %vm518 = vweird.f32 %v511
    %vm519 = vmor %vm517, %vm518
    %v520 = vsel %vm519, %v511, %v516
    %v521 = vrsqrt.pop %v504
    %v522 = vmul.f32 %v521, %v504
    %v523 = vmul.f32 %v522, %v521
    %v524 = vmul.f32 0.5, %v523
    %v525 = vsub.f32 1.5, %v524
    %v526 = vmul.f32 %v521, %v525
    %vm527 = vweird.f32 %v504
    %vm528 = vweird.f32 %v521
    %vm529 = vmor %vm527, %vm528
    %v530 = vsel %vm529, %v521, %v526
    %v531 = vrsqrt.pop %v505
    %v532 = vmul.f32 %v531, %v505
    %v533 = vmul.f32 %v532, %v531
    %v534 = vmul.f32 0.5, %v533
    %v535 = vsub.f32 1.5, %v534
    %v536 = vmul.f32 %v531, %v535
    %vm537 = vweird.f32 %v505
    %vm538 = vweird.f32 %v531
    %vm539 = vmor %vm537, %vm538
    %v540 = vsel %vm539, %v531, %v536
    %v541 = vrsqrt.pop %v506
    %v542 = vmul.f32 %v541, %v506
    %v543 = vmul.f32 %v542, %v541
    %v544 = vmul.f32 0.5, %v543
    %v545 = vsub.f32 1.5, %v544
    %v546 = vmul.f32 %v541, %v545
    %vm547 = vweird.f32 %v506
    %vm548 = vweird.f32 %v541
    %vm549 = vmor %vm547, %vm548
    %v550 = vsel %vm549, %v541, %v546
    %v551 = vrsqrt.pop %v507
    %v552 = vmul.f32 %v551, %v507
    %v553 = vmul.f32 %v552, %v551
    %v554 = vmul.f32 0.5, %v553
    %v555 = vsub.f32 1.5, %v554
    %v556 = vmul.f32 %v551, %v555
    %vm557 = vweird.f32 %v507
    %vm558 = vweird.f32 %v551
    %vm559 = vmor %vm557, %vm558
    %v560 = vsel %vm559, %v551, %v556
    %v561 = vrsqrt.pop %v508
    %v562 = vmul.f32 %v561, %v508
    %v563 = vmul.f32 %v562, %v561
    %v564 = vmul.f32 0.5, %v563
    %v565 = vsub.f32 1.5, %v564
    %v566 = vmul.f32 %v561, %v565
    %vm567 = vweird.f32 %v508
    %vm568 = vweird.f32 %v561
    %vm569 = vmor %vm567, %vm568
    %v570 = vsel %vm569, %v561, %v566
    %v571 = vrsqrt.pop %v509
    %v572 = vmul.f32 %v571, %v509
    %v573 = vmul.f32 %v572, %v571
    %v574 = vmul.f32 0.5, %v573
    %v575 = vsub.f32 1.5, %v574
    %v576 = vmul.f32 %v571, %v575
    %vm577 = vweird.f32 %v509
    %vm578 = vweird.f32 %v571
    %vm579 = vmor %vm577, %vm578
    %v580 = vsel %vm579, %v571, %v576
    %v581 = vrsqrt.pop %v510
    %v582 = vmul.f32 %v581, %v510
    %v583 = vmul.f32 %v582, %v581
    %v584 = vmul.f32 0.5, %v583
    %v585 = vsub.f32 1.5, %v584
    %v586 = vmul.f32 %v581, %v585
    %vm587 = vweird.f32 %v510
    %vm588 = vweird.f32 %v581
    %vm589 = vmor %vm587, %vm588
    %v590 = vsel %vm589, %v581, %v586
    %v591 = vld [vmem:[#allocation4] sm:$0xff]
    %v593 = vperm.slane %v591, 0
    %v594 = vperm.slane %v591, 1
    %v595 = vperm.slane %v591, 2
    %v596 = vperm.slane %v591, 3
    %v597 = vperm.slane %v591, 4
    %v598 = vperm.slane %v591, 5
    %v599 = vperm.slane %v591, 6
    %v600 = vperm.slane %v591, 7
    %v609 = vmul.f32 %v520, %v593
    %v610 = vmul.f32 %v530, %v594
    %v611 = vmul.f32 %v540, %v595
    %v612 = vmul.f32 %v550, %v596
    %v613 = vmul.f32 %v560, %v597
    %v614 = vmul.f32 %v570, %v598
    %v615 = vmul.f32 %v580, %v599
    %v616 = vmul.f32 %v590, %v600
    %v617 = vperm.slane %v609, 0
    %v618 = vperm.slane %v610, 0
    %v619 = vperm.slane %v611, 0
    %v620 = vperm.slane %v612, 0
    %v621 = vperm.slane %v613, 0
    %v622 = vperm.slane %v614, 0
    %v623 = vperm.slane %v615, 0
    %v624 = vperm.slane %v616, 0
    %v625 = vmul.f32 %v431, %v617
    %v626 = vmul.f32 %v432, %v618
    %v627 = vmul.f32 %v433, %v619
    %v628 = vmul.f32 %v434, %v620
    %v629 = vmul.f32 %v435, %v621
    %v630 = vmul.f32 %v436, %v622
    %v631 = vmul.f32 %v437, %v623
    %v632 = vmul.f32 %v438, %v624
    %v633 = vld [vmem:[#allocation6] sm:$0xff]
    %v635 = vperm.slane %v633, 0
    %v636 = vperm.slane %v633, 1
    %v637 = vperm.slane %v633, 2
    %v638 = vperm.slane %v633, 3
    %v639 = vperm.slane %v633, 4
    %v640 = vperm.slane %v633, 5
    %v641 = vperm.slane %v633, 6
    %v642 = vperm.slane %v633, 7
    %v651 = vadd.f32 %v625, %v635
    %v652 = vadd.f32 %v626, %v636
    %v653 = vadd.f32 %v627, %v637
    %v654 = vadd.f32 %v628, %v638
    %v655 = vadd.f32 %v629, %v639
    %v656 = vadd.f32 %v630, %v640
    %v657 = vadd.f32 %v631, %v641
    %v658 = vadd.f32 %v632, %v642
    %v659 = vmax.f32 %v651, 0.0
    %v660 = vmax.f32 %v652, 0.0
    %v661 = vmax.f32 %v653, 0.0
    %v662 = vmax.f32 %v654, 0.0
    %v663 = vmax.f32 %v655, 0.0
    %v664 = vmax.f32 %v656, 0.0
    %v665 = vmax.f32 %v657, 0.0
    %v666 = vmax.f32 %v658, 0.0
    %v667 = vpack.c.bf16 %v660, %v659
    %v668 = vpack.c.bf16 %v662, %v661
    %v669 = vpack.c.bf16 %v664, %v663
    %v670 = vpack.c.bf16 %v666, %v665
    %671 = vst [vmem:[%s5] sm:$0xff] %v667
    %672 = vst [vmem:[%s5 + $0x8] sm:$0xff] %v668
    %673 = vst [vmem:[%s5 + $0x10] sm:$0xff] %v669
    %674 = vst [vmem:[%s5 + $0x18] sm:$0xff] %v670
    // Predicated region
    $region34: #{_lambda_.4} parent=1 // pred_check
      _
    $region35: #{_lambda_.4} parent=1 // pred_check_branch
      %676 = sbr.rel (0) target = $region37
    $region36: #{_lambda_.4} parent=1 // pred_region
      _
    $region37: #{_lambda_.4} parent=1 // pred_fallthru
      _
    // Predicated region
    $region38: #{_lambda_.4} parent=1 // pred_check
      _
    $region39: #{_lambda_.4} parent=1 // pred_check_branch
      %678 = sbr.rel (0) target = $region41
    $region40: #{_lambda_.4} parent=1 // pred_region
      _
    $region41: #{_lambda_.4} parent=1 // pred_fallthru
      _
    %679 = vsyncpa [#allocation3], 1
    %680 = vsyncpa [#allocation5], 1

// kernel: _lambda_.5
$region0: #{_lambda_.5}
  #allocation0 [shape = 'u32[]', space=smem, size = 0x4, offset = 0x4, fixed_abs, tag = 'smem constant byte address 0x4 - core index']
  #allocation1 [shape = 'u32[72,128]{1,0:T(1,128)}', space=vmem, size = 0x9000, scoped, tag = 'internal scratch']
  %s0 = inlined_call_operand.vmem [shape: bf16[8,1024], index: 0, kind: input, shape index: {}]
  %s1 = inlined_call_operand.vmem [shape: bf16[1024,2048], index: 1, kind: input, shape index: {}]
  %s2 = inlined_call_operand.vmem [shape: f32[1,2048], index: 2, kind: input, shape index: {}]
  %s3 = inlined_call_operand.vmem [shape: f32[1,2048], index: 3, kind: input, shape index: {}]
  %s4 = inlined_call_operand.vmem [shape: f32[1,2048], index: 4, kind: input, shape index: {}]
  %s5 = inlined_call_operand.vmem [shape: bf16[8,2048], index: 5, kind: output, shape index: {}]
  %s6 = sld [smem:[#allocation0]]
  $region76: #{_lambda_.5} parent=0
    _
  %s8 = ssub.s32 1, %s6
  %s9 = scalar_select 0, %s8, %s6
  $region1: #{_lambda_.5} parent=0
    #allocation2 [shape = 'u8[2097152]{0}', space=vmem, size = 0x200000, scoped, tag = 'input window, operand 1']
    loop: start=0, step=1, limit=6
    $region2: #{_lambda_.5} parent=1 // loop_pre_header
      _
    $region3: #{_lambda_.5} parent=1 // loop_header
      %s11 = sphi 0, %s15
      %p12 = scmp.ge.s32.totalorder %s11, 6
      %s19 = sphi 0, %s19
      %s21 = sphi 0, %s19
      %s22 = sphi 0, %s21
      %s36 = sphi 0, %s22
      %s42 = sphi 0, %s44
      %s45 = sphi 0, %s42
      %s46 = sphi 0, %s45
      %s62 = sphi 0, %s46
      %s68 = sphi 0, %s70
      %s71 = sphi 0, %s68
      %s72 = sphi 0, %s71
      %s88 = sphi 0, %s72
      %s94 = sphi 0, %s96
      %s97 = sphi 0, %s94
      %s98 = sphi 0, %s97
      %s114 = sphi 0, %s98
      %s120 = sphi 0, %s122
      %s123 = sphi 0, %s120
      %s124 = sphi 0, %s123
      %s140 = sphi 0, %s124
      %s146 = sphi 0, %s148
      %s149 = sphi 0, %s146
      %s150 = sphi 0, %s149
      %s166 = sphi 0, %s150
    $region4: #{_lambda_.5} parent=1 // loop_header_branch
      %14 = sbr.rel (%p12) target = $region8
    $region5: #{_lambda_.5} parent=1 // loop_body
      %s16 = ssub.s32 %s11, 1
      %s17 = ssub.s32 %s11, 2
      %s18 = sadd.s32 %s11, 1
      %s20 = sadd.s32 %s19, 1
      %p23 = scmp.eq.s32.totalorder %s11, 3
      %p24 = scmp.ne.s32.totalorder %s19, %s21
      %p25 = scmp.eq.s32.totalorder %s11, 0
      %p26 = por %p24, %p25
      %p27 = scmp.ne.s32.totalorder %s19, %s21
      %p28 = scmp.eq.s32.totalorder %s16, 3
      %p29 = por %p27, %p28
      %p30 = scmp.ne.s32.totalorder %s21, %s22
      %p31 = scmp.eq.s32.totalorder %s16, 0
      %p32 = por %p30, %p31
      %p33 = scmp.ne.s32.totalorder %s21, %s22
      %p34 = scmp.eq.s32.totalorder %s17, 3
      %p35 = por %p33, %p34
      %p37 = scmp.ne.s32.totalorder %s22, %s36
      %p38 = scmp.eq.s32.totalorder %s17, 0
      %p39 = por %p37, %p38
      %s40 = ssub.s32 %s11, %s18
      %p41 = scmp.eq.s32.totalorder %s40, 0
      %s43 = sadd.s32 %s42, 1
      %s44 = scalar_select %p41, %s42, %s43
      %p47 = pneg %p41
      %p48 = scmp.eq.s32.totalorder %s11, 3
      %p49 = por %p47, %p48
      %p50 = scmp.ne.s32.totalorder %s42, %s45
      %p51 = scmp.eq.s32.totalorder %s11, 0
      %p52 = por %p50, %p51
      %p53 = scmp.ne.s32.totalorder %s42, %s45
      %p54 = scmp.eq.s32.totalorder %s16, 3
      %p55 = por %p53, %p54
      %p56 = scmp.ne.s32.totalorder %s45, %s46
      %p57 = scmp.eq.s32.totalorder %s16, 0
      %p58 = por %p56, %p57
      %p59 = scmp.ne.s32.totalorder %s45, %s46
      %p60 = scmp.eq.s32.totalorder %s17, 3
      %p61 = por %p59, %p60
      %p63 = scmp.ne.s32.totalorder %s46, %s62
      %p64 = scmp.eq.s32.totalorder %s17, 0
      %p65 = por %p63, %p64
      %s66 = ssub.s32 %s11, %s18
      %p67 = scmp.eq.s32.totalorder %s66, 0
      %s69 = sadd.s32 %s68, 1
      %s70 = scalar_select %p67, %s68, %s69
      %p73 = pneg %p67
      %p74 = scmp.eq.s32.totalorder %s11, 3
      %p75 = por %p73, %p74
      %p76 = scmp.ne.s32.totalorder %s68, %s71
      %p77 = scmp.eq.s32.totalorder %s11, 0
      %p78 = por %p76, %p77
      %p79 = scmp.ne.s32.totalorder %s68, %s71
      %p80 = scmp.eq.s32.totalorder %s16, 3
      %p81 = por %p79, %p80
      %p82 = scmp.ne.s32.totalorder %s71, %s72
      %p83 = scmp.eq.s32.totalorder %s16, 0
      %p84 = por %p82, %p83
      %p85 = scmp.ne.s32.totalorder %s71, %s72
      %p86 = scmp.eq.s32.totalorder %s17, 3
      %p87 = por %p85, %p86
      %p89 = scmp.ne.s32.totalorder %s72, %s88
      %p90 = scmp.eq.s32.totalorder %s17, 0
      %p91 = por %p89, %p90
      %s92 = ssub.s32 %s11, %s18
      %p93 = scmp.eq.s32.totalorder %s92, 0
      %s95 = sadd.s32 %s94, 1
      %s96 = scalar_select %p93, %s94, %s95
      %p99 = pneg %p93
      %p100 = scmp.eq.s32.totalorder %s11, 3
      %p101 = por %p99, %p100
      %p102 = scmp.ne.s32.totalorder %s94, %s97
      %p103 = scmp.eq.s32.totalorder %s11, 0
      %p104 = por %p102, %p103
      %p105 = scmp.ne.s32.totalorder %s94, %s97
      %p106 = scmp.eq.s32.totalorder %s16, 3
      %p107 = por %p105, %p106
      %p108 = scmp.ne.s32.totalorder %s97, %s98
      %p109 = scmp.eq.s32.totalorder %s16, 0
      %p110 = por %p108, %p109
      %p111 = scmp.ne.s32.totalorder %s97, %s98
      %p112 = scmp.eq.s32.totalorder %s17, 3
      %p113 = por %p111, %p112
      %p115 = scmp.ne.s32.totalorder %s98, %s114
      %p116 = scmp.eq.s32.totalorder %s17, 0
      %p117 = por %p115, %p116
      %s118 = ssub.s32 %s11, %s18
      %p119 = scmp.eq.s32.totalorder %s118, 0
      %s121 = sadd.s32 %s120, 1
      %s122 = scalar_select %p119, %s120, %s121
      %p125 = pneg %p119
      %p126 = scmp.eq.s32.totalorder %s11, 3
      %p127 = por %p125, %p126
      %p128 = scmp.ne.s32.totalorder %s120, %s123
      %p129 = scmp.eq.s32.totalorder %s11, 0
      %p130 = por %p128, %p129
      %p131 = scmp.ne.s32.totalorder %s120, %s123
      %p132 = scmp.eq.s32.totalorder %s16, 3
      %p133 = por %p131, %p132
      %p134 = scmp.ne.s32.totalorder %s123, %s124
      %p135 = scmp.eq.s32.totalorder %s16, 0
      %p136 = por %p134, %p135
      %p137 = scmp.ne.s32.totalorder %s123, %s124
      %p138 = scmp.eq.s32.totalorder %s17, 3
      %p139 = por %p137, %p138
      %p141 = scmp.ne.s32.totalorder %s124, %s140
      %p142 = scmp.eq.s32.totalorder %s17, 0
      %p143 = por %p141, %p142
      %s144 = ssub.s32 %s11, %s18
      %p145 = scmp.eq.s32.totalorder %s144, 0
      %s147 = sadd.s32 %s146, 1
      %s148 = scalar_select %p145, %s146, %s147
      %p151 = pneg %p145
      %p152 = scmp.eq.s32.totalorder %s11, 3
      %p153 = por %p151, %p152
      %p154 = scmp.ne.s32.totalorder %s146, %s149
      %p155 = scmp.eq.s32.totalorder %s11, 0
      %p156 = por %p154, %p155
      %p157 = scmp.ne.s32.totalorder %s146, %s149
      %p158 = scmp.eq.s32.totalorder %s16, 3
      %p159 = por %p157, %p158
      %p160 = scmp.ne.s32.totalorder %s149, %s150
      %p161 = scmp.eq.s32.totalorder %s16, 0
      %p162 = por %p160, %p161
      %p163 = scmp.ne.s32.totalorder %s149, %s150
      %p164 = scmp.eq.s32.totalorder %s17, 3
      %p165 = por %p163, %p164
      %p167 = scmp.ne.s32.totalorder %s150, %s166
      %p168 = scmp.eq.s32.totalorder %s17, 0
      %p169 = por %p167, %p168
      %p170 = scmp.le.s32.totalorder 1, %s11
      %p171 = scmp.lt.s32.totalorder %s11, 5
      %p172 = pnand %p170, %p171
      %p173 = pneg %p172
      // Predicated region
      $region9: #{_lambda_.5} parent=5 // pred_check
        _
      $region10: #{_lambda_.5} parent=5 // pred_check_branch
        %175 = sbr.rel (%p172) target = $region12
      $region11: #{_lambda_.5} parent=5 // pred_region
        %s176 = ssub.s32 %s11, 1
        // Predicated region
        $region13: #{_lambda_.5} parent=11 // pred_check
          %p177 = pneg %p32
        $region14: #{_lambda_.5} parent=11 // pred_check_branch
          %179 = sbr.rel (%p177) target = $region16
        $region15: #{_lambda_.5} parent=11 // pred_region
          _
        $region16: #{_lambda_.5} parent=11 // pred_fallthru
          _
      $region12: #{_lambda_.5} parent=5 // pred_fallthru
        _
      %p180 = scmp.lt.s32.totalorder %s11, 4
      // Predicated region
      $region17: #{_lambda_.5} parent=5 // pred_check
        %p181 = pneg %p180
      $region18: #{_lambda_.5} parent=5 // pred_check_branch
        %183 = sbr.rel (%p181) target = $region20
      $region19: #{_lambda_.5} parent=5 // pred_region
        // Predicated region
        $region21: #{_lambda_.5} parent=19 // pred_check
          %p184 = pneg %p52
        $region22: #{_lambda_.5} parent=19 // pred_check_branch
          %186 = sbr.rel (%p184) target = $region24
        $region23: #{_lambda_.5} parent=19 // pred_region
          %s187 = sand.u32 %s42, 1
          %s188 = sand.u32 %s42, 1
          %s189 = smul.addr %s188, 2048
          %s190 = scalar_lea.vmem [#allocation2], %s189
          %s191 = smul.u32 4, %s11
          %s192 = smul.addr %s191, 4
          %s193 = scalar_lea.vmem %s1, %s192
          // Predicated region
          $region25: #{_lambda_.5} parent=23 // pred_check
            _
          $region26: #{_lambda_.5} parent=23 // pred_check_branch
            %195 = sbr.rel (0) target = $region28
          $region27: #{_lambda_.5} parent=23 // pred_region
            // Predicated region
            $region29: #{_lambda_.5} parent=27 // pred_check
              _
            $region30: #{_lambda_.5} parent=27 // pred_check_branch
              %197 = sbr.rel (0) target = $region32
            $region31: #{_lambda_.5} parent=27 // pred_region
              loop: start=0, step=1, limit=1
              $region33: #{_lambda_.5} parent=31 // loop_pre_header
                _
              $region34: #{_lambda_.5} parent=31 // loop_header
                %s199 = sphi 0, %s203
                %p200 = scmp.ge.s32.totalorder %s199, 1
                %s204 = sphi %s193, %s193
                %s205 = sphi %s190, %s190
              $region35: #{_lambda_.5} parent=31 // loop_header_branch
                %202 = sbr.rel (%p200) target = $region39
              $region36: #{_lambda_.5} parent=31 // loop_body
                %v206 = vld [vmem:[%s204] sm:$0xff]
                %207 = vst [vmem:[%s205] sm:$0xff] %v206
                %v208 = vld [vmem:[%s204 + $0x8] sm:$0xff]
                %209 = vst [vmem:[%s205 + $0x8] sm:$0xff] %v208
                %v210 = vld [vmem:[%s204 + $0x40] sm:$0xff]
                %211 = vst [vmem:[%s205 + $0x10] sm:$0xff] %v210
                %v212 = vld [vmem:[%s204 + $0x48] sm:$0xff]
                %213 = vst [vmem:[%s205 + $0x18] sm:$0xff] %v212
                %v214 = vld [vmem:[%s204 + $0x80] sm:$0xff]
                %215 = vst [vmem:[%s205 + $0x20] sm:$0xff] %v214
                %v216 = vld [vmem:[%s204 + $0x88] sm:$0xff]
                %217 = vst [vmem:[%s205 + $0x28] sm:$0xff] %v216
                %v218 = vld [vmem:[%s204 + $0xc0] sm:$0xff]
                %219 = vst [vmem:[%s205 + $0x30] sm:$0xff] %v218
                %v220 = vld [vmem:[%s204 + $0xc8] sm:$0xff]
                %221 = vst [vmem:[%s205 + $0x38] sm:$0xff] %v220
                %v222 = vld [vmem:[%s204 + $0x100] sm:$0xff]
                %223 = vst [vmem:[%s205 + $0x40] sm:$0xff] %v222
                %v224 = vld [vmem:[%s204 + $0x108] sm:$0xff]
                %225 = vst [vmem:[%s205 + $0x48] sm:$0xff] %v224
                %v226 = vld [vmem:[%s204 + $0x140] sm:$0xff]
                %227 = vst [vmem:[%s205 + $0x50] sm:$0xff] %v226
                %v228 = vld [vmem:[%s204 + $0x148] sm:$0xff]
                %229 = vst [vmem:[%s205 + $0x58] sm:$0xff] %v228
                %v230 = vld [vmem:[%s204 + $0x180] sm:$0xff]
                %231 = vst [vmem:[%s205 + $0x60] sm:$0xff] %v230
                %v232 = vld [vmem:[%s204 + $0x188] sm:$0xff]
                %233 = vst [vmem:[%s205 + $0x68] sm:$0xff] %v232
                %v234 = vld [vmem:[%s204 + $0x1c0] sm:$0xff]
                %235 = vst [vmem:[%s205 + $0x70] sm:$0xff] %v234
                %v236 = vld [vmem:[%s204 + $0x1c8] sm:$0xff]
                %237 = vst [vmem:[%s205 + $0x78] sm:$0xff] %v236
                %v238 = vld [vmem:[%s204 + $0x200] sm:$0xff]
                %239 = vst [vmem:[%s205 + $0x80] sm:$0xff] %v238
                %v240 = vld [vmem:[%s204 + $0x208] sm:$0xff]
                %241 = vst [vmem:[%s205 + $0x88] sm:$0xff] %v240
                %v242 = vld [vmem:[%s204 + $0x240] sm:$0xff]
                %243 = vst [vmem:[%s205 + $0x90] sm:$0xff] %v242
                %v244 = vld [vmem:[%s204 + $0x248] sm:$0xff]
                %245 = vst [vmem:[%s205 + $0x98] sm:$0xff] %v244
                %v246 = vld [vmem:[%s204 + $0x280] sm:$0xff]
                %247 = vst [vmem:[%s205 + $0xa0] sm:$0xff] %v246
                %v248 = vld [vmem:[%s204 + $0x288] sm:$0xff]
                %249 = vst [vmem:[%s205 + $0xa8] sm:$0xff] %v248
                %v250 = vld [vmem:[%s204 + $0x2c0] sm:$0xff]
                %251 = vst [vmem:[%s205 + $0xb0] sm:$0xff] %v250
                %v252 = vld [vmem:[%s204 + $0x2c8] sm:$0xff]
                %253 = vst [vmem:[%s205 + $0xb8] sm:$0xff] %v252
                %v254 = vld [vmem:[%s204 + $0x300] sm:$0xff]
                %255 = vst [vmem:[%s205 + $0xc0] sm:$0xff] %v254
                %v256 = vld [vmem:[%s204 + $0x308] sm:$0xff]
                %257 = vst [vmem:[%s205 + $0xc8] sm:$0xff] %v256
                %v258 = vld [vmem:[%s204 + $0x340] sm:$0xff]
                %259 = vst [vmem:[%s205 + $0xd0] sm:$0xff] %v258
                %v260 = vld [vmem:[%s204 + $0x348] sm:$0xff]
                %261 = vst [vmem:[%s205 + $0xd8] sm:$0xff] %v260
                %v262 = vld [vmem:[%s204 + $0x380] sm:$0xff]
                %263 = vst [vmem:[%s205 + $0xe0] sm:$0xff] %v262
                %v264 = vld [vmem:[%s204 + $0x388] sm:$0xff]
                %265 = vst [vmem:[%s205 + $0xe8] sm:$0xff] %v264
                %v266 = vld [vmem:[%s204 + $0x3c0] sm:$0xff]
                %267 = vst [vmem:[%s205 + $0xf0] sm:$0xff] %v266
                %v268 = vld [vmem:[%s204 + $0x3c8] sm:$0xff]
                %269 = vst [vmem:[%s205 + $0xf8] sm:$0xff] %v268
                %v270 = vld [vmem:[%s204 + $0x400] sm:$0xff]
                %271 = vst [vmem:[%s205 + $0x100] sm:$0xff] %v270
                %v272 = vld [vmem:[%s204 + $0x408] sm:$0xff]
                %273 = vst [vmem:[%s205 + $0x108] sm:$0xff] %v272
                %v274 = vld [vmem:[%s204 + $0x440] sm:$0xff]
                %275 = vst [vmem:[%s205 + $0x110] sm:$0xff] %v274
                %v276 = vld [vmem:[%s204 + $0x448] sm:$0xff]
                %277 = vst [vmem:[%s205 + $0x118] sm:$0xff] %v276
                %v278 = vld [vmem:[%s204 + $0x480] sm:$0xff]
                %279 = vst [vmem:[%s205 + $0x120] sm:$0xff] %v278
                %v280 = vld [vmem:[%s204 + $0x488] sm:$0xff]
                %281 = vst [vmem:[%s205 + $0x128] sm:$0xff] %v280
                %v282 = vld [vmem:[%s204 + $0x4c0] sm:$0xff]
                %283 = vst [vmem:[%s205 + $0x130] sm:$0xff] %v282
                %v284 = vld [vmem:[%s204 + $0x4c8] sm:$0xff]
                %285 = vst [vmem:[%s205 + $0x138] sm:$0xff] %v284
                %v286 = vld [vmem:[%s204 + $0x500] sm:$0xff]
                %287 = vst [vmem:[%s205 + $0x140] sm:$0xff] %v286
                %v288 = vld [vmem:[%s204 + $0x508] sm:$0xff]
                %289 = vst [vmem:[%s205 + $0x148] sm:$0xff] %v288
                %v290 = vld [vmem:[%s204 + $0x540] sm:$0xff]
                %291 = vst [vmem:[%s205 + $0x150] sm:$0xff] %v290
                %v292 = vld [vmem:[%s204 + $0x548] sm:$0xff]
                %293 = vst [vmem:[%s205 + $0x158] sm:$0xff] %v292
                %v294 = vld [vmem:[%s204 + $0x580] sm:$0xff]
                %295 = vst [vmem:[%s205 + $0x160] sm:$0xff] %v294
                %v296 = vld [vmem:[%s204 + $0x588] sm:$0xff]
                %297 = vst [vmem:[%s205 + $0x168] sm:$0xff] %v296
                %v298 = vld [vmem:[%s204 + $0x5c0] sm:$0xff]
                %299 = vst [vmem:[%s205 + $0x170] sm:$0xff] %v298
                %v300 = vld [vmem:[%s204 + $0x5c8] sm:$0xff]
                %301 = vst [vmem:[%s205 + $0x178] sm:$0xff] %v300
                %v302 = vld [vmem:[%s204 + $0x600] sm:$0xff]
                %303 = vst [vmem:[%s205 + $0x180] sm:$0xff] %v302
                %v304 = vld [vmem:[%s204 + $0x608] sm:$0xff]
                %305 = vst [vmem:[%s205 + $0x188] sm:$0xff] %v304
                %v306 = vld [vmem:[%s204 + $0x640] sm:$0xff]
                %307 = vst [vmem:[%s205 + $0x190] sm:$0xff] %v306
                %v308 = vld [vmem:[%s204 + $0x648] sm:$0xff]
                %309 = vst [vmem:[%s205 + $0x198] sm:$0xff] %v308
                %v310 = vld [vmem:[%s204 + $0x680] sm:$0xff]
                %311 = vst [vmem:[%s205 + $0x1a0] sm:$0xff] %v310
                %v312 = vld [vmem:[%s204 + $0x688] sm:$0xff]
                %313 = vst [vmem:[%s205 + $0x1a8] sm:$0xff] %v312
                %v314 = vld [vmem:[%s204 + $0x6c0] sm:$0xff]
                %315 = vst [vmem:[%s205 + $0x1b0] sm:$0xff] %v314
                %v316 = vld [vmem:[%s204 + $0x6c8] sm:$0xff]
                %317 = vst [vmem:[%s205 + $0x1b8] sm:$0xff] %v316
                %v318 = vld [vmem:[%s204 + $0x700] sm:$0xff]
                %319 = vst [vmem:[%s205 + $0x1c0] sm:$0xff] %v318
                %v320 = vld [vmem:[%s204 + $0x708] sm:$0xff]
                %321 = vst [vmem:[%s205 + $0x1c8] sm:$0xff] %v320
                %v322 = vld [vmem:[%s204 + $0x740] sm:$0xff]
                %323 = vst [vmem:[%s205 + $0x1d0] sm:$0xff] %v322
                %v324 = vld [vmem:[%s204 + $0x748] sm:$0xff]
                %325 = vst [vmem:[%s205 + $0x1d8] sm:$0xff] %v324
                %v326 = vld [vmem:[%s204 + $0x780] sm:$0xff]
                %327 = vst [vmem:[%s205 + $0x1e0] sm:$0xff] %v326
                %v328 = vld [vmem:[%s204 + $0x788] sm:$0xff]
                %329 = vst [vmem:[%s205 + $0x1e8] sm:$0xff] %v328
                %v330 = vld [vmem:[%s204 + $0x7c0] sm:$0xff]
                %331 = vst [vmem:[%s205 + $0x1f0] sm:$0xff] %v330
                %v332 = vld [vmem:[%s204 + $0x7c8] sm:$0xff]
                %333 = vst [vmem:[%s205 + $0x1f8] sm:$0xff] %v332
                %v334 = vld [vmem:[%s204 + $0x800] sm:$0xff]
                %335 = vst [vmem:[%s205 + $0x200] sm:$0xff] %v334
                %v336 = vld [vmem:[%s204 + $0x808] sm:$0xff]
                %337 = vst [vmem:[%s205 + $0x208] sm:$0xff] %v336
                %v338 = vld [vmem:[%s204 + $0x840] sm:$0xff]
                %339 = vst [vmem:[%s205 + $0x210] sm:$0xff] %v338
                %v340 = vld [vmem:[%s204 + $0x848] sm:$0xff]
                %341 = vst [vmem:[%s205 + $0x218] sm:$0xff] %v340
                %v342 = vld [vmem:[%s204 + $0x880] sm:$0xff]
                %343 = vst [vmem:[%s205 + $0x220] sm:$0xff] %v342
                %v344 = vld [vmem:[%s204 + $0x888] sm:$0xff]
                %345 = vst [vmem:[%s205 + $0x228] sm:$0xff] %v344
                %v346 = vld [vmem:[%s204 + $0x8c0] sm:$0xff]
                %347 = vst [vmem:[%s205 + $0x230] sm:$0xff] %v346
                %v348 = vld [vmem:[%s204 + $0x8c8] sm:$0xff]
                %349 = vst [vmem:[%s205 + $0x238] sm:$0xff] %v348
                %v350 = vld [vmem:[%s204 + $0x900] sm:$0xff]
                %351 = vst [vmem:[%s205 + $0x240] sm:$0xff] %v350
                %v352 = vld [vmem:[%s204 + $0x908] sm:$0xff]
                %353 = vst [vmem:[%s205 + $0x248] sm:$0xff] %v352
                %v354 = vld [vmem:[%s204 + $0x940] sm:$0xff]
                %355 = vst [vmem:[%s205 + $0x250] sm:$0xff] %v354
                %v356 = vld [vmem:[%s204 + $0x948] sm:$0xff]
                %357 = vst [vmem:[%s205 + $0x258] sm:$0xff] %v356
                %v358 = vld [vmem:[%s204 + $0x980] sm:$0xff]
                %359 = vst [vmem:[%s205 + $0x260] sm:$0xff] %v358
                %v360 = vld [vmem:[%s204 + $0x988] sm:$0xff]
                %361 = vst [vmem:[%s205 + $0x268] sm:$0xff] %v360
                %v362 = vld [vmem:[%s204 + $0x9c0] sm:$0xff]
                %363 = vst [vmem:[%s205 + $0x270] sm:$0xff] %v362
                %v364 = vld [vmem:[%s204 + $0x9c8] sm:$0xff]
                %365 = vst [vmem:[%s205 + $0x278] sm:$0xff] %v364
                %v366 = vld [vmem:[%s204 + $0xa00] sm:$0xff]
                %367 = vst [vmem:[%s205 + $0x280] sm:$0xff] %v366
                %v368 = vld [vmem:[%s204 + $0xa08] sm:$0xff]
                %369 = vst [vmem:[%s205 + $0x288] sm:$0xff] %v368
                %v370 = vld [vmem:[%s204 + $0xa40] sm:$0xff]
                %371 = vst [vmem:[%s205 + $0x290] sm:$0xff] %v370
                %v372 = vld [vmem:[%s204 + $0xa48] sm:$0xff]
                %373 = vst [vmem:[%s205 + $0x298] sm:$0xff] %v372
                %v374 = vld [vmem:[%s204 + $0xa80] sm:$0xff]
                %375 = vst [vmem:[%s205 + $0x2a0] sm:$0xff] %v374
                %v376 = vld [vmem:[%s204 + $0xa88] sm:$0xff]
                %377 = vst [vmem:[%s205 + $0x2a8] sm:$0xff] %v376
                %v378 = vld [vmem:[%s204 + $0xac0] sm:$0xff]
                %379 = vst [vmem:[%s205 + $0x2b0] sm:$0xff] %v378
                %v380 = vld [vmem:[%s204 + $0xac8] sm:$0xff]
                %381 = vst [vmem:[%s205 + $0x2b8] sm:$0xff] %v380
                %v382 = vld [vmem:[%s204 + $0xb00] sm:$0xff]
                %383 = vst [vmem:[%s205 + $0x2c0] sm:$0xff] %v382
                %v384 = vld [vmem:[%s204 + $0xb08] sm:$0xff]
                %385 = vst [vmem:[%s205 + $0x2c8] sm:$0xff] %v384
                %v386 = vld [vmem:[%s204 + $0xb40] sm:$0xff]
                %387 = vst [vmem:[%s205 + $0x2d0] sm:$0xff] %v386
                %v388 = vld [vmem:[%s204 + $0xb48] sm:$0xff]
                %389 = vst [vmem:[%s205 + $0x2d8] sm:$0xff] %v388
                %v390 = vld [vmem:[%s204 + $0xb80] sm:$0xff]
                %391 = vst [vmem:[%s205 + $0x2e0] sm:$0xff] %v390
                %v392 = vld [vmem:[%s204 + $0xb88] sm:$0xff]
                %393 = vst [vmem:[%s205 + $0x2e8] sm:$0xff] %v392
                %v394 = vld [vmem:[%s204 + $0xbc0] sm:$0xff]
                %395 = vst [vmem:[%s205 + $0x2f0] sm:$0xff] %v394
                %v396 = vld [vmem:[%s204 + $0xbc8] sm:$0xff]
                %397 = vst [vmem:[%s205 + $0x2f8] sm:$0xff] %v396
                %v398 = vld [vmem:[%s204 + $0xc00] sm:$0xff]
                %399 = vst [vmem:[%s205 + $0x300] sm:$0xff] %v398
                %v400 = vld [vmem:[%s204 + $0xc08] sm:$0xff]
                %401 = vst [vmem:[%s205 + $0x308] sm:$0xff] %v400
                %v402 = vld [vmem:[%s204 + $0xc40] sm:$0xff]
                %403 = vst [vmem:[%s205 + $0x310] sm:$0xff] %v402
                %v404 = vld [vmem:[%s204 + $0xc48] sm:$0xff]
                %405 = vst [vmem:[%s205 + $0x318] sm:$0xff] %v404
                %v406 = vld [vmem:[%s204 + $0xc80] sm:$0xff]
                %407 = vst [vmem:[%s205 + $0x320] sm:$0xff] %v406
                %v408 = vld [vmem:[%s204 + $0xc88] sm:$0xff]
                %409 = vst [vmem:[%s205 + $0x328] sm:$0xff] %v408
                %v410 = vld [vmem:[%s204 + $0xcc0] sm:$0xff]
                %411 = vst [vmem:[%s205 + $0x330] sm:$0xff] %v410
                %v412 = vld [vmem:[%s204 + $0xcc8] sm:$0xff]
                %413 = vst [vmem:[%s205 + $0x338] sm:$0xff] %v412
                %v414 = vld [vmem:[%s204 + $0xd00] sm:$0xff]
                %415 = vst [vmem:[%s205 + $0x340] sm:$0xff] %v414
                %v416 = vld [vmem:[%s204 + $0xd08] sm:$0xff]
                %417 = vst [vmem:[%s205 + $0x348] sm:$0xff] %v416
                %v418 = vld [vmem:[%s204 + $0xd40] sm:$0xff]
                %419 = vst [vmem:[%s205 + $0x350] sm:$0xff] %v418
                %v420 = vld [vmem:[%s204 + $0xd48] sm:$0xff]
                %421 = vst [vmem:[%s205 + $0x358] sm:$0xff] %v420
                %v422 = vld [vmem:[%s204 + $0xd80] sm:$0xff]
                %423 = vst [vmem:[%s205 + $0x360] sm:$0xff] %v422
                %v424 = vld [vmem:[%s204 + $0xd88] sm:$0xff]
                %425 = vst [vmem:[%s205 + $0x368] sm:$0xff] %v424
                %v426 = vld [vmem:[%s204 + $0xdc0] sm:$0xff]
                %427 = vst [vmem:[%s205 + $0x370] sm:$0xff] %v426
                %v428 = vld [vmem:[%s204 + $0xdc8] sm:$0xff]
                %429 = vst [vmem:[%s205 + $0x378] sm:$0xff] %v428
                %v430 = vld [vmem:[%s204 + $0xe00] sm:$0xff]
                %431 = vst [vmem:[%s205 + $0x380] sm:$0xff] %v430
                %v432 = vld [vmem:[%s204 + $0xe08] sm:$0xff]
                %433 = vst [vmem:[%s205 + $0x388] sm:$0xff] %v432
                %v434 = vld [vmem:[%s204 + $0xe40] sm:$0xff]
                %435 = vst [vmem:[%s205 + $0x390] sm:$0xff] %v434
                %v436 = vld [vmem:[%s204 + $0xe48] sm:$0xff]
                %437 = vst [vmem:[%s205 + $0x398] sm:$0xff] %v436
                %v438 = vld [vmem:[%s204 + $0xe80] sm:$0xff]
                %439 = vst [vmem:[%s205 + $0x3a0] sm:$0xff] %v438
                %v440 = vld [vmem:[%s204 + $0xe88] sm:$0xff]
                %441 = vst [vmem:[%s205 + $0x3a8] sm:$0xff] %v440
                %v442 = vld [vmem:[%s204 + $0xec0] sm:$0xff]
                %443 = vst [vmem:[%s205 + $0x3b0] sm:$0xff] %v442
                %v444 = vld [vmem:[%s204 + $0xec8] sm:$0xff]
                %445 = vst [vmem:[%s205 + $0x3b8] sm:$0xff] %v444
                %v446 = vld [vmem:[%s204 + $0xf00] sm:$0xff]
                %447 = vst [vmem:[%s205 + $0x3c0] sm:$0xff] %v446
                %v448 = vld [vmem:[%s204 + $0xf08] sm:$0xff]
                %449 = vst [vmem:[%s205 + $0x3c8] sm:$0xff] %v448
                %v450 = vld [vmem:[%s204 + $0xf40] sm:$0xff]
                %451 = vst [vmem:[%s205 + $0x3d0] sm:$0xff] %v450
                %v452 = vld [vmem:[%s204 + $0xf48] sm:$0xff]
                %453 = vst [vmem:[%s205 + $0x3d8] sm:$0xff] %v452
                %v454 = vld [vmem:[%s204 + $0xf80] sm:$0xff]
                %455 = vst [vmem:[%s205 + $0x3e0] sm:$0xff] %v454
                %v456 = vld [vmem:[%s204 + $0xf88] sm:$0xff]
                %457 = vst [vmem:[%s205 + $0x3e8] sm:$0xff] %v456
                %v458 = vld [vmem:[%s204 + $0xfc0] sm:$0xff]
                %459 = vst [vmem:[%s205 + $0x3f0] sm:$0xff] %v458
                %v460 = vld [vmem:[%s204 + $0xfc8] sm:$0xff]
                %461 = vst [vmem:[%s205 + $0x3f8] sm:$0xff] %v460
                %v462 = vld [vmem:[%s204 + $0x1000] sm:$0xff]
                %463 = vst [vmem:[%s205 + $0x400] sm:$0xff] %v462
                %v464 = vld [vmem:[%s204 + $0x1008] sm:$0xff]
                %465 = vst [vmem:[%s205 + $0x408] sm:$0xff] %v464
                %v466 = vld [vmem:[%s204 + $0x1040] sm:$0xff]
                %467 = vst [vmem:[%s205 + $0x410] sm:$0xff] %v466
                %v468 = vld [vmem:[%s204 + $0x1048] sm:$0xff]
                %469 = vst [vmem:[%s205 + $0x418] sm:$0xff] %v468
                %v470 = vld [vmem:[%s204 + $0x1080] sm:$0xff]
                %471 = vst [vmem:[%s205 + $0x420] sm:$0xff] %v470
                %v472 = vld [vmem:[%s204 + $0x1088] sm:$0xff]
                %473 = vst [vmem:[%s205 + $0x428] sm:$0xff] %v472
                %v474 = vld [vmem:[%s204 + $0x10c0] sm:$0xff]
                %475 = vst [vmem:[%s205 + $0x430] sm:$0xff] %v474
                %v476 = vld [vmem:[%s204 + $0x10c8] sm:$0xff]
                %477 = vst [vmem:[%s205 + $0x438] sm:$0xff] %v476
                %v478 = vld [vmem:[%s204 + $0x1100] sm:$0xff]
                %479 = vst [vmem:[%s205 + $0x440] sm:$0xff] %v478
                %v480 = vld [vmem:[%s204 + $0x1108] sm:$0xff]
                %481 = vst [vmem:[%s205 + $0x448] sm:$0xff] %v480
                %v482 = vld [vmem:[%s204 + $0x1140] sm:$0xff]
                %483 = vst [vmem:[%s205 + $0x450] sm:$0xff] %v482
                %v484 = vld [vmem:[%s204 + $0x1148] sm:$0xff]
                %485 = vst [vmem:[%s205 + $0x458] sm:$0xff] %v484
                %v486 = vld [vmem:[%s204 + $0x1180] sm:$0xff]
                %487 = vst [vmem:[%s205 + $0x460] sm:$0xff] %v486
                %v488 = vld [vmem:[%s204 + $0x1188] sm:$0xff]
                %489 = vst [vmem:[%s205 + $0x468] sm:$0xff] %v488
                %v490 = vld [vmem:[%s204 + $0x11c0] sm:$0xff]
                %491 = vst [vmem:[%s205 + $0x470] sm:$0xff] %v490
                %v492 = vld [vmem:[%s204 + $0x11c8] sm:$0xff]
                %493 = vst [vmem:[%s205 + $0x478] sm:$0xff] %v492
                %v494 = vld [vmem:[%s204 + $0x1200] sm:$0xff]
                %495 = vst [vmem:[%s205 + $0x480] sm:$0xff] %v494
                %v496 = vld [vmem:[%s204 + $0x1208] sm:$0xff]
                %497 = vst [vmem:[%s205 + $0x488] sm:$0xff] %v496
                %v498 = vld [vmem:[%s204 + $0x1240] sm:$0xff]
                %499 = vst [vmem:[%s205 + $0x490] sm:$0xff] %v498
                %v500 = vld [vmem:[%s204 + $0x1248] sm:$0xff]
                %501 = vst [vmem:[%s205 + $0x498] sm:$0xff] %v500
                %v502 = vld [vmem:[%s204 + $0x1280] sm:$0xff]
                %503 = vst [vmem:[%s205 + $0x4a0] sm:$0xff] %v502
                %v504 = vld [vmem:[%s204 + $0x1288] sm:$0xff]
                %505 = vst [vmem:[%s205 + $0x4a8] sm:$0xff] %v504
                %v506 = vld [vmem:[%s204 + $0x12c0] sm:$0xff]
                %507 = vst [vmem:[%s205 + $0x4b0] sm:$0xff] %v506
                %v508 = vld [vmem:[%s204 + $0x12c8] sm:$0xff]
                %509 = vst [vmem:[%s205 + $0x4b8] sm:$0xff] %v508
                %v510 = vld [vmem:[%s204 + $0x1300] sm:$0xff]
                %511 = vst [vmem:[%s205 + $0x4c0] sm:$0xff] %v510
                %v512 = vld [vmem:[%s204 + $0x1308] sm:$0xff]
                %513 = vst [vmem:[%s205 + $0x4c8] sm:$0xff] %v512
                %v514 = vld [vmem:[%s204 + $0x1340] sm:$0xff]
                %515 = vst [vmem:[%s205 + $0x4d0] sm:$0xff] %v514
                %v516 = vld [vmem:[%s204 + $0x1348] sm:$0xff]
                %517 = vst [vmem:[%s205 + $0x4d8] sm:$0xff] %v516
                %v518 = vld [vmem:[%s204 + $0x1380] sm:$0xff]
                %519 = vst [vmem:[%s205 + $0x4e0] sm:$0xff] %v518
                %v520 = vld [vmem:[%s204 + $0x1388] sm:$0xff]
                %521 = vst [vmem:[%s205 + $0x4e8] sm:$0xff] %v520
                %v522 = vld [vmem:[%s204 + $0x13c0] sm:$0xff]
                %523 = vst [vmem:[%s205 + $0x4f0] sm:$0xff] %v522
                %v524 = vld [vmem:[%s204 + $0x13c8] sm:$0xff]
                %525 = vst [vmem:[%s205 + $0x4f8] sm:$0xff] %v524
                %v526 = vld [vmem:[%s204 + $0x1400] sm:$0xff]
                %527 = vst [vmem:[%s205 + $0x500] sm:$0xff] %v526
                %v528 = vld [vmem:[%s204 + $0x1408] sm:$0xff]
                %529 = vst [vmem:[%s205 + $0x508] sm:$0xff] %v528
                %v530 = vld [vmem:[%s204 + $0x1440] sm:$0xff]
                %531 = vst [vmem:[%s205 + $0x510] sm:$0xff] %v530
                %v532 = vld [vmem:[%s204 + $0x1448] sm:$0xff]
                %533 = vst [vmem:[%s205 + $0x518] sm:$0xff] %v532
                %v534 = vld [vmem:[%s204 + $0x1480] sm:$0xff]
                %535 = vst [vmem:[%s205 + $0x520] sm:$0xff] %v534
                %v536 = vld [vmem:[%s204 + $0x1488] sm:$0xff]
                %537 = vst [vmem:[%s205 + $0x528] sm:$0xff] %v536
                %v538 = vld [vmem:[%s204 + $0x14c0] sm:$0xff]
                %539 = vst [vmem:[%s205 + $0x530] sm:$0xff] %v538
                %v540 = vld [vmem:[%s204 + $0x14c8] sm:$0xff]
                %541 = vst [vmem:[%s205 + $0x538] sm:$0xff] %v540
                %v542 = vld [vmem:[%s204 + $0x1500] sm:$0xff]
                %543 = vst [vmem:[%s205 + $0x540] sm:$0xff] %v542
                %v544 = vld [vmem:[%s204 + $0x1508] sm:$0xff]
                %545 = vst [vmem:[%s205 + $0x548] sm:$0xff] %v544
                %v546 = vld [vmem:[%s204 + $0x1540] sm:$0xff]
                %547 = vst [vmem:[%s205 + $0x550] sm:$0xff] %v546
                %v548 = vld [vmem:[%s204 + $0x1548] sm:$0xff]
                %549 = vst [vmem:[%s205 + $0x558] sm:$0xff] %v548
                %v550 = vld [vmem:[%s204 + $0x1580] sm:$0xff]
                %551 = vst [vmem:[%s205 + $0x560] sm:$0xff] %v550
                %v552 = vld [vmem:[%s204 + $0x1588] sm:$0xff]
                %553 = vst [vmem:[%s205 + $0x568] sm:$0xff] %v552
                %v554 = vld [vmem:[%s204 + $0x15c0] sm:$0xff]
                %555 = vst [vmem:[%s205 + $0x570] sm:$0xff] %v554
                %v556 = vld [vmem:[%s204 + $0x15c8] sm:$0xff]
                %557 = vst [vmem:[%s205 + $0x578] sm:$0xff] %v556
                %v558 = vld [vmem:[%s204 + $0x1600] sm:$0xff]
                %559 = vst [vmem:[%s205 + $0x580] sm:$0xff] %v558
                %v560 = vld [vmem:[%s204 + $0x1608] sm:$0xff]
                %561 = vst [vmem:[%s205 + $0x588] sm:$0xff] %v560
                %v562 = vld [vmem:[%s204 + $0x1640] sm:$0xff]
                %563 = vst [vmem:[%s205 + $0x590] sm:$0xff] %v562
                %v564 = vld [vmem:[%s204 + $0x1648] sm:$0xff]
                %565 = vst [vmem:[%s205 + $0x598] sm:$0xff] %v564
                %v566 = vld [vmem:[%s204 + $0x1680] sm:$0xff]
                %567 = vst [vmem:[%s205 + $0x5a0] sm:$0xff] %v566
                %v568 = vld [vmem:[%s204 + $0x1688] sm:$0xff]
                %569 = vst [vmem:[%s205 + $0x5a8] sm:$0xff] %v568
                %v570 = vld [vmem:[%s204 + $0x16c0] sm:$0xff]
                %571 = vst [vmem:[%s205 + $0x5b0] sm:$0xff] %v570
                %v572 = vld [vmem:[%s204 + $0x16c8] sm:$0xff]
                %573 = vst [vmem:[%s205 + $0x5b8] sm:$0xff] %v572
                %v574 = vld [vmem:[%s204 + $0x1700] sm:$0xff]
                %575 = vst [vmem:[%s205 + $0x5c0] sm:$0xff] %v574
                %v576 = vld [vmem:[%s204 + $0x1708] sm:$0xff]
                %577 = vst [vmem:[%s205 + $0x5c8] sm:$0xff] %v576
                %v578 = vld [vmem:[%s204 + $0x1740] sm:$0xff]
                %579 = vst [vmem:[%s205 + $0x5d0] sm:$0xff] %v578
                %v580 = vld [vmem:[%s204 + $0x1748] sm:$0xff]
                %581 = vst [vmem:[%s205 + $0x5d8] sm:$0xff] %v580
                %v582 = vld [vmem:[%s204 + $0x1780] sm:$0xff]
                %583 = vst [vmem:[%s205 + $0x5e0] sm:$0xff] %v582
                %v584 = vld [vmem:[%s204 + $0x1788] sm:$0xff]
                %585 = vst [vmem:[%s205 + $0x5e8] sm:$0xff] %v584
                %v586 = vld [vmem:[%s204 + $0x17c0] sm:$0xff]
                %587 = vst [vmem:[%s205 + $0x5f0] sm:$0xff] %v586
                %v588 = vld [vmem:[%s204 + $0x17c8] sm:$0xff]
                %589 = vst [vmem:[%s205 + $0x5f8] sm:$0xff] %v588
                %v590 = vld [vmem:[%s204 + $0x1800] sm:$0xff]
                %591 = vst [vmem:[%s205 + $0x600] sm:$0xff] %v590
                %v592 = vld [vmem:[%s204 + $0x1808] sm:$0xff]
                %593 = vst [vmem:[%s205 + $0x608] sm:$0xff] %v592
                %v594 = vld [vmem:[%s204 + $0x1840] sm:$0xff]
                %595 = vst [vmem:[%s205 + $0x610] sm:$0xff] %v594
                %v596 = vld [vmem:[%s204 + $0x1848] sm:$0xff]
                %597 = vst [vmem:[%s205 + $0x618] sm:$0xff] %v596
                %v598 = vld [vmem:[%s204 + $0x1880] sm:$0xff]
                %599 = vst [vmem:[%s205 + $0x620] sm:$0xff] %v598
                %v600 = vld [vmem:[%s204 + $0x1888] sm:$0xff]
                %601 = vst [vmem:[%s205 + $0x628] sm:$0xff] %v600
                %v602 = vld [vmem:[%s204 + $0x18c0] sm:$0xff]
                %603 = vst [vmem:[%s205 + $0x630] sm:$0xff] %v602
                %v604 = vld [vmem:[%s204 + $0x18c8] sm:$0xff]
                %605 = vst [vmem:[%s205 + $0x638] sm:$0xff] %v604
                %v606 = vld [vmem:[%s204 + $0x1900] sm:$0xff]
                %607 = vst [vmem:[%s205 + $0x640] sm:$0xff] %v606
                %v608 = vld [vmem:[%s204 + $0x1908] sm:$0xff]
                %609 = vst [vmem:[%s205 + $0x648] sm:$0xff] %v608
                %v610 = vld [vmem:[%s204 + $0x1940] sm:$0xff]
                %611 = vst [vmem:[%s205 + $0x650] sm:$0xff] %v610
                %v612 = vld [vmem:[%s204 + $0x1948] sm:$0xff]
                %613 = vst [vmem:[%s205 + $0x658] sm:$0xff] %v612
                %v614 = vld [vmem:[%s204 + $0x1980] sm:$0xff]
                %615 = vst [vmem:[%s205 + $0x660] sm:$0xff] %v614
                %v616 = vld [vmem:[%s204 + $0x1988] sm:$0xff]
                %617 = vst [vmem:[%s205 + $0x668] sm:$0xff] %v616
                %v618 = vld [vmem:[%s204 + $0x19c0] sm:$0xff]
                %619 = vst [vmem:[%s205 + $0x670] sm:$0xff] %v618
                %v620 = vld [vmem:[%s204 + $0x19c8] sm:$0xff]
                %621 = vst [vmem:[%s205 + $0x678] sm:$0xff] %v620
                %v622 = vld [vmem:[%s204 + $0x1a00] sm:$0xff]
                %623 = vst [vmem:[%s205 + $0x680] sm:$0xff] %v622
                %v624 = vld [vmem:[%s204 + $0x1a08] sm:$0xff]
                %625 = vst [vmem:[%s205 + $0x688] sm:$0xff] %v624
                %v626 = vld [vmem:[%s204 + $0x1a40] sm:$0xff]
                %627 = vst [vmem:[%s205 + $0x690] sm:$0xff] %v626
                %v628 = vld [vmem:[%s204 + $0x1a48] sm:$0xff]
                %629 = vst [vmem:[%s205 + $0x698] sm:$0xff] %v628
                %v630 = vld [vmem:[%s204 + $0x1a80] sm:$0xff]
                %631 = vst [vmem:[%s205 + $0x6a0] sm:$0xff] %v630
                %v632 = vld [vmem:[%s204 + $0x1a88] sm:$0xff]
                %633 = vst [vmem:[%s205 + $0x6a8] sm:$0xff] %v632
                %v634 = vld [vmem:[%s204 + $0x1ac0] sm:$0xff]
                %635 = vst [vmem:[%s205 + $0x6b0] sm:$0xff] %v634
                %v636 = vld [vmem:[%s204 + $0x1ac8] sm:$0xff]
                %637 = vst [vmem:[%s205 + $0x6b8] sm:$0xff] %v636
                %v638 = vld [vmem:[%s204 + $0x1b00] sm:$0xff]
                %639 = vst [vmem:[%s205 + $0x6c0] sm:$0xff] %v638
                %v640 = vld [vmem:[%s204 + $0x1b08] sm:$0xff]
                %641 = vst [vmem:[%s205 + $0x6c8] sm:$0xff] %v640
                %v642 = vld [vmem:[%s204 + $0x1b40] sm:$0xff]
                %643 = vst [vmem:[%s205 + $0x6d0] sm:$0xff] %v642
                %v644 = vld [vmem:[%s204 + $0x1b48] sm:$0xff]
                %645 = vst [vmem:[%s205 + $0x6d8] sm:$0xff] %v644
                %v646 = vld [vmem:[%s204 + $0x1b80] sm:$0xff]
                %647 = vst [vmem:[%s205 + $0x6e0] sm:$0xff] %v646
                %v648 = vld [vmem:[%s204 + $0x1b88] sm:$0xff]
                %649 = vst [vmem:[%s205 + $0x6e8] sm:$0xff] %v648
                %v650 = vld [vmem:[%s204 + $0x1bc0] sm:$0xff]
                %651 = vst [vmem:[%s205 + $0x6f0] sm:$0xff] %v650
                %v652 = vld [vmem:[%s204 + $0x1bc8] sm:$0xff]
                %653 = vst [vmem:[%s205 + $0x6f8] sm:$0xff] %v652
                %v654 = vld [vmem:[%s204 + $0x1c00] sm:$0xff]
                %655 = vst [vmem:[%s205 + $0x700] sm:$0xff] %v654
                %v656 = vld [vmem:[%s204 + $0x1c08] sm:$0xff]
                %657 = vst [vmem:[%s205 + $0x708] sm:$0xff] %v656
                %v658 = vld [vmem:[%s204 + $0x1c40] sm:$0xff]
                %659 = vst [vmem:[%s205 + $0x710] sm:$0xff] %v658
                %v660 = vld [vmem:[%s204 + $0x1c48] sm:$0xff]
                %661 = vst [vmem:[%s205 + $0x718] sm:$0xff] %v660
                %v662 = vld [vmem:[%s204 + $0x1c80] sm:$0xff]
                %663 = vst [vmem:[%s205 + $0x720] sm:$0xff] %v662
                %v664 = vld [vmem:[%s204 + $0x1c88] sm:$0xff]
                %665 = vst [vmem:[%s205 + $0x728] sm:$0xff] %v664
                %v666 = vld [vmem:[%s204 + $0x1cc0] sm:$0xff]
                %667 = vst [vmem:[%s205 + $0x730] sm:$0xff] %v666
                %v668 = vld [vmem:[%s204 + $0x1cc8] sm:$0xff]
                %669 = vst [vmem:[%s205 + $0x738] sm:$0xff] %v668
                %v670 = vld [vmem:[%s204 + $0x1d00] sm:$0xff]
                %671 = vst [vmem:[%s205 + $0x740] sm:$0xff] %v670
                %v672 = vld [vmem:[%s204 + $0x1d08] sm:$0xff]
                %673 = vst [vmem:[%s205 + $0x748] sm:$0xff] %v672
                %v674 = vld [vmem:[%s204 + $0x1d40] sm:$0xff]
                %675 = vst [vmem:[%s205 + $0x750] sm:$0xff] %v674
                %v676 = vld [vmem:[%s204 + $0x1d48] sm:$0xff]
                %677 = vst [vmem:[%s205 + $0x758] sm:$0xff] %v676
                %v678 = vld [vmem:[%s204 + $0x1d80] sm:$0xff]
                %679 = vst [vmem:[%s205 + $0x760] sm:$0xff] %v678
                %v680 = vld [vmem:[%s204 + $0x1d88] sm:$0xff]
                %681 = vst [vmem:[%s205 + $0x768] sm:$0xff] %v680
                %v682 = vld [vmem:[%s204 + $0x1dc0] sm:$0xff]
                %683 = vst [vmem:[%s205 + $0x770] sm:$0xff] %v682
                %v684 = vld [vmem:[%s204 + $0x1dc8] sm:$0xff]
                %685 = vst [vmem:[%s205 + $0x778] sm:$0xff] %v684
                %v686 = vld [vmem:[%s204 + $0x1e00] sm:$0xff]
                %687 = vst [vmem:[%s205 + $0x780] sm:$0xff] %v686
                %v688 = vld [vmem:[%s204 + $0x1e08] sm:$0xff]
                %689 = vst [vmem:[%s205 + $0x788] sm:$0xff] %v688
                %v690 = vld [vmem:[%s204 + $0x1e40] sm:$0xff]
                %691 = vst [vmem:[%s205 + $0x790] sm:$0xff] %v690
                %v692 = vld [vmem:[%s204 + $0x1e48] sm:$0xff]
                %693 = vst [vmem:[%s205 + $0x798] sm:$0xff] %v692
                %v694 = vld [vmem:[%s204 + $0x1e80] sm:$0xff]
                %695 = vst [vmem:[%s205 + $0x7a0] sm:$0xff] %v694
                %v696 = vld [vmem:[%s204 + $0x1e88] sm:$0xff]
                %697 = vst [vmem:[%s205 + $0x7a8] sm:$0xff] %v696
                %v698 = vld [vmem:[%s204 + $0x1ec0] sm:$0xff]
                %699 = vst [vmem:[%s205 + $0x7b0] sm:$0xff] %v698
                %v700 = vld [vmem:[%s204 + $0x1ec8] sm:$0xff]
                %701 = vst [vmem:[%s205 + $0x7b8] sm:$0xff] %v700
                %v702 = vld [vmem:[%s204 + $0x1f00] sm:$0xff]
                %703 = vst [vmem:[%s205 + $0x7c0] sm:$0xff] %v702
                %v704 = vld [vmem:[%s204 + $0x1f08] sm:$0xff]
                %705 = vst [vmem:[%s205 + $0x7c8] sm:$0xff] %v704
                %v706 = vld [vmem:[%s204 + $0x1f40] sm:$0xff]
                %707 = vst [vmem:[%s205 + $0x7d0] sm:$0xff] %v706
                %v708 = vld [vmem:[%s204 + $0x1f48] sm:$0xff]
                %709 = vst [vmem:[%s205 + $0x7d8] sm:$0xff] %v708
                %v710 = vld [vmem:[%s204 + $0x1f80] sm:$0xff]
                %711 = vst [vmem:[%s205 + $0x7e0] sm:$0xff] %v710
                %v712 = vld [vmem:[%s204 + $0x1f88] sm:$0xff]
                %713 = vst [vmem:[%s205 + $0x7e8] sm:$0xff] %v712
                %v714 = vld [vmem:[%s204 + $0x1fc0] sm:$0xff]
                %715 = vst [vmem:[%s205 + $0x7f0] sm:$0xff] %v714
                %v716 = vld [vmem:[%s204 + $0x1fc8] sm:$0xff]
                %717 = vst [vmem:[%s205 + $0x7f8] sm:$0xff] %v716
              $region37: #{_lambda_.5} parent=31 // loop_footer
                %s203 = sadd.s32 1, %s199
              $region38: #{_lambda_.5} parent=31 // loop_footer_branch
                %198 = sbr.rel target = $region34
              $region39: #{_lambda_.5} parent=31 // loop_exit
                _
            $region32: #{_lambda_.5} parent=27 // pred_fallthru
              _
            // Predicated region
            $region40: #{_lambda_.5} parent=27 // pred_check
              _
            $region41: #{_lambda_.5} parent=27 // pred_check_branch
              %719 = sbr.rel target = $region43
            $region42: #{_lambda_.5} parent=27 // pred_region
              _
            $region43: #{_lambda_.5} parent=27 // pred_fallthru
              _
          $region28: #{_lambda_.5} parent=23 // pred_fallthru
            _
          %720 = vnop
        $region24: #{_lambda_.5} parent=19 // pred_fallthru
          _
        // Predicated region
        $region44: #{_lambda_.5} parent=19 // pred_check
          %p721 = pneg %p78
        $region45: #{_lambda_.5} parent=19 // pred_check_branch
          %723 = sbr.rel (%p721) target = $region47
        $region46: #{_lambda_.5} parent=19 // pred_region
          %s724 = smul.u32 4, %s11
          %p725 = scmp.lt.s32.totalorder %s724, 15
          %s726 = scalar_select %p725, %s724, 15
          %s727 = scalar_lea.vmem %s2, %s726
          %s728 = smul.u32 4, %s11
        $region47: #{_lambda_.5} parent=19 // pred_fallthru
          _
        // Predicated region
        $region48: #{_lambda_.5} parent=19 // pred_check
          %p729 = pneg %p104
        $region49: #{_lambda_.5} parent=19 // pred_check_branch
          %731 = sbr.rel (%p729) target = $region51
        $region50: #{_lambda_.5} parent=19 // pred_region
          %s732 = smul.u32 4, %s11
          %p733 = scmp.lt.s32.totalorder %s732, 15
          %s734 = scalar_select %p733, %s732, 15
          %s735 = scalar_lea.vmem %s3, %s734
          %s736 = smul.u32 4, %s11
        $region51: #{_lambda_.5} parent=19 // pred_fallthru
          _
        // Predicated region
        $region52: #{_lambda_.5} parent=19 // pred_check
          %p737 = pneg %p130
        $region53: #{_lambda_.5} parent=19 // pred_check_branch
          %739 = sbr.rel (%p737) target = $region55
        $region54: #{_lambda_.5} parent=19 // pred_region
          %s740 = smul.u32 4, %s11
          %p741 = scmp.lt.s32.totalorder %s740, 15
          %s742 = scalar_select %p741, %s740, 15
          %s743 = scalar_lea.vmem %s4, %s742
          %s744 = smul.u32 4, %s11
        $region55: #{_lambda_.5} parent=19 // pred_fallthru
          _
      $region20: #{_lambda_.5} parent=5 // pred_fallthru
        _
      %p745 = scmp.le.s32.totalorder 1, %s11
      %p746 = scmp.lt.s32.totalorder %s11, 5
      %p747 = pnand %p745, %p746
      %p748 = pneg %p747
      // Predicated region
      $region56: #{_lambda_.5} parent=5 // pred_check
        _
      $region57: #{_lambda_.5} parent=5 // pred_check_branch
        %750 = sbr.rel (%p747) target = $region59
      $region58: #{_lambda_.5} parent=5 // pred_region
        %s751 = ssub.s32 %s11, 1
        %s752 = sand.u32 %s45, 1
        %s753 = sand.u32 %s45, 1
        %s754 = smul.addr %s753, 2048
        %s755 = scalar_lea.vmem [#allocation2], %s754
        // Predicated region
        $region60: #{_lambda_.5} parent=58 // pred_check
          %p756 = pneg %p58
        $region61: #{_lambda_.5} parent=58 // pred_check_branch
          %758 = sbr.rel (%p756) target = $region63
        $region62: #{_lambda_.5} parent=58 // pred_region
          _
        $region63: #{_lambda_.5} parent=58 // pred_fallthru
          _
        %p759 = pneg %p32
        %p760 = pneg %p29
        %s761 = sand.u32 %s45, 1
        %s762 = sand.u32 %s45, 1
        %s763 = smul.addr %s762, 2048
        %s764 = scalar_lea.vmem [#allocation2], %s763
        %p765 = pneg %p58
        %p766 = pneg %p55
        %s767 = smul.u32 4, %s16
        %p768 = scmp.lt.s32.totalorder %s767, 15
        %s769 = scalar_select %p768, %s767, 15
        %s770 = scalar_lea.vmem %s2, %s769
        %p771 = pneg %p84
        %p772 = pneg %p81
        %s773 = smul.u32 4, %s16
        %p774 = scmp.lt.s32.totalorder %s773, 15
        %s775 = scalar_select %p774, %s773, 15
        %s776 = scalar_lea.vmem %s3, %s775
        %p777 = pneg %p110
        %p778 = pneg %p107
        %s779 = smul.u32 4, %s16
        %p780 = scmp.lt.s32.totalorder %s779, 15
        %s781 = scalar_select %p780, %s779, 15
        %s782 = scalar_lea.vmem %s4, %s781
        %p783 = pneg %p136
        %p784 = pneg %p133
        %p785 = pneg %p162
        %p786 = pneg %p159
        %s787 = smul.u32 4, %s16
        %p788 = scmp.lt.s32.totalorder %s787, 15
        %s789 = scalar_select %p788, %s787, 15
        %s790 = smul.addr %s789, 4
        %s791 = scalar_lea.vmem %s5, %s790
        %s792 = smul.u32 4, %s16
        %s793 = smul.u32 4, %s16
        %p794 = scmp.lt.s32.totalorder %s793, 15
        %s795 = scalar_select %p794, %s793, 15
        %s796 = scalar_lea.vmem %s2, %s795
        %s797 = smul.u32 4, %s16
        %s798 = smul.u32 4, %s16
        %p799 = scmp.lt.s32.totalorder %s798, 15
        %s800 = scalar_select %p799, %s798, 15
        %s801 = scalar_lea.vmem %s3, %s800
        %s802 = smul.u32 4, %s16
        %s803 = smul.u32 4, %s16
        %p804 = scmp.lt.s32.totalorder %s803, 15
        %s805 = scalar_select %p804, %s803, 15
        %s806 = scalar_lea.vmem %s4, %s805
        %s807 = smul.u32 4, %s16
        %s808 = smul.u32 4, %s16
        %p809 = scmp.lt.s32.totalorder %s808, 15
        %s810 = scalar_select %p809, %s808, 15
        %s811 = smul.addr %s810, 4
        %s812 = scalar_lea.vmem %s5, %s811
        %s813 = smul.u32 4, %s16
        %v814 = vld [vmem:[%s0] sm:$0xff]
        %v815 = vld [vmem:[%s0 + $0x8] sm:$0xff]
        %v816 = vld [vmem:[%s0 + $0x10] sm:$0xff]
        %v817 = vld [vmem:[%s0 + $0x18] sm:$0xff]
        %v818 = vld [vmem:[%s755] sm:$0xff]
        %v819 = vld [vmem:[%s755 + $0x8] sm:$0xff]
        %v820 = vld [vmem:[%s755 + $0x10] sm:$0xff]
        %v821 = vld [vmem:[%s755 + $0x18] sm:$0xff]
        %v822 = vld [vmem:[%s755 + $0x20] sm:$0xff]
        %v823 = vld [vmem:[%s755 + $0x28] sm:$0xff]
        %v824 = vld [vmem:[%s755 + $0x30] sm:$0xff]
        %v825 = vld [vmem:[%s755 + $0x38] sm:$0xff]
        %v826 = vld [vmem:[%s755 + $0x40] sm:$0xff]
        %v827 = vld [vmem:[%s755 + $0x48] sm:$0xff]
        %v828 = vld [vmem:[%s755 + $0x50] sm:$0xff]
        %v829 = vld [vmem:[%s755 + $0x58] sm:$0xff]
        %v830 = vld [vmem:[%s755 + $0x60] sm:$0xff]
        %v831 = vld [vmem:[%s755 + $0x68] sm:$0xff]
        %v832 = vld [vmem:[%s755 + $0x70] sm:$0xff]
        %v833 = vld [vmem:[%s755 + $0x78] sm:$0xff]
        %v834 = vld [vmem:[%s755 + $0x80] sm:$0xff]
        %v835 = vld [vmem:[%s755 + $0x88] sm:$0xff]
        %v836 = vld [vmem:[%s755 + $0x90] sm:$0xff]
        %v837 = vld [vmem:[%s755 + $0x98] sm:$0xff]
        %v838 = vld [vmem:[%s755 + $0xa0] sm:$0xff]
        %v839 = vld [vmem:[%s755 + $0xa8] sm:$0xff]
        %v840 = vld [vmem:[%s755 + $0xb0] sm:$0xff]
        %v841 = vld [vmem:[%s755 + $0xb8] sm:$0xff]
        %v842 = vld [vmem:[%s755 + $0xc0] sm:$0xff]
        %v843 = vld [vmem:[%s755 + $0xc8] sm:$0xff]
        %v844 = vld [vmem:[%s755 + $0xd0] sm:$0xff]
        %v845 = vld [vmem:[%s755 + $0xd8] sm:$0xff]
        %v846 = vld [vmem:[%s755 + $0xe0] sm:$0xff]
        %v847 = vld [vmem:[%s755 + $0xe8] sm:$0xff]
        %v848 = vld [vmem:[%s755 + $0xf0] sm:$0xff]
        %v849 = vld [vmem:[%s755 + $0xf8] sm:$0xff]
        %v850 = vld [vmem:[%s755 + $0x100] sm:$0xff]
        %v851 = vld [vmem:[%s755 + $0x108] sm:$0xff]
        %v852 = vld [vmem:[%s755 + $0x110] sm:$0xff]
        %v853 = vld [vmem:[%s755 + $0x118] sm:$0xff]
        %v854 = vld [vmem:[%s755 + $0x120] sm:$0xff]
        %v855 = vld [vmem:[%s755 + $0x128] sm:$0xff]
        %v856 = vld [vmem:[%s755 + $0x130] sm:$0xff]
        %v857 = vld [vmem:[%s755 + $0x138] sm:$0xff]
        %v858 = vld [vmem:[%s755 + $0x140] sm:$0xff]
        %v859 = vld [vmem:[%s755 + $0x148] sm:$0xff]
        %v860 = vld [vmem:[%s755 + $0x150] sm:$0xff]
        %v861 = vld [vmem:[%s755 + $0x158] sm:$0xff]
        %v862 = vld [vmem:[%s755 + $0x160] sm:$0xff]
        %v863 = vld [vmem:[%s755 + $0x168] sm:$0xff]
        %v864 = vld [vmem:[%s755 + $0x170] sm:$0xff]
        %v865 = vld [vmem:[%s755 + $0x178] sm:$0xff]
        %v866 = vld [vmem:[%s755 + $0x180] sm:$0xff]
        %v867 = vld [vmem:[%s755 + $0x188] sm:$0xff]
        %v868 = vld [vmem:[%s755 + $0x190] sm:$0xff]
        %v869 = vld [vmem:[%s755 + $0x198] sm:$0xff]
        %v870 = vld [vmem:[%s755 + $0x1a0] sm:$0xff]
        %v871 = vld [vmem:[%s755 + $0x1a8] sm:$0xff]
        %v872 = vld [vmem:[%s755 + $0x1b0] sm:$0xff]
        %v873 = vld [vmem:[%s755 + $0x1b8] sm:$0xff]
        %v874 = vld [vmem:[%s755 + $0x1c0] sm:$0xff]
        %v875 = vld [vmem:[%s755 + $0x1c8] sm:$0xff]
        %v876 = vld [vmem:[%s755 + $0x1d0] sm:$0xff]
        %v877 = vld [vmem:[%s755 + $0x1d8] sm:$0xff]
        %v878 = vld [vmem:[%s755 + $0x1e0] sm:$0xff]
        %v879 = vld [vmem:[%s755 + $0x1e8] sm:$0xff]
        %v880 = vld [vmem:[%s755 + $0x1f0] sm:$0xff]
        %v881 = vld [vmem:[%s755 + $0x1f8] sm:$0xff]
        %v882 = vld [vmem:[%s755 + $0x200] sm:$0xff]
        %v883 = vld [vmem:[%s755 + $0x208] sm:$0xff]
        %v884 = vld [vmem:[%s755 + $0x210] sm:$0xff]
        %v885 = vld [vmem:[%s755 + $0x218] sm:$0xff]
        %v886 = vld [vmem:[%s755 + $0x220] sm:$0xff]
        %v887 = vld [vmem:[%s755 + $0x228] sm:$0xff]
        %v888 = vld [vmem:[%s755 + $0x230] sm:$0xff]
        %v889 = vld [vmem:[%s755 + $0x238] sm:$0xff]
        %v890 = vld [vmem:[%s755 + $0x240] sm:$0xff]
        %v891 = vld [vmem:[%s755 + $0x248] sm:$0xff]
        %v892 = vld [vmem:[%s755 + $0x250] sm:$0xff]
        %v893 = vld [vmem:[%s755 + $0x258] sm:$0xff]
        %v894 = vld [vmem:[%s755 + $0x260] sm:$0xff]
        %v895 = vld [vmem:[%s755 + $0x268] sm:$0xff]
        %v896 = vld [vmem:[%s755 + $0x270] sm:$0xff]
        %v897 = vld [vmem:[%s755 + $0x278] sm:$0xff]
        %v898 = vld [vmem:[%s755 + $0x280] sm:$0xff]
        %v899 = vld [vmem:[%s755 + $0x288] sm:$0xff]
        %v900 = vld [vmem:[%s755 + $0x290] sm:$0xff]
        %v901 = vld [vmem:[%s755 + $0x298] sm:$0xff]
        %v902 = vld [vmem:[%s755 + $0x2a0] sm:$0xff]
        %v903 = vld [vmem:[%s755 + $0x2a8] sm:$0xff]
        %v904 = vld [vmem:[%s755 + $0x2b0] sm:$0xff]
        %v905 = vld [vmem:[%s755 + $0x2b8] sm:$0xff]
        %v906 = vld [vmem:[%s755 + $0x2c0] sm:$0xff]
        %v907 = vld [vmem:[%s755 + $0x2c8] sm:$0xff]
        %v908 = vld [vmem:[%s755 + $0x2d0] sm:$0xff]
        %v909 = vld [vmem:[%s755 + $0x2d8] sm:$0xff]
        %v910 = vld [vmem:[%s755 + $0x2e0] sm:$0xff]
        %v911 = vld [vmem:[%s755 + $0x2e8] sm:$0xff]
        %v912 = vld [vmem:[%s755 + $0x2f0] sm:$0xff]
        %v913 = vld [vmem:[%s755 + $0x2f8] sm:$0xff]
        %v914 = vld [vmem:[%s755 + $0x300] sm:$0xff]
        %v915 = vld [vmem:[%s755 + $0x308] sm:$0xff]
        %v916 = vld [vmem:[%s755 + $0x310] sm:$0xff]
        %v917 = vld [vmem:[%s755 + $0x318] sm:$0xff]
        %v918 = vld [vmem:[%s755 + $0x320] sm:$0xff]
        %v919 = vld [vmem:[%s755 + $0x328] sm:$0xff]
        %v920 = vld [vmem:[%s755 + $0x330] sm:$0xff]
        %v921 = vld [vmem:[%s755 + $0x338] sm:$0xff]
        %v922 = vld [vmem:[%s755 + $0x340] sm:$0xff]
        %v923 = vld [vmem:[%s755 + $0x348] sm:$0xff]
        %v924 = vld [vmem:[%s755 + $0x350] sm:$0xff]
        %v925 = vld [vmem:[%s755 + $0x358] sm:$0xff]
        %v926 = vld [vmem:[%s755 + $0x360] sm:$0xff]
        %v927 = vld [vmem:[%s755 + $0x368] sm:$0xff]
        %v928 = vld [vmem:[%s755 + $0x370] sm:$0xff]
        %v929 = vld [vmem:[%s755 + $0x378] sm:$0xff]
        %v930 = vld [vmem:[%s755 + $0x380] sm:$0xff]
        %v931 = vld [vmem:[%s755 + $0x388] sm:$0xff]
        %v932 = vld [vmem:[%s755 + $0x390] sm:$0xff]
        %v933 = vld [vmem:[%s755 + $0x398] sm:$0xff]
        %v934 = vld [vmem:[%s755 + $0x3a0] sm:$0xff]
        %v935 = vld [vmem:[%s755 + $0x3a8] sm:$0xff]
        %v936 = vld [vmem:[%s755 + $0x3b0] sm:$0xff]
        %v937 = vld [vmem:[%s755 + $0x3b8] sm:$0xff]
        %v938 = vld [vmem:[%s755 + $0x3c0] sm:$0xff]
        %v939 = vld [vmem:[%s755 + $0x3c8] sm:$0xff]
        %v940 = vld [vmem:[%s755 + $0x3d0] sm:$0xff]
        %v941 = vld [vmem:[%s755 + $0x3d8] sm:$0xff]
        %v942 = vld [vmem:[%s755 + $0x3e0] sm:$0xff]
        %v943 = vld [vmem:[%s755 + $0x3e8] sm:$0xff]
        %v944 = vld [vmem:[%s755 + $0x3f0] sm:$0xff]
        %v945 = vld [vmem:[%s755 + $0x3f8] sm:$0xff]
        %v946 = vld [vmem:[%s755 + $0x400] sm:$0xff]
        %v947 = vld [vmem:[%s755 + $0x408] sm:$0xff]
        %v948 = vld [vmem:[%s755 + $0x410] sm:$0xff]
        %v949 = vld [vmem:[%s755 + $0x418] sm:$0xff]
        %v950 = vld [vmem:[%s755 + $0x420] sm:$0xff]
        %v951 = vld [vmem:[%s755 + $0x428] sm:$0xff]
        %v952 = vld [vmem:[%s755 + $0x430] sm:$0xff]
        %v953 = vld [vmem:[%s755 + $0x438] sm:$0xff]
        %v954 = vld [vmem:[%s755 + $0x440] sm:$0xff]
        %v955 = vld [vmem:[%s755 + $0x448] sm:$0xff]
        %v956 = vld [vmem:[%s755 + $0x450] sm:$0xff]
        %v957 = vld [vmem:[%s755 + $0x458] sm:$0xff]
        %v958 = vld [vmem:[%s755 + $0x460] sm:$0xff]
        %v959 = vld [vmem:[%s755 + $0x468] sm:$0xff]
        %v960 = vld [vmem:[%s755 + $0x470] sm:$0xff]
        %v961 = vld [vmem:[%s755 + $0x478] sm:$0xff]
        %v962 = vld [vmem:[%s755 + $0x480] sm:$0xff]
        %v963 = vld [vmem:[%s755 + $0x488] sm:$0xff]
        %v964 = vld [vmem:[%s755 + $0x490] sm:$0xff]
        %v965 = vld [vmem:[%s755 + $0x498] sm:$0xff]
        %v966 = vld [vmem:[%s755 + $0x4a0] sm:$0xff]
        %v967 = vld [vmem:[%s755 + $0x4a8] sm:$0xff]
        %v968 = vld [vmem:[%s755 + $0x4b0] sm:$0xff]
        %v969 = vld [vmem:[%s755 + $0x4b8] sm:$0xff]
        %v970 = vld [vmem:[%s755 + $0x4c0] sm:$0xff]
        %v971 = vld [vmem:[%s755 + $0x4c8] sm:$0xff]
        %v972 = vld [vmem:[%s755 + $0x4d0] sm:$0xff]
        %v973 = vld [vmem:[%s755 + $0x4d8] sm:$0xff]
        %v974 = vld [vmem:[%s755 + $0x4e0] sm:$0xff]
        %v975 = vld [vmem:[%s755 + $0x4e8] sm:$0xff]
        %v976 = vld [vmem:[%s755 + $0x4f0] sm:$0xff]
        %v977 = vld [vmem:[%s755 + $0x4f8] sm:$0xff]
        %v978 = vld [vmem:[%s755 + $0x500] sm:$0xff]
        %v979 = vld [vmem:[%s755 + $0x508] sm:$0xff]
        %v980 = vld [vmem:[%s755 + $0x510] sm:$0xff]
        %v981 = vld [vmem:[%s755 + $0x518] sm:$0xff]
        %v982 = vld [vmem:[%s755 + $0x520] sm:$0xff]
        %v983 = vld [vmem:[%s755 + $0x528] sm:$0xff]
        %v984 = vld [vmem:[%s755 + $0x530] sm:$0xff]
        %v985 = vld [vmem:[%s755 + $0x538] sm:$0xff]
        %v986 = vld [vmem:[%s755 + $0x540] sm:$0xff]
        %v987 = vld [vmem:[%s755 + $0x548] sm:$0xff]
        %v988 = vld [vmem:[%s755 + $0x550] sm:$0xff]
        %v989 = vld [vmem:[%s755 + $0x558] sm:$0xff]
        %v990 = vld [vmem:[%s755 + $0x560] sm:$0xff]
        %v991 = vld [vmem:[%s755 + $0x568] sm:$0xff]
        %v992 = vld [vmem:[%s755 + $0x570] sm:$0xff]
        %v993 = vld [vmem:[%s755 + $0x578] sm:$0xff]
        %v994 = vld [vmem:[%s755 + $0x580] sm:$0xff]
        %v995 = vld [vmem:[%s755 + $0x588] sm:$0xff]
        %v996 = vld [vmem:[%s755 + $0x590] sm:$0xff]
        %v997 = vld [vmem:[%s755 + $0x598] sm:$0xff]
        %v998 = vld [vmem:[%s755 + $0x5a0] sm:$0xff]
        %v999 = vld [vmem:[%s755 + $0x5a8] sm:$0xff]
        %v1000 = vld [vmem:[%s755 + $0x5b0] sm:$0xff]
        %v1001 = vld [vmem:[%s755 + $0x5b8] sm:$0xff]
        %v1002 = vld [vmem:[%s755 + $0x5c0] sm:$0xff]
        %v1003 = vld [vmem:[%s755 + $0x5c8] sm:$0xff]
        %v1004 = vld [vmem:[%s755 + $0x5d0] sm:$0xff]
        %v1005 = vld [vmem:[%s755 + $0x5d8] sm:$0xff]
        %v1006 = vld [vmem:[%s755 + $0x5e0] sm:$0xff]
        %v1007 = vld [vmem:[%s755 + $0x5e8] sm:$0xff]
        %v1008 = vld [vmem:[%s755 + $0x5f0] sm:$0xff]
        %v1009 = vld [vmem:[%s755 + $0x5f8] sm:$0xff]
        %v1010 = vld [vmem:[%s755 + $0x600] sm:$0xff]
        %v1011 = vld [vmem:[%s755 + $0x608] sm:$0xff]
        %v1012 = vld [vmem:[%s755 + $0x610] sm:$0xff]
        %v1013 = vld [vmem:[%s755 + $0x618] sm:$0xff]
        %v1014 = vld [vmem:[%s755 + $0x620] sm:$0xff]
        %v1015 = vld [vmem:[%s755 + $0x628] sm:$0xff]
        %v1016 = vld [vmem:[%s755 + $0x630] sm:$0xff]
        %v1017 = vld [vmem:[%s755 + $0x638] sm:$0xff]
        %v1018 = vld [vmem:[%s755 + $0x640] sm:$0xff]
        %v1019 = vld [vmem:[%s755 + $0x648] sm:$0xff]
        %v1020 = vld [vmem:[%s755 + $0x650] sm:$0xff]
        %v1021 = vld [vmem:[%s755 + $0x658] sm:$0xff]
        %v1022 = vld [vmem:[%s755 + $0x660] sm:$0xff]
        %v1023 = vld [vmem:[%s755 + $0x668] sm:$0xff]
        %v1024 = vld [vmem:[%s755 + $0x670] sm:$0xff]
        %v1025 = vld [vmem:[%s755 + $0x678] sm:$0xff]
        %v1026 = vld [vmem:[%s755 + $0x680] sm:$0xff]
        %v1027 = vld [vmem:[%s755 + $0x688] sm:$0xff]
        %v1028 = vld [vmem:[%s755 + $0x690] sm:$0xff]
        %v1029 = vld [vmem:[%s755 + $0x698] sm:$0xff]
        %v1030 = vld [vmem:[%s755 + $0x6a0] sm:$0xff]
        %v1031 = vld [vmem:[%s755 + $0x6a8] sm:$0xff]
        %v1032 = vld [vmem:[%s755 + $0x6b0] sm:$0xff]
        %v1033 = vld [vmem:[%s755 + $0x6b8] sm:$0xff]
        %v1034 = vld [vmem:[%s755 + $0x6c0] sm:$0xff]
        %v1035 = vld [vmem:[%s755 + $0x6c8] sm:$0xff]
        %v1036 = vld [vmem:[%s755 + $0x6d0] sm:$0xff]
        %v1037 = vld [vmem:[%s755 + $0x6d8] sm:$0xff]
        %v1038 = vld [vmem:[%s755 + $0x6e0] sm:$0xff]
        %v1039 = vld [vmem:[%s755 + $0x6e8] sm:$0xff]
        %v1040 = vld [vmem:[%s755 + $0x6f0] sm:$0xff]
        %v1041 = vld [vmem:[%s755 + $0x6f8] sm:$0xff]
        %v1042 = vld [vmem:[%s755 + $0x700] sm:$0xff]
        %v1043 = vld [vmem:[%s755 + $0x708] sm:$0xff]
        %v1044 = vld [vmem:[%s755 + $0x710] sm:$0xff]
        %v1045 = vld [vmem:[%s755 + $0x718] sm:$0xff]
        %v1046 = vld [vmem:[%s755 + $0x720] sm:$0xff]
        %v1047 = vld [vmem:[%s755 + $0x728] sm:$0xff]
        %v1048 = vld [vmem:[%s755 + $0x730] sm:$0xff]
        %v1049 = vld [vmem:[%s755 + $0x738] sm:$0xff]
        %v1050 = vld [vmem:[%s755 + $0x740] sm:$0xff]
        %v1051 = vld [vmem:[%s755 + $0x748] sm:$0xff]
        %v1052 = vld [vmem:[%s755 + $0x750] sm:$0xff]
        %v1053 = vld [vmem:[%s755 + $0x758] sm:$0xff]
        %v1054 = vld [vmem:[%s755 + $0x760] sm:$0xff]
        %v1055 = vld [vmem:[%s755 + $0x768] sm:$0xff]
        %v1056 = vld [vmem:[%s755 + $0x770] sm:$0xff]
        %v1057 = vld [vmem:[%s755 + $0x778] sm:$0xff]
        %v1058 = vld [vmem:[%s755 + $0x780] sm:$0xff]
        %v1059 = vld [vmem:[%s755 + $0x788] sm:$0xff]
        %v1060 = vld [vmem:[%s755 + $0x790] sm:$0xff]
        %v1061 = vld [vmem:[%s755 + $0x798] sm:$0xff]
        %v1062 = vld [vmem:[%s755 + $0x7a0] sm:$0xff]
        %v1063 = vld [vmem:[%s755 + $0x7a8] sm:$0xff]
        %v1064 = vld [vmem:[%s755 + $0x7b0] sm:$0xff]
        %v1065 = vld [vmem:[%s755 + $0x7b8] sm:$0xff]
        %v1066 = vld [vmem:[%s755 + $0x7c0] sm:$0xff]
        %v1067 = vld [vmem:[%s755 + $0x7c8] sm:$0xff]
        %v1068 = vld [vmem:[%s755 + $0x7d0] sm:$0xff]
        %v1069 = vld [vmem:[%s755 + $0x7d8] sm:$0xff]
        %v1070 = vld [vmem:[%s755 + $0x7e0] sm:$0xff]
        %v1071 = vld [vmem:[%s755 + $0x7e8] sm:$0xff]
        %v1072 = vld [vmem:[%s755 + $0x7f0] sm:$0xff]
        %v1073 = vld [vmem:[%s755 + $0x7f8] sm:$0xff]
        %v1074 = vld [vmem:[%s796] sm:$0xf]
        %v1076 = vperm.slane %v1074, 0
        %v1077 = vperm.slane %v1074, 1
        %v1078 = vperm.slane %v1074, 2
        %v1079 = vperm.slane %v1074, 3
        %v1088 = vunpack.c.l.b16 %v814
        %v1089 = vunpack.c.h.b16 %v814
        %v1090 = vunpack.c.l.b16 %v815
        %v1091 = vunpack.c.h.b16 %v815
        %v1092 = vunpack.c.l.b16 %v816
        %v1093 = vunpack.c.h.b16 %v816
        %v1094 = vunpack.c.l.b16 %v817
        %v1095 = vunpack.c.h.b16 %v817
        %v1096 = vpack.c.b16 %v1088, %v1088
        %v1097 = vpack.c.b16 %v1089, %v1089
        %v1098 = vpack.c.b16 %v1090, %v1090
        %v1099 = vpack.c.b16 %v1091, %v1091
        %v1100 = vpack.c.b16 %v1092, %v1092
        %v1101 = vpack.c.b16 %v1093, %v1093
        %v1102 = vpack.c.b16 %v1094, %v1094
        %v1103 = vpack.c.b16 %v1095, %v1095
        %v1368 = vunpack.c.l.b16 %v818
        %v1369 = vunpack.c.h.b16 %v818
        %v1370 = vunpack.c.l.b16 %v819
        %v1371 = vunpack.c.h.b16 %v819
        %v1372 = vunpack.c.l.b16 %v820
        %v1373 = vunpack.c.h.b16 %v820
        %v1374 = vunpack.c.l.b16 %v821
        %v1375 = vunpack.c.h.b16 %v821
        %v1376 = vunpack.c.l.b16 %v822
        %v1377 = vunpack.c.h.b16 %v822
        %v1378 = vunpack.c.l.b16 %v823
        %v1379 = vunpack.c.h.b16 %v823
        %v1380 = vunpack.c.l.b16 %v824
        %v1381 = vunpack.c.h.b16 %v824
        %v1382 = vunpack.c.l.b16 %v825
        %v1383 = vunpack.c.h.b16 %v825
        %v1384 = vunpack.c.l.b16 %v826
        %v1385 = vunpack.c.h.b16 %v826
        %v1386 = vunpack.c.l.b16 %v827
        %v1387 = vunpack.c.h.b16 %v827
        %v1388 = vunpack.c.l.b16 %v828
        %v1389 = vunpack.c.h.b16 %v828
        %v1390 = vunpack.c.l.b16 %v829
        %v1391 = vunpack.c.h.b16 %v829
        %v1392 = vunpack.c.l.b16 %v830
        %v1393 = vunpack.c.h.b16 %v830
        %v1394 = vunpack.c.l.b16 %v831
        %v1395 = vunpack.c.h.b16 %v831
        %v1396 = vunpack.c.l.b16 %v832
        %v1397 = vunpack.c.h.b16 %v832
        %v1398 = vunpack.c.l.b16 %v833
        %v1399 = vunpack.c.h.b16 %v833
        %v1400 = vunpack.c.l.b16 %v834
        %v1401 = vunpack.c.h.b16 %v834
        %v1402 = vunpack.c.l.b16 %v835
        %v1403 = vunpack.c.h.b16 %v835
        %v1404 = vunpack.c.l.b16 %v836
        %v1405 = vunpack.c.h.b16 %v836
        %v1406 = vunpack.c.l.b16 %v837
        %v1407 = vunpack.c.h.b16 %v837
        %v1408 = vunpack.c.l.b16 %v838
        %v1409 = vunpack.c.h.b16 %v838
        %v1410 = vunpack.c.l.b16 %v839
        %v1411 = vunpack.c.h.b16 %v839
        %v1412 = vunpack.c.l.b16 %v840
        %v1413 = vunpack.c.h.b16 %v840
        %v1414 = vunpack.c.l.b16 %v841
        %v1415 = vunpack.c.h.b16 %v841
        %v1416 = vunpack.c.l.b16 %v842
        %v1417 = vunpack.c.h.b16 %v842
        %v1418 = vunpack.c.l.b16 %v843
        %v1419 = vunpack.c.h.b16 %v843
        %v1420 = vunpack.c.l.b16 %v844
        %v1421 = vunpack.c.h.b16 %v844
        %v1422 = vunpack.c.l.b16 %v845
        %v1423 = vunpack.c.h.b16 %v845
        %v1424 = vunpack.c.l.b16 %v846
        %v1425 = vunpack.c.h.b16 %v846
        %v1426 = vunpack.c.l.b16 %v847
        %v1427 = vunpack.c.h.b16 %v847
        %v1428 = vunpack.c.l.b16 %v848
        %v1429 = vunpack.c.h.b16 %v848
        %v1430 = vunpack.c.l.b16 %v849
        %v1431 = vunpack.c.h.b16 %v849
        %v1432 = vunpack.c.l.b16 %v850
        %v1433 = vunpack.c.h.b16 %v850
        %v1434 = vunpack.c.l.b16 %v851
        %v1435 = vunpack.c.h.b16 %v851
        %v1436 = vunpack.c.l.b16 %v852
        %v1437 = vunpack.c.h.b16 %v852
        %v1438 = vunpack.c.l.b16 %v853
        %v1439 = vunpack.c.h.b16 %v853
        %v1440 = vunpack.c.l.b16 %v854
        %v1441 = vunpack.c.h.b16 %v854
        %v1442 = vunpack.c.l.b16 %v855
        %v1443 = vunpack.c.h.b16 %v855
        %v1444 = vunpack.c.l.b16 %v856
        %v1445 = vunpack.c.h.b16 %v856
        %v1446 = vunpack.c.l.b16 %v857
        %v1447 = vunpack.c.h.b16 %v857
        %v1448 = vunpack.c.l.b16 %v858
        %v1449 = vunpack.c.h.b16 %v858
        %v1450 = vunpack.c.l.b16 %v859
        %v1451 = vunpack.c.h.b16 %v859
        %v1452 = vunpack.c.l.b16 %v860
        %v1453 = vunpack.c.h.b16 %v860
        %v1454 = vunpack.c.l.b16 %v861
        %v1455 = vunpack.c.h.b16 %v861
        %v1456 = vunpack.c.l.b16 %v862
        %v1457 = vunpack.c.h.b16 %v862
        %v1458 = vunpack.c.l.b16 %v863
        %v1459 = vunpack.c.h.b16 %v863
        %v1460 = vunpack.c.l.b16 %v864
        %v1461 = vunpack.c.h.b16 %v864
        %v1462 = vunpack.c.l.b16 %v865
        %v1463 = vunpack.c.h.b16 %v865
        %v1464 = vunpack.c.l.b16 %v866
        %v1465 = vunpack.c.h.b16 %v866
        %v1466 = vunpack.c.l.b16 %v867
        %v1467 = vunpack.c.h.b16 %v867
        %v1468 = vunpack.c.l.b16 %v868
        %v1469 = vunpack.c.h.b16 %v868
        %v1470 = vunpack.c.l.b16 %v869
        %v1471 = vunpack.c.h.b16 %v869
        %v1472 = vunpack.c.l.b16 %v870
        %v1473 = vunpack.c.h.b16 %v870
        %v1474 = vunpack.c.l.b16 %v871
        %v1475 = vunpack.c.h.b16 %v871
        %v1476 = vunpack.c.l.b16 %v872
        %v1477 = vunpack.c.h.b16 %v872
        %v1478 = vunpack.c.l.b16 %v873
        %v1479 = vunpack.c.h.b16 %v873
        %v1480 = vunpack.c.l.b16 %v874
        %v1481 = vunpack.c.h.b16 %v874
        %v1482 = vunpack.c.l.b16 %v875
        %v1483 = vunpack.c.h.b16 %v875
        %v1484 = vunpack.c.l.b16 %v876
        %v1485 = vunpack.c.h.b16 %v876
        %v1486 = vunpack.c.l.b16 %v877
        %v1487 = vunpack.c.h.b16 %v877
        %v1488 = vunpack.c.l.b16 %v878
        %v1489 = vunpack.c.h.b16 %v878
        %v1490 = vunpack.c.l.b16 %v879
        %v1491 = vunpack.c.h.b16 %v879
        %v1492 = vunpack.c.l.b16 %v880
        %v1493 = vunpack.c.h.b16 %v880
        %v1494 = vunpack.c.l.b16 %v881
        %v1495 = vunpack.c.h.b16 %v881
        %v1496 = vunpack.c.l.b16 %v882
        %v1497 = vunpack.c.h.b16 %v882
        %v1498 = vunpack.c.l.b16 %v883
        %v1499 = vunpack.c.h.b16 %v883
        %v1500 = vunpack.c.l.b16 %v884
        %v1501 = vunpack.c.h.b16 %v884
        %v1502 = vunpack.c.l.b16 %v885
        %v1503 = vunpack.c.h.b16 %v885
        %v1504 = vunpack.c.l.b16 %v886
        %v1505 = vunpack.c.h.b16 %v886
        %v1506 = vunpack.c.l.b16 %v887
        %v1507 = vunpack.c.h.b16 %v887
        %v1508 = vunpack.c.l.b16 %v888
        %v1509 = vunpack.c.h.b16 %v888
        %v1510 = vunpack.c.l.b16 %v889
        %v1511 = vunpack.c.h.b16 %v889
        %v1512 = vunpack.c.l.b16 %v890
        %v1513 = vunpack.c.h.b16 %v890
        %v1514 = vunpack.c.l.b16 %v891
        %v1515 = vunpack.c.h.b16 %v891
        %v1516 = vunpack.c.l.b16 %v892
        %v1517 = vunpack.c.h.b16 %v892
        %v1518 = vunpack.c.l.b16 %v893
        %v1519 = vunpack.c.h.b16 %v893
        %v1520 = vunpack.c.l.b16 %v894
        %v1521 = vunpack.c.h.b16 %v894
        %v1522 = vunpack.c.l.b16 %v895
        %v1523 = vunpack.c.h.b16 %v895
        %v1524 = vunpack.c.l.b16 %v896
        %v1525 = vunpack.c.h.b16 %v896
        %v1526 = vunpack.c.l.b16 %v897
        %v1527 = vunpack.c.h.b16 %v897
        %v1528 = vunpack.c.l.b16 %v898
        %v1529 = vunpack.c.h.b16 %v898
        %v1530 = vunpack.c.l.b16 %v899
        %v1531 = vunpack.c.h.b16 %v899
        %v1532 = vunpack.c.l.b16 %v900
        %v1533 = vunpack.c.h.b16 %v900
        %v1534 = vunpack.c.l.b16 %v901
        %v1535 = vunpack.c.h.b16 %v901
        %v1536 = vunpack.c.l.b16 %v902
        %v1537 = vunpack.c.h.b16 %v902
        %v1538 = vunpack.c.l.b16 %v903
        %v1539 = vunpack.c.h.b16 %v903
        %v1540 = vunpack.c.l.b16 %v904
        %v1541 = vunpack.c.h.b16 %v904
        %v1542 = vunpack.c.l.b16 %v905
        %v1543 = vunpack.c.h.b16 %v905
        %v1544 = vunpack.c.l.b16 %v906
        %v1545 = vunpack.c.h.b16 %v906
        %v1546 = vunpack.c.l.b16 %v907
        %v1547 = vunpack.c.h.b16 %v907
        %v1548 = vunpack.c.l.b16 %v908
        %v1549 = vunpack.c.h.b16 %v908
        %v1550 = vunpack.c.l.b16 %v909
        %v1551 = vunpack.c.h.b16 %v909
        %v1552 = vunpack.c.l.b16 %v910
        %v1553 = vunpack.c.h.b16 %v910
        %v1554 = vunpack.c.l.b16 %v911
        %v1555 = vunpack.c.h.b16 %v911
        %v1556 = vunpack.c.l.b16 %v912
        %v1557 = vunpack.c.h.b16 %v912
        %v1558 = vunpack.c.l.b16 %v913
        %v1559 = vunpack.c.h.b16 %v913
        %v1560 = vunpack.c.l.b16 %v914
        %v1561 = vunpack.c.h.b16 %v914
        %v1562 = vunpack.c.l.b16 %v915
        %v1563 = vunpack.c.h.b16 %v915
        %v1564 = vunpack.c.l.b16 %v916
        %v1565 = vunpack.c.h.b16 %v916
        %v1566 = vunpack.c.l.b16 %v917
        %v1567 = vunpack.c.h.b16 %v917
        %v1568 = vunpack.c.l.b16 %v918
        %v1569 = vunpack.c.h.b16 %v918
        %v1570 = vunpack.c.l.b16 %v919
        %v1571 = vunpack.c.h.b16 %v919
        %v1572 = vunpack.c.l.b16 %v920
        %v1573 = vunpack.c.h.b16 %v920
        %v1574 = vunpack.c.l.b16 %v921
        %v1575 = vunpack.c.h.b16 %v921
        %v1576 = vunpack.c.l.b16 %v922
        %v1577 = vunpack.c.h.b16 %v922
        %v1578 = vunpack.c.l.b16 %v923
        %v1579 = vunpack.c.h.b16 %v923
        %v1580 = vunpack.c.l.b16 %v924
        %v1581 = vunpack.c.h.b16 %v924
        %v1582 = vunpack.c.l.b16 %v925
        %v1583 = vunpack.c.h.b16 %v925
        %v1584 = vunpack.c.l.b16 %v926
        %v1585 = vunpack.c.h.b16 %v926
        %v1586 = vunpack.c.l.b16 %v927
        %v1587 = vunpack.c.h.b16 %v927
        %v1588 = vunpack.c.l.b16 %v928
        %v1589 = vunpack.c.h.b16 %v928
        %v1590 = vunpack.c.l.b16 %v929
        %v1591 = vunpack.c.h.b16 %v929
        %v1592 = vunpack.c.l.b16 %v930
        %v1593 = vunpack.c.h.b16 %v930
        %v1594 = vunpack.c.l.b16 %v931
        %v1595 = vunpack.c.h.b16 %v931
        %v1596 = vunpack.c.l.b16 %v932
        %v1597 = vunpack.c.h.b16 %v932
        %v1598 = vunpack.c.l.b16 %v933
        %v1599 = vunpack.c.h.b16 %v933
        %v1600 = vunpack.c.l.b16 %v934
        %v1601 = vunpack.c.h.b16 %v934
        %v1602 = vunpack.c.l.b16 %v935
        %v1603 = vunpack.c.h.b16 %v935
        %v1604 = vunpack.c.l.b16 %v936
        %v1605 = vunpack.c.h.b16 %v936
        %v1606 = vunpack.c.l.b16 %v937
        %v1607 = vunpack.c.h.b16 %v937
        %v1608 = vunpack.c.l.b16 %v938
        %v1609 = vunpack.c.h.b16 %v938
        %v1610 = vunpack.c.l.b16 %v939
        %v1611 = vunpack.c.h.b16 %v939
        %v1612 = vunpack.c.l.b16 %v940
        %v1613 = vunpack.c.h.b16 %v940
        %v1614 = vunpack.c.l.b16 %v941
        %v1615 = vunpack.c.h.b16 %v941
        %v1616 = vunpack.c.l.b16 %v942
        %v1617 = vunpack.c.h.b16 %v942
        %v1618 = vunpack.c.l.b16 %v943
        %v1619 = vunpack.c.h.b16 %v943
        %v1620 = vunpack.c.l.b16 %v944
        %v1621 = vunpack.c.h.b16 %v944
        %v1622 = vunpack.c.l.b16 %v945
        %v1623 = vunpack.c.h.b16 %v945
        %v1624 = vunpack.c.l.b16 %v946
        %v1625 = vunpack.c.h.b16 %v946
        %v1626 = vunpack.c.l.b16 %v947
        %v1627 = vunpack.c.h.b16 %v947
        %v1628 = vunpack.c.l.b16 %v948
        %v1629 = vunpack.c.h.b16 %v948
        %v1630 = vunpack.c.l.b16 %v949
        %v1631 = vunpack.c.h.b16 %v949
        %v1632 = vunpack.c.l.b16 %v950
        %v1633 = vunpack.c.h.b16 %v950
        %v1634 = vunpack.c.l.b16 %v951
        %v1635 = vunpack.c.h.b16 %v951
        %v1636 = vunpack.c.l.b16 %v952
        %v1637 = vunpack.c.h.b16 %v952
        %v1638 = vunpack.c.l.b16 %v953
        %v1639 = vunpack.c.h.b16 %v953
        %v1640 = vunpack.c.l.b16 %v954
        %v1641 = vunpack.c.h.b16 %v954
        %v1642 = vunpack.c.l.b16 %v955
        %v1643 = vunpack.c.h.b16 %v955
        %v1644 = vunpack.c.l.b16 %v956
        %v1645 = vunpack.c.h.b16 %v956
        %v1646 = vunpack.c.l.b16 %v957
        %v1647 = vunpack.c.h.b16 %v957
        %v1648 = vunpack.c.l.b16 %v958
        %v1649 = vunpack.c.h.b16 %v958
        %v1650 = vunpack.c.l.b16 %v959
        %v1651 = vunpack.c.h.b16 %v959
        %v1652 = vunpack.c.l.b16 %v960
        %v1653 = vunpack.c.h.b16 %v960
        %v1654 = vunpack.c.l.b16 %v961
        %v1655 = vunpack.c.h.b16 %v961
        %v1656 = vunpack.c.l.b16 %v962
        %v1657 = vunpack.c.h.b16 %v962
        %v1658 = vunpack.c.l.b16 %v963
        %v1659 = vunpack.c.h.b16 %v963
        %v1660 = vunpack.c.l.b16 %v964
        %v1661 = vunpack.c.h.b16 %v964
        %v1662 = vunpack.c.l.b16 %v965
        %v1663 = vunpack.c.h.b16 %v965
        %v1664 = vunpack.c.l.b16 %v966
        %v1665 = vunpack.c.h.b16 %v966
        %v1666 = vunpack.c.l.b16 %v967
        %v1667 = vunpack.c.h.b16 %v967
        %v1668 = vunpack.c.l.b16 %v968
        %v1669 = vunpack.c.h.b16 %v968
        %v1670 = vunpack.c.l.b16 %v969
        %v1671 = vunpack.c.h.b16 %v969
        %v1672 = vunpack.c.l.b16 %v970
        %v1673 = vunpack.c.h.b16 %v970
        %v1674 = vunpack.c.l.b16 %v971
        %v1675 = vunpack.c.h.b16 %v971
        %v1676 = vunpack.c.l.b16 %v972
        %v1677 = vunpack.c.h.b16 %v972
        %v1678 = vunpack.c.l.b16 %v973
        %v1679 = vunpack.c.h.b16 %v973
        %v1680 = vunpack.c.l.b16 %v974
        %v1681 = vunpack.c.h.b16 %v974
        %v1682 = vunpack.c.l.b16 %v975
        %v1683 = vunpack.c.h.b16 %v975
        %v1684 = vunpack.c.l.b16 %v976
        %v1685 = vunpack.c.h.b16 %v976
        %v1686 = vunpack.c.l.b16 %v977
        %v1687 = vunpack.c.h.b16 %v977
        %v1688 = vunpack.c.l.b16 %v978
        %v1689 = vunpack.c.h.b16 %v978
        %v1690 = vunpack.c.l.b16 %v979
        %v1691 = vunpack.c.h.b16 %v979
        %v1692 = vunpack.c.l.b16 %v980
        %v1693 = vunpack.c.h.b16 %v980
        %v1694 = vunpack.c.l.b16 %v981
        %v1695 = vunpack.c.h.b16 %v981
        %v1696 = vunpack.c.l.b16 %v982
        %v1697 = vunpack.c.h.b16 %v982
        %v1698 = vunpack.c.l.b16 %v983
        %v1699 = vunpack.c.h.b16 %v983
        %v1700 = vunpack.c.l.b16 %v984
        %v1701 = vunpack.c.h.b16 %v984
        %v1702 = vunpack.c.l.b16 %v985
        %v1703 = vunpack.c.h.b16 %v985
        %v1704 = vunpack.c.l.b16 %v986
        %v1705 = vunpack.c.h.b16 %v986
        %v1706 = vunpack.c.l.b16 %v987
        %v1707 = vunpack.c.h.b16 %v987
        %v1708 = vunpack.c.l.b16 %v988
        %v1709 = vunpack.c.h.b16 %v988
        %v1710 = vunpack.c.l.b16 %v989
        %v1711 = vunpack.c.h.b16 %v989
        %v1712 = vunpack.c.l.b16 %v990
        %v1713 = vunpack.c.h.b16 %v990
        %v1714 = vunpack.c.l.b16 %v991
        %v1715 = vunpack.c.h.b16 %v991
        %v1716 = vunpack.c.l.b16 %v992
        %v1717 = vunpack.c.h.b16 %v992
        %v1718 = vunpack.c.l.b16 %v993
        %v1719 = vunpack.c.h.b16 %v993
        %v1720 = vunpack.c.l.b16 %v994
        %v1721 = vunpack.c.h.b16 %v994
        %v1722 = vunpack.c.l.b16 %v995
        %v1723 = vunpack.c.h.b16 %v995
        %v1724 = vunpack.c.l.b16 %v996
        %v1725 = vunpack.c.h.b16 %v996
        %v1726 = vunpack.c.l.b16 %v997
        %v1727 = vunpack.c.h.b16 %v997
        %v1728 = vunpack.c.l.b16 %v998
        %v1729 = vunpack.c.h.b16 %v998
        %v1730 = vunpack.c.l.b16 %v999
        %v1731 = vunpack.c.h.b16 %v999
        %v1732 = vunpack.c.l.b16 %v1000
        %v1733 = vunpack.c.h.b16 %v1000
        %v1734 = vunpack.c.l.b16 %v1001
        %v1735 = vunpack.c.h.b16 %v1001
        %v1736 = vunpack.c.l.b16 %v1002
        %v1737 = vunpack.c.h.b16 %v1002
        %v1738 = vunpack.c.l.b16 %v1003
        %v1739 = vunpack.c.h.b16 %v1003
        %v1740 = vunpack.c.l.b16 %v1004
        %v1741 = vunpack.c.h.b16 %v1004
        %v1742 = vunpack.c.l.b16 %v1005
        %v1743 = vunpack.c.h.b16 %v1005
        %v1744 = vunpack.c.l.b16 %v1006
        %v1745 = vunpack.c.h.b16 %v1006
        %v1746 = vunpack.c.l.b16 %v1007
        %v1747 = vunpack.c.h.b16 %v1007
        %v1748 = vunpack.c.l.b16 %v1008
        %v1749 = vunpack.c.h.b16 %v1008
        %v1750 = vunpack.c.l.b16 %v1009
        %v1751 = vunpack.c.h.b16 %v1009
        %v1752 = vunpack.c.l.b16 %v1010
        %v1753 = vunpack.c.h.b16 %v1010
        %v1754 = vunpack.c.l.b16 %v1011
        %v1755 = vunpack.c.h.b16 %v1011
        %v1756 = vunpack.c.l.b16 %v1012
        %v1757 = vunpack.c.h.b16 %v1012
        %v1758 = vunpack.c.l.b16 %v1013
        %v1759 = vunpack.c.h.b16 %v1013
        %v1760 = vunpack.c.l.b16 %v1014
        %v1761 = vunpack.c.h.b16 %v1014
        %v1762 = vunpack.c.l.b16 %v1015
        %v1763 = vunpack.c.h.b16 %v1015
        %v1764 = vunpack.c.l.b16 %v1016
        %v1765 = vunpack.c.h.b16 %v1016
        %v1766 = vunpack.c.l.b16 %v1017
        %v1767 = vunpack.c.h.b16 %v1017
        %v1768 = vunpack.c.l.b16 %v1018
        %v1769 = vunpack.c.h.b16 %v1018
        %v1770 = vunpack.c.l.b16 %v1019
        %v1771 = vunpack.c.h.b16 %v1019
        %v1772 = vunpack.c.l.b16 %v1020
        %v1773 = vunpack.c.h.b16 %v1020
        %v1774 = vunpack.c.l.b16 %v1021
        %v1775 = vunpack.c.h.b16 %v1021
        %v1776 = vunpack.c.l.b16 %v1022
        %v1777 = vunpack.c.h.b16 %v1022
        %v1778 = vunpack.c.l.b16 %v1023
        %v1779 = vunpack.c.h.b16 %v1023
        %v1780 = vunpack.c.l.b16 %v1024
        %v1781 = vunpack.c.h.b16 %v1024
        %v1782 = vunpack.c.l.b16 %v1025
        %v1783 = vunpack.c.h.b16 %v1025
        %v1784 = vunpack.c.l.b16 %v1026
        %v1785 = vunpack.c.h.b16 %v1026
        %v1786 = vunpack.c.l.b16 %v1027
        %v1787 = vunpack.c.h.b16 %v1027
        %v1788 = vunpack.c.l.b16 %v1028
        %v1789 = vunpack.c.h.b16 %v1028
        %v1790 = vunpack.c.l.b16 %v1029
        %v1791 = vunpack.c.h.b16 %v1029
        %v1792 = vunpack.c.l.b16 %v1030
        %v1793 = vunpack.c.h.b16 %v1030
        %v1794 = vunpack.c.l.b16 %v1031
        %v1795 = vunpack.c.h.b16 %v1031
        %v1796 = vunpack.c.l.b16 %v1032
        %v1797 = vunpack.c.h.b16 %v1032
        %v1798 = vunpack.c.l.b16 %v1033
        %v1799 = vunpack.c.h.b16 %v1033
        %v1800 = vunpack.c.l.b16 %v1034
        %v1801 = vunpack.c.h.b16 %v1034
        %v1802 = vunpack.c.l.b16 %v1035
        %v1803 = vunpack.c.h.b16 %v1035
        %v1804 = vunpack.c.l.b16 %v1036
        %v1805 = vunpack.c.h.b16 %v1036
        %v1806 = vunpack.c.l.b16 %v1037
        %v1807 = vunpack.c.h.b16 %v1037
        %v1808 = vunpack.c.l.b16 %v1038
        %v1809 = vunpack.c.h.b16 %v1038
        %v1810 = vunpack.c.l.b16 %v1039
        %v1811 = vunpack.c.h.b16 %v1039
        %v1812 = vunpack.c.l.b16 %v1040
        %v1813 = vunpack.c.h.b16 %v1040
        %v1814 = vunpack.c.l.b16 %v1041
        %v1815 = vunpack.c.h.b16 %v1041
        %v1816 = vunpack.c.l.b16 %v1042
        %v1817 = vunpack.c.h.b16 %v1042
        %v1818 = vunpack.c.l.b16 %v1043
        %v1819 = vunpack.c.h.b16 %v1043
        %v1820 = vunpack.c.l.b16 %v1044
        %v1821 = vunpack.c.h.b16 %v1044
        %v1822 = vunpack.c.l.b16 %v1045
        %v1823 = vunpack.c.h.b16 %v1045
        %v1824 = vunpack.c.l.b16 %v1046
        %v1825 = vunpack.c.h.b16 %v1046
        %v1826 = vunpack.c.l.b16 %v1047
        %v1827 = vunpack.c.h.b16 %v1047
        %v1828 = vunpack.c.l.b16 %v1048
        %v1829 = vunpack.c.h.b16 %v1048
        %v1830 = vunpack.c.l.b16 %v1049
        %v1831 = vunpack.c.h.b16 %v1049
        %v1832 = vunpack.c.l.b16 %v1050
        %v1833 = vunpack.c.h.b16 %v1050
        %v1834 = vunpack.c.l.b16 %v1051
        %v1835 = vunpack.c.h.b16 %v1051
        %v1836 = vunpack.c.l.b16 %v1052
        %v1837 = vunpack.c.h.b16 %v1052
        %v1838 = vunpack.c.l.b16 %v1053
        %v1839 = vunpack.c.h.b16 %v1053
        %v1840 = vunpack.c.l.b16 %v1054
        %v1841 = vunpack.c.h.b16 %v1054
        %v1842 = vunpack.c.l.b16 %v1055
        %v1843 = vunpack.c.h.b16 %v1055
        %v1844 = vunpack.c.l.b16 %v1056
        %v1845 = vunpack.c.h.b16 %v1056
        %v1846 = vunpack.c.l.b16 %v1057
        %v1847 = vunpack.c.h.b16 %v1057
        %v1848 = vunpack.c.l.b16 %v1058
        %v1849 = vunpack.c.h.b16 %v1058
        %v1850 = vunpack.c.l.b16 %v1059
        %v1851 = vunpack.c.h.b16 %v1059
        %v1852 = vunpack.c.l.b16 %v1060
        %v1853 = vunpack.c.h.b16 %v1060
        %v1854 = vunpack.c.l.b16 %v1061
        %v1855 = vunpack.c.h.b16 %v1061
        %v1856 = vunpack.c.l.b16 %v1062
        %v1857 = vunpack.c.h.b16 %v1062
        %v1858 = vunpack.c.l.b16 %v1063
        %v1859 = vunpack.c.h.b16 %v1063
        %v1860 = vunpack.c.l.b16 %v1064
        %v1861 = vunpack.c.h.b16 %v1064
        %v1862 = vunpack.c.l.b16 %v1065
        %v1863 = vunpack.c.h.b16 %v1065
        %v1864 = vunpack.c.l.b16 %v1066
        %v1865 = vunpack.c.h.b16 %v1066
        %v1866 = vunpack.c.l.b16 %v1067
        %v1867 = vunpack.c.h.b16 %v1067
        %v1868 = vunpack.c.l.b16 %v1068
        %v1869 = vunpack.c.h.b16 %v1068
        %v1870 = vunpack.c.l.b16 %v1069
        %v1871 = vunpack.c.h.b16 %v1069
        %v1872 = vunpack.c.l.b16 %v1070
        %v1873 = vunpack.c.h.b16 %v1070
        %v1874 = vunpack.c.l.b16 %v1071
        %v1875 = vunpack.c.h.b16 %v1071
        %v1876 = vunpack.c.l.b16 %v1072
        %v1877 = vunpack.c.h.b16 %v1072
        %v1878 = vunpack.c.l.b16 %v1073
        %v1879 = vunpack.c.h.b16 %v1073
        %v1880 = vpack.c.b16 %v1372, %v1368
        %v1881 = vpack.c.b16 %v1373, %v1369
        %v1882 = vpack.c.b16 %v1374, %v1370
        %v1883 = vpack.c.b16 %v1375, %v1371
        %v1884 = vpack.c.b16 %v1380, %v1376
        %v1885 = vpack.c.b16 %v1381, %v1377
        %v1886 = vpack.c.b16 %v1382, %v1378
        %v1887 = vpack.c.b16 %v1383, %v1379
        %v1888 = vpack.c.b16 %v1388, %v1384
        %v1889 = vpack.c.b16 %v1389, %v1385
        %v1890 = vpack.c.b16 %v1390, %v1386
        %v1891 = vpack.c.b16 %v1391, %v1387
        %v1892 = vpack.c.b16 %v1396, %v1392
        %v1893 = vpack.c.b16 %v1397, %v1393
        %v1894 = vpack.c.b16 %v1398, %v1394
        %v1895 = vpack.c.b16 %v1399, %v1395
        %v1896 = vpack.c.b16 %v1404, %v1400
        %v1897 = vpack.c.b16 %v1405, %v1401
        %v1898 = vpack.c.b16 %v1406, %v1402
        %v1899 = vpack.c.b16 %v1407, %v1403
        %v1900 = vpack.c.b16 %v1412, %v1408
        %v1901 = vpack.c.b16 %v1413, %v1409
        %v1902 = vpack.c.b16 %v1414, %v1410
        %v1903 = vpack.c.b16 %v1415, %v1411
        %v1904 = vpack.c.b16 %v1420, %v1416
        %v1905 = vpack.c.b16 %v1421, %v1417
        %v1906 = vpack.c.b16 %v1422, %v1418
        %v1907 = vpack.c.b16 %v1423, %v1419
        %v1908 = vpack.c.b16 %v1428, %v1424
        %v1909 = vpack.c.b16 %v1429, %v1425
        %v1910 = vpack.c.b16 %v1430, %v1426
        %v1911 = vpack.c.b16 %v1431, %v1427
        %v1912 = vpack.c.b16 %v1436, %v1432
        %v1913 = vpack.c.b16 %v1437, %v1433
        %v1914 = vpack.c.b16 %v1438, %v1434
        %v1915 = vpack.c.b16 %v1439, %v1435
        %v1916 = vpack.c.b16 %v1444, %v1440
        %v1917 = vpack.c.b16 %v1445, %v1441
        %v1918 = vpack.c.b16 %v1446, %v1442
        %v1919 = vpack.c.b16 %v1447, %v1443
        %v1920 = vpack.c.b16 %v1452, %v1448
        %v1921 = vpack.c.b16 %v1453, %v1449
        %v1922 = vpack.c.b16 %v1454, %v1450
        %v1923 = vpack.c.b16 %v1455, %v1451
        %v1924 = vpack.c.b16 %v1460, %v1456
        %v1925 = vpack.c.b16 %v1461, %v1457
        %v1926 = vpack.c.b16 %v1462, %v1458
        %v1927 = vpack.c.b16 %v1463, %v1459
        %v1928 = vpack.c.b16 %v1468, %v1464
        %v1929 = vpack.c.b16 %v1469, %v1465
        %v1930 = vpack.c.b16 %v1470, %v1466
        %v1931 = vpack.c.b16 %v1471, %v1467
        %v1932 = vpack.c.b16 %v1476, %v1472
        %v1933 = vpack.c.b16 %v1477, %v1473
        %v1934 = vpack.c.b16 %v1478, %v1474
        %v1935 = vpack.c.b16 %v1479, %v1475
        %v1936 = vpack.c.b16 %v1484, %v1480
        %v1937 = vpack.c.b16 %v1485, %v1481
        %v1938 = vpack.c.b16 %v1486, %v1482
        %v1939 = vpack.c.b16 %v1487, %v1483
        %v1940 = vpack.c.b16 %v1492, %v1488
        %v1941 = vpack.c.b16 %v1493, %v1489
        %v1942 = vpack.c.b16 %v1494, %v1490
        %v1943 = vpack.c.b16 %v1495, %v1491
        %v1944 = vpack.c.b16 %v1500, %v1496
        %v1945 = vpack.c.b16 %v1501, %v1497
        %v1946 = vpack.c.b16 %v1502, %v1498
        %v1947 = vpack.c.b16 %v1503, %v1499
        %v1948 = vpack.c.b16 %v1508, %v1504
        %v1949 = vpack.c.b16 %v1509, %v1505
        %v1950 = vpack.c.b16 %v1510, %v1506
        %v1951 = vpack.c.b16 %v1511, %v1507
        %v1952 = vpack.c.b16 %v1516, %v1512
        %v1953 = vpack.c.b16 %v1517, %v1513
        %v1954 = vpack.c.b16 %v1518, %v1514
        %v1955 = vpack.c.b16 %v1519, %v1515
        %v1956 = vpack.c.b16 %v1524, %v1520
        %v1957 = vpack.c.b16 %v1525, %v1521
        %v1958 = vpack.c.b16 %v1526, %v1522
        %v1959 = vpack.c.b16 %v1527, %v1523
        %v1960 = vpack.c.b16 %v1532, %v1528
        %v1961 = vpack.c.b16 %v1533, %v1529
        %v1962 = vpack.c.b16 %v1534, %v1530
        %v1963 = vpack.c.b16 %v1535, %v1531
        %v1964 = vpack.c.b16 %v1540, %v1536
        %v1965 = vpack.c.b16 %v1541, %v1537
        %v1966 = vpack.c.b16 %v1542, %v1538
        %v1967 = vpack.c.b16 %v1543, %v1539
        %v1968 = vpack.c.b16 %v1548, %v1544
        %v1969 = vpack.c.b16 %v1549, %v1545
        %v1970 = vpack.c.b16 %v1550, %v1546
        %v1971 = vpack.c.b16 %v1551, %v1547
        %v1972 = vpack.c.b16 %v1556, %v1552
        %v1973 = vpack.c.b16 %v1557, %v1553
        %v1974 = vpack.c.b16 %v1558, %v1554
        %v1975 = vpack.c.b16 %v1559, %v1555
        %v1976 = vpack.c.b16 %v1564, %v1560
        %v1977 = vpack.c.b16 %v1565, %v1561
        %v1978 = vpack.c.b16 %v1566, %v1562
        %v1979 = vpack.c.b16 %v1567, %v1563
        %v1980 = vpack.c.b16 %v1572, %v1568
        %v1981 = vpack.c.b16 %v1573, %v1569
        %v1982 = vpack.c.b16 %v1574, %v1570
        %v1983 = vpack.c.b16 %v1575, %v1571
        %v1984 = vpack.c.b16 %v1580, %v1576
        %v1985 = vpack.c.b16 %v1581, %v1577
        %v1986 = vpack.c.b16 %v1582, %v1578
        %v1987 = vpack.c.b16 %v1583, %v1579
        %v1988 = vpack.c.b16 %v1588, %v1584
        %v1989 = vpack.c.b16 %v1589, %v1585
        %v1990 = vpack.c.b16 %v1590, %v1586
        %v1991 = vpack.c.b16 %v1591, %v1587
        %v1992 = vpack.c.b16 %v1596, %v1592
        %v1993 = vpack.c.b16 %v1597, %v1593
        %v1994 = vpack.c.b16 %v1598, %v1594
        %v1995 = vpack.c.b16 %v1599, %v1595
        %v1996 = vpack.c.b16 %v1604, %v1600
        %v1997 = vpack.c.b16 %v1605, %v1601
        %v1998 = vpack.c.b16 %v1606, %v1602
        %v1999 = vpack.c.b16 %v1607, %v1603
        %v2000 = vpack.c.b16 %v1612, %v1608
        %v2001 = vpack.c.b16 %v1613, %v1609
        %v2002 = vpack.c.b16 %v1614, %v1610
        %v2003 = vpack.c.b16 %v1615, %v1611
        %v2004 = vpack.c.b16 %v1620, %v1616
        %v2005 = vpack.c.b16 %v1621, %v1617
        %v2006 = vpack.c.b16 %v1622, %v1618
        %v2007 = vpack.c.b16 %v1623, %v1619
        %v2008 = vpack.c.b16 %v1628, %v1624
        %v2009 = vpack.c.b16 %v1629, %v1625
        %v2010 = vpack.c.b16 %v1630, %v1626
        %v2011 = vpack.c.b16 %v1631, %v1627
        %v2012 = vpack.c.b16 %v1636, %v1632
        %v2013 = vpack.c.b16 %v1637, %v1633
        %v2014 = vpack.c.b16 %v1638, %v1634
        %v2015 = vpack.c.b16 %v1639, %v1635
        %v2016 = vpack.c.b16 %v1644, %v1640
        %v2017 = vpack.c.b16 %v1645, %v1641
        %v2018 = vpack.c.b16 %v1646, %v1642
        %v2019 = vpack.c.b16 %v1647, %v1643
        %v2020 = vpack.c.b16 %v1652, %v1648
        %v2021 = vpack.c.b16 %v1653, %v1649
        %v2022 = vpack.c.b16 %v1654, %v1650
        %v2023 = vpack.c.b16 %v1655, %v1651
        %v2024 = vpack.c.b16 %v1660, %v1656
        %v2025 = vpack.c.b16 %v1661, %v1657
        %v2026 = vpack.c.b16 %v1662, %v1658
        %v2027 = vpack.c.b16 %v1663, %v1659
        %v2028 = vpack.c.b16 %v1668, %v1664
        %v2029 = vpack.c.b16 %v1669, %v1665
        %v2030 = vpack.c.b16 %v1670, %v1666
        %v2031 = vpack.c.b16 %v1671, %v1667
        %v2032 = vpack.c.b16 %v1676, %v1672
        %v2033 = vpack.c.b16 %v1677, %v1673
        %v2034 = vpack.c.b16 %v1678, %v1674
        %v2035 = vpack.c.b16 %v1679, %v1675
        %v2036 = vpack.c.b16 %v1684, %v1680
        %v2037 = vpack.c.b16 %v1685, %v1681
        %v2038 = vpack.c.b16 %v1686, %v1682
        %v2039 = vpack.c.b16 %v1687, %v1683
        %v2040 = vpack.c.b16 %v1692, %v1688
        %v2041 = vpack.c.b16 %v1693, %v1689
        %v2042 = vpack.c.b16 %v1694, %v1690
        %v2043 = vpack.c.b16 %v1695, %v1691
        %v2044 = vpack.c.b16 %v1700, %v1696
        %v2045 = vpack.c.b16 %v1701, %v1697
        %v2046 = vpack.c.b16 %v1702, %v1698
        %v2047 = vpack.c.b16 %v1703, %v1699
        %v2048 = vpack.c.b16 %v1708, %v1704
        %v2049 = vpack.c.b16 %v1709, %v1705
        %v2050 = vpack.c.b16 %v1710, %v1706
        %v2051 = vpack.c.b16 %v1711, %v1707
        %v2052 = vpack.c.b16 %v1716, %v1712
        %v2053 = vpack.c.b16 %v1717, %v1713
        %v2054 = vpack.c.b16 %v1718, %v1714
        %v2055 = vpack.c.b16 %v1719, %v1715
        %v2056 = vpack.c.b16 %v1724, %v1720
        %v2057 = vpack.c.b16 %v1725, %v1721
        %v2058 = vpack.c.b16 %v1726, %v1722
        %v2059 = vpack.c.b16 %v1727, %v1723
        %v2060 = vpack.c.b16 %v1732, %v1728
        %v2061 = vpack.c.b16 %v1733, %v1729
        %v2062 = vpack.c.b16 %v1734, %v1730
        %v2063 = vpack.c.b16 %v1735, %v1731
        %v2064 = vpack.c.b16 %v1740, %v1736
        %v2065 = vpack.c.b16 %v1741, %v1737
        %v2066 = vpack.c.b16 %v1742, %v1738
        %v2067 = vpack.c.b16 %v1743, %v1739
        %v2068 = vpack.c.b16 %v1748, %v1744
        %v2069 = vpack.c.b16 %v1749, %v1745
        %v2070 = vpack.c.b16 %v1750, %v1746
        %v2071 = vpack.c.b16 %v1751, %v1747
        %v2072 = vpack.c.b16 %v1756, %v1752
        %v2073 = vpack.c.b16 %v1757, %v1753
        %v2074 = vpack.c.b16 %v1758, %v1754
        %v2075 = vpack.c.b16 %v1759, %v1755
        %v2076 = vpack.c.b16 %v1764, %v1760
        %v2077 = vpack.c.b16 %v1765, %v1761
        %v2078 = vpack.c.b16 %v1766, %v1762
        %v2079 = vpack.c.b16 %v1767, %v1763
        %v2080 = vpack.c.b16 %v1772, %v1768
        %v2081 = vpack.c.b16 %v1773, %v1769
        %v2082 = vpack.c.b16 %v1774, %v1770
        %v2083 = vpack.c.b16 %v1775, %v1771
        %v2084 = vpack.c.b16 %v1780, %v1776
        %v2085 = vpack.c.b16 %v1781, %v1777
        %v2086 = vpack.c.b16 %v1782, %v1778
        %v2087 = vpack.c.b16 %v1783, %v1779
        %v2088 = vpack.c.b16 %v1788, %v1784
        %v2089 = vpack.c.b16 %v1789, %v1785
        %v2090 = vpack.c.b16 %v1790, %v1786
        %v2091 = vpack.c.b16 %v1791, %v1787
        %v2092 = vpack.c.b16 %v1796, %v1792
        %v2093 = vpack.c.b16 %v1797, %v1793
        %v2094 = vpack.c.b16 %v1798, %v1794
        %v2095 = vpack.c.b16 %v1799, %v1795
        %v2096 = vpack.c.b16 %v1804, %v1800
        %v2097 = vpack.c.b16 %v1805, %v1801
        %v2098 = vpack.c.b16 %v1806, %v1802
        %v2099 = vpack.c.b16 %v1807, %v1803
        %v2100 = vpack.c.b16 %v1812, %v1808
        %v2101 = vpack.c.b16 %v1813, %v1809
        %v2102 = vpack.c.b16 %v1814, %v1810
        %v2103 = vpack.c.b16 %v1815, %v1811
        %v2104 = vpack.c.b16 %v1820, %v1816
        %v2105 = vpack.c.b16 %v1821, %v1817
        %v2106 = vpack.c.b16 %v1822, %v1818
        %v2107 = vpack.c.b16 %v1823, %v1819
        %v2108 = vpack.c.b16 %v1828, %v1824
        %v2109 = vpack.c.b16 %v1829, %v1825
        %v2110 = vpack.c.b16 %v1830, %v1826
        %v2111 = vpack.c.b16 %v1831, %v1827
        %v2112 = vpack.c.b16 %v1836, %v1832
        %v2113 = vpack.c.b16 %v1837, %v1833
        %v2114 = vpack.c.b16 %v1838, %v1834
        %v2115 = vpack.c.b16 %v1839, %v1835
        %v2116 = vpack.c.b16 %v1844, %v1840
        %v2117 = vpack.c.b16 %v1845, %v1841
        %v2118 = vpack.c.b16 %v1846, %v1842
        %v2119 = vpack.c.b16 %v1847, %v1843
        %v2120 = vpack.c.b16 %v1852, %v1848
        %v2121 = vpack.c.b16 %v1853, %v1849
        %v2122 = vpack.c.b16 %v1854, %v1850
        %v2123 = vpack.c.b16 %v1855, %v1851
        %v2124 = vpack.c.b16 %v1860, %v1856
        %v2125 = vpack.c.b16 %v1861, %v1857
        %v2126 = vpack.c.b16 %v1862, %v1858
        %v2127 = vpack.c.b16 %v1863, %v1859
        %v2128 = vpack.c.b16 %v1868, %v1864
        %v2129 = vpack.c.b16 %v1869, %v1865
        %v2130 = vpack.c.b16 %v1870, %v1866
        %v2131 = vpack.c.b16 %v1871, %v1867
        %v2132 = vpack.c.b16 %v1876, %v1872
        %v2133 = vpack.c.b16 %v1877, %v1873
        %v2134 = vpack.c.b16 %v1878, %v1874
        %v2135 = vpack.c.b16 %v1879, %v1875
        %2392 = vmatpush.bf16.msra.mxu0 %v1908
        %2393 = vmatpush.bf16.msra.mxu0 %v1904
        %2394 = vmatpush.bf16.msra.mxu0 %v1900
        %2395 = vmatpush.bf16.msra.mxu0 %v1896
        %2396 = vmatpush.bf16.msra.mxu0 %v1892
        %2397 = vmatpush.bf16.msra.mxu0 %v1888
        %2398 = vmatpush.bf16.msra.mxu0 %v1884
        %2399 = vmatpush.bf16.msra.mxu0 %v1880
        %2400 = vmatmul.bf16.gmra.mxu0 %v1096
        %v2401 = vpop.f32.mrf.mxu0
        %v2402 = vadd.f32 %v1076, %v2401
        %v2403 = vpop.f32.mrf.mxu0
        %2404 = vdwg.mxu0
        %2405 = vmatpush.bf16.msra.mxu0 %v1940
        %2406 = vmatpush.bf16.msra.mxu0 %v1936
        %2407 = vmatpush.bf16.msra.mxu0 %v1932
        %2408 = vmatpush.bf16.msra.mxu0 %v1928
        %2409 = vmatpush.bf16.msra.mxu0 %v1924
        %2410 = vmatpush.bf16.msra.mxu0 %v1920
        %2411 = vmatpush.bf16.msra.mxu0 %v1916
        %2412 = vmatpush.bf16.msra.mxu0 %v1912
        %2413 = vmatmul.bf16.gmra.mxu0 %v1097
        %v2414 = vpop.f32.mrf.mxu0
        %v2415 = vadd.f32 %v2402, %v2414
        %v2416 = vpop.f32.mrf.mxu0
        %2417 = vdwg.mxu0
        %2418 = vmatpush.bf16.msra.mxu0 %v1972
        %2419 = vmatpush.bf16.msra.mxu0 %v1968
        %2420 = vmatpush.bf16.msra.mxu0 %v1964
        %2421 = vmatpush.bf16.msra.mxu0 %v1960
        %2422 = vmatpush.bf16.msra.mxu0 %v1956
        %2423 = vmatpush.bf16.msra.mxu0 %v1952
        %2424 = vmatpush.bf16.msra.mxu0 %v1948
        %2425 = vmatpush.bf16.msra.mxu0 %v1944
        %2426 = vmatmul.bf16.gmra.mxu0 %v1098
        %v2427 = vpop.f32.mrf.mxu0
        %v2428 = vadd.f32 %v2415, %v2427
        %v2429 = vpop.f32.mrf.mxu0
        %2430 = vdwg.mxu0
        %2431 = vmatpush.bf16.msra.mxu0 %v2004
        %2432 = vmatpush.bf16.msra.mxu0 %v2000
        %2433 = vmatpush.bf16.msra.mxu0 %v1996
        %2434 = vmatpush.bf16.msra.mxu0 %v1992
        %2435 = vmatpush.bf16.msra.mxu0 %v1988
        %2436 = vmatpush.bf16.msra.mxu0 %v1984
        %2437 = vmatpush.bf16.msra.mxu0 %v1980
        %2438 = vmatpush.bf16.msra.mxu0 %v1976
        %2439 = vmatmul.bf16.gmra.mxu0 %v1099
        %v2440 = vpop.f32.mrf.mxu0
        %v2441 = vadd.f32 %v2428, %v2440
        %v2442 = vpop.f32.mrf.mxu0
        %2443 = vdwg.mxu0
        %2444 = vmatpush.bf16.msra.mxu0 %v2036
        %2445 = vmatpush.bf16.msra.mxu0 %v2032
        %2446 = vmatpush.bf16.msra.mxu0 %v2028
        %2447 = vmatpush.bf16.msra.mxu0 %v2024
        %2448 = vmatpush.bf16.msra.mxu0 %v2020
        %2449 = vmatpush.bf16.msra.mxu0 %v2016
        %2450 = vmatpush.bf16.msra.mxu0 %v2012
        %2451 = vmatpush.bf16.msra.mxu0 %v2008
        %2452 = vmatmul.bf16.gmra.mxu0 %v1100
        %v2453 = vpop.f32.mrf.mxu0
        %v2454 = vadd.f32 %v2441, %v2453
        %v2455 = vpop.f32.mrf.mxu0
        %2456 = vdwg.mxu0
        %2457 = vmatpush.bf16.msra.mxu0 %v2068
        %2458 = vmatpush.bf16.msra.mxu0 %v2064
        %2459 = vmatpush.bf16.msra.mxu0 %v2060
        %2460 = vmatpush.bf16.msra.mxu0 %v2056
        %2461 = vmatpush.bf16.msra.mxu0 %v2052
        %2462 = vmatpush.bf16.msra.mxu0 %v2048
        %2463 = vmatpush.bf16.msra.mxu0 %v2044
        %2464 = vmatpush.bf16.msra.mxu0 %v2040
        %2465 = vmatmul.bf16.gmra.mxu0 %v1101
        %v2466 = vpop.f32.mrf.mxu0
        %v2467 = vadd.f32 %v2454, %v2466
        %v2468 = vpop.f32.mrf.mxu0
        %2469 = vdwg.mxu0
        %2470 = vmatpush.bf16.msra.mxu0 %v2100
        %2471 = vmatpush.bf16.msra.mxu0 %v2096
        %2472 = vmatpush.bf16.msra.mxu0 %v2092
        %2473 = vmatpush.bf16.msra.mxu0 %v2088
        %2474 = vmatpush.bf16.msra.mxu0 %v2084
        %2475 = vmatpush.bf16.msra.mxu0 %v2080
        %2476 = vmatpush.bf16.msra.mxu0 %v2076
        %2477 = vmatpush.bf16.msra.mxu0 %v2072
        %2478 = vmatmul.bf16.gmra.mxu0 %v1102
        %v2479 = vpop.f32.mrf.mxu0
        %v2480 = vadd.f32 %v2467, %v2479
        %v2481 = vpop.f32.mrf.mxu0
        %2482 = vdwg.mxu0
        %2483 = vmatpush.bf16.msra.mxu0 %v2132
        %2484 = vmatpush.bf16.msra.mxu0 %v2128
        %2485 = vmatpush.bf16.msra.mxu0 %v2124
        %2486 = vmatpush.bf16.msra.mxu0 %v2120
        %2487 = vmatpush.bf16.msra.mxu0 %v2116
        %2488 = vmatpush.bf16.msra.mxu0 %v2112
        %2489 = vmatpush.bf16.msra.mxu0 %v2108
        %2490 = vmatpush.bf16.msra.mxu0 %v2104
        %2491 = vmatmul.bf16.gmra.mxu0 %v1103
        %v2492 = vpop.f32.mrf.mxu0
        %v2493 = vadd.f32 %v2480, %v2492
        %v2494 = vpop.f32.mrf.mxu0
        %2495 = vdwg.mxu0
        %2496 = vmatpush.bf16.msra.mxu0 %v1909
        %2497 = vmatpush.bf16.msra.mxu0 %v1905
        %2498 = vmatpush.bf16.msra.mxu0 %v1901
        %2499 = vmatpush.bf16.msra.mxu0 %v1897
        %2500 = vmatpush.bf16.msra.mxu0 %v1893
        %2501 = vmatpush.bf16.msra.mxu0 %v1889
        %2502 = vmatpush.bf16.msra.mxu0 %v1885
        %2503 = vmatpush.bf16.msra.mxu0 %v1881
        %2504 = vmatmul.bf16.gmra.mxu0 %v1096
        %v2505 = vpop.f32.mrf.mxu0
        %v2506 = vadd.f32 %v1077, %v2505
        %v2507 = vpop.f32.mrf.mxu0
        %2508 = vdwg.mxu0
        %2509 = vmatpush.bf16.msra.mxu0 %v1941
        %2510 = vmatpush.bf16.msra.mxu0 %v1937
        %2511 = vmatpush.bf16.msra.mxu0 %v1933
        %2512 = vmatpush.bf16.msra.mxu0 %v1929
        %2513 = vmatpush.bf16.msra.mxu0 %v1925
        %2514 = vmatpush.bf16.msra.mxu0 %v1921
        %2515 = vmatpush.bf16.msra.mxu0 %v1917
        %2516 = vmatpush.bf16.msra.mxu0 %v1913
        %2517 = vmatmul.bf16.gmra.mxu0 %v1097
        %v2518 = vpop.f32.mrf.mxu0
        %v2519 = vadd.f32 %v2506, %v2518
        %v2520 = vpop.f32.mrf.mxu0
        %2521 = vdwg.mxu0
        %2522 = vmatpush.bf16.msra.mxu0 %v1973
        %2523 = vmatpush.bf16.msra.mxu0 %v1969
        %2524 = vmatpush.bf16.msra.mxu0 %v1965
        %2525 = vmatpush.bf16.msra.mxu0 %v1961
        %2526 = vmatpush.bf16.msra.mxu0 %v1957
        %2527 = vmatpush.bf16.msra.mxu0 %v1953
        %2528 = vmatpush.bf16.msra.mxu0 %v1949
        %2529 = vmatpush.bf16.msra.mxu0 %v1945
        %2530 = vmatmul.bf16.gmra.mxu0 %v1098
        %v2531 = vpop.f32.mrf.mxu0
        %v2532 = vadd.f32 %v2519, %v2531
        %v2533 = vpop.f32.mrf.mxu0
        %2534 = vdwg.mxu0
        %2535 = vmatpush.bf16.msra.mxu0 %v2005
        %2536 = vmatpush.bf16.msra.mxu0 %v2001
        %2537 = vmatpush.bf16.msra.mxu0 %v1997
        %2538 = vmatpush.bf16.msra.mxu0 %v1993
        %2539 = vmatpush.bf16.msra.mxu0 %v1989
        %2540 = vmatpush.bf16.msra.mxu0 %v1985
        %2541 = vmatpush.bf16.msra.mxu0 %v1981
        %2542 = vmatpush.bf16.msra.mxu0 %v1977
        %2543 = vmatmul.bf16.gmra.mxu0 %v1099
        %v2544 = vpop.f32.mrf.mxu0
        %v2545 = vadd.f32 %v2532, %v2544
        %v2546 = vpop.f32.mrf.mxu0
        %2547 = vdwg.mxu0
        %2548 = vmatpush.bf16.msra.mxu0 %v2037
        %2549 = vmatpush.bf16.msra.mxu0 %v2033
        %2550 = vmatpush.bf16.msra.mxu0 %v2029
        %2551 = vmatpush.bf16.msra.mxu0 %v2025
        %2552 = vmatpush.bf16.msra.mxu0 %v2021
        %2553 = vmatpush.bf16.msra.mxu0 %v2017
        %2554 = vmatpush.bf16.msra.mxu0 %v2013
        %2555 = vmatpush.bf16.msra.mxu0 %v2009
        %2556 = vmatmul.bf16.gmra.mxu0 %v1100
        %v2557 = vpop.f32.mrf.mxu0
        %v2558 = vadd.f32 %v2545, %v2557
        %v2559 = vpop.f32.mrf.mxu0
        %2560 = vdwg.mxu0
        %2561 = vmatpush.bf16.msra.mxu0 %v2069
        %2562 = vmatpush.bf16.msra.mxu0 %v2065
        %2563 = vmatpush.bf16.msra.mxu0 %v2061
        %2564 = vmatpush.bf16.msra.mxu0 %v2057
        %2565 = vmatpush.bf16.msra.mxu0 %v2053
        %2566 = vmatpush.bf16.msra.mxu0 %v2049
        %2567 = vmatpush.bf16.msra.mxu0 %v2045
        %2568 = vmatpush.bf16.msra.mxu0 %v2041
        %2569 = vmatmul.bf16.gmra.mxu0 %v1101
        %v2570 = vpop.f32.mrf.mxu0
        %v2571 = vadd.f32 %v2558, %v2570
        %v2572 = vpop.f32.mrf.mxu0
        %2573 = vdwg.mxu0
        %2574 = vmatpush.bf16.msra.mxu0 %v2101
        %2575 = vmatpush.bf16.msra.mxu0 %v2097
        %2576 = vmatpush.bf16.msra.mxu0 %v2093
        %2577 = vmatpush.bf16.msra.mxu0 %v2089
        %2578 = vmatpush.bf16.msra.mxu0 %v2085
        %2579 = vmatpush.bf16.msra.mxu0 %v2081
        %2580 = vmatpush.bf16.msra.mxu0 %v2077
        %2581 = vmatpush.bf16.msra.mxu0 %v2073
        %2582 = vmatmul.bf16.gmra.mxu0 %v1102
        %v2583 = vpop.f32.mrf.mxu0
        %v2584 = vadd.f32 %v2571, %v2583
        %v2585 = vpop.f32.mrf.mxu0
        %2586 = vdwg.mxu0
        %2587 = vmatpush.bf16.msra.mxu0 %v2133
        %2588 = vmatpush.bf16.msra.mxu0 %v2129
        %2589 = vmatpush.bf16.msra.mxu0 %v2125
        %2590 = vmatpush.bf16.msra.mxu0 %v2121
        %2591 = vmatpush.bf16.msra.mxu0 %v2117
        %2592 = vmatpush.bf16.msra.mxu0 %v2113
        %2593 = vmatpush.bf16.msra.mxu0 %v2109
        %2594 = vmatpush.bf16.msra.mxu0 %v2105
        %2595 = vmatmul.bf16.gmra.mxu0 %v1103
        %v2596 = vpop.f32.mrf.mxu0
        %v2597 = vadd.f32 %v2584, %v2596
        %v2598 = vpop.f32.mrf.mxu0
        %2599 = vdwg.mxu0
        %2600 = vmatpush.bf16.msra.mxu0 %v1910
        %2601 = vmatpush.bf16.msra.mxu0 %v1906
        %2602 = vmatpush.bf16.msra.mxu0 %v1902
        %2603 = vmatpush.bf16.msra.mxu0 %v1898
        %2604 = vmatpush.bf16.msra.mxu0 %v1894
        %2605 = vmatpush.bf16.msra.mxu0 %v1890
        %2606 = vmatpush.bf16.msra.mxu0 %v1886
        %2607 = vmatpush.bf16.msra.mxu0 %v1882
        %2608 = vmatmul.bf16.gmra.mxu0 %v1096
        %v2609 = vpop.f32.mrf.mxu0
        %v2610 = vadd.f32 %v1078, %v2609
        %v2611 = vpop.f32.mrf.mxu0
        %2612 = vdwg.mxu0
        %2613 = vmatpush.bf16.msra.mxu0 %v1942
        %2614 = vmatpush.bf16.msra.mxu0 %v1938
        %2615 = vmatpush.bf16.msra.mxu0 %v1934
        %2616 = vmatpush.bf16.msra.mxu0 %v1930
        %2617 = vmatpush.bf16.msra.mxu0 %v1926
        %2618 = vmatpush.bf16.msra.mxu0 %v1922
        %2619 = vmatpush.bf16.msra.mxu0 %v1918
        %2620 = vmatpush.bf16.msra.mxu0 %v1914
        %2621 = vmatmul.bf16.gmra.mxu0 %v1097
        %v2622 = vpop.f32.mrf.mxu0
        %v2623 = vadd.f32 %v2610, %v2622
        %v2624 = vpop.f32.mrf.mxu0
        %2625 = vdwg.mxu0
        %2626 = vmatpush.bf16.msra.mxu0 %v1974
        %2627 = vmatpush.bf16.msra.mxu0 %v1970
        %2628 = vmatpush.bf16.msra.mxu0 %v1966
        %2629 = vmatpush.bf16.msra.mxu0 %v1962
        %2630 = vmatpush.bf16.msra.mxu0 %v1958
        %2631 = vmatpush.bf16.msra.mxu0 %v1954
        %2632 = vmatpush.bf16.msra.mxu0 %v1950
        %2633 = vmatpush.bf16.msra.mxu0 %v1946
        %2634 = vmatmul.bf16.gmra.mxu0 %v1098
        %v2635 = vpop.f32.mrf.mxu0
        %v2636 = vadd.f32 %v2623, %v2635
        %v2637 = vpop.f32.mrf.mxu0
        %2638 = vdwg.mxu0
        %2639 = vmatpush.bf16.msra.mxu0 %v2006
        %2640 = vmatpush.bf16.msra.mxu0 %v2002
        %2641 = vmatpush.bf16.msra.mxu0 %v1998
        %2642 = vmatpush.bf16.msra.mxu0 %v1994
        %2643 = vmatpush.bf16.msra.mxu0 %v1990
        %2644 = vmatpush.bf16.msra.mxu0 %v1986
        %2645 = vmatpush.bf16.msra.mxu0 %v1982
        %2646 = vmatpush.bf16.msra.mxu0 %v1978
        %2647 = vmatmul.bf16.gmra.mxu0 %v1099
        %v2648 = vpop.f32.mrf.mxu0
        %v2649 = vadd.f32 %v2636, %v2648
        %v2650 = vpop.f32.mrf.mxu0
        %2651 = vdwg.mxu0
        %2652 = vmatpush.bf16.msra.mxu0 %v2038
        %2653 = vmatpush.bf16.msra.mxu0 %v2034
        %2654 = vmatpush.bf16.msra.mxu0 %v2030
        %2655 = vmatpush.bf16.msra.mxu0 %v2026
        %2656 = vmatpush.bf16.msra.mxu0 %v2022
        %2657 = vmatpush.bf16.msra.mxu0 %v2018
        %2658 = vmatpush.bf16.msra.mxu0 %v2014
        %2659 = vmatpush.bf16.msra.mxu0 %v2010
        %2660 = vmatmul.bf16.gmra.mxu0 %v1100
        %v2661 = vpop.f32.mrf.mxu0
        %v2662 = vadd.f32 %v2649, %v2661
        %v2663 = vpop.f32.mrf.mxu0
        %2664 = vdwg.mxu0
        %2665 = vmatpush.bf16.msra.mxu0 %v2070
        %2666 = vmatpush.bf16.msra.mxu0 %v2066
        %2667 = vmatpush.bf16.msra.mxu0 %v2062
        %2668 = vmatpush.bf16.msra.mxu0 %v2058
        %2669 = vmatpush.bf16.msra.mxu0 %v2054
        %2670 = vmatpush.bf16.msra.mxu0 %v2050
        %2671 = vmatpush.bf16.msra.mxu0 %v2046
        %2672 = vmatpush.bf16.msra.mxu0 %v2042
        %2673 = vmatmul.bf16.gmra.mxu0 %v1101
        %v2674 = vpop.f32.mrf.mxu0
        %v2675 = vadd.f32 %v2662, %v2674
        %v2676 = vpop.f32.mrf.mxu0
        %2677 = vdwg.mxu0
        %2678 = vmatpush.bf16.msra.mxu0 %v2102
        %2679 = vmatpush.bf16.msra.mxu0 %v2098
        %2680 = vmatpush.bf16.msra.mxu0 %v2094
        %2681 = vmatpush.bf16.msra.mxu0 %v2090
        %2682 = vmatpush.bf16.msra.mxu0 %v2086
        %2683 = vmatpush.bf16.msra.mxu0 %v2082
        %2684 = vmatpush.bf16.msra.mxu0 %v2078
        %2685 = vmatpush.bf16.msra.mxu0 %v2074
        %2686 = vmatmul.bf16.gmra.mxu0 %v1102
        %v2687 = vpop.f32.mrf.mxu0
        %v2688 = vadd.f32 %v2675, %v2687
        %v2689 = vpop.f32.mrf.mxu0
        %2690 = vdwg.mxu0
        %2691 = vmatpush.bf16.msra.mxu0 %v2134
        %2692 = vmatpush.bf16.msra.mxu0 %v2130
        %2693 = vmatpush.bf16.msra.mxu0 %v2126
        %2694 = vmatpush.bf16.msra.mxu0 %v2122
        %2695 = vmatpush.bf16.msra.mxu0 %v2118
        %2696 = vmatpush.bf16.msra.mxu0 %v2114
        %2697 = vmatpush.bf16.msra.mxu0 %v2110
        %2698 = vmatpush.bf16.msra.mxu0 %v2106
        %2699 = vmatmul.bf16.gmra.mxu0 %v1103
        %v2700 = vpop.f32.mrf.mxu0
        %v2701 = vadd.f32 %v2688, %v2700
        %v2702 = vpop.f32.mrf.mxu0
        %2703 = vdwg.mxu0
        %2704 = vmatpush.bf16.msra.mxu0 %v1911
        %2705 = vmatpush.bf16.msra.mxu0 %v1907
        %2706 = vmatpush.bf16.msra.mxu0 %v1903
        %2707 = vmatpush.bf16.msra.mxu0 %v1899
        %2708 = vmatpush.bf16.msra.mxu0 %v1895
        %2709 = vmatpush.bf16.msra.mxu0 %v1891
        %2710 = vmatpush.bf16.msra.mxu0 %v1887
        %2711 = vmatpush.bf16.msra.mxu0 %v1883
        %2712 = vmatmul.bf16.gmra.mxu0 %v1096
        %v2713 = vpop.f32.mrf.mxu0
        %v2714 = vadd.f32 %v1079, %v2713
        %v2715 = vpop.f32.mrf.mxu0
        %2716 = vdwg.mxu0
        %2717 = vmatpush.bf16.msra.mxu0 %v1943
        %2718 = vmatpush.bf16.msra.mxu0 %v1939
        %2719 = vmatpush.bf16.msra.mxu0 %v1935
        %2720 = vmatpush.bf16.msra.mxu0 %v1931
        %2721 = vmatpush.bf16.msra.mxu0 %v1927
        %2722 = vmatpush.bf16.msra.mxu0 %v1923
        %2723 = vmatpush.bf16.msra.mxu0 %v1919
        %2724 = vmatpush.bf16.msra.mxu0 %v1915
        %2725 = vmatmul.bf16.gmra.mxu0 %v1097
        %v2726 = vpop.f32.mrf.mxu0
        %v2727 = vadd.f32 %v2714, %v2726
        %v2728 = vpop.f32.mrf.mxu0
        %2729 = vdwg.mxu0
        %2730 = vmatpush.bf16.msra.mxu0 %v1975
        %2731 = vmatpush.bf16.msra.mxu0 %v1971
        %2732 = vmatpush.bf16.msra.mxu0 %v1967
        %2733 = vmatpush.bf16.msra.mxu0 %v1963
        %2734 = vmatpush.bf16.msra.mxu0 %v1959
        %2735 = vmatpush.bf16.msra.mxu0 %v1955
        %2736 = vmatpush.bf16.msra.mxu0 %v1951
        %2737 = vmatpush.bf16.msra.mxu0 %v1947
        %2738 = vmatmul.bf16.gmra.mxu0 %v1098
        %v2739 = vpop.f32.mrf.mxu0
        %v2740 = vadd.f32 %v2727, %v2739
        %v2741 = vpop.f32.mrf.mxu0
        %2742 = vdwg.mxu0
        %2743 = vmatpush.bf16.msra.mxu0 %v2007
        %2744 = vmatpush.bf16.msra.mxu0 %v2003
        %2745 = vmatpush.bf16.msra.mxu0 %v1999
        %2746 = vmatpush.bf16.msra.mxu0 %v1995
        %2747 = vmatpush.bf16.msra.mxu0 %v1991
        %2748 = vmatpush.bf16.msra.mxu0 %v1987
        %2749 = vmatpush.bf16.msra.mxu0 %v1983
        %2750 = vmatpush.bf16.msra.mxu0 %v1979
        %2751 = vmatmul.bf16.gmra.mxu0 %v1099
        %v2752 = vpop.f32.mrf.mxu0
        %v2753 = vadd.f32 %v2740, %v2752
        %v2754 = vpop.f32.mrf.mxu0
        %2755 = vdwg.mxu0
        %2756 = vmatpush.bf16.msra.mxu0 %v2039
        %2757 = vmatpush.bf16.msra.mxu0 %v2035
        %2758 = vmatpush.bf16.msra.mxu0 %v2031
        %2759 = vmatpush.bf16.msra.mxu0 %v2027
        %2760 = vmatpush.bf16.msra.mxu0 %v2023
        %2761 = vmatpush.bf16.msra.mxu0 %v2019
        %2762 = vmatpush.bf16.msra.mxu0 %v2015
        %2763 = vmatpush.bf16.msra.mxu0 %v2011
        %2764 = vmatmul.bf16.gmra.mxu0 %v1100
        %v2765 = vpop.f32.mrf.mxu0
        %v2766 = vadd.f32 %v2753, %v2765
        %v2767 = vpop.f32.mrf.mxu0
        %2768 = vdwg.mxu0
        %2769 = vmatpush.bf16.msra.mxu0 %v2071
        %2770 = vmatpush.bf16.msra.mxu0 %v2067
        %2771 = vmatpush.bf16.msra.mxu0 %v2063
        %2772 = vmatpush.bf16.msra.mxu0 %v2059
        %2773 = vmatpush.bf16.msra.mxu0 %v2055
        %2774 = vmatpush.bf16.msra.mxu0 %v2051
        %2775 = vmatpush.bf16.msra.mxu0 %v2047
        %2776 = vmatpush.bf16.msra.mxu0 %v2043
        %2777 = vmatmul.bf16.gmra.mxu0 %v1101
        %v2778 = vpop.f32.mrf.mxu0
        %v2779 = vadd.f32 %v2766, %v2778
        %v2780 = vpop.f32.mrf.mxu0
        %2781 = vdwg.mxu0
        %2782 = vmatpush.bf16.msra.mxu0 %v2103
        %2783 = vmatpush.bf16.msra.mxu0 %v2099
        %2784 = vmatpush.bf16.msra.mxu0 %v2095
        %2785 = vmatpush.bf16.msra.mxu0 %v2091
        %2786 = vmatpush.bf16.msra.mxu0 %v2087
        %2787 = vmatpush.bf16.msra.mxu0 %v2083
        %2788 = vmatpush.bf16.msra.mxu0 %v2079
        %2789 = vmatpush.bf16.msra.mxu0 %v2075
        %2790 = vmatmul.bf16.gmra.mxu0 %v1102
        %v2791 = vpop.f32.mrf.mxu0
        %v2792 = vadd.f32 %v2779, %v2791
        %v2793 = vpop.f32.mrf.mxu0
        %2794 = vdwg.mxu0
        %2795 = vmatpush.bf16.msra.mxu0 %v2135
        %2796 = vmatpush.bf16.msra.mxu0 %v2131
        %2797 = vmatpush.bf16.msra.mxu0 %v2127
        %2798 = vmatpush.bf16.msra.mxu0 %v2123
        %2799 = vmatpush.bf16.msra.mxu0 %v2119
        %2800 = vmatpush.bf16.msra.mxu0 %v2115
        %2801 = vmatpush.bf16.msra.mxu0 %v2111
        %2802 = vmatpush.bf16.msra.mxu0 %v2107
        %2803 = vmatmul.bf16.gmra.mxu0 %v1103
        %v2804 = vpop.f32.mrf.mxu0
        %v2805 = vadd.f32 %v2792, %v2804
        %v2806 = vpop.f32.mrf.mxu0
        %2807 = vdwg.mxu0
        %v2808 = vrot.slane %v2493, 4
        %v2809 = vadd.f32 %v2493, %v2808
        %v2810 = vrot.slane %v2809, 2
        %v2811 = vadd.f32 %v2809, %v2810
        %v2812 = vrot.slane %v2811, 1
        %v2813 = vadd.f32 %v2811, %v2812
        %v2814 = vrot.slane %v2597, 4
        %v2815 = vadd.f32 %v2597, %v2814
        %v2816 = vrot.slane %v2815, 2
        %v2817 = vadd.f32 %v2815, %v2816
        %v2818 = vrot.slane %v2817, 1
        %v2819 = vadd.f32 %v2817, %v2818
        %v2820 = vrot.slane %v2701, 4
        %v2821 = vadd.f32 %v2701, %v2820
        %v2822 = vrot.slane %v2821, 2
        %v2823 = vadd.f32 %v2821, %v2822
        %v2824 = vrot.slane %v2823, 1
        %v2825 = vadd.f32 %v2823, %v2824
        %v2826 = vrot.slane %v2805, 4
        %v2827 = vadd.f32 %v2805, %v2826
        %v2828 = vrot.slane %v2827, 2
        %v2829 = vadd.f32 %v2827, %v2828
        %v2830 = vrot.slane %v2829, 1
        %v2831 = vadd.f32 %v2829, %v2830
        %v2832 = vrcp.pop 8.0
        %v2833 = vmul.f32 8.0, %v2832
        %v2834 = vsub.f32 1.0, %v2833
        %v2835 = vmul.f32 %v2832, %v2834
        %v2836 = vadd.f32 %v2832, %v2835
        %vm2837 = vweird.f32 %v2832
        %v2838 = vsel %vm2837, %v2832, %v2836
        %v2839 = vmul.f32 %v2813, %v2838
        %v2840 = vmul.f32 %v2819, %v2838
        %v2841 = vmul.f32 %v2825, %v2838
        %v2842 = vmul.f32 %v2831, %v2838
        %v2843 = vsub.f32 %v2493, %v2839
        %v2844 = vsub.f32 %v2597, %v2840
        %v2845 = vsub.f32 %v2701, %v2841
        %v2846 = vsub.f32 %v2805, %v2842
        %v2847 = vmul.f32 %v2843, %v2843
        %v2848 = vmul.f32 %v2844, %v2844
        %v2849 = vmul.f32 %v2845, %v2845
        %v2850 = vmul.f32 %v2846, %v2846
        %v2851 = vrot.slane %v2847, 4
        %v2852 = vadd.f32 %v2847, %v2851
        %v2853 = vrot.slane %v2852, 2
        %v2854 = vadd.f32 %v2852, %v2853
        %v2855 = vrot.slane %v2854, 1
        %v2856 = vadd.f32 %v2854, %v2855
        %v2857 = vrot.slane %v2848, 4
        %v2858 = vadd.f32 %v2848, %v2857
        %v2859 = vrot.slane %v2858, 2
        %v2860 = vadd.f32 %v2858, %v2859
        %v2861 = vrot.slane %v2860, 1
        %v2862 = vadd.f32 %v2860, %v2861
        %v2863 = vrot.slane %v2849, 4
        %v2864 = vadd.f32 %v2849, %v2863
        %v2865 = vrot.slane %v2864, 2
        %v2866 = vadd.f32 %v2864, %v2865
        %v2867 = vrot.slane %v2866, 1
        %v2868 = vadd.f32 %v2866, %v2867
        %v2869 = vrot.slane %v2850, 4
        %v2870 = vadd.f32 %v2850, %v2869
        %v2871 = vrot.slane %v2870, 2
        %v2872 = vadd.f32 %v2870, %v2871
        %v2873 = vrot.slane %v2872, 1
        %v2874 = vadd.f32 %v2872, %v2873
        %v2875 = vmul.f32 %v2856, %v2838
        %v2876 = vmul.f32 %v2862, %v2838
        %v2877 = vmul.f32 %v2868, %v2838
        %v2878 = vmul.f32 %v2874, %v2838
        %v2879 = vadd.f32 %v2875, 1e-05
        %v2880 = vadd.f32 %v2876, 1e-05
        %v2881 = vadd.f32 %v2877, 1e-05
        %v2882 = vadd.f32 %v2878, 1e-05
        %v2883 = vrsqrt.pop %v2879
        %v2884 = vmul.f32 %v2883, %v2879
        %v2885 = vmul.f32 %v2884, %v2883
        %v2886 = vmul.f32 0.5, %v2885
        %v2887 = vsub.f32 1.5, %v2886
        %v2888 = vmul.f32 %v2883, %v2887
        %vm2889 = vweird.f32 %v2879
        %vm2890 = vweird.f32 %v2883
        %vm2891 = vmor %vm2889, %vm2890
        %v2892 = vsel %vm2891, %v2883, %v2888
        %v2893 = vrsqrt.pop %v2880
        %v2894 = vmul.f32 %v2893, %v2880
        %v2895 = vmul.f32 %v2894, %v2893
        %v2896 = vmul.f32 0.5, %v2895
        %v2897 = vsub.f32 1.5, %v2896
        %v2898 = vmul.f32 %v2893, %v2897
        %vm2899 = vweird.f32 %v2880
        %vm2900 = vweird.f32 %v2893
        %vm2901 = vmor %vm2899, %vm2900
        %v2902 = vsel %vm2901, %v2893, %v2898
        %v2903 = vrsqrt.pop %v2881
        %v2904 = vmul.f32 %v2903, %v2881
        %v2905 = vmul.f32 %v2904, %v2903
        %v2906 = vmul.f32 0.5, %v2905
        %v2907 = vsub.f32 1.5, %v2906
        %v2908 = vmul.f32 %v2903, %v2907
        %vm2909 = vweird.f32 %v2881
        %vm2910 = vweird.f32 %v2903
        %vm2911 = vmor %vm2909, %vm2910
        %v2912 = vsel %vm2911, %v2903, %v2908
        %v2913 = vrsqrt.pop %v2882
        %v2914 = vmul.f32 %v2913, %v2882
        %v2915 = vmul.f32 %v2914, %v2913
        %v2916 = vmul.f32 0.5, %v2915
        %v2917 = vsub.f32 1.5, %v2916
        %v2918 = vmul.f32 %v2913, %v2917
        %vm2919 = vweird.f32 %v2882
        %vm2920 = vweird.f32 %v2913
        %vm2921 = vmor %vm2919, %vm2920
        %v2922 = vsel %vm2921, %v2913, %v2918
        %v2923 = vld [vmem:[%s801] sm:$0xf]
        %v2925 = vperm.slane %v2923, 0
        %v2926 = vperm.slane %v2923, 1
        %v2927 = vperm.slane %v2923, 2
        %v2928 = vperm.slane %v2923, 3
        %v2933 = vmul.f32 %v2892, %v2925
        %v2934 = vmul.f32 %v2902, %v2926
        %v2935 = vmul.f32 %v2912, %v2927
        %v2936 = vmul.f32 %v2922, %v2928
        %v2937 = vperm.slane %v2933, 0
        %v2938 = vperm.slane %v2934, 0
        %v2939 = vperm.slane %v2935, 0
        %v2940 = vperm.slane %v2936, 0
        %v2941 = vmul.f32 %v2843, %v2937
        %v2942 = vmul.f32 %v2844, %v2938
        %v2943 = vmul.f32 %v2845, %v2939
        %v2944 = vmul.f32 %v2846, %v2940
        %v2945 = vld [vmem:[%s806] sm:$0xf]
        %v2947 = vperm.slane %v2945, 0
        %v2948 = vperm.slane %v2945, 1
        %v2949 = vperm.slane %v2945, 2
        %v2950 = vperm.slane %v2945, 3
        %v2955 = vadd.f32 %v2941, %v2947
        %v2956 = vadd.f32 %v2942, %v2948
        %v2957 = vadd.f32 %v2943, %v2949
        %v2958 = vadd.f32 %v2944, %v2950
        %v2959 = vmax.f32 %v2955, 0.0
        %v2960 = vmax.f32 %v2956, 0.0
        %v2961 = vmax.f32 %v2957, 0.0
        %v2962 = vmax.f32 %v2958, 0.0
        %v2963 = vpack.c.bf16 %v2960, %v2959
        %v2964 = vpack.c.bf16 %v2962, %v2961
        %2965 = vst [vmem:[%s812] sm:$0xff] %v2963
        %2966 = vst [vmem:[%s812 + $0x8] sm:$0xff] %v2964
        %s2967 = smul.u32 4, %s16
        %p2968 = scmp.lt.s32.totalorder %s2967, 15
        %s2969 = scalar_select %p2968, %s2967, 15
        %s2970 = smul.addr %s2969, 4
        %s2971 = scalar_lea.vmem %s5, %s2970
        // Predicated region
        $region64: #{_lambda_.5} parent=58 // pred_check
          %p2972 = pneg %p159
        $region65: #{_lambda_.5} parent=58 // pred_check_branch
          %2974 = sbr.rel (%p2972) target = $region67
        $region66: #{_lambda_.5} parent=58 // pred_region
          %s2975 = smul.u32 4, %s16
        $region67: #{_lambda_.5} parent=58 // pred_fallthru
          _
      $region59: #{_lambda_.5} parent=5 // pred_fallthru
        _
      %p2976 = scmp.le.s32.totalorder 2, %s11
      // Predicated region
      $region68: #{_lambda_.5} parent=5 // pred_check
        %p2977 = pneg %p2976
      $region69: #{_lambda_.5} parent=5 // pred_check_branch
        %2979 = sbr.rel (%p2977) target = $region71
      $region70: #{_lambda_.5} parent=5 // pred_region
        %s2980 = ssub.s32 %s11, 2
        // Predicated region
        $region72: #{_lambda_.5} parent=70 // pred_check
          %p2981 = pneg %p165
        $region73: #{_lambda_.5} parent=70 // pred_check_branch
          %2983 = sbr.rel (%p2981) target = $region75
        $region74: #{_lambda_.5} parent=70 // pred_region
          %s2984 = smul.u32 4, %s17
          %p2985 = scmp.lt.s32.totalorder %s2984, 15
          %s2986 = scalar_select %p2985, %s2984, 15
          %s2987 = smul.addr %s2986, 4
          %s2988 = scalar_lea.vmem %s5, %s2987
        $region75: #{_lambda_.5} parent=70 // pred_fallthru
          _
      $region71: #{_lambda_.5} parent=5 // pred_fallthru
        _
    $region6: #{_lambda_.5} parent=1 // loop_footer
      %s15 = sadd.s32 1, %s11
    $region7: #{_lambda_.5} parent=1 // loop_footer_branch
      %10 = sbr.rel target = $region3
    $region8: #{_lambda_.5} parent=1 // loop_exit
      _

// kernel: _lambda_.6
$region0: #{_lambda_.6}
  #allocation0 [shape = 'u32[]', space=smem, size = 0x4, offset = 0x4, fixed_abs, tag = 'smem constant byte address 0x4 - core index']
  #allocation1 [shape = 'u32[72,128]{1,0:T(1,128)}', space=vmem, size = 0x9000, scoped, tag = 'internal scratch']
  %s0 = inlined_call_operand.vmem [shape: bf16[128,1152], index: 0, kind: input, shape index: {}]
  %s1 = inlined_call_operand.vmem [shape: bf16[1152,256], index: 1, kind: input, shape index: {}]
  %s2 = inlined_call_operand.vmem [shape: f32[1,256], index: 2, kind: input, shape index: {}]
  %s3 = inlined_call_operand.vmem [shape: f32[1,64], index: 3, kind: input, shape index: {}]
  %s4 = inlined_call_operand.vmem [shape: f32[1,64], index: 4, kind: input, shape index: {}]
  %s5 = inlined_call_operand.vmem [shape: bf16[128,256], index: 5, kind: output, shape index: {}]
  %s6 = sld [smem:[#allocation0]]
  $region30: #{_lambda_.6} parent=0
    _
  %s8 = ssub.s32 1, %s6
  %s9 = scalar_select 0, %s8, %s6
  // Predicated region
  $region2: #{_lambda_.6} parent=0 // pred_check
    _
  $region3: #{_lambda_.6} parent=0 // pred_check_branch
    %11 = sbr.rel (0) target = $region5
  $region4: #{_lambda_.6} parent=0 // pred_region
    _
  $region5: #{_lambda_.6} parent=0 // pred_fallthru
    _
  // Predicated region
  $region6: #{_lambda_.6} parent=0 // pred_check
    _
  $region7: #{_lambda_.6} parent=0 // pred_check_branch
    %13 = sbr.rel (0) target = $region9
  $region8: #{_lambda_.6} parent=0 // pred_region
    _
  $region9: #{_lambda_.6} parent=0 // pred_fallthru
    _
  // Predicated region
  $region10: #{_lambda_.6} parent=0 // pred_check
    _
  $region11: #{_lambda_.6} parent=0 // pred_check_branch
    %15 = sbr.rel (0) target = $region13
  $region12: #{_lambda_.6} parent=0 // pred_region
    _
  $region13: #{_lambda_.6} parent=0 // pred_fallthru
    _
  // Predicated region
  $region14: #{_lambda_.6} parent=0 // pred_check
    _
  $region15: #{_lambda_.6} parent=0 // pred_check_branch
    %17 = sbr.rel (0) target = $region17
  $region16: #{_lambda_.6} parent=0 // pred_region
    _
  $region17: #{_lambda_.6} parent=0 // pred_fallthru
    _
  // Predicated region
  $region18: #{_lambda_.6} parent=0 // pred_check
    _
  $region19: #{_lambda_.6} parent=0 // pred_check_branch
    %19 = sbr.rel (0) target = $region21
  $region20: #{_lambda_.6} parent=0 // pred_region
    _
  $region21: #{_lambda_.6} parent=0 // pred_fallthru
    _
  %v20 = vld [vmem:[%s0] sm:$0xff]
  %v21 = vld [vmem:[%s0 + $0x8] sm:$0xff]
  %v22 = vld [vmem:[%s0 + $0x10] sm:$0xff]
  %v23 = vld [vmem:[%s0 + $0x18] sm:$0xff]
  %v24 = vld [vmem:[%s0 + $0x20] sm:$0xf]
  %v25 = vld [vmem:[%s0 + $0x24] sm:$0xff]
  %v26 = vld [vmem:[%s0 + $0x2c] sm:$0xff]
  %v27 = vld [vmem:[%s0 + $0x34] sm:$0xff]
  %v28 = vld [vmem:[%s0 + $0x3c] sm:$0xff]
  %v29 = vld [vmem:[%s0 + $0x44] sm:$0xf]
  %v30 = vld [vmem:[%s0 + $0x48] sm:$0xff]
  %v31 = vld [vmem:[%s0 + $0x50] sm:$0xff]
  %v32 = vld [vmem:[%s0 + $0x58] sm:$0xff]
  %v33 = vld [vmem:[%s0 + $0x60] sm:$0xff]
  %v34 = vld [vmem:[%s0 + $0x68] sm:$0xf]
  %v35 = vld [vmem:[%s0 + $0x6c] sm:$0xff]
  %v36 = vld [vmem:[%s0 + $0x74] sm:$0xff]
  %v37 = vld [vmem:[%s0 + $0x7c] sm:$0xff]
  %v38 = vld [vmem:[%s0 + $0x84] sm:$0xff]
  %v39 = vld [vmem:[%s0 + $0x8c] sm:$0xf]
  %v40 = vld [vmem:[%s0 + $0x90] sm:$0xff]
  %v41 = vld [vmem:[%s0 + $0x98] sm:$0xff]
  %v42 = vld [vmem:[%s0 + $0xa0] sm:$0xff]
  %v43 = vld [vmem:[%s0 + $0xa8] sm:$0xff]
  %v44 = vld [vmem:[%s0 + $0xb0] sm:$0xf]
  %v45 = vld [vmem:[%s0 + $0xb4] sm:$0xff]
  %v46 = vld [vmem:[%s0 + $0xbc] sm:$0xff]
  %v47 = vld [vmem:[%s0 + $0xc4] sm:$0xff]
  %v48 = vld [vmem:[%s0 + $0xcc] sm:$0xff]
  %v49 = vld [vmem:[%s0 + $0xd4] sm:$0xf]
  %v50 = vld [vmem:[%s0 + $0xd8] sm:$0xff]
  %v51 = vld [vmem:[%s0 + $0xe0] sm:$0xff]
  %v52 = vld [vmem:[%s0 + $0xe8] sm:$0xff]
  %v53 = vld [vmem:[%s0 + $0xf0] sm:$0xff]
  %v54 = vld [vmem:[%s0 + $0xf8] sm:$0xf]
  %v55 = vld [vmem:[%s0 + $0xfc] sm:$0xff]
  %v56 = vld [vmem:[%s0 + $0x104] sm:$0xff]
  %v57 = vld [vmem:[%s0 + $0x10c] sm:$0xff]
  %v58 = vld [vmem:[%s0 + $0x114] sm:$0xff]
  %v59 = vld [vmem:[%s0 + $0x11c] sm:$0xf]
  %v60 = vld [vmem:[%s0 + $0x120] sm:$0xff]
  %v61 = vld [vmem:[%s0 + $0x128] sm:$0xff]
  %v62 = vld [vmem:[%s0 + $0x130] sm:$0xff]
  %v63 = vld [vmem:[%s0 + $0x138] sm:$0xff]
  %v64 = vld [vmem:[%s0 + $0x140] sm:$0xf]
  %v65 = vld [vmem:[%s0 + $0x144] sm:$0xff]
  %v66 = vld [vmem:[%s0 + $0x14c] sm:$0xff]
  %v67 = vld [vmem:[%s0 + $0x154] sm:$0xff]
  %v68 = vld [vmem:[%s0 + $0x15c] sm:$0xff]
  %v69 = vld [vmem:[%s0 + $0x164] sm:$0xf]
  %v70 = vld [vmem:[%s0 + $0x168] sm:$0xff]
  %v71 = vld [vmem:[%s0 + $0x170] sm:$0xff]
  %v72 = vld [vmem:[%s0 + $0x178] sm:$0xff]
  %v73 = vld [vmem:[%s0 + $0x180] sm:$0xff]
  %v74 = vld [vmem:[%s0 + $0x188] sm:$0xf]
  %v75 = vld [vmem:[%s0 + $0x18c] sm:$0xff]
  %v76 = vld [vmem:[%s0 + $0x194] sm:$0xff]
  %v77 = vld [vmem:[%s0 + $0x19c] sm:$0xff]
  %v78 = vld [vmem:[%s0 + $0x1a4] sm:$0xff]
  %v79 = vld [vmem:[%s0 + $0x1ac] sm:$0xf]
  %v80 = vld [vmem:[%s0 + $0x1b0] sm:$0xff]
  %v81 = vld [vmem:[%s0 + $0x1b8] sm:$0xff]
  %v82 = vld [vmem:[%s0 + $0x1c0] sm:$0xff]
  %v83 = vld [vmem:[%s0 + $0x1c8] sm:$0xff]
  %v84 = vld [vmem:[%s0 + $0x1d0] sm:$0xf]
  %v85 = vld [vmem:[%s0 + $0x1d4] sm:$0xff]
  %v86 = vld [vmem:[%s0 + $0x1dc] sm:$0xff]
  %v87 = vld [vmem:[%s0 + $0x1e4] sm:$0xff]
  %v88 = vld [vmem:[%s0 + $0x1ec] sm:$0xff]
  %v89 = vld [vmem:[%s0 + $0x1f4] sm:$0xf]
  %v90 = vld [vmem:[%s0 + $0x1f8] sm:$0xff]
  %v91 = vld [vmem:[%s0 + $0x200] sm:$0xff]
  %v92 = vld [vmem:[%s0 + $0x208] sm:$0xff]
  %v93 = vld [vmem:[%s0 + $0x210] sm:$0xff]
  %v94 = vld [vmem:[%s0 + $0x218] sm:$0xf]
  %v95 = vld [vmem:[%s0 + $0x21c] sm:$0xff]
  %v96 = vld [vmem:[%s0 + $0x224] sm:$0xff]
  %v97 = vld [vmem:[%s0 + $0x22c] sm:$0xff]
  %v98 = vld [vmem:[%s0 + $0x234] sm:$0xff]
  %v99 = vld [vmem:[%s0 + $0x23c] sm:$0xf]
  %v100 = vld [vmem:[%s1] sm:$0xff]
  %v101 = vld [vmem:[%s1 + $0x8] sm:$0xff]
  %v102 = vld [vmem:[%s1 + $0x10] sm:$0xff]
  %v103 = vld [vmem:[%s1 + $0x18] sm:$0xff]
  %v104 = vld [vmem:[%s1 + $0x20] sm:$0xff]
  %v105 = vld [vmem:[%s1 + $0x28] sm:$0xff]
  %v106 = vld [vmem:[%s1 + $0x30] sm:$0xff]
  %v107 = vld [vmem:[%s1 + $0x38] sm:$0xff]
  %v108 = vld [vmem:[%s1 + $0x40] sm:$0xff]
  %v109 = vld [vmem:[%s1 + $0x48] sm:$0xff]
  %v110 = vld [vmem:[%s1 + $0x50] sm:$0xff]
  %v111 = vld [vmem:[%s1 + $0x58] sm:$0xff]
  %v112 = vld [vmem:[%s1 + $0x60] sm:$0xff]
  %v113 = vld [vmem:[%s1 + $0x68] sm:$0xff]
  %v114 = vld [vmem:[%s1 + $0x70] sm:$0xff]
  %v115 = vld [vmem:[%s1 + $0x78] sm:$0xff]
  %v116 = vld [vmem:[%s1 + $0x80] sm:$0xff]
  %v117 = vld [vmem:[%s1 + $0x88] sm:$0xff]
  %v118 = vld [vmem:[%s1 + $0x90] sm:$0xff]
  %v119 = vld [vmem:[%s1 + $0x98] sm:$0xff]
  %v120 = vld [vmem:[%s1 + $0xa0] sm:$0xff]
  %v121 = vld [vmem:[%s1 + $0xa8] sm:$0xff]
  %v122 = vld [vmem:[%s1 + $0xb0] sm:$0xff]
  %v123 = vld [vmem:[%s1 + $0xb8] sm:$0xff]
  %v124 = vld [vmem:[%s1 + $0xc0] sm:$0xff]
  %v125 = vld [vmem:[%s1 + $0xc8] sm:$0xff]
  %v126 = vld [vmem:[%s1 + $0xd0] sm:$0xff]
  %v127 = vld [vmem:[%s1 + $0xd8] sm:$0xff]
  %v128 = vld [vmem:[%s1 + $0xe0] sm:$0xff]
  %v129 = vld [vmem:[%s1 + $0xe8] sm:$0xff]
  %v130 = vld [vmem:[%s1 + $0xf0] sm:$0xff]
  %v131 = vld [vmem:[%s1 + $0xf8] sm:$0xff]
  %v132 = vld [vmem:[%s1 + $0x100] sm:$0xff]
  %v133 = vld [vmem:[%s1 + $0x108] sm:$0xff]
  %v134 = vld [vmem:[%s1 + $0x110] sm:$0xff]
  %v135 = vld [vmem:[%s1 + $0x118] sm:$0xff]
  %v136 = vld [vmem:[%s1 + $0x120] sm:$0xff]
  %v137 = vld [vmem:[%s1 + $0x128] sm:$0xff]
  %v138 = vld [vmem:[%s1 + $0x130] sm:$0xff]
  %v139 = vld [vmem:[%s1 + $0x138] sm:$0xff]
  %v140 = vld [vmem:[%s1 + $0x140] sm:$0xff]
  %v141 = vld [vmem:[%s1 + $0x148] sm:$0xff]
  %v142 = vld [vmem:[%s1 + $0x150] sm:$0xff]
  %v143 = vld [vmem:[%s1 + $0x158] sm:$0xff]
  %v144 = vld [vmem:[%s1 + $0x160] sm:$0xff]
  %v145 = vld [vmem:[%s1 + $0x168] sm:$0xff]
  %v146 = vld [vmem:[%s1 + $0x170] sm:$0xff]
  %v147 = vld [vmem:[%s1 + $0x178] sm:$0xff]
  %v148 = vld [vmem:[%s1 + $0x180] sm:$0xff]
  %v149 = vld [vmem:[%s1 + $0x188] sm:$0xff]
  %v150 = vld [vmem:[%s1 + $0x190] sm:$0xff]
  %v151 = vld [vmem:[%s1 + $0x198] sm:$0xff]
  %v152 = vld [vmem:[%s1 + $0x1a0] sm:$0xff]
  %v153 = vld [vmem:[%s1 + $0x1a8] sm:$0xff]
  %v154 = vld [vmem:[%s1 + $0x1b0] sm:$0xff]
  %v155 = vld [vmem:[%s1 + $0x1b8] sm:$0xff]
  %v156 = vld [vmem:[%s1 + $0x1c0] sm:$0xff]
  %v157 = vld [vmem:[%s1 + $0x1c8] sm:$0xff]
  %v158 = vld [vmem:[%s1 + $0x1d0] sm:$0xff]
  %v159 = vld [vmem:[%s1 + $0x1d8] sm:$0xff]
  %v160 = vld [vmem:[%s1 + $0x1e0] sm:$0xff]
  %v161 = vld [vmem:[%s1 + $0x1e8] sm:$0xff]
  %v162 = vld [vmem:[%s1 + $0x1f0] sm:$0xff]
  %v163 = vld [vmem:[%s1 + $0x1f8] sm:$0xff]
  %v164 = vld [vmem:[%s1 + $0x200] sm:$0xff]
  %v165 = vld [vmem:[%s1 + $0x208] sm:$0xff]
  %v166 = vld [vmem:[%s1 + $0x210] sm:$0xff]
  %v167 = vld [vmem:[%s1 + $0x218] sm:$0xff]
  %v168 = vld [vmem:[%s1 + $0x220] sm:$0xff]
  %v169 = vld [vmem:[%s1 + $0x228] sm:$0xff]
  %v170 = vld [vmem:[%s1 + $0x230] sm:$0xff]
  %v171 = vld [vmem:[%s1 + $0x238] sm:$0xff]
  %v172 = vld [vmem:[%s1 + $0x240] sm:$0xff]
  %v173 = vld [vmem:[%s1 + $0x248] sm:$0xff]
  %v174 = vld [vmem:[%s1 + $0x250] sm:$0xff]
  %v175 = vld [vmem:[%s1 + $0x258] sm:$0xff]
  %v176 = vld [vmem:[%s1 + $0x260] sm:$0xff]
  %v177 = vld [vmem:[%s1 + $0x268] sm:$0xff]
  %v178 = vld [vmem:[%s1 + $0x270] sm:$0xff]
  %v179 = vld [vmem:[%s1 + $0x278] sm:$0xff]
  %v180 = vld [vmem:[%s1 + $0x280] sm:$0xff]
  %v181 = vld [vmem:[%s1 + $0x288] sm:$0xff]
  %v182 = vld [vmem:[%s1 + $0x290] sm:$0xff]
  %v183 = vld [vmem:[%s1 + $0x298] sm:$0xff]
  %v184 = vld [vmem:[%s1 + $0x2a0] sm:$0xff]
  %v185 = vld [vmem:[%s1 + $0x2a8] sm:$0xff]
  %v186 = vld [vmem:[%s1 + $0x2b0] sm:$0xff]
  %v187 = vld [vmem:[%s1 + $0x2b8] sm:$0xff]
  %v188 = vld [vmem:[%s1 + $0x2c0] sm:$0xff]
  %v189 = vld [vmem:[%s1 + $0x2c8] sm:$0xff]
  %v190 = vld [vmem:[%s1 + $0x2d0] sm:$0xff]
  %v191 = vld [vmem:[%s1 + $0x2d8] sm:$0xff]
  %v192 = vld [vmem:[%s1 + $0x2e0] sm:$0xff]
  %v193 = vld [vmem:[%s1 + $0x2e8] sm:$0xff]
  %v194 = vld [vmem:[%s1 + $0x2f0] sm:$0xff]
  %v195 = vld [vmem:[%s1 + $0x2f8] sm:$0xff]
  %v196 = vld [vmem:[%s1 + $0x300] sm:$0xff]
  %v197 = vld [vmem:[%s1 + $0x308] sm:$0xff]
  %v198 = vld [vmem:[%s1 + $0x310] sm:$0xff]
  %v199 = vld [vmem:[%s1 + $0x318] sm:$0xff]
  %v200 = vld [vmem:[%s1 + $0x320] sm:$0xff]
  %v201 = vld [vmem:[%s1 + $0x328] sm:$0xff]
  %v202 = vld [vmem:[%s1 + $0x330] sm:$0xff]
  %v203 = vld [vmem:[%s1 + $0x338] sm:$0xff]
  %v204 = vld [vmem:[%s1 + $0x340] sm:$0xff]
  %v205 = vld [vmem:[%s1 + $0x348] sm:$0xff]
  %v206 = vld [vmem:[%s1 + $0x350] sm:$0xff]
  %v207 = vld [vmem:[%s1 + $0x358] sm:$0xff]
  %v208 = vld [vmem:[%s1 + $0x360] sm:$0xff]
  %v209 = vld [vmem:[%s1 + $0x368] sm:$0xff]
  %v210 = vld [vmem:[%s1 + $0x370] sm:$0xff]
  %v211 = vld [vmem:[%s1 + $0x378] sm:$0xff]
  %v212 = vld [vmem:[%s1 + $0x380] sm:$0xff]
  %v213 = vld [vmem:[%s1 + $0x388] sm:$0xff]
  %v214 = vld [vmem:[%s1 + $0x390] sm:$0xff]
  %v215 = vld [vmem:[%s1 + $0x398] sm:$0xff]
  %v216 = vld [vmem:[%s1 + $0x3a0] sm:$0xff]
  %v217 = vld [vmem:[%s1 + $0x3a8] sm:$0xff]
  %v218 = vld [vmem:[%s1 + $0x3b0] sm:$0xff]
  %v219 = vld [vmem:[%s1 + $0x3b8] sm:$0xff]
  %v220 = vld [vmem:[%s1 + $0x3c0] sm:$0xff]
  %v221 = vld [vmem:[%s1 + $0x3c8] sm:$0xff]
  %v222 = vld [vmem:[%s1 + $0x3d0] sm:$0xff]
  %v223 = vld [vmem:[%s1 + $0x3d8] sm:$0xff]
  %v224 = vld [vmem:[%s1 + $0x3e0] sm:$0xff]
  %v225 = vld [vmem:[%s1 + $0x3e8] sm:$0xff]
  %v226 = vld [vmem:[%s1 + $0x3f0] sm:$0xff]
  %v227 = vld [vmem:[%s1 + $0x3f8] sm:$0xff]
  %v228 = vld [vmem:[%s1 + $0x400] sm:$0xff]
  %v229 = vld [vmem:[%s1 + $0x408] sm:$0xff]
  %v230 = vld [vmem:[%s1 + $0x410] sm:$0xff]
  %v231 = vld [vmem:[%s1 + $0x418] sm:$0xff]
  %v232 = vld [vmem:[%s1 + $0x420] sm:$0xff]
  %v233 = vld [vmem:[%s1 + $0x428] sm:$0xff]
  %v234 = vld [vmem:[%s1 + $0x430] sm:$0xff]
  %v235 = vld [vmem:[%s1 + $0x438] sm:$0xff]
  %v236 = vld [vmem:[%s1 + $0x440] sm:$0xff]
  %v237 = vld [vmem:[%s1 + $0x448] sm:$0xff]
  %v238 = vld [vmem:[%s1 + $0x450] sm:$0xff]
  %v239 = vld [vmem:[%s1 + $0x458] sm:$0xff]
  %v240 = vld [vmem:[%s1 + $0x460] sm:$0xff]
  %v241 = vld [vmem:[%s1 + $0x468] sm:$0xff]
  %v242 = vld [vmem:[%s1 + $0x470] sm:$0xff]
  %v243 = vld [vmem:[%s1 + $0x478] sm:$0xff]
  %v244 = vld [vmem:[%s2] sm:$0x3]
  %v246 = vperm.slane %v244, 0
  %v247 = vperm.slane %v244, 1
  %v330 = vunpack.c.l.b16 %v20
  %v331 = vunpack.c.h.b16 %v20
  %v332 = vunpack.c.l.b16 %v21
  %v333 = vunpack.c.h.b16 %v21
  %v334 = vunpack.c.l.b16 %v22
  %v335 = vunpack.c.h.b16 %v22
  %v336 = vunpack.c.l.b16 %v23
  %v337 = vunpack.c.h.b16 %v23
  %v338 = vunpack.c.l.b16 %v24
  %v339 = vunpack.c.l.b16 %v25
  %v340 = vunpack.c.h.b16 %v25
  %v341 = vunpack.c.l.b16 %v26
  %v342 = vunpack.c.h.b16 %v26
  %v343 = vunpack.c.l.b16 %v27
  %v344 = vunpack.c.h.b16 %v27
  %v345 = vunpack.c.l.b16 %v28
  %v346 = vunpack.c.h.b16 %v28
  %v347 = vunpack.c.l.b16 %v29
  %v348 = vunpack.c.l.b16 %v30
  %v349 = vunpack.c.h.b16 %v30
  %v350 = vunpack.c.l.b16 %v31
  %v351 = vunpack.c.h.b16 %v31
  %v352 = vunpack.c.l.b16 %v32
  %v353 = vunpack.c.h.b16 %v32
  %v354 = vunpack.c.l.b16 %v33
  %v355 = vunpack.c.h.b16 %v33
  %v356 = vunpack.c.l.b16 %v34
  %v357 = vunpack.c.l.b16 %v35
  %v358 = vunpack.c.h.b16 %v35
  %v359 = vunpack.c.l.b16 %v36
  %v360 = vunpack.c.h.b16 %v36
  %v361 = vunpack.c.l.b16 %v37
  %v362 = vunpack.c.h.b16 %v37
  %v363 = vunpack.c.l.b16 %v38
  %v364 = vunpack.c.h.b16 %v38
  %v365 = vunpack.c.l.b16 %v39
  %v366 = vunpack.c.l.b16 %v40
  %v367 = vunpack.c.h.b16 %v40
  %v368 = vunpack.c.l.b16 %v41
  %v369 = vunpack.c.h.b16 %v41
  %v370 = vunpack.c.l.b16 %v42
  %v371 = vunpack.c.h.b16 %v42
  %v372 = vunpack.c.l.b16 %v43
  %v373 = vunpack.c.h.b16 %v43
  %v374 = vunpack.c.l.b16 %v44
  %v375 = vunpack.c.l.b16 %v45
  %v376 = vunpack.c.h.b16 %v45
  %v377 = vunpack.c.l.b16 %v46
  %v378 = vunpack.c.h.b16 %v46
  %v379 = vunpack.c.l.b16 %v47
  %v380 = vunpack.c.h.b16 %v47
  %v381 = vunpack.c.l.b16 %v48
  %v382 = vunpack.c.h.b16 %v48
  %v383 = vunpack.c.l.b16 %v49
  %v384 = vunpack.c.l.b16 %v50
  %v385 = vunpack.c.h.b16 %v50
  %v386 = vunpack.c.l.b16 %v51
  %v387 = vunpack.c.h.b16 %v51
  %v388 = vunpack.c.l.b16 %v52
  %v389 = vunpack.c.h.b16 %v52
  %v390 = vunpack.c.l.b16 %v53
  %v391 = vunpack.c.h.b16 %v53
  %v392 = vunpack.c.l.b16 %v54
  %v393 = vunpack.c.l.b16 %v55
  %v394 = vunpack.c.h.b16 %v55
  %v395 = vunpack.c.l.b16 %v56
  %v396 = vunpack.c.h.b16 %v56
  %v397 = vunpack.c.l.b16 %v57
  %v398 = vunpack.c.h.b16 %v57
  %v399 = vunpack.c.l.b16 %v58
  %v400 = vunpack.c.h.b16 %v58
  %v401 = vunpack.c.l.b16 %v59
  %v402 = vunpack.c.l.b16 %v60
  %v403 = vunpack.c.h.b16 %v60
  %v404 = vunpack.c.l.b16 %v61
  %v405 = vunpack.c.h.b16 %v61
  %v406 = vunpack.c.l.b16 %v62
  %v407 = vunpack.c.h.b16 %v62
  %v408 = vunpack.c.l.b16 %v63
  %v409 = vunpack.c.h.b16 %v63
  %v410 = vunpack.c.l.b16 %v64
  %v411 = vunpack.c.l.b16 %v65
  %v412 = vunpack.c.h.b16 %v65
  %v413 = vunpack.c.l.b16 %v66
  %v414 = vunpack.c.h.b16 %v66
  %v415 = vunpack.c.l.b16 %v67
  %v416 = vunpack.c.h.b16 %v67
  %v417 = vunpack.c.l.b16 %v68
  %v418 = vunpack.c.h.b16 %v68
  %v419 = vunpack.c.l.b16 %v69
  %v420 = vunpack.c.l.b16 %v70
  %v421 = vunpack.c.h.b16 %v70
  %v422 = vunpack.c.l.b16 %v71
  %v423 = vunpack.c.h.b16 %v71
  %v424 = vunpack.c.l.b16 %v72
  %v425 = vunpack.c.h.b16 %v72
  %v426 = vunpack.c.l.b16 %v73
  %v427 = vunpack.c.h.b16 %v73
  %v428 = vunpack.c.l.b16 %v74
  %v429 = vunpack.c.l.b16 %v75
  %v430 = vunpack.c.h.b16 %v75
  %v431 = vunpack.c.l.b16 %v76
  %v432 = vunpack.c.h.b16 %v76
  %v433 = vunpack.c.l.b16 %v77
  %v434 = vunpack.c.h.b16 %v77
  %v435 = vunpack.c.l.b16 %v78
  %v436 = vunpack.c.h.b16 %v78
  %v437 = vunpack.c.l.b16 %v79
  %v438 = vunpack.c.l.b16 %v80
  %v439 = vunpack.c.h.b16 %v80
  %v440 = vunpack.c.l.b16 %v81
  %v441 = vunpack.c.h.b16 %v81
  %v442 = vunpack.c.l.b16 %v82
  %v443 = vunpack.c.h.b16 %v82
  %v444 = vunpack.c.l.b16 %v83
  %v445 = vunpack.c.h.b16 %v83
  %v446 = vunpack.c.l.b16 %v84
  %v447 = vunpack.c.l.b16 %v85
  %v448 = vunpack.c.h.b16 %v85
  %v449 = vunpack.c.l.b16 %v86
  %v450 = vunpack.c.h.b16 %v86
  %v451 = vunpack.c.l.b16 %v87
  %v452 = vunpack.c.h.b16 %v87
  %v453 = vunpack.c.l.b16 %v88
  %v454 = vunpack.c.h.b16 %v88
  %v455 = vunpack.c.l.b16 %v89
  %v456 = vunpack.c.l.b16 %v90
  %v457 = vunpack.c.h.b16 %v90
  %v458 = vunpack.c.l.b16 %v91
  %v459 = vunpack.c.h.b16 %v91
  %v460 = vunpack.c.l.b16 %v92
  %v461 = vunpack.c.h.b16 %v92
  %v462 = vunpack.c.l.b16 %v93
  %v463 = vunpack.c.h.b16 %v93
  %v464 = vunpack.c.l.b16 %v94
  %v465 = vunpack.c.l.b16 %v95
  %v466 = vunpack.c.h.b16 %v95
  %v467 = vunpack.c.l.b16 %v96
  %v468 = vunpack.c.h.b16 %v96
  %v469 = vunpack.c.l.b16 %v97
  %v470 = vunpack.c.h.b16 %v97
  %v471 = vunpack.c.l.b16 %v98
  %v472 = vunpack.c.h.b16 %v98
  %v473 = vunpack.c.l.b16 %v99
  %v474 = vpack.c.b16 %v339, %v330
  %v475 = vpack.c.b16 %v340, %v331
  %v476 = vpack.c.b16 %v341, %v332
  %v477 = vpack.c.b16 %v342, %v333
  %v478 = vpack.c.b16 %v343, %v334
  %v479 = vpack.c.b16 %v344, %v335
  %v480 = vpack.c.b16 %v345, %v336
  %v481 = vpack.c.b16 %v346, %v337
  %v482 = vpack.c.b16 %v347, %v338
  %v483 = vpack.c.b16 %v357, %v348
  %v484 = vpack.c.b16 %v358, %v349
  %v485 = vpack.c.b16 %v359, %v350
  %v486 = vpack.c.b16 %v360, %v351
  %v487 = vpack.c.b16 %v361, %v352
  %v488 = vpack.c.b16 %v362, %v353
  %v489 = vpack.c.b16 %v363, %v354
  %v490 = vpack.c.b16 %v364, %v355
  %v491 = vpack.c.b16 %v365, %v356
  %v492 = vpack.c.b16 %v375, %v366
  %v493 = vpack.c.b16 %v376, %v367
  %v494 = vpack.c.b16 %v377, %v368
  %v495 = vpack.c.b16 %v378, %v369
  %v496 = vpack.c.b16 %v379, %v370
  %v497 = vpack.c.b16 %v380, %v371
  %v498 = vpack.c.b16 %v381, %v372
  %v499 = vpack.c.b16 %v382, %v373
  %v500 = vpack.c.b16 %v383, %v374
  %v501 = vpack.c.b16 %v393, %v384
  %v502 = vpack.c.b16 %v394, %v385
  %v503 = vpack.c.b16 %v395, %v386
  %v504 = vpack.c.b16 %v396, %v387
  %v505 = vpack.c.b16 %v397, %v388
  %v506 = vpack.c.b16 %v398, %v389
  %v507 = vpack.c.b16 %v399, %v390
  %v508 = vpack.c.b16 %v400, %v391
  %v509 = vpack.c.b16 %v401, %v392
  %v510 = vpack.c.b16 %v411, %v402
  %v511 = vpack.c.b16 %v412, %v403
  %v512 = vpack.c.b16 %v413, %v404
  %v513 = vpack.c.b16 %v414, %v405
  %v514 = vpack.c.b16 %v415, %v406
  %v515 = vpack.c.b16 %v416, %v407
  %v516 = vpack.c.b16 %v417, %v408
  %v517 = vpack.c.b16 %v418, %v409
  %v518 = vpack.c.b16 %v419, %v410
  %v519 = vpack.c.b16 %v429, %v420
  %v520 = vpack.c.b16 %v430, %v421
  %v521 = vpack.c.b16 %v431, %v422
  %v522 = vpack.c.b16 %v432, %v423
  %v523 = vpack.c.b16 %v433, %v424
  %v524 = vpack.c.b16 %v434, %v425
  %v525 = vpack.c.b16 %v435, %v426
  %v526 = vpack.c.b16 %v436, %v427
  %v527 = vpack.c.b16 %v437, %v428
  %v528 = vpack.c.b16 %v447, %v438
  %v529 = vpack.c.b16 %v448, %v439
  %v530 = vpack.c.b16 %v449, %v440
  %v531 = vpack.c.b16 %v450, %v441
  %v532 = vpack.c.b16 %v451, %v442
  %v533 = vpack.c.b16 %v452, %v443
  %v534 = vpack.c.b16 %v453, %v444
  %v535 = vpack.c.b16 %v454, %v445
  %v536 = vpack.c.b16 %v455, %v446
  %v537 = vpack.c.b16 %v465, %v456
  %v538 = vpack.c.b16 %v466, %v457
  %v539 = vpack.c.b16 %v467, %v458
  %v540 = vpack.c.b16 %v468, %v459
  %v541 = vpack.c.b16 %v469, %v460
  %v542 = vpack.c.b16 %v470, %v461
  %v543 = vpack.c.b16 %v471, %v462
  %v544 = vpack.c.b16 %v472, %v463
  %v545 = vpack.c.b16 %v473, %v464
  %v762 = vunpack.c.l.b16 %v100
  %v763 = vunpack.c.h.b16 %v100
  %v764 = vunpack.c.l.b16 %v101
  %v765 = vunpack.c.h.b16 %v101
  %v766 = vunpack.c.l.b16 %v102
  %v767 = vunpack.c.h.b16 %v102
  %v768 = vunpack.c.l.b16 %v103
  %v769 = vunpack.c.h.b16 %v103
  %v770 = vunpack.c.l.b16 %v104
  %v771 = vunpack.c.h.b16 %v104
  %v772 = vunpack.c.l.b16 %v105
  %v773 = vunpack.c.h.b16 %v105
  %v774 = vunpack.c.l.b16 %v106
  %v775 = vunpack.c.h.b16 %v106
  %v776 = vunpack.c.l.b16 %v107
  %v777 = vunpack.c.h.b16 %v107
  %v778 = vunpack.c.l.b16 %v108
  %v779 = vunpack.c.h.b16 %v108
  %v780 = vunpack.c.l.b16 %v109
  %v781 = vunpack.c.h.b16 %v109
  %v782 = vunpack.c.l.b16 %v110
  %v783 = vunpack.c.h.b16 %v110
  %v784 = vunpack.c.l.b16 %v111
  %v785 = vunpack.c.h.b16 %v111
  %v786 = vunpack.c.l.b16 %v112
  %v787 = vunpack.c.h.b16 %v112
  %v788 = vunpack.c.l.b16 %v113
  %v789 = vunpack.c.h.b16 %v113
  %v790 = vunpack.c.l.b16 %v114
  %v791 = vunpack.c.h.b16 %v114
  %v792 = vunpack.c.l.b16 %v115
  %v793 = vunpack.c.h.b16 %v115
  %v794 = vunpack.c.l.b16 %v116
  %v795 = vunpack.c.h.b16 %v116
  %v796 = vunpack.c.l.b16 %v117
  %v797 = vunpack.c.h.b16 %v117
  %v798 = vunpack.c.l.b16 %v118
  %v799 = vunpack.c.h.b16 %v118
  %v800 = vunpack.c.l.b16 %v119
  %v801 = vunpack.c.h.b16 %v119
  %v802 = vunpack.c.l.b16 %v120
  %v803 = vunpack.c.h.b16 %v120
  %v804 = vunpack.c.l.b16 %v121
  %v805 = vunpack.c.h.b16 %v121
  %v806 = vunpack.c.l.b16 %v122
  %v807 = vunpack.c.h.b16 %v122
  %v808 = vunpack.c.l.b16 %v123
  %v809 = vunpack.c.h.b16 %v123
  %v810 = vunpack.c.l.b16 %v124
  %v811 = vunpack.c.h.b16 %v124
  %v812 = vunpack.c.l.b16 %v125
  %v813 = vunpack.c.h.b16 %v125
  %v814 = vunpack.c.l.b16 %v126
  %v815 = vunpack.c.h.b16 %v126
  %v816 = vunpack.c.l.b16 %v127
  %v817 = vunpack.c.h.b16 %v127
  %v818 = vunpack.c.l.b16 %v128
  %v819 = vunpack.c.h.b16 %v128
  %v820 = vunpack.c.l.b16 %v129
  %v821 = vunpack.c.h.b16 %v129
  %v822 = vunpack.c.l.b16 %v130
  %v823 = vunpack.c.h.b16 %v130
  %v824 = vunpack.c.l.b16 %v131
  %v825 = vunpack.c.h.b16 %v131
  %v826 = vunpack.c.l.b16 %v132
  %v827 = vunpack.c.h.b16 %v132
  %v828 = vunpack.c.l.b16 %v133
  %v829 = vunpack.c.h.b16 %v133
  %v830 = vunpack.c.l.b16 %v134
  %v831 = vunpack.c.h.b16 %v134
  %v832 = vunpack.c.l.b16 %v135
  %v833 = vunpack.c.h.b16 %v135
  %v834 = vunpack.c.l.b16 %v136
  %v835 = vunpack.c.h.b16 %v136
  %v836 = vunpack.c.l.b16 %v137
  %v837 = vunpack.c.h.b16 %v137
  %v838 = vunpack.c.l.b16 %v138
  %v839 = vunpack.c.h.b16 %v138
  %v840 = vunpack.c.l.b16 %v139
  %v841 = vunpack.c.h.b16 %v139
  %v842 = vunpack.c.l.b16 %v140
  %v843 = vunpack.c.h.b16 %v140
  %v844 = vunpack.c.l.b16 %v141
  %v845 = vunpack.c.h.b16 %v141
  %v846 = vunpack.c.l.b16 %v142
  %v847 = vunpack.c.h.b16 %v142
  %v848 = vunpack.c.l.b16 %v143
  %v849 = vunpack.c.h.b16 %v143
  %v850 = vunpack.c.l.b16 %v144
  %v851 = vunpack.c.h.b16 %v144
  %v852 = vunpack.c.l.b16 %v145
  %v853 = vunpack.c.h.b16 %v145
  %v854 = vunpack.c.l.b16 %v146
  %v855 = vunpack.c.h.b16 %v146
  %v856 = vunpack.c.l.b16 %v147
  %v857 = vunpack.c.h.b16 %v147
  %v858 = vunpack.c.l.b16 %v148
  %v859 = vunpack.c.h.b16 %v148
  %v860 = vunpack.c.l.b16 %v149
  %v861 = vunpack.c.h.b16 %v149
  %v862 = vunpack.c.l.b16 %v150
  %v863 = vunpack.c.h.b16 %v150
  %v864 = vunpack.c.l.b16 %v151
  %v865 = vunpack.c.h.b16 %v151
  %v866 = vunpack.c.l.b16 %v152
  %v867 = vunpack.c.h.b16 %v152
  %v868 = vunpack.c.l.b16 %v153
  %v869 = vunpack.c.h.b16 %v153
  %v870 = vunpack.c.l.b16 %v154
  %v871 = vunpack.c.h.b16 %v154
  %v872 = vunpack.c.l.b16 %v155
  %v873 = vunpack.c.h.b16 %v155
  %v874 = vunpack.c.l.b16 %v156
  %v875 = vunpack.c.h.b16 %v156
  %v876 = vunpack.c.l.b16 %v157
  %v877 = vunpack.c.h.b16 %v157
  %v878 = vunpack.c.l.b16 %v158
  %v879 = vunpack.c.h.b16 %v158
  %v880 = vunpack.c.l.b16 %v159
  %v881 = vunpack.c.h.b16 %v159
  %v882 = vunpack.c.l.b16 %v160
  %v883 = vunpack.c.h.b16 %v160
  %v884 = vunpack.c.l.b16 %v161
  %v885 = vunpack.c.h.b16 %v161
  %v886 = vunpack.c.l.b16 %v162
  %v887 = vunpack.c.h.b16 %v162
  %v888 = vunpack.c.l.b16 %v163
  %v889 = vunpack.c.h.b16 %v163
  %v890 = vunpack.c.l.b16 %v164
  %v891 = vunpack.c.h.b16 %v164
  %v892 = vunpack.c.l.b16 %v165
  %v893 = vunpack.c.h.b16 %v165
  %v894 = vunpack.c.l.b16 %v166
  %v895 = vunpack.c.h.b16 %v166
  %v896 = vunpack.c.l.b16 %v167
  %v897 = vunpack.c.h.b16 %v167
  %v898 = vunpack.c.l.b16 %v168
  %v899 = vunpack.c.h.b16 %v168
  %v900 = vunpack.c.l.b16 %v169
  %v901 = vunpack.c.h.b16 %v169
  %v902 = vunpack.c.l.b16 %v170
  %v903 = vunpack.c.h.b16 %v170
  %v904 = vunpack.c.l.b16 %v171
  %v905 = vunpack.c.h.b16 %v171
  %v906 = vunpack.c.l.b16 %v172
  %v907 = vunpack.c.h.b16 %v172
  %v908 = vunpack.c.l.b16 %v173
  %v909 = vunpack.c.h.b16 %v173
  %v910 = vunpack.c.l.b16 %v174
  %v911 = vunpack.c.h.b16 %v174
  %v912 = vunpack.c.l.b16 %v175
  %v913 = vunpack.c.h.b16 %v175
  %v914 = vunpack.c.l.b16 %v176
  %v915 = vunpack.c.h.b16 %v176
  %v916 = vunpack.c.l.b16 %v177
  %v917 = vunpack.c.h.b16 %v177
  %v918 = vunpack.c.l.b16 %v178
  %v919 = vunpack.c.h.b16 %v178
  %v920 = vunpack.c.l.b16 %v179
  %v921 = vunpack.c.h.b16 %v179
  %v922 = vunpack.c.l.b16 %v180
  %v923 = vunpack.c.h.b16 %v180
  %v924 = vunpack.c.l.b16 %v181
  %v925 = vunpack.c.h.b16 %v181
  %v926 = vunpack.c.l.b16 %v182
  %v927 = vunpack.c.h.b16 %v182
  %v928 = vunpack.c.l.b16 %v183
  %v929 = vunpack.c.h.b16 %v183
  %v930 = vunpack.c.l.b16 %v184
  %v931 = vunpack.c.h.b16 %v184
  %v932 = vunpack.c.l.b16 %v185
  %v933 = vunpack.c.h.b16 %v185
  %v934 = vunpack.c.l.b16 %v186
  %v935 = vunpack.c.h.b16 %v186
  %v936 = vunpack.c.l.b16 %v187
  %v937 = vunpack.c.h.b16 %v187
  %v938 = vunpack.c.l.b16 %v188
  %v939 = vunpack.c.h.b16 %v188
  %v940 = vunpack.c.l.b16 %v189
  %v941 = vunpack.c.h.b16 %v189
  %v942 = vunpack.c.l.b16 %v190
  %v943 = vunpack.c.h.b16 %v190
  %v944 = vunpack.c.l.b16 %v191
  %v945 = vunpack.c.h.b16 %v191
  %v946 = vunpack.c.l.b16 %v192
  %v947 = vunpack.c.h.b16 %v192
  %v948 = vunpack.c.l.b16 %v193
  %v949 = vunpack.c.h.b16 %v193
  %v950 = vunpack.c.l.b16 %v194
  %v951 = vunpack.c.h.b16 %v194
  %v952 = vunpack.c.l.b16 %v195
  %v953 = vunpack.c.h.b16 %v195
  %v954 = vunpack.c.l.b16 %v196
  %v955 = vunpack.c.h.b16 %v196
  %v956 = vunpack.c.l.b16 %v197
  %v957 = vunpack.c.h.b16 %v197
  %v958 = vunpack.c.l.b16 %v198
  %v959 = vunpack.c.h.b16 %v198
  %v960 = vunpack.c.l.b16 %v199
  %v961 = vunpack.c.h.b16 %v199
  %v962 = vunpack.c.l.b16 %v200
  %v963 = vunpack.c.h.b16 %v200
  %v964 = vunpack.c.l.b16 %v201
  %v965 = vunpack.c.h.b16 %v201
  %v966 = vunpack.c.l.b16 %v202
  %v967 = vunpack.c.h.b16 %v202
  %v968 = vunpack.c.l.b16 %v203
  %v969 = vunpack.c.h.b16 %v203
  %v970 = vunpack.c.l.b16 %v204
  %v971 = vunpack.c.h.b16 %v204
  %v972 = vunpack.c.l.b16 %v205
  %v973 = vunpack.c.h.b16 %v205
  %v974 = vunpack.c.l.b16 %v206
  %v975 = vunpack.c.h.b16 %v206
  %v976 = vunpack.c.l.b16 %v207
  %v977 = vunpack.c.h.b16 %v207
  %v978 = vunpack.c.l.b16 %v208
  %v979 = vunpack.c.h.b16 %v208
  %v980 = vunpack.c.l.b16 %v209
  %v981 = vunpack.c.h.b16 %v209
  %v982 = vunpack.c.l.b16 %v210
  %v983 = vunpack.c.h.b16 %v210
  %v984 = vunpack.c.l.b16 %v211
  %v985 = vunpack.c.h.b16 %v211
  %v986 = vunpack.c.l.b16 %v212
  %v987 = vunpack.c.h.b16 %v212
  %v988 = vunpack.c.l.b16 %v213
  %v989 = vunpack.c.h.b16 %v213
  %v990 = vunpack.c.l.b16 %v214
  %v991 = vunpack.c.h.b16 %v214
  %v992 = vunpack.c.l.b16 %v215
  %v993 = vunpack.c.h.b16 %v215
  %v994 = vunpack.c.l.b16 %v216
  %v995 = vunpack.c.h.b16 %v216
  %v996 = vunpack.c.l.b16 %v217
  %v997 = vunpack.c.h.b16 %v217
  %v998 = vunpack.c.l.b16 %v218
  %v999 = vunpack.c.h.b16 %v218
  %v1000 = vunpack.c.l.b16 %v219
  %v1001 = vunpack.c.h.b16 %v219
  %v1002 = vunpack.c.l.b16 %v220
  %v1003 = vunpack.c.h.b16 %v220
  %v1004 = vunpack.c.l.b16 %v221
  %v1005 = vunpack.c.h.b16 %v221
  %v1006 = vunpack.c.l.b16 %v222
  %v1007 = vunpack.c.h.b16 %v222
  %v1008 = vunpack.c.l.b16 %v223
  %v1009 = vunpack.c.h.b16 %v223
  %v1010 = vunpack.c.l.b16 %v224
  %v1011 = vunpack.c.h.b16 %v224
  %v1012 = vunpack.c.l.b16 %v225
  %v1013 = vunpack.c.h.b16 %v225
  %v1014 = vunpack.c.l.b16 %v226
  %v1015 = vunpack.c.h.b16 %v226
  %v1016 = vunpack.c.l.b16 %v227
  %v1017 = vunpack.c.h.b16 %v227
  %v1018 = vunpack.c.l.b16 %v228
  %v1019 = vunpack.c.h.b16 %v228
  %v1020 = vunpack.c.l.b16 %v229
  %v1021 = vunpack.c.h.b16 %v229
  %v1022 = vunpack.c.l.b16 %v230
  %v1023 = vunpack.c.h.b16 %v230
  %v1024 = vunpack.c.l.b16 %v231
  %v1025 = vunpack.c.h.b16 %v231
  %v1026 = vunpack.c.l.b16 %v232
  %v1027 = vunpack.c.h.b16 %v232
  %v1028 = vunpack.c.l.b16 %v233
  %v1029 = vunpack.c.h.b16 %v233
  %v1030 = vunpack.c.l.b16 %v234
  %v1031 = vunpack.c.h.b16 %v234
  %v1032 = vunpack.c.l.b16 %v235
  %v1033 = vunpack.c.h.b16 %v235
  %v1034 = vunpack.c.l.b16 %v236
  %v1035 = vunpack.c.h.b16 %v236
  %v1036 = vunpack.c.l.b16 %v237
  %v1037 = vunpack.c.h.b16 %v237
  %v1038 = vunpack.c.l.b16 %v238
  %v1039 = vunpack.c.h.b16 %v238
  %v1040 = vunpack.c.l.b16 %v239
  %v1041 = vunpack.c.h.b16 %v239
  %v1042 = vunpack.c.l.b16 %v240
  %v1043 = vunpack.c.h.b16 %v240
  %v1044 = vunpack.c.l.b16 %v241
  %v1045 = vunpack.c.h.b16 %v241
  %v1046 = vunpack.c.l.b16 %v242
  %v1047 = vunpack.c.h.b16 %v242
  %v1048 = vunpack.c.l.b16 %v243
  %v1049 = vunpack.c.h.b16 %v243
  %v1050 = vpack.c.b16 %v764, %v762
  %v1051 = vpack.c.b16 %v765, %v763
  %v1052 = vpack.c.b16 %v768, %v766
  %v1053 = vpack.c.b16 %v769, %v767
  %v1054 = vpack.c.b16 %v772, %v770
  %v1055 = vpack.c.b16 %v773, %v771
  %v1056 = vpack.c.b16 %v776, %v774
  %v1057 = vpack.c.b16 %v777, %v775
  %v1058 = vpack.c.b16 %v780, %v778
  %v1059 = vpack.c.b16 %v781, %v779
  %v1060 = vpack.c.b16 %v784, %v782
  %v1061 = vpack.c.b16 %v785, %v783
  %v1062 = vpack.c.b16 %v788, %v786
  %v1063 = vpack.c.b16 %v789, %v787
  %v1064 = vpack.c.b16 %v792, %v790
  %v1065 = vpack.c.b16 %v793, %v791
  %v1066 = vpack.c.b16 %v796, %v794
  %v1067 = vpack.c.b16 %v797, %v795
  %v1068 = vpack.c.b16 %v800, %v798
  %v1069 = vpack.c.b16 %v801, %v799
  %v1070 = vpack.c.b16 %v804, %v802
  %v1071 = vpack.c.b16 %v805, %v803
  %v1072 = vpack.c.b16 %v808, %v806
  %v1073 = vpack.c.b16 %v809, %v807
  %v1074 = vpack.c.b16 %v812, %v810
  %v1075 = vpack.c.b16 %v813, %v811
  %v1076 = vpack.c.b16 %v816, %v814
  %v1077 = vpack.c.b16 %v817, %v815
  %v1078 = vpack.c.b16 %v820, %v818
  %v1079 = vpack.c.b16 %v821, %v819
  %v1080 = vpack.c.b16 %v824, %v822
  %v1081 = vpack.c.b16 %v825, %v823
  %v1082 = vpack.c.b16 %v828, %v826
  %v1083 = vpack.c.b16 %v829, %v827
  %v1084 = vpack.c.b16 %v832, %v830
  %v1085 = vpack.c.b16 %v833, %v831
  %v1086 = vpack.c.b16 %v836, %v834
  %v1087 = vpack.c.b16 %v837, %v835
  %v1088 = vpack.c.b16 %v840, %v838
  %v1089 = vpack.c.b16 %v841, %v839
  %v1090 = vpack.c.b16 %v844, %v842
  %v1091 = vpack.c.b16 %v845, %v843
  %v1092 = vpack.c.b16 %v848, %v846
  %v1093 = vpack.c.b16 %v849, %v847
  %v1094 = vpack.c.b16 %v852, %v850
  %v1095 = vpack.c.b16 %v853, %v851
  %v1096 = vpack.c.b16 %v856, %v854
  %v1097 = vpack.c.b16 %v857, %v855
  %v1098 = vpack.c.b16 %v860, %v858
  %v1099 = vpack.c.b16 %v861, %v859
  %v1100 = vpack.c.b16 %v864, %v862
  %v1101 = vpack.c.b16 %v865, %v863
  %v1102 = vpack.c.b16 %v868, %v866
  %v1103 = vpack.c.b16 %v869, %v867
  %v1104 = vpack.c.b16 %v872, %v870
  %v1105 = vpack.c.b16 %v873, %v871
  %v1106 = vpack.c.b16 %v876, %v874
  %v1107 = vpack.c.b16 %v877, %v875
  %v1108 = vpack.c.b16 %v880, %v878
  %v1109 = vpack.c.b16 %v881, %v879
  %v1110 = vpack.c.b16 %v884, %v882
  %v1111 = vpack.c.b16 %v885, %v883
  %v1112 = vpack.c.b16 %v888, %v886
  %v1113 = vpack.c.b16 %v889, %v887
  %v1114 = vpack.c.b16 %v892, %v890
  %v1115 = vpack.c.b16 %v893, %v891
  %v1116 = vpack.c.b16 %v896, %v894
  %v1117 = vpack.c.b16 %v897, %v895
  %v1118 = vpack.c.b16 %v900, %v898
  %v1119 = vpack.c.b16 %v901, %v899
  %v1120 = vpack.c.b16 %v904, %v902
  %v1121 = vpack.c.b16 %v905, %v903
  %v1122 = vpack.c.b16 %v908, %v906
  %v1123 = vpack.c.b16 %v909, %v907
  %v1124 = vpack.c.b16 %v912, %v910
  %v1125 = vpack.c.b16 %v913, %v911
  %v1126 = vpack.c.b16 %v916, %v914
  %v1127 = vpack.c.b16 %v917, %v915
  %v1128 = vpack.c.b16 %v920, %v918
  %v1129 = vpack.c.b16 %v921, %v919
  %v1130 = vpack.c.b16 %v924, %v922
  %v1131 = vpack.c.b16 %v925, %v923
  %v1132 = vpack.c.b16 %v928, %v926
  %v1133 = vpack.c.b16 %v929, %v927
  %v1134 = vpack.c.b16 %v932, %v930
  %v1135 = vpack.c.b16 %v933, %v931
  %v1136 = vpack.c.b16 %v936, %v934
  %v1137 = vpack.c.b16 %v937, %v935
  %v1138 = vpack.c.b16 %v940, %v938
  %v1139 = vpack.c.b16 %v941, %v939
  %v1140 = vpack.c.b16 %v944, %v942
  %v1141 = vpack.c.b16 %v945, %v943
  %v1142 = vpack.c.b16 %v948, %v946
  %v1143 = vpack.c.b16 %v949, %v947
  %v1144 = vpack.c.b16 %v952, %v950
  %v1145 = vpack.c.b16 %v953, %v951
  %v1146 = vpack.c.b16 %v956, %v954
  %v1147 = vpack.c.b16 %v957, %v955
  %v1148 = vpack.c.b16 %v960, %v958
  %v1149 = vpack.c.b16 %v961, %v959
  %v1150 = vpack.c.b16 %v964, %v962
  %v1151 = vpack.c.b16 %v965, %v963
  %v1152 = vpack.c.b16 %v968, %v966
  %v1153 = vpack.c.b16 %v969, %v967
  %v1154 = vpack.c.b16 %v972, %v970
  %v1155 = vpack.c.b16 %v973, %v971
  %v1156 = vpack.c.b16 %v976, %v974
  %v1157 = vpack.c.b16 %v977, %v975
  %v1158 = vpack.c.b16 %v980, %v978
  %v1159 = vpack.c.b16 %v981, %v979
  %v1160 = vpack.c.b16 %v984, %v982
  %v1161 = vpack.c.b16 %v985, %v983
  %v1162 = vpack.c.b16 %v988, %v986
  %v1163 = vpack.c.b16 %v989, %v987
  %v1164 = vpack.c.b16 %v992, %v990
  %v1165 = vpack.c.b16 %v993, %v991
  %v1166 = vpack.c.b16 %v996, %v994
  %v1167 = vpack.c.b16 %v997, %v995
  %v1168 = vpack.c.b16 %v1000, %v998
  %v1169 = vpack.c.b16 %v1001, %v999
  %v1170 = vpack.c.b16 %v1004, %v1002
  %v1171 = vpack.c.b16 %v1005, %v1003
  %v1172 = vpack.c.b16 %v1008, %v1006
  %v1173 = vpack.c.b16 %v1009, %v1007
  %v1174 = vpack.c.b16 %v1012, %v1010
  %v1175 = vpack.c.b16 %v1013, %v1011
  %v1176 = vpack.c.b16 %v1016, %v1014
  %v1177 = vpack.c.b16 %v1017, %v1015
  %v1178 = vpack.c.b16 %v1020, %v1018
  %v1179 = vpack.c.b16 %v1021, %v1019
  %v1180 = vpack.c.b16 %v1024, %v1022
  %v1181 = vpack.c.b16 %v1025, %v1023
  %v1182 = vpack.c.b16 %v1028, %v1026
  %v1183 = vpack.c.b16 %v1029, %v1027
  %v1184 = vpack.c.b16 %v1032, %v1030
  %v1185 = vpack.c.b16 %v1033, %v1031
  %v1186 = vpack.c.b16 %v1036, %v1034
  %v1187 = vpack.c.b16 %v1037, %v1035
  %v1188 = vpack.c.b16 %v1040, %v1038
  %v1189 = vpack.c.b16 %v1041, %v1039
  %v1190 = vpack.c.b16 %v1044, %v1042
  %v1191 = vpack.c.b16 %v1045, %v1043
  %v1192 = vpack.c.b16 %v1048, %v1046
  %v1193 = vpack.c.b16 %v1049, %v1047
  %1338 = vmatpush.bf16.msra.mxu0 %v1064
  %1339 = vmatpush.bf16.msra.mxu0 %v1062
  %1340 = vmatpush.bf16.msra.mxu0 %v1060
  %1341 = vmatpush.bf16.msra.mxu0 %v1058
  %1342 = vmatpush.bf16.msra.mxu0 %v1056
  %1343 = vmatpush.bf16.msra.mxu0 %v1054
  %1344 = vmatpush.bf16.msra.mxu0 %v1052
  %1345 = vmatpush.bf16.msra.mxu0 %v1050
  %1346 = vmatmul.bf16.gmra.mxu0 %v474
  %v1347 = vpop.f32.mrf.mxu0
  %v1348 = vadd.f32 %v246, %v1347
  %v1349 = vpop.f32.mrf.mxu0
  %v1350 = vadd.f32 %v246, %v1349
  %1351 = vmatmul.bf16.gmra.mxu0 %v483
  %v1352 = vpop.f32.mrf.mxu0
  %v1353 = vadd.f32 %v246, %v1352
  %v1354 = vpop.f32.mrf.mxu0
  %v1355 = vadd.f32 %v246, %v1354
  %1356 = vmatmul.bf16.gmra.mxu0 %v492
  %v1357 = vpop.f32.mrf.mxu0
  %v1358 = vadd.f32 %v246, %v1357
  %v1359 = vpop.f32.mrf.mxu0
  %v1360 = vadd.f32 %v246, %v1359
  %1361 = vmatmul.bf16.gmra.mxu0 %v501
  %v1362 = vpop.f32.mrf.mxu0
  %v1363 = vadd.f32 %v246, %v1362
  %v1364 = vpop.f32.mrf.mxu0
  %v1365 = vadd.f32 %v246, %v1364
  %1366 = vmatmul.bf16.gmra.mxu0 %v510
  %v1367 = vpop.f32.mrf.mxu0
  %v1368 = vadd.f32 %v246, %v1367
  %v1369 = vpop.f32.mrf.mxu0
  %v1370 = vadd.f32 %v246, %v1369
  %1371 = vmatmul.bf16.gmra.mxu0 %v519
  %v1372 = vpop.f32.mrf.mxu0
  %v1373 = vadd.f32 %v246, %v1372
  %v1374 = vpop.f32.mrf.mxu0
  %v1375 = vadd.f32 %v246, %v1374
  %1376 = vmatmul.bf16.gmra.mxu0 %v528
  %v1377 = vpop.f32.mrf.mxu0
  %v1378 = vadd.f32 %v246, %v1377
  %v1379 = vpop.f32.mrf.mxu0
  %v1380 = vadd.f32 %v246, %v1379
  %1381 = vmatmul.bf16.gmra.mxu0 %v537
  %v1382 = vpop.f32.mrf.mxu0
  %v1383 = vadd.f32 %v246, %v1382
  %v1384 = vpop.f32.mrf.mxu0
  %v1385 = vadd.f32 %v246, %v1384
  %1386 = vdwg.mxu0
  %1387 = vmatpush.bf16.msra.mxu0 %v1080
  %1388 = vmatpush.bf16.msra.mxu0 %v1078
  %1389 = vmatpush.bf16.msra.mxu0 %v1076
  %1390 = vmatpush.bf16.msra.mxu0 %v1074
  %1391 = vmatpush.bf16.msra.mxu0 %v1072
  %1392 = vmatpush.bf16.msra.mxu0 %v1070
  %1393 = vmatpush.bf16.msra.mxu0 %v1068
  %1394 = vmatpush.bf16.msra.mxu0 %v1066
  %1395 = vmatmul.bf16.gmra.mxu0 %v475
  %v1396 = vpop.f32.mrf.mxu0
  %v1397 = vadd.f32 %v1348, %v1396
  %v1398 = vpop.f32.mrf.mxu0
  %v1399 = vadd.f32 %v1350, %v1398
  %1400 = vmatmul.bf16.gmra.mxu0 %v484
  %v1401 = vpop.f32.mrf.mxu0
  %v1402 = vadd.f32 %v1353, %v1401
  %v1403 = vpop.f32.mrf.mxu0
  %v1404 = vadd.f32 %v1355, %v1403
  %1405 = vmatmul.bf16.gmra.mxu0 %v493
  %v1406 = vpop.f32.mrf.mxu0
  %v1407 = vadd.f32 %v1358, %v1406
  %v1408 = vpop.f32.mrf.mxu0
  %v1409 = vadd.f32 %v1360, %v1408
  %1410 = vmatmul.bf16.gmra.mxu0 %v502
  %v1411 = vpop.f32.mrf.mxu0
  %v1412 = vadd.f32 %v1363, %v1411
  %v1413 = vpop.f32.mrf.mxu0
  %v1414 = vadd.f32 %v1365, %v1413
  %1415 = vmatmul.bf16.gmra.mxu0 %v511
  %v1416 = vpop.f32.mrf.mxu0
  %v1417 = vadd.f32 %v1368, %v1416
  %v1418 = vpop.f32.mrf.mxu0
  %v1419 = vadd.f32 %v1370, %v1418
  %1420 = vmatmul.bf16.gmra.mxu0 %v520
  %v1421 = vpop.f32.mrf.mxu0
  %v1422 = vadd.f32 %v1373, %v1421
  %v1423 = vpop.f32.mrf.mxu0
  %v1424 = vadd.f32 %v1375, %v1423
  %1425 = vmatmul.bf16.gmra.mxu0 %v529
  %v1426 = vpop.f32.mrf.mxu0
  %v1427 = vadd.f32 %v1378, %v1426
  %v1428 = vpop.f32.mrf.mxu0
  %v1429 = vadd.f32 %v1380, %v1428
  %1430 = vmatmul.bf16.gmra.mxu0 %v538
  %v1431 = vpop.f32.mrf.mxu0
  %v1432 = vadd.f32 %v1383, %v1431
  %v1433 = vpop.f32.mrf.mxu0
  %v1434 = vadd.f32 %v1385, %v1433
  %1435 = vdwg.mxu0
  %1436 = vmatpush.bf16.msra.mxu0 %v1096
  %1437 = vmatpush.bf16.msra.mxu0 %v1094
  %1438 = vmatpush.bf16.msra.mxu0 %v1092
  %1439 = vmatpush.bf16.msra.mxu0 %v1090
  %1440 = vmatpush.bf16.msra.mxu0 %v1088
  %1441 = vmatpush.bf16.msra.mxu0 %v1086
  %1442 = vmatpush.bf16.msra.mxu0 %v1084
  %1443 = vmatpush.bf16.msra.mxu0 %v1082
  %1444 = vmatmul.bf16.gmra.mxu0 %v476
  %v1445 = vpop.f32.mrf.mxu0
  %v1446 = vadd.f32 %v1397, %v1445
  %v1447 = vpop.f32.mrf.mxu0
  %v1448 = vadd.f32 %v1399, %v1447
  %1449 = vmatmul.bf16.gmra.mxu0 %v485
  %v1450 = vpop.f32.mrf.mxu0
  %v1451 = vadd.f32 %v1402, %v1450
  %v1452 = vpop.f32.mrf.mxu0
  %v1453 = vadd.f32 %v1404, %v1452
  %1454 = vmatmul.bf16.gmra.mxu0 %v494
  %v1455 = vpop.f32.mrf.mxu0
  %v1456 = vadd.f32 %v1407, %v1455
  %v1457 = vpop.f32.mrf.mxu0
  %v1458 = vadd.f32 %v1409, %v1457
  %1459 = vmatmul.bf16.gmra.mxu0 %v503
  %v1460 = vpop.f32.mrf.mxu0
  %v1461 = vadd.f32 %v1412, %v1460
  %v1462 = vpop.f32.mrf.mxu0
  %v1463 = vadd.f32 %v1414, %v1462
  %1464 = vmatmul.bf16.gmra.mxu0 %v512
  %v1465 = vpop.f32.mrf.mxu0
  %v1466 = vadd.f32 %v1417, %v1465
  %v1467 = vpop.f32.mrf.mxu0
  %v1468 = vadd.f32 %v1419, %v1467
  %1469 = vmatmul.bf16.gmra.mxu0 %v521
  %v1470 = vpop.f32.mrf.mxu0
  %v1471 = vadd.f32 %v1422, %v1470
  %v1472 = vpop.f32.mrf.mxu0
  %v1473 = vadd.f32 %v1424, %v1472
  %1474 = vmatmul.bf16.gmra.mxu0 %v530
  %v1475 = vpop.f32.mrf.mxu0
  %v1476 = vadd.f32 %v1427, %v1475
  %v1477 = vpop.f32.mrf.mxu0
  %v1478 = vadd.f32 %v1429, %v1477
  %1479 = vmatmul.bf16.gmra.mxu0 %v539
  %v1480 = vpop.f32.mrf.mxu0
  %v1481 = vadd.f32 %v1432, %v1480
  %v1482 = vpop.f32.mrf.mxu0
  %v1483 = vadd.f32 %v1434, %v1482
  %1484 = vdwg.mxu0
  %1485 = vmatpush.bf16.msra.mxu0 %v1112
  %1486 = vmatpush.bf16.msra.mxu0 %v1110
  %1487 = vmatpush.bf16.msra.mxu0 %v1108
  %1488 = vmatpush.bf16.msra.mxu0 %v1106
  %1489 = vmatpush.bf16.msra.mxu0 %v1104
  %1490 = vmatpush.bf16.msra.mxu0 %v1102
  %1491 = vmatpush.bf16.msra.mxu0 %v1100
  %1492 = vmatpush.bf16.msra.mxu0 %v1098
  %1493 = vmatmul.bf16.gmra.mxu0 %v477
  %v1494 = vpop.f32.mrf.mxu0
  %v1495 = vadd.f32 %v1446, %v1494
  %v1496 = vpop.f32.mrf.mxu0
  %v1497 = vadd.f32 %v1448, %v1496
  %1498 = vmatmul.bf16.gmra.mxu0 %v486
  %v1499 = vpop.f32.mrf.mxu0
  %v1500 = vadd.f32 %v1451, %v1499
  %v1501 = vpop.f32.mrf.mxu0
  %v1502 = vadd.f32 %v1453, %v1501
  %1503 = vmatmul.bf16.gmra.mxu0 %v495
  %v1504 = vpop.f32.mrf.mxu0
  %v1505 = vadd.f32 %v1456, %v1504
  %v1506 = vpop.f32.mrf.mxu0
  %v1507 = vadd.f32 %v1458, %v1506
  %1508 = vmatmul.bf16.gmra.mxu0 %v504
  %v1509 = vpop.f32.mrf.mxu0
  %v1510 = vadd.f32 %v1461, %v1509
  %v1511 = vpop.f32.mrf.mxu0
  %v1512 = vadd.f32 %v1463, %v1511
  %1513 = vmatmul.bf16.gmra.mxu0 %v513
  %v1514 = vpop.f32.mrf.mxu0
  %v1515 = vadd.f32 %v1466, %v1514
  %v1516 = vpop.f32.mrf.mxu0
  %v1517 = vadd.f32 %v1468, %v1516
  %1518 = vmatmul.bf16.gmra.mxu0 %v522
  %v1519 = vpop.f32.mrf.mxu0
  %v1520 = vadd.f32 %v1471, %v1519
  %v1521 = vpop.f32.mrf.mxu0
  %v1522 = vadd.f32 %v1473, %v1521
  %1523 = vmatmul.bf16.gmra.mxu0 %v531
  %v1524 = vpop.f32.mrf.mxu0
  %v1525 = vadd.f32 %v1476, %v1524
  %v1526 = vpop.f32.mrf.mxu0
  %v1527 = vadd.f32 %v1478, %v1526
  %1528 = vmatmul.bf16.gmra.mxu0 %v540
  %v1529 = vpop.f32.mrf.mxu0
  %v1530 = vadd.f32 %v1481, %v1529
  %v1531 = vpop.f32.mrf.mxu0
  %v1532 = vadd.f32 %v1483, %v1531
  %1533 = vdwg.mxu0
  %1534 = vmatpush.bf16.msra.mxu0 %v1128
  %1535 = vmatpush.bf16.msra.mxu0 %v1126
  %1536 = vmatpush.bf16.msra.mxu0 %v1124
  %1537 = vmatpush.bf16.msra.mxu0 %v1122
  %1538 = vmatpush.bf16.msra.mxu0 %v1120
  %1539 = vmatpush.bf16.msra.mxu0 %v1118
  %1540 = vmatpush.bf16.msra.mxu0 %v1116
  %1541 = vmatpush.bf16.msra.mxu0 %v1114
  %1542 = vmatmul.bf16.gmra.mxu0 %v478
  %v1543 = vpop.f32.mrf.mxu0
  %v1544 = vadd.f32 %v1495, %v1543
  %v1545 = vpop.f32.mrf.mxu0
  %v1546 = vadd.f32 %v1497, %v1545
  %1547 = vmatmul.bf16.gmra.mxu0 %v487
  %v1548 = vpop.f32.mrf.mxu0
  %v1549 = vadd.f32 %v1500, %v1548
  %v1550 = vpop.f32.mrf.mxu0
  %v1551 = vadd.f32 %v1502, %v1550
  %1552 = vmatmul.bf16.gmra.mxu0 %v496
  %v1553 = vpop.f32.mrf.mxu0
  %v1554 = vadd.f32 %v1505, %v1553
  %v1555 = vpop.f32.mrf.mxu0
  %v1556 = vadd.f32 %v1507, %v1555
  %1557 = vmatmul.bf16.gmra.mxu0 %v505
  %v1558 = vpop.f32.mrf.mxu0
  %v1559 = vadd.f32 %v1510, %v1558
  %v1560 = vpop.f32.mrf.mxu0
  %v1561 = vadd.f32 %v1512, %v1560
  %1562 = vmatmul.bf16.gmra.mxu0 %v514
  %v1563 = vpop.f32.mrf.mxu0
  %v1564 = vadd.f32 %v1515, %v1563
  %v1565 = vpop.f32.mrf.mxu0
  %v1566 = vadd.f32 %v1517, %v1565
  %1567 = vmatmul.bf16.gmra.mxu0 %v523
  %v1568 = vpop.f32.mrf.mxu0
  %v1569 = vadd.f32 %v1520, %v1568
  %v1570 = vpop.f32.mrf.mxu0
  %v1571 = vadd.f32 %v1522, %v1570
  %1572 = vmatmul.bf16.gmra.mxu0 %v532
  %v1573 = vpop.f32.mrf.mxu0
  %v1574 = vadd.f32 %v1525, %v1573
  %v1575 = vpop.f32.mrf.mxu0
  %v1576 = vadd.f32 %v1527, %v1575
  %1577 = vmatmul.bf16.gmra.mxu0 %v541
  %v1578 = vpop.f32.mrf.mxu0
  %v1579 = vadd.f32 %v1530, %v1578
  %v1580 = vpop.f32.mrf.mxu0
  %v1581 = vadd.f32 %v1532, %v1580
  %1582 = vdwg.mxu0
  %1583 = vmatpush.bf16.msra.mxu0 %v1144
  %1584 = vmatpush.bf16.msra.mxu0 %v1142
  %1585 = vmatpush.bf16.msra.mxu0 %v1140
  %1586 = vmatpush.bf16.msra.mxu0 %v1138
  %1587 = vmatpush.bf16.msra.mxu0 %v1136
  %1588 = vmatpush.bf16.msra.mxu0 %v1134
  %1589 = vmatpush.bf16.msra.mxu0 %v1132
  %1590 = vmatpush.bf16.msra.mxu0 %v1130
  %1591 = vmatmul.bf16.gmra.mxu0 %v479
  %v1592 = vpop.f32.mrf.mxu0
  %v1593 = vadd.f32 %v1544, %v1592
  %v1594 = vpop.f32.mrf.mxu0
  %v1595 = vadd.f32 %v1546, %v1594
  %1596 = vmatmul.bf16.gmra.mxu0 %v488
  %v1597 = vpop.f32.mrf.mxu0
  %v1598 = vadd.f32 %v1549, %v1597
  %v1599 = vpop.f32.mrf.mxu0
  %v1600 = vadd.f32 %v1551, %v1599
  %1601 = vmatmul.bf16.gmra.mxu0 %v497
  %v1602 = vpop.f32.mrf.mxu0
  %v1603 = vadd.f32 %v1554, %v1602
  %v1604 = vpop.f32.mrf.mxu0
  %v1605 = vadd.f32 %v1556, %v1604
  %1606 = vmatmul.bf16.gmra.mxu0 %v506
  %v1607 = vpop.f32.mrf.mxu0
  %v1608 = vadd.f32 %v1559, %v1607
  %v1609 = vpop.f32.mrf.mxu0
  %v1610 = vadd.f32 %v1561, %v1609
  %1611 = vmatmul.bf16.gmra.mxu0 %v515
  %v1612 = vpop.f32.mrf.mxu0
  %v1613 = vadd.f32 %v1564, %v1612
  %v1614 = vpop.f32.mrf.mxu0
  %v1615 = vadd.f32 %v1566, %v1614
  %1616 = vmatmul.bf16.gmra.mxu0 %v524
  %v1617 = vpop.f32.mrf.mxu0
  %v1618 = vadd.f32 %v1569, %v1617
  %v1619 = vpop.f32.mrf.mxu0
  %v1620 = vadd.f32 %v1571, %v1619
  %1621 = vmatmul.bf16.gmra.mxu0 %v533
  %v1622 = vpop.f32.mrf.mxu0
  %v1623 = vadd.f32 %v1574, %v1622
  %v1624 = vpop.f32.mrf.mxu0
  %v1625 = vadd.f32 %v1576, %v1624
  %1626 = vmatmul.bf16.gmra.mxu0 %v542
  %v1627 = vpop.f32.mrf.mxu0
  %v1628 = vadd.f32 %v1579, %v1627
  %v1629 = vpop.f32.mrf.mxu0
  %v1630 = vadd.f32 %v1581, %v1629
  %1631 = vdwg.mxu0
  %1632 = vmatpush.bf16.msra.mxu0 %v1160
  %1633 = vmatpush.bf16.msra.mxu0 %v1158
  %1634 = vmatpush.bf16.msra.mxu0 %v1156
  %1635 = vmatpush.bf16.msra.mxu0 %v1154
  %1636 = vmatpush.bf16.msra.mxu0 %v1152
  %1637 = vmatpush.bf16.msra.mxu0 %v1150
  %1638 = vmatpush.bf16.msra.mxu0 %v1148
  %1639 = vmatpush.bf16.msra.mxu0 %v1146
  %1640 = vmatmul.bf16.gmra.mxu0 %v480
  %v1641 = vpop.f32.mrf.mxu0
  %v1642 = vadd.f32 %v1593, %v1641
  %v1643 = vpop.f32.mrf.mxu0
  %v1644 = vadd.f32 %v1595, %v1643
  %1645 = vmatmul.bf16.gmra.mxu0 %v489
  %v1646 = vpop.f32.mrf.mxu0
  %v1647 = vadd.f32 %v1598, %v1646
  %v1648 = vpop.f32.mrf.mxu0
  %v1649 = vadd.f32 %v1600, %v1648
  %1650 = vmatmul.bf16.gmra.mxu0 %v498
  %v1651 = vpop.f32.mrf.mxu0
  %v1652 = vadd.f32 %v1603, %v1651
  %v1653 = vpop.f32.mrf.mxu0
  %v1654 = vadd.f32 %v1605, %v1653
  %1655 = vmatmul.bf16.gmra.mxu0 %v507
  %v1656 = vpop.f32.mrf.mxu0
  %v1657 = vadd.f32 %v1608, %v1656
  %v1658 = vpop.f32.mrf.mxu0
  %v1659 = vadd.f32 %v1610, %v1658
  %1660 = vmatmul.bf16.gmra.mxu0 %v516
  %v1661 = vpop.f32.mrf.mxu0
  %v1662 = vadd.f32 %v1613, %v1661
  %v1663 = vpop.f32.mrf.mxu0
  %v1664 = vadd.f32 %v1615, %v1663
  %1665 = vmatmul.bf16.gmra.mxu0 %v525
  %v1666 = vpop.f32.mrf.mxu0
  %v1667 = vadd.f32 %v1618, %v1666
  %v1668 = vpop.f32.mrf.mxu0
  %v1669 = vadd.f32 %v1620, %v1668
  %1670 = vmatmul.bf16.gmra.mxu0 %v534
  %v1671 = vpop.f32.mrf.mxu0
  %v1672 = vadd.f32 %v1623, %v1671
  %v1673 = vpop.f32.mrf.mxu0
  %v1674 = vadd.f32 %v1625, %v1673
  %1675 = vmatmul.bf16.gmra.mxu0 %v543
  %v1676 = vpop.f32.mrf.mxu0
  %v1677 = vadd.f32 %v1628, %v1676
  %v1678 = vpop.f32.mrf.mxu0
  %v1679 = vadd.f32 %v1630, %v1678
  %1680 = vdwg.mxu0
  %1681 = vmatpush.bf16.msra.mxu0 %v1176
  %1682 = vmatpush.bf16.msra.mxu0 %v1174
  %1683 = vmatpush.bf16.msra.mxu0 %v1172
  %1684 = vmatpush.bf16.msra.mxu0 %v1170
  %1685 = vmatpush.bf16.msra.mxu0 %v1168
  %1686 = vmatpush.bf16.msra.mxu0 %v1166
  %1687 = vmatpush.bf16.msra.mxu0 %v1164
  %1688 = vmatpush.bf16.msra.mxu0 %v1162
  %1689 = vmatmul.bf16.gmra.mxu0 %v481
  %v1690 = vpop.f32.mrf.mxu0
  %v1691 = vadd.f32 %v1642, %v1690
  %v1692 = vpop.f32.mrf.mxu0
  %v1693 = vadd.f32 %v1644, %v1692
  %1694 = vmatmul.bf16.gmra.mxu0 %v490
  %v1695 = vpop.f32.mrf.mxu0
  %v1696 = vadd.f32 %v1647, %v1695
  %v1697 = vpop.f32.mrf.mxu0
  %v1698 = vadd.f32 %v1649, %v1697
  %1699 = vmatmul.bf16.gmra.mxu0 %v499
  %v1700 = vpop.f32.mrf.mxu0
  %v1701 = vadd.f32 %v1652, %v1700
  %v1702 = vpop.f32.mrf.mxu0
  %v1703 = vadd.f32 %v1654, %v1702
  %1704 = vmatmul.bf16.gmra.mxu0 %v508
  %v1705 = vpop.f32.mrf.mxu0
  %v1706 = vadd.f32 %v1657, %v1705
  %v1707 = vpop.f32.mrf.mxu0
  %v1708 = vadd.f32 %v1659, %v1707
  %1709 = vmatmul.bf16.gmra.mxu0 %v517
  %v1710 = vpop.f32.mrf.mxu0
  %v1711 = vadd.f32 %v1662, %v1710
  %v1712 = vpop.f32.mrf.mxu0
  %v1713 = vadd.f32 %v1664, %v1712
  %1714 = vmatmul.bf16.gmra.mxu0 %v526
  %v1715 = vpop.f32.mrf.mxu0
  %v1716 = vadd.f32 %v1667, %v1715
  %v1717 = vpop.f32.mrf.mxu0
  %v1718 = vadd.f32 %v1669, %v1717
  %1719 = vmatmul.bf16.gmra.mxu0 %v535
  %v1720 = vpop.f32.mrf.mxu0
  %v1721 = vadd.f32 %v1672, %v1720
  %v1722 = vpop.f32.mrf.mxu0
  %v1723 = vadd.f32 %v1674, %v1722
  %1724 = vmatmul.bf16.gmra.mxu0 %v544
  %v1725 = vpop.f32.mrf.mxu0
  %v1726 = vadd.f32 %v1677, %v1725
  %v1727 = vpop.f32.mrf.mxu0
  %v1728 = vadd.f32 %v1679, %v1727
  %1729 = vdwg.mxu0
  %1730 = vmatpush.bf16.msra.mxu0 %v1192
  %1731 = vmatpush.bf16.msra.mxu0 %v1190
  %1732 = vmatpush.bf16.msra.mxu0 %v1188
  %1733 = vmatpush.bf16.msra.mxu0 %v1186
  %1734 = vmatpush.bf16.msra.mxu0 %v1184
  %1735 = vmatpush.bf16.msra.mxu0 %v1182
  %1736 = vmatpush.bf16.msra.mxu0 %v1180
  %1737 = vmatpush.bf16.msra.mxu0 %v1178
  %1738 = vmatmul.bf16.gmra.mxu0 %v482
  %v1739 = vpop.f32.mrf.mxu0
  %v1740 = vadd.f32 %v1691, %v1739
  %v1741 = vpop.f32.mrf.mxu0
  %v1742 = vadd.f32 %v1693, %v1741
  %1743 = vmatmul.bf16.gmra.mxu0 %v491
  %v1744 = vpop.f32.mrf.mxu0
  %v1745 = vadd.f32 %v1696, %v1744
  %v1746 = vpop.f32.mrf.mxu0
  %v1747 = vadd.f32 %v1698, %v1746
  %1748 = vmatmul.bf16.gmra.mxu0 %v500
  %v1749 = vpop.f32.mrf.mxu0
  %v1750 = vadd.f32 %v1701, %v1749
  %v1751 = vpop.f32.mrf.mxu0
  %v1752 = vadd.f32 %v1703, %v1751
  %1753 = vmatmul.bf16.gmra.mxu0 %v509
  %v1754 = vpop.f32.mrf.mxu0
  %v1755 = vadd.f32 %v1706, %v1754
  %v1756 = vpop.f32.mrf.mxu0
  %v1757 = vadd.f32 %v1708, %v1756
  %1758 = vmatmul.bf16.gmra.mxu0 %v518
  %v1759 = vpop.f32.mrf.mxu0
  %v1760 = vadd.f32 %v1711, %v1759
  %v1761 = vpop.f32.mrf.mxu0
  %v1762 = vadd.f32 %v1713, %v1761
  %1763 = vmatmul.bf16.gmra.mxu0 %v527
  %v1764 = vpop.f32.mrf.mxu0
  %v1765 = vadd.f32 %v1716, %v1764
  %v1766 = vpop.f32.mrf.mxu0
  %v1767 = vadd.f32 %v1718, %v1766
  %1768 = vmatmul.bf16.gmra.mxu0 %v536
  %v1769 = vpop.f32.mrf.mxu0
  %v1770 = vadd.f32 %v1721, %v1769
  %v1771 = vpop.f32.mrf.mxu0
  %v1772 = vadd.f32 %v1723, %v1771
  %1773 = vmatmul.bf16.gmra.mxu0 %v545
  %v1774 = vpop.f32.mrf.mxu0
  %v1775 = vadd.f32 %v1726, %v1774
  %v1776 = vpop.f32.mrf.mxu0
  %v1777 = vadd.f32 %v1728, %v1776
  %1778 = vdwg.mxu0
  %1779 = vmatpush.bf16.msra.mxu0 %v1065
  %1780 = vmatpush.bf16.msra.mxu0 %v1063
  %1781 = vmatpush.bf16.msra.mxu0 %v1061
  %1782 = vmatpush.bf16.msra.mxu0 %v1059
  %1783 = vmatpush.bf16.msra.mxu0 %v1057
  %1784 = vmatpush.bf16.msra.mxu0 %v1055
  %1785 = vmatpush.bf16.msra.mxu0 %v1053
  %1786 = vmatpush.bf16.msra.mxu0 %v1051
  %1787 = vmatmul.bf16.gmra.mxu0 %v474
  %v1788 = vpop.f32.mrf.mxu0
  %v1789 = vadd.f32 %v247, %v1788
  %v1790 = vpop.f32.mrf.mxu0
  %v1791 = vadd.f32 %v247, %v1790
  %1792 = vmatmul.bf16.gmra.mxu0 %v483
  %v1793 = vpop.f32.mrf.mxu0
  %v1794 = vadd.f32 %v247, %v1793
  %v1795 = vpop.f32.mrf.mxu0
  %v1796 = vadd.f32 %v247, %v1795
  %1797 = vmatmul.bf16.gmra.mxu0 %v492
  %v1798 = vpop.f32.mrf.mxu0
  %v1799 = vadd.f32 %v247, %v1798
  %v1800 = vpop.f32.mrf.mxu0
  %v1801 = vadd.f32 %v247, %v1800
  %1802 = vmatmul.bf16.gmra.mxu0 %v501
  %v1803 = vpop.f32.mrf.mxu0
  %v1804 = vadd.f32 %v247, %v1803
  %v1805 = vpop.f32.mrf.mxu0
  %v1806 = vadd.f32 %v247, %v1805
  %1807 = vmatmul.bf16.gmra.mxu0 %v510
  %v1808 = vpop.f32.mrf.mxu0
  %v1809 = vadd.f32 %v247, %v1808
  %v1810 = vpop.f32.mrf.mxu0
  %v1811 = vadd.f32 %v247, %v1810
  %1812 = vmatmul.bf16.gmra.mxu0 %v519
  %v1813 = vpop.f32.mrf.mxu0
  %v1814 = vadd.f32 %v247, %v1813
  %v1815 = vpop.f32.mrf.mxu0
  %v1816 = vadd.f32 %v247, %v1815
  %1817 = vmatmul.bf16.gmra.mxu0 %v528
  %v1818 = vpop.f32.mrf.mxu0
  %v1819 = vadd.f32 %v247, %v1818
  %v1820 = vpop.f32.mrf.mxu0
  %v1821 = vadd.f32 %v247, %v1820
  %1822 = vmatmul.bf16.gmra.mxu0 %v537
  %v1823 = vpop.f32.mrf.mxu0
  %v1824 = vadd.f32 %v247, %v1823
  %v1825 = vpop.f32.mrf.mxu0
  %v1826 = vadd.f32 %v247, %v1825
  %1827 = vdwg.mxu0
  %1828 = vmatpush.bf16.msra.mxu0 %v1081
  %1829 = vmatpush.bf16.msra.mxu0 %v1079
  %1830 = vmatpush.bf16.msra.mxu0 %v1077
  %1831 = vmatpush.bf16.msra.mxu0 %v1075
  %1832 = vmatpush.bf16.msra.mxu0 %v1073
  %1833 = vmatpush.bf16.msra.mxu0 %v1071
  %1834 = vmatpush.bf16.msra.mxu0 %v1069
  %1835 = vmatpush.bf16.msra.mxu0 %v1067
  %1836 = vmatmul.bf16.gmra.mxu0 %v475
  %v1837 = vpop.f32.mrf.mxu0
  %v1838 = vadd.f32 %v1789, %v1837
  %v1839 = vpop.f32.mrf.mxu0
  %v1840 = vadd.f32 %v1791, %v1839
  %1841 = vmatmul.bf16.gmra.mxu0 %v484
  %v1842 = vpop.f32.mrf.mxu0
  %v1843 = vadd.f32 %v1794, %v1842
  %v1844 = vpop.f32.mrf.mxu0
  %v1845 = vadd.f32 %v1796, %v1844
  %1846 = vmatmul.bf16.gmra.mxu0 %v493
  %v1847 = vpop.f32.mrf.mxu0
  %v1848 = vadd.f32 %v1799, %v1847
  %v1849 = vpop.f32.mrf.mxu0
  %v1850 = vadd.f32 %v1801, %v1849
  %1851 = vmatmul.bf16.gmra.mxu0 %v502
  %v1852 = vpop.f32.mrf.mxu0
  %v1853 = vadd.f32 %v1804, %v1852
  %v1854 = vpop.f32.mrf.mxu0
  %v1855 = vadd.f32 %v1806, %v1854
  %1856 = vmatmul.bf16.gmra.mxu0 %v511
  %v1857 = vpop.f32.mrf.mxu0
  %v1858 = vadd.f32 %v1809, %v1857
  %v1859 = vpop.f32.mrf.mxu0
  %v1860 = vadd.f32 %v1811, %v1859
  %1861 = vmatmul.bf16.gmra.mxu0 %v520
  %v1862 = vpop.f32.mrf.mxu0
  %v1863 = vadd.f32 %v1814, %v1862
  %v1864 = vpop.f32.mrf.mxu0
  %v1865 = vadd.f32 %v1816, %v1864
  %1866 = vmatmul.bf16.gmra.mxu0 %v529
  %v1867 = vpop.f32.mrf.mxu0
  %v1868 = vadd.f32 %v1819, %v1867
  %v1869 = vpop.f32.mrf.mxu0
  %v1870 = vadd.f32 %v1821, %v1869
  %1871 = vmatmul.bf16.gmra.mxu0 %v538
  %v1872 = vpop.f32.mrf.mxu0
  %v1873 = vadd.f32 %v1824, %v1872
  %v1874 = vpop.f32.mrf.mxu0
  %v1875 = vadd.f32 %v1826, %v1874
  %1876 = vdwg.mxu0
  %1877 = vmatpush.bf16.msra.mxu0 %v1097
  %1878 = vmatpush.bf16.msra.mxu0 %v1095
  %1879 = vmatpush.bf16.msra.mxu0 %v1093
  %1880 = vmatpush.bf16.msra.mxu0 %v1091
  %1881 = vmatpush.bf16.msra.mxu0 %v1089
  %1882 = vmatpush.bf16.msra.mxu0 %v1087
  %1883 = vmatpush.bf16.msra.mxu0 %v1085
  %1884 = vmatpush.bf16.msra.mxu0 %v1083
  %1885 = vmatmul.bf16.gmra.mxu0 %v476
  %v1886 = vpop.f32.mrf.mxu0
  %v1887 = vadd.f32 %v1838, %v1886
  %v1888 = vpop.f32.mrf.mxu0
  %v1889 = vadd.f32 %v1840, %v1888
  %1890 = vmatmul.bf16.gmra.mxu0 %v485
  %v1891 = vpop.f32.mrf.mxu0
  %v1892 = vadd.f32 %v1843, %v1891
  %v1893 = vpop.f32.mrf.mxu0
  %v1894 = vadd.f32 %v1845, %v1893
  %1895 = vmatmul.bf16.gmra.mxu0 %v494
  %v1896 = vpop.f32.mrf.mxu0
  %v1897 = vadd.f32 %v1848, %v1896
  %v1898 = vpop.f32.mrf.mxu0
  %v1899 = vadd.f32 %v1850, %v1898
  %1900 = vmatmul.bf16.gmra.mxu0 %v503
  %v1901 = vpop.f32.mrf.mxu0
  %v1902 = vadd.f32 %v1853, %v1901
  %v1903 = vpop.f32.mrf.mxu0
  %v1904 = vadd.f32 %v1855, %v1903
  %1905 = vmatmul.bf16.gmra.mxu0 %v512
  %v1906 = vpop.f32.mrf.mxu0
  %v1907 = vadd.f32 %v1858, %v1906
  %v1908 = vpop.f32.mrf.mxu0
  %v1909 = vadd.f32 %v1860, %v1908
  %1910 = vmatmul.bf16.gmra.mxu0 %v521
  %v1911 = vpop.f32.mrf.mxu0
  %v1912 = vadd.f32 %v1863, %v1911
  %v1913 = vpop.f32.mrf.mxu0
  %v1914 = vadd.f32 %v1865, %v1913
  %1915 = vmatmul.bf16.gmra.mxu0 %v530
  %v1916 = vpop.f32.mrf.mxu0
  %v1917 = vadd.f32 %v1868, %v1916
  %v1918 = vpop.f32.mrf.mxu0
  %v1919 = vadd.f32 %v1870, %v1918
  %1920 = vmatmul.bf16.gmra.mxu0 %v539
  %v1921 = vpop.f32.mrf.mxu0
  %v1922 = vadd.f32 %v1873, %v1921
  %v1923 = vpop.f32.mrf.mxu0
  %v1924 = vadd.f32 %v1875, %v1923
  %1925 = vdwg.mxu0
  %1926 = vmatpush.bf16.msra.mxu0 %v1113
  %1927 = vmatpush.bf16.msra.mxu0 %v1111
  %1928 = vmatpush.bf16.msra.mxu0 %v1109
  %1929 = vmatpush.bf16.msra.mxu0 %v1107
  %1930 = vmatpush.bf16.msra.mxu0 %v1105
  %1931 = vmatpush.bf16.msra.mxu0 %v1103
  %1932 = vmatpush.bf16.msra.mxu0 %v1101
  %1933 = vmatpush.bf16.msra.mxu0 %v1099
  %1934 = vmatmul.bf16.gmra.mxu0 %v477
  %v1935 = vpop.f32.mrf.mxu0
  %v1936 = vadd.f32 %v1887, %v1935
  %v1937 = vpop.f32.mrf.mxu0
  %v1938 = vadd.f32 %v1889, %v1937
  %1939 = vmatmul.bf16.gmra.mxu0 %v486
  %v1940 = vpop.f32.mrf.mxu0
  %v1941 = vadd.f32 %v1892, %v1940
  %v1942 = vpop.f32.mrf.mxu0
  %v1943 = vadd.f32 %v1894, %v1942
  %1944 = vmatmul.bf16.gmra.mxu0 %v495
  %v1945 = vpop.f32.mrf.mxu0
  %v1946 = vadd.f32 %v1897, %v1945
  %v1947 = vpop.f32.mrf.mxu0
  %v1948 = vadd.f32 %v1899, %v1947
  %1949 = vmatmul.bf16.gmra.mxu0 %v504
  %v1950 = vpop.f32.mrf.mxu0
  %v1951 = vadd.f32 %v1902, %v1950
  %v1952 = vpop.f32.mrf.mxu0
  %v1953 = vadd.f32 %v1904, %v1952
  %1954 = vmatmul.bf16.gmra.mxu0 %v513
  %v1955 = vpop.f32.mrf.mxu0
  %v1956 = vadd.f32 %v1907, %v1955
  %v1957 = vpop.f32.mrf.mxu0
  %v1958 = vadd.f32 %v1909, %v1957
  %1959 = vmatmul.bf16.gmra.mxu0 %v522
  %v1960 = vpop.f32.mrf.mxu0
  %v1961 = vadd.f32 %v1912, %v1960
  %v1962 = vpop.f32.mrf.mxu0
  %v1963 = vadd.f32 %v1914, %v1962
  %1964 = vmatmul.bf16.gmra.mxu0 %v531
  %v1965 = vpop.f32.mrf.mxu0
  %v1966 = vadd.f32 %v1917, %v1965
  %v1967 = vpop.f32.mrf.mxu0
  %v1968 = vadd.f32 %v1919, %v1967
  %1969 = vmatmul.bf16.gmra.mxu0 %v540
  %v1970 = vpop.f32.mrf.mxu0
  %v1971 = vadd.f32 %v1922, %v1970
  %v1972 = vpop.f32.mrf.mxu0
  %v1973 = vadd.f32 %v1924, %v1972
  %1974 = vdwg.mxu0
  %1975 = vmatpush.bf16.msra.mxu0 %v1129
  %1976 = vmatpush.bf16.msra.mxu0 %v1127
  %1977 = vmatpush.bf16.msra.mxu0 %v1125
  %1978 = vmatpush.bf16.msra.mxu0 %v1123
  %1979 = vmatpush.bf16.msra.mxu0 %v1121
  %1980 = vmatpush.bf16.msra.mxu0 %v1119
  %1981 = vmatpush.bf16.msra.mxu0 %v1117
  %1982 = vmatpush.bf16.msra.mxu0 %v1115
  %1983 = vmatmul.bf16.gmra.mxu0 %v478
  %v1984 = vpop.f32.mrf.mxu0
  %v1985 = vadd.f32 %v1936, %v1984
  %v1986 = vpop.f32.mrf.mxu0
  %v1987 = vadd.f32 %v1938, %v1986
  %1988 = vmatmul.bf16.gmra.mxu0 %v487
  %v1989 = vpop.f32.mrf.mxu0
  %v1990 = vadd.f32 %v1941, %v1989
  %v1991 = vpop.f32.mrf.mxu0
  %v1992 = vadd.f32 %v1943, %v1991
  %1993 = vmatmul.bf16.gmra.mxu0 %v496
  %v1994 = vpop.f32.mrf.mxu0
  %v1995 = vadd.f32 %v1946, %v1994
  %v1996 = vpop.f32.mrf.mxu0
  %v1997 = vadd.f32 %v1948, %v1996
  %1998 = vmatmul.bf16.gmra.mxu0 %v505
  %v1999 = vpop.f32.mrf.mxu0
  %v2000 = vadd.f32 %v1951, %v1999
  %v2001 = vpop.f32.mrf.mxu0
  %v2002 = vadd.f32 %v1953, %v2001
  %2003 = vmatmul.bf16.gmra.mxu0 %v514
  %v2004 = vpop.f32.mrf.mxu0
  %v2005 = vadd.f32 %v1956, %v2004
  %v2006 = vpop.f32.mrf.mxu0
  %v2007 = vadd.f32 %v1958, %v2006
  %2008 = vmatmul.bf16.gmra.mxu0 %v523
  %v2009 = vpop.f32.mrf.mxu0
  %v2010 = vadd.f32 %v1961, %v2009
  %v2011 = vpop.f32.mrf.mxu0
  %v2012 = vadd.f32 %v1963, %v2011
  %2013 = vmatmul.bf16.gmra.mxu0 %v532
  %v2014 = vpop.f32.mrf.mxu0
  %v2015 = vadd.f32 %v1966, %v2014
  %v2016 = vpop.f32.mrf.mxu0
  %v2017 = vadd.f32 %v1968, %v2016
  %2018 = vmatmul.bf16.gmra.mxu0 %v541
  %v2019 = vpop.f32.mrf.mxu0
  %v2020 = vadd.f32 %v1971, %v2019
  %v2021 = vpop.f32.mrf.mxu0
  %v2022 = vadd.f32 %v1973, %v2021
  %2023 = vdwg.mxu0
  %2024 = vmatpush.bf16.msra.mxu0 %v1145
  %2025 = vmatpush.bf16.msra.mxu0 %v1143
  %2026 = vmatpush.bf16.msra.mxu0 %v1141
  %2027 = vmatpush.bf16.msra.mxu0 %v1139
  %2028 = vmatpush.bf16.msra.mxu0 %v1137
  %2029 = vmatpush.bf16.msra.mxu0 %v1135
  %2030 = vmatpush.bf16.msra.mxu0 %v1133
  %2031 = vmatpush.bf16.msra.mxu0 %v1131
  %2032 = vmatmul.bf16.gmra.mxu0 %v479
  %v2033 = vpop.f32.mrf.mxu0
  %v2034 = vadd.f32 %v1985, %v2033
  %v2035 = vpop.f32.mrf.mxu0
  %v2036 = vadd.f32 %v1987, %v2035
  %2037 = vmatmul.bf16.gmra.mxu0 %v488
  %v2038 = vpop.f32.mrf.mxu0
  %v2039 = vadd.f32 %v1990, %v2038
  %v2040 = vpop.f32.mrf.mxu0
  %v2041 = vadd.f32 %v1992, %v2040
  %2042 = vmatmul.bf16.gmra.mxu0 %v497
  %v2043 = vpop.f32.mrf.mxu0
  %v2044 = vadd.f32 %v1995, %v2043
  %v2045 = vpop.f32.mrf.mxu0
  %v2046 = vadd.f32 %v1997, %v2045
  %2047 = vmatmul.bf16.gmra.mxu0 %v506
  %v2048 = vpop.f32.mrf.mxu0
  %v2049 = vadd.f32 %v2000, %v2048
  %v2050 = vpop.f32.mrf.mxu0
  %v2051 = vadd.f32 %v2002, %v2050
  %2052 = vmatmul.bf16.gmra.mxu0 %v515
  %v2053 = vpop.f32.mrf.mxu0
  %v2054 = vadd.f32 %v2005, %v2053
  %v2055 = vpop.f32.mrf.mxu0
  %v2056 = vadd.f32 %v2007, %v2055
  %2057 = vmatmul.bf16.gmra.mxu0 %v524
  %v2058 = vpop.f32.mrf.mxu0
  %v2059 = vadd.f32 %v2010, %v2058
  %v2060 = vpop.f32.mrf.mxu0
  %v2061 = vadd.f32 %v2012, %v2060
  %2062 = vmatmul.bf16.gmra.mxu0 %v533
  %v2063 = vpop.f32.mrf.mxu0
  %v2064 = vadd.f32 %v2015, %v2063
  %v2065 = vpop.f32.mrf.mxu0
  %v2066 = vadd.f32 %v2017, %v2065
  %2067 = vmatmul.bf16.gmra.mxu0 %v542
  %v2068 = vpop.f32.mrf.mxu0
  %v2069 = vadd.f32 %v2020, %v2068
  %v2070 = vpop.f32.mrf.mxu0
  %v2071 = vadd.f32 %v2022, %v2070
  %2072 = vdwg.mxu0
  %2073 = vmatpush.bf16.msra.mxu0 %v1161
  %2074 = vmatpush.bf16.msra.mxu0 %v1159
  %2075 = vmatpush.bf16.msra.mxu0 %v1157
  %2076 = vmatpush.bf16.msra.mxu0 %v1155
  %2077 = vmatpush.bf16.msra.mxu0 %v1153
  %2078 = vmatpush.bf16.msra.mxu0 %v1151
  %2079 = vmatpush.bf16.msra.mxu0 %v1149
  %2080 = vmatpush.bf16.msra.mxu0 %v1147
  %2081 = vmatmul.bf16.gmra.mxu0 %v480
  %v2082 = vpop.f32.mrf.mxu0
  %v2083 = vadd.f32 %v2034, %v2082
  %v2084 = vpop.f32.mrf.mxu0
  %v2085 = vadd.f32 %v2036, %v2084
  %2086 = vmatmul.bf16.gmra.mxu0 %v489
  %v2087 = vpop.f32.mrf.mxu0
  %v2088 = vadd.f32 %v2039, %v2087
  %v2089 = vpop.f32.mrf.mxu0
  %v2090 = vadd.f32 %v2041, %v2089
  %2091 = vmatmul.bf16.gmra.mxu0 %v498
  %v2092 = vpop.f32.mrf.mxu0
  %v2093 = vadd.f32 %v2044, %v2092
  %v2094 = vpop.f32.mrf.mxu0
  %v2095 = vadd.f32 %v2046, %v2094
  %2096 = vmatmul.bf16.gmra.mxu0 %v507
  %v2097 = vpop.f32.mrf.mxu0
  %v2098 = vadd.f32 %v2049, %v2097
  %v2099 = vpop.f32.mrf.mxu0
  %v2100 = vadd.f32 %v2051, %v2099
  %2101 = vmatmul.bf16.gmra.mxu0 %v516
  %v2102 = vpop.f32.mrf.mxu0
  %v2103 = vadd.f32 %v2054, %v2102
  %v2104 = vpop.f32.mrf.mxu0
  %v2105 = vadd.f32 %v2056, %v2104
  %2106 = vmatmul.bf16.gmra.mxu0 %v525
  %v2107 = vpop.f32.mrf.mxu0
  %v2108 = vadd.f32 %v2059, %v2107
  %v2109 = vpop.f32.mrf.mxu0
  %v2110 = vadd.f32 %v2061, %v2109
  %2111 = vmatmul.bf16.gmra.mxu0 %v534
  %v2112 = vpop.f32.mrf.mxu0
  %v2113 = vadd.f32 %v2064, %v2112
  %v2114 = vpop.f32.mrf.mxu0
  %v2115 = vadd.f32 %v2066, %v2114
  %2116 = vmatmul.bf16.gmra.mxu0 %v543
  %v2117 = vpop.f32.mrf.mxu0
  %v2118 = vadd.f32 %v2069, %v2117
  %v2119 = vpop.f32.mrf.mxu0
  %v2120 = vadd.f32 %v2071, %v2119
  %2121 = vdwg.mxu0
  %2122 = vmatpush.bf16.msra.mxu0 %v1177
  %2123 = vmatpush.bf16.msra.mxu0 %v1175
  %2124 = vmatpush.bf16.msra.mxu0 %v1173
  %2125 = vmatpush.bf16.msra.mxu0 %v1171
  %2126 = vmatpush.bf16.msra.mxu0 %v1169
  %2127 = vmatpush.bf16.msra.mxu0 %v1167
  %2128 = vmatpush.bf16.msra.mxu0 %v1165
  %2129 = vmatpush.bf16.msra.mxu0 %v1163
  %2130 = vmatmul.bf16.gmra.mxu0 %v481
  %v2131 = vpop.f32.mrf.mxu0
  %v2132 = vadd.f32 %v2083, %v2131
  %v2133 = vpop.f32.mrf.mxu0
  %v2134 = vadd.f32 %v2085, %v2133
  %2135 = vmatmul.bf16.gmra.mxu0 %v490
  %v2136 = vpop.f32.mrf.mxu0
  %v2137 = vadd.f32 %v2088, %v2136
  %v2138 = vpop.f32.mrf.mxu0
  %v2139 = vadd.f32 %v2090, %v2138
  %2140 = vmatmul.bf16.gmra.mxu0 %v499
  %v2141 = vpop.f32.mrf.mxu0
  %v2142 = vadd.f32 %v2093, %v2141
  %v2143 = vpop.f32.mrf.mxu0
  %v2144 = vadd.f32 %v2095, %v2143
  %2145 = vmatmul.bf16.gmra.mxu0 %v508
  %v2146 = vpop.f32.mrf.mxu0
  %v2147 = vadd.f32 %v2098, %v2146
  %v2148 = vpop.f32.mrf.mxu0
  %v2149 = vadd.f32 %v2100, %v2148
  %2150 = vmatmul.bf16.gmra.mxu0 %v517
  %v2151 = vpop.f32.mrf.mxu0
  %v2152 = vadd.f32 %v2103, %v2151
  %v2153 = vpop.f32.mrf.mxu0
  %v2154 = vadd.f32 %v2105, %v2153
  %2155 = vmatmul.bf16.gmra.mxu0 %v526
  %v2156 = vpop.f32.mrf.mxu0
  %v2157 = vadd.f32 %v2108, %v2156
  %v2158 = vpop.f32.mrf.mxu0
  %v2159 = vadd.f32 %v2110, %v2158
  %2160 = vmatmul.bf16.gmra.mxu0 %v535
  %v2161 = vpop.f32.mrf.mxu0
  %v2162 = vadd.f32 %v2113, %v2161
  %v2163 = vpop.f32.mrf.mxu0
  %v2164 = vadd.f32 %v2115, %v2163
  %2165 = vmatmul.bf16.gmra.mxu0 %v544
  %v2166 = vpop.f32.mrf.mxu0
  %v2167 = vadd.f32 %v2118, %v2166
  %v2168 = vpop.f32.mrf.mxu0
  %v2169 = vadd.f32 %v2120, %v2168
  %2170 = vdwg.mxu0
  %2171 = vmatpush.bf16.msra.mxu0 %v1193
  %2172 = vmatpush.bf16.msra.mxu0 %v1191
  %2173 = vmatpush.bf16.msra.mxu0 %v1189
  %2174 = vmatpush.bf16.msra.mxu0 %v1187
  %2175 = vmatpush.bf16.msra.mxu0 %v1185
  %2176 = vmatpush.bf16.msra.mxu0 %v1183
  %2177 = vmatpush.bf16.msra.mxu0 %v1181
  %2178 = vmatpush.bf16.msra.mxu0 %v1179
  %2179 = vmatmul.bf16.gmra.mxu0 %v482
  %v2180 = vpop.f32.mrf.mxu0
  %v2181 = vadd.f32 %v2132, %v2180
  %v2182 = vpop.f32.mrf.mxu0
  %v2183 = vadd.f32 %v2134, %v2182
  %2184 = vmatmul.bf16.gmra.mxu0 %v491
  %v2185 = vpop.f32.mrf.mxu0
  %v2186 = vadd.f32 %v2137, %v2185
  %v2187 = vpop.f32.mrf.mxu0
  %v2188 = vadd.f32 %v2139, %v2187
  %2189 = vmatmul.bf16.gmra.mxu0 %v500
  %v2190 = vpop.f32.mrf.mxu0
  %v2191 = vadd.f32 %v2142, %v2190
  %v2192 = vpop.f32.mrf.mxu0
  %v2193 = vadd.f32 %v2144, %v2192
  %2194 = vmatmul.bf16.gmra.mxu0 %v509
  %v2195 = vpop.f32.mrf.mxu0
  %v2196 = vadd.f32 %v2147, %v2195
  %v2197 = vpop.f32.mrf.mxu0
  %v2198 = vadd.f32 %v2149, %v2197
  %2199 = vmatmul.bf16.gmra.mxu0 %v518
  %v2200 = vpop.f32.mrf.mxu0
  %v2201 = vadd.f32 %v2152, %v2200
  %v2202 = vpop.f32.mrf.mxu0
  %v2203 = vadd.f32 %v2154, %v2202
  %2204 = vmatmul.bf16.gmra.mxu0 %v527
  %v2205 = vpop.f32.mrf.mxu0
  %v2206 = vadd.f32 %v2157, %v2205
  %v2207 = vpop.f32.mrf.mxu0
  %v2208 = vadd.f32 %v2159, %v2207
  %2209 = vmatmul.bf16.gmra.mxu0 %v536
  %v2210 = vpop.f32.mrf.mxu0
  %v2211 = vadd.f32 %v2162, %v2210
  %v2212 = vpop.f32.mrf.mxu0
  %v2213 = vadd.f32 %v2164, %v2212
  %2214 = vmatmul.bf16.gmra.mxu0 %v545
  %v2215 = vpop.f32.mrf.mxu0
  %v2216 = vadd.f32 %v2167, %v2215
  %v2217 = vpop.f32.mrf.mxu0
  %v2218 = vadd.f32 %v2169, %v2217
  %2219 = vdwg.mxu0
  %v2220 = vadd.f32 %v1740, %v1742
  %v2221 = vadd.f32 %v2220, %v1745
  %v2222 = vadd.f32 %v2221, %v1747
  %v2223 = vadd.f32 %v2222, %v1750
  %v2224 = vadd.f32 %v2223, %v1752
  %v2225 = vadd.f32 %v2224, %v1755
  %v2226 = vadd.f32 %v2225, %v1757
  %v2227 = vadd.f32 %v2226, %v1760
  %v2228 = vadd.f32 %v2227, %v1762
  %v2229 = vadd.f32 %v2228, %v1765
  %v2230 = vadd.f32 %v2229, %v1767
  %v2231 = vadd.f32 %v2230, %v1770
  %v2232 = vadd.f32 %v2231, %v1772
  %v2233 = vadd.f32 %v2232, %v1775
  %v2234 = vadd.f32 %v2233, %v1777
  %v2235 = vrot.slane %v2234, 4
  %v2236 = vadd.f32 %v2234, %v2235
  %v2237 = vrot.slane %v2236, 2
  %v2238 = vadd.f32 %v2236, %v2237
  %v2239 = vrot.slane %v2238, 1
  %v2240 = vadd.f32 %v2238, %v2239
  %v2241 = vadd.f32 %v2181, %v2183
  %v2242 = vadd.f32 %v2241, %v2186
  %v2243 = vadd.f32 %v2242, %v2188
  %v2244 = vadd.f32 %v2243, %v2191
  %v2245 = vadd.f32 %v2244, %v2193
  %v2246 = vadd.f32 %v2245, %v2196
  %v2247 = vadd.f32 %v2246, %v2198
  %v2248 = vadd.f32 %v2247, %v2201
  %v2249 = vadd.f32 %v2248, %v2203
  %v2250 = vadd.f32 %v2249, %v2206
  %v2251 = vadd.f32 %v2250, %v2208
  %v2252 = vadd.f32 %v2251, %v2211
  %v2253 = vadd.f32 %v2252, %v2213
  %v2254 = vadd.f32 %v2253, %v2216
  %v2255 = vadd.f32 %v2254, %v2218
  %v2256 = vrot.slane %v2255, 4
  %v2257 = vadd.f32 %v2255, %v2256
  %v2258 = vrot.slane %v2257, 2
  %v2259 = vadd.f32 %v2257, %v2258
  %v2260 = vrot.slane %v2259, 1
  %v2261 = vadd.f32 %v2259, %v2260
  %2263 = vrot.lane.b32.xlu0 %v2240, 64
  %v2264 = vpop.permute.xlu0 %2263
  %v2266 = vadd.f32 %v2240, %v2264
  %v2267 = vadd.f32 %v2266, %v2261
  %2269 = vrot.lane.b32.xlu0 %v2261, 64
  %v2270 = vpop.permute.xlu0 %2269
  %v2272 = vadd.f32 %v2267, %v2270
  %v2273 = vrcp.pop 512.0
  %v2274 = vmul.f32 512.0, %v2273
  %v2275 = vsub.f32 1.0, %v2274
  %v2276 = vmul.f32 %v2273, %v2275
  %v2277 = vadd.f32 %v2273, %v2276
  %vm2278 = vweird.f32 %v2273
  %v2279 = vsel %vm2278, %v2273, %v2277
  %v2280 = vmul.f32 %v2272, %v2279
  %2282 = vrot.lane.b32.xlu0 %v2280, 64
  %v2283 = vpop.permute.xlu0 %2282
  %vm2285 = vcmask 523264
  %v2286 = vsel %vm2285, %v2280, %v2283
  %v2287 = vperm.slane %v2286, 0
  %v2288 = vsub.f32 %v1740, %v2287
  %v2289 = vsub.f32 %v2181, %v2287
  %v2290 = vsub.f32 %v1742, %v2287
  %v2291 = vsub.f32 %v2183, %v2287
  %v2292 = vsub.f32 %v1745, %v2287
  %v2293 = vsub.f32 %v2186, %v2287
  %v2294 = vsub.f32 %v1747, %v2287
  %v2295 = vsub.f32 %v2188, %v2287
  %v2296 = vsub.f32 %v1750, %v2287
  %v2297 = vsub.f32 %v2191, %v2287
  %v2298 = vsub.f32 %v1752, %v2287
  %v2299 = vsub.f32 %v2193, %v2287
  %v2300 = vsub.f32 %v1755, %v2287
  %v2301 = vsub.f32 %v2196, %v2287
  %v2302 = vsub.f32 %v1757, %v2287
  %v2303 = vsub.f32 %v2198, %v2287
  %v2304 = vsub.f32 %v1760, %v2287
  %v2305 = vsub.f32 %v2201, %v2287
  %v2306 = vsub.f32 %v1762, %v2287
  %v2307 = vsub.f32 %v2203, %v2287
  %v2308 = vsub.f32 %v1765, %v2287
  %v2309 = vsub.f32 %v2206, %v2287
  %v2310 = vsub.f32 %v1767, %v2287
  %v2311 = vsub.f32 %v2208, %v2287
  %v2312 = vsub.f32 %v1770, %v2287
  %v2313 = vsub.f32 %v2211, %v2287
  %v2314 = vsub.f32 %v1772, %v2287
  %v2315 = vsub.f32 %v2213, %v2287
  %v2316 = vsub.f32 %v1775, %v2287
  %v2317 = vsub.f32 %v2216, %v2287
  %v2318 = vsub.f32 %v1777, %v2287
  %v2319 = vsub.f32 %v2218, %v2287
  %v2320 = vmul.f32 %v2288, %v2288
  %v2321 = vmul.f32 %v2289, %v2289
  %v2322 = vmul.f32 %v2290, %v2290
  %v2323 = vmul.f32 %v2291, %v2291
  %v2324 = vmul.f32 %v2292, %v2292
  %v2325 = vmul.f32 %v2293, %v2293
  %v2326 = vmul.f32 %v2294, %v2294
  %v2327 = vmul.f32 %v2295, %v2295
  %v2328 = vmul.f32 %v2296, %v2296
  %v2329 = vmul.f32 %v2297, %v2297
  %v2330 = vmul.f32 %v2298, %v2298
  %v2331 = vmul.f32 %v2299, %v2299
  %v2332 = vmul.f32 %v2300, %v2300
  %v2333 = vmul.f32 %v2301, %v2301
  %v2334 = vmul.f32 %v2302, %v2302
  %v2335 = vmul.f32 %v2303, %v2303
  %v2336 = vmul.f32 %v2304, %v2304
  %v2337 = vmul.f32 %v2305, %v2305
  %v2338 = vmul.f32 %v2306, %v2306
  %v2339 = vmul.f32 %v2307, %v2307
  %v2340 = vmul.f32 %v2308, %v2308
  %v2341 = vmul.f32 %v2309, %v2309
  %v2342 = vmul.f32 %v2310, %v2310
  %v2343 = vmul.f32 %v2311, %v2311
  %v2344 = vmul.f32 %v2312, %v2312
  %v2345 = vmul.f32 %v2313, %v2313
  %v2346 = vmul.f32 %v2314, %v2314
  %v2347 = vmul.f32 %v2315, %v2315
  %v2348 = vmul.f32 %v2316, %v2316
  %v2349 = vmul.f32 %v2317, %v2317
  %v2350 = vmul.f32 %v2318, %v2318
  %v2351 = vmul.f32 %v2319, %v2319
  %v2352 = vadd.f32 %v2320, %v2322
  %v2353 = vadd.f32 %v2352, %v2324
  %v2354 = vadd.f32 %v2353, %v2326
  %v2355 = vadd.f32 %v2354, %v2328
  %v2356 = vadd.f32 %v2355, %v2330
  %v2357 = vadd.f32 %v2356, %v2332
  %v2358 = vadd.f32 %v2357, %v2334
  %v2359 = vadd.f32 %v2358, %v2336
  %v2360 = vadd.f32 %v2359, %v2338
  %v2361 = vadd.f32 %v2360, %v2340
  %v2362 = vadd.f32 %v2361, %v2342
  %v2363 = vadd.f32 %v2362, %v2344
  %v2364 = vadd.f32 %v2363, %v2346
  %v2365 = vadd.f32 %v2364, %v2348
  %v2366 = vadd.f32 %v2365, %v2350
  %v2367 = vrot.slane %v2366, 4
  %v2368 = vadd.f32 %v2366, %v2367
  %v2369 = vrot.slane %v2368, 2
  %v2370 = vadd.f32 %v2368, %v2369
  %v2371 = vrot.slane %v2370, 1
  %v2372 = vadd.f32 %v2370, %v2371
  %v2373 = vadd.f32 %v2321, %v2323
  %v2374 = vadd.f32 %v2373, %v2325
  %v2375 = vadd.f32 %v2374, %v2327
  %v2376 = vadd.f32 %v2375, %v2329
  %v2377 = vadd.f32 %v2376, %v2331
  %v2378 = vadd.f32 %v2377, %v2333
  %v2379 = vadd.f32 %v2378, %v2335
  %v2380 = vadd.f32 %v2379, %v2337
  %v2381 = vadd.f32 %v2380, %v2339
  %v2382 = vadd.f32 %v2381, %v2341
  %v2383 = vadd.f32 %v2382, %v2343
  %v2384 = vadd.f32 %v2383, %v2345
  %v2385 = vadd.f32 %v2384, %v2347
  %v2386 = vadd.f32 %v2385, %v2349
  %v2387 = vadd.f32 %v2386, %v2351
  %v2388 = vrot.slane %v2387, 4
  %v2389 = vadd.f32 %v2387, %v2388
  %v2390 = vrot.slane %v2389, 2
  %v2391 = vadd.f32 %v2389, %v2390
  %v2392 = vrot.slane %v2391, 1
  %v2393 = vadd.f32 %v2391, %v2392
  %2395 = vrot.lane.b32.xlu0 %v2372, 64
  %v2396 = vpop.permute.xlu0 %2395
  %v2398 = vadd.f32 %v2372, %v2396
  %v2399 = vadd.f32 %v2398, %v2393
  %2401 = vrot.lane.b32.xlu0 %v2393, 64
  %v2402 = vpop.permute.xlu0 %2401
  %v2404 = vadd.f32 %v2399, %v2402
  %v2405 = vmul.f32 %v2404, %v2279
  %v2406 = vld [vmem:[%s3] sm:$0x1]
  %v2407 = vadd.f32 %v2405, 1e-05
  %v2408 = vrsqrt.pop %v2407
  %v2409 = vmul.f32 %v2408, %v2407
  %v2410 = vmul.f32 %v2409, %v2408
  %v2411 = vmul.f32 0.5, %v2410
  %v2412 = vsub.f32 1.5, %v2411
  %v2413 = vmul.f32 %v2408, %v2412
  %vm2414 = vweird.f32 %v2407
  %vm2415 = vweird.f32 %v2408
  %vm2416 = vmor %vm2414, %vm2415
  %v2417 = vsel %vm2416, %v2408, %v2413
  %v2418 = vmul.f32 %v2406, %v2417
  %v2420 = vperm.slane %v2418, 0
  %2421 = vrot.lane.b32.xlu0 %v2420, 64
  %v2422 = vpop.permute.xlu0 %2421
  %v2424 = vsel %vm2285, %v2418, %v2422
  %v2425 = vld [vmem:[%s4] sm:$0x1]
  %v2427 = vperm.slane %v2425, 0
  %2428 = vrot.lane.b32.xlu0 %v2427, 64
  %v2429 = vpop.permute.xlu0 %2428
  %v2431 = vsel %vm2285, %v2425, %v2429
  %v2432 = vperm.slane %v2424, 0
  %v2433 = vmul.f32 %v2288, %v2432
  %v2434 = vmul.f32 %v2289, %v2432
  %v2435 = vmul.f32 %v2290, %v2432
  %v2436 = vmul.f32 %v2291, %v2432
  %v2437 = vmul.f32 %v2292, %v2432
  %v2438 = vmul.f32 %v2293, %v2432
  %v2439 = vmul.f32 %v2294, %v2432
  %v2440 = vmul.f32 %v2295, %v2432
  %v2441 = vmul.f32 %v2296, %v2432
  %v2442 = vmul.f32 %v2297, %v2432
  %v2443 = vmul.f32 %v2298, %v2432
  %v2444 = vmul.f32 %v2299, %v2432
  %v2445 = vmul.f32 %v2300, %v2432
  %v2446 = vmul.f32 %v2301, %v2432
  %v2447 = vmul.f32 %v2302, %v2432
  %v2448 = vmul.f32 %v2303, %v2432
  %v2449 = vmul.f32 %v2304, %v2432
  %v2450 = vmul.f32 %v2305, %v2432
  %v2451 = vmul.f32 %v2306, %v2432
  %v2452 = vmul.f32 %v2307, %v2432
  %v2453 = vmul.f32 %v2308, %v2432
  %v2454 = vmul.f32 %v2309, %v2432
  %v2455 = vmul.f32 %v2310, %v2432
  %v2456 = vmul.f32 %v2311, %v2432
  %v2457 = vmul.f32 %v2312, %v2432
  %v2458 = vmul.f32 %v2313, %v2432
  %v2459 = vmul.f32 %v2314, %v2432
  %v2460 = vmul.f32 %v2315, %v2432
  %v2461 = vmul.f32 %v2316, %v2432
  %v2462 = vmul.f32 %v2317, %v2432
  %v2463 = vmul.f32 %v2318, %v2432
  %v2464 = vmul.f32 %v2319, %v2432
  %v2465 = vperm.slane %v2431, 0
  %v2466 = vadd.f32 %v2433, %v2465
  %v2467 = vadd.f32 %v2434, %v2465
  %v2468 = vadd.f32 %v2435, %v2465
  %v2469 = vadd.f32 %v2436, %v2465
  %v2470 = vadd.f32 %v2437, %v2465
  %v2471 = vadd.f32 %v2438, %v2465
  %v2472 = vadd.f32 %v2439, %v2465
  %v2473 = vadd.f32 %v2440, %v2465
  %v2474 = vadd.f32 %v2441, %v2465
  %v2475 = vadd.f32 %v2442, %v2465
  %v2476 = vadd.f32 %v2443, %v2465
  %v2477 = vadd.f32 %v2444, %v2465
  %v2478 = vadd.f32 %v2445, %v2465
  %v2479 = vadd.f32 %v2446, %v2465
  %v2480 = vadd.f32 %v2447, %v2465
  %v2481 = vadd.f32 %v2448, %v2465
  %v2482 = vadd.f32 %v2449, %v2465
  %v2483 = vadd.f32 %v2450, %v2465
  %v2484 = vadd.f32 %v2451, %v2465
  %v2485 = vadd.f32 %v2452, %v2465
  %v2486 = vadd.f32 %v2453, %v2465
  %v2487 = vadd.f32 %v2454, %v2465
  %v2488 = vadd.f32 %v2455, %v2465
  %v2489 = vadd.f32 %v2456, %v2465
  %v2490 = vadd.f32 %v2457, %v2465
  %v2491 = vadd.f32 %v2458, %v2465
  %v2492 = vadd.f32 %v2459, %v2465
  %v2493 = vadd.f32 %v2460, %v2465
  %v2494 = vadd.f32 %v2461, %v2465
  %v2495 = vadd.f32 %v2462, %v2465
  %v2496 = vadd.f32 %v2463, %v2465
  %v2497 = vadd.f32 %v2464, %v2465
  %v2498 = vmax.f32 %v2466, 0.0
  %v2499 = vmax.f32 %v2467, 0.0
  %v2500 = vmax.f32 %v2468, 0.0
  %v2501 = vmax.f32 %v2469, 0.0
  %v2502 = vmax.f32 %v2470, 0.0
  %v2503 = vmax.f32 %v2471, 0.0
  %v2504 = vmax.f32 %v2472, 0.0
  %v2505 = vmax.f32 %v2473, 0.0
  %v2506 = vmax.f32 %v2474, 0.0
  %v2507 = vmax.f32 %v2475, 0.0
  %v2508 = vmax.f32 %v2476, 0.0
  %v2509 = vmax.f32 %v2477, 0.0
  %v2510 = vmax.f32 %v2478, 0.0
  %v2511 = vmax.f32 %v2479, 0.0
  %v2512 = vmax.f32 %v2480, 0.0
  %v2513 = vmax.f32 %v2481, 0.0
  %v2514 = vmax.f32 %v2482, 0.0
  %v2515 = vmax.f32 %v2483, 0.0
  %v2516 = vmax.f32 %v2484, 0.0
  %v2517 = vmax.f32 %v2485, 0.0
  %v2518 = vmax.f32 %v2486, 0.0
  %v2519 = vmax.f32 %v2487, 0.0
  %v2520 = vmax.f32 %v2488, 0.0
  %v2521 = vmax.f32 %v2489, 0.0
  %v2522 = vmax.f32 %v2490, 0.0
  %v2523 = vmax.f32 %v2491, 0.0
  %v2524 = vmax.f32 %v2492, 0.0
  %v2525 = vmax.f32 %v2493, 0.0
  %v2526 = vmax.f32 %v2494, 0.0
  %v2527 = vmax.f32 %v2495, 0.0
  %v2528 = vmax.f32 %v2496, 0.0
  %v2529 = vmax.f32 %v2497, 0.0
  %v2530 = vpack.c.bf16 %v2499, %v2498
  %v2531 = vpack.c.bf16 %v2501, %v2500
  %v2532 = vpack.c.bf16 %v2503, %v2502
  %v2533 = vpack.c.bf16 %v2505, %v2504
  %v2534 = vpack.c.bf16 %v2507, %v2506
  %v2535 = vpack.c.bf16 %v2509, %v2508
  %v2536 = vpack.c.bf16 %v2511, %v2510
  %v2537 = vpack.c.bf16 %v2513, %v2512
  %v2538 = vpack.c.bf16 %v2515, %v2514
  %v2539 = vpack.c.bf16 %v2517, %v2516
  %v2540 = vpack.c.bf16 %v2519, %v2518
  %v2541 = vpack.c.bf16 %v2521, %v2520
  %v2542 = vpack.c.bf16 %v2523, %v2522
  %v2543 = vpack.c.bf16 %v2525, %v2524
  %v2544 = vpack.c.bf16 %v2527, %v2526
  %v2545 = vpack.c.bf16 %v2529, %v2528
  %2546 = vst [vmem:[%s5] sm:$0xff] %v2530
  %2547 = vst [vmem:[%s5 + $0x8] sm:$0xff] %v2531
  %2548 = vst [vmem:[%s5 + $0x10] sm:$0xff] %v2532
  %2549 = vst [vmem:[%s5 + $0x18] sm:$0xff] %v2533
  %2550 = vst [vmem:[%s5 + $0x20] sm:$0xff] %v2534
  %2551 = vst [vmem:[%s5 + $0x28] sm:$0xff] %v2535
  %2552 = vst [vmem:[%s5 + $0x30] sm:$0xff] %v2536
  %2553 = vst [vmem:[%s5 + $0x38] sm:$0xff] %v2537
  %2554 = vst [vmem:[%s5 + $0x40] sm:$0xff] %v2538
  %2555 = vst [vmem:[%s5 + $0x48] sm:$0xff] %v2539
  %2556 = vst [vmem:[%s5 + $0x50] sm:$0xff] %v2540
  %2557 = vst [vmem:[%s5 + $0x58] sm:$0xff] %v2541
  %2558 = vst [vmem:[%s5 + $0x60] sm:$0xff] %v2542
  %2559 = vst [vmem:[%s5 + $0x68] sm:$0xff] %v2543
  %2560 = vst [vmem:[%s5 + $0x70] sm:$0xff] %v2544
  %2561 = vst [vmem:[%s5 + $0x78] sm:$0xff] %v2545
  // Predicated region
  $region22: #{_lambda_.6} parent=0 // pred_check
    _
  $region23: #{_lambda_.6} parent=0 // pred_check_branch
    %2563 = sbr.rel (0) target = $region25
  $region24: #{_lambda_.6} parent=0 // pred_region
    _
  $region25: #{_lambda_.6} parent=0 // pred_fallthru
    _
  // Predicated region
  $region26: #{_lambda_.6} parent=0 // pred_check
    _
  $region27: #{_lambda_.6} parent=0 // pred_check_branch
    %2565 = sbr.rel (0) target = $region29
  $region28: #{_lambda_.6} parent=0 // pred_region
    _
  $region29: #{_lambda_.6} parent=0 // pred_fallthru
    _

// kernel: _lambda_.7
$region0: #{_lambda_.7}
  #allocation0 [shape = 'u32[]', space=smem, size = 0x4, offset = 0x4, fixed_abs, tag = 'smem constant byte address 0x4 - core index']
  #allocation1 [shape = 'u32[72,128]{1,0:T(1,128)}', space=vmem, size = 0x9000, scoped, tag = 'internal scratch']
  %s0 = inlined_call_operand.vmem [shape: bf16[512,640], index: 0, kind: input, shape index: {}]
  %s1 = inlined_call_operand.vmem [shape: bf16[640,128], index: 1, kind: input, shape index: {}]
  %s2 = inlined_call_operand.vmem [shape: f32[1,128], index: 2, kind: input, shape index: {}]
  %s3 = inlined_call_operand.vmem [shape: f32[512,128], index: 3, kind: output, shape index: {}]
  %s4 = sld [smem:[#allocation0]]
  $region45: #{_lambda_.7} parent=0
    _
  %s6 = ssub.s32 1, %s4
  %s7 = scalar_select 0, %s6, %s4
  loop: start=0, step=1, limit=6
  $region2: #{_lambda_.7} parent=0 // loop_pre_header
    _
  $region3: #{_lambda_.7} parent=0 // loop_header
    %s9 = sphi 0, %s13
    %p10 = scmp.ge.s32.totalorder %s9, 6
    %s19 = sphi 0, %s21
    %s22 = sphi 0, %s19
    %s23 = sphi 0, %s22
    %s39 = sphi 0, %s23
    %s43 = sphi 0, %s43
    %s45 = sphi 0, %s43
    %s46 = sphi 0, %s45
    %s60 = sphi 0, %s46
    %s64 = sphi 0, %s64
    %s66 = sphi 0, %s64
    %s67 = sphi 0, %s66
    %s81 = sphi 0, %s67
    %s87 = sphi 0, %s89
    %s90 = sphi 0, %s87
    %s91 = sphi 0, %s90
    %s107 = sphi 0, %s91
  $region4: #{_lambda_.7} parent=0 // loop_header_branch
    %12 = sbr.rel (%p10) target = $region8
  $region5: #{_lambda_.7} parent=0 // loop_body
    %s14 = ssub.s32 %s9, 1
    %s15 = ssub.s32 %s9, 2
    %s16 = sadd.s32 %s9, 1
    %s17 = ssub.s32 %s9, %s16
    %p18 = scmp.eq.s32.totalorder %s17, 0
    %s20 = sadd.s32 %s19, 1
    %s21 = scalar_select %p18, %s19, %s20
    %p24 = pneg %p18
    %p25 = scmp.eq.s32.totalorder %s9, 3
    %p26 = por %p24, %p25
    %p27 = scmp.ne.s32.totalorder %s19, %s22
    %p28 = scmp.eq.s32.totalorder %s9, 0
    %p29 = por %p27, %p28
    %p30 = scmp.ne.s32.totalorder %s19, %s22
    %p31 = scmp.eq.s32.totalorder %s14, 3
    %p32 = por %p30, %p31
    %p33 = scmp.ne.s32.totalorder %s22, %s23
    %p34 = scmp.eq.s32.totalorder %s14, 0
    %p35 = por %p33, %p34
    %p36 = scmp.ne.s32.totalorder %s22, %s23
    %p37 = scmp.eq.s32.totalorder %s15, 3
    %p38 = por %p36, %p37
    %p40 = scmp.ne.s32.totalorder %s23, %s39
    %p41 = scmp.eq.s32.totalorder %s15, 0
    %p42 = por %p40, %p41
    %s44 = sadd.s32 %s43, 1
    %p47 = scmp.eq.s32.totalorder %s9, 3
    %p48 = scmp.ne.s32.totalorder %s43, %s45
    %p49 = scmp.eq.s32.totalorder %s9, 0
    %p50 = por %p48, %p49
    %p51 = scmp.ne.s32.totalorder %s43, %s45
    %p52 = scmp.eq.s32.totalorder %s14, 3
    %p53 = por %p51, %p52
    %p54 = scmp.ne.s32.totalorder %s45, %s46
    %p55 = scmp.eq.s32.totalorder %s14, 0
    %p56 = por %p54, %p55
    %p57 = scmp.ne.s32.totalorder %s45, %s46
    %p58 = scmp.eq.s32.totalorder %s15, 3
    %p59 = por %p57, %p58
    %p61 = scmp.ne.s32.totalorder %s46, %s60
    %p62 = scmp.eq.s32.totalorder %s15, 0
    %p63 = por %p61, %p62
    %s65 = sadd.s32 %s64, 1
    %p68 = scmp.eq.s32.totalorder %s9, 3
    %p69 = scmp.ne.s32.totalorder %s64, %s66
    %p70 = scmp.eq.s32.totalorder %s9, 0
    %p71 = por %p69, %p70
    %p72 = scmp.ne.s32.totalorder %s64, %s66
    %p73 = scmp.eq.s32.totalorder %s14, 3
    %p74 = por %p72, %p73
    %p75 = scmp.ne.s32.totalorder %s66, %s67
    %p76 = scmp.eq.s32.totalorder %s14, 0
    %p77 = por %p75, %p76
    %p78 = scmp.ne.s32.totalorder %s66, %s67
    %p79 = scmp.eq.s32.totalorder %s15, 3
    %p80 = por %p78, %p79
    %p82 = scmp.ne.s32.totalorder %s67, %s81
    %p83 = scmp.eq.s32.totalorder %s15, 0
    %p84 = por %p82, %p83
    %s85 = ssub.s32 %s9, %s16
    %p86 = scmp.eq.s32.totalorder %s85, 0
    %s88 = sadd.s32 %s87, 1
    %s89 = scalar_select %p86, %s87, %s88
    %p92 = pneg %p86
    %p93 = scmp.eq.s32.totalorder %s9, 3
    %p94 = por %p92, %p93
    %p95 = scmp.ne.s32.totalorder %s87, %s90
    %p96 = scmp.eq.s32.totalorder %s9, 0
    %p97 = por %p95, %p96
    %p98 = scmp.ne.s32.totalorder %s87, %s90
    %p99 = scmp.eq.s32.totalorder %s14, 3
    %p100 = por %p98, %p99
    %p101 = scmp.ne.s32.totalorder %s90, %s91
    %p102 = scmp.eq.s32.totalorder %s14, 0
    %p103 = por %p101, %p102
    %p104 = scmp.ne.s32.totalorder %s90, %s91
    %p105 = scmp.eq.s32.totalorder %s15, 3
    %p106 = por %p104, %p105
    %p108 = scmp.ne.s32.totalorder %s91, %s107
    %p109 = scmp.eq.s32.totalorder %s15, 0
    %p110 = por %p108, %p109
    %p111 = scmp.le.s32.totalorder 1, %s9
    %p112 = scmp.lt.s32.totalorder %s9, 5
    %p113 = pnand %p111, %p112
    %p114 = pneg %p113
    // Predicated region
    $region9: #{_lambda_.7} parent=5 // pred_check
      _
    $region10: #{_lambda_.7} parent=5 // pred_check_branch
      %116 = sbr.rel (%p113) target = $region12
    $region11: #{_lambda_.7} parent=5 // pred_region
      %s117 = ssub.s32 %s9, 1
      // Predicated region
      $region13: #{_lambda_.7} parent=11 // pred_check
        %p118 = pneg %p56
      $region14: #{_lambda_.7} parent=11 // pred_check_branch
        %120 = sbr.rel (%p118) target = $region16
      $region15: #{_lambda_.7} parent=11 // pred_region
        _
      $region16: #{_lambda_.7} parent=11 // pred_fallthru
        _
      // Predicated region
      $region17: #{_lambda_.7} parent=11 // pred_check
        %p121 = pneg %p77
      $region18: #{_lambda_.7} parent=11 // pred_check_branch
        %123 = sbr.rel (%p121) target = $region20
      $region19: #{_lambda_.7} parent=11 // pred_region
        _
      $region20: #{_lambda_.7} parent=11 // pred_fallthru
        _
    $region12: #{_lambda_.7} parent=5 // pred_fallthru
      _
    %p124 = scmp.lt.s32.totalorder %s9, 4
    // Predicated region
    $region21: #{_lambda_.7} parent=5 // pred_check
      %p125 = pneg %p124
    $region22: #{_lambda_.7} parent=5 // pred_check_branch
      %127 = sbr.rel (%p125) target = $region24
    $region23: #{_lambda_.7} parent=5 // pred_region
      // Predicated region
      $region25: #{_lambda_.7} parent=23 // pred_check
        %p128 = pneg %p29
      $region26: #{_lambda_.7} parent=23 // pred_check_branch
        %130 = sbr.rel (%p128) target = $region28
      $region27: #{_lambda_.7} parent=23 // pred_region
        %s131 = smul.u32 16, %s9
        %p132 = scmp.lt.s32.totalorder %s131, 63
        %s133 = scalar_select %p132, %s131, 63
        %s134 = smul.addr %s133, 5
        %s135 = smul.addr %s134, 4
        %s136 = scalar_lea.vmem %s0, %s135
        %s137 = smul.u32 16, %s9
      $region28: #{_lambda_.7} parent=23 // pred_fallthru
        _
    $region24: #{_lambda_.7} parent=5 // pred_fallthru
      _
    %p138 = scmp.le.s32.totalorder 1, %s9
    %p139 = scmp.lt.s32.totalorder %s9, 5
    %p140 = pnand %p138, %p139
    %p141 = pneg %p140
    // Predicated region
    $region29: #{_lambda_.7} parent=5 // pred_check
      _
    $region30: #{_lambda_.7} parent=5 // pred_check_branch
      %143 = sbr.rel (%p140) target = $region32
    $region31: #{_lambda_.7} parent=5 // pred_region
      %s144 = ssub.s32 %s9, 1
      %s145 = smul.u32 16, %s14
      %p146 = scmp.lt.s32.totalorder %s145, 63
      %s147 = scalar_select %p146, %s145, 63
      %s148 = smul.addr %s147, 5
      %s149 = smul.addr %s148, 4
      %s150 = scalar_lea.vmem %s0, %s149
      %p151 = pneg %p35
      %p152 = pneg %p32
      %p153 = pneg %p56
      %p154 = pneg %p53
      %p155 = pneg %p77
      %p156 = pneg %p74
      %p157 = pneg %p103
      %p158 = pneg %p100
      %s159 = smul.u32 16, %s14
      %p160 = scmp.lt.s32.totalorder %s159, 63
      %s161 = scalar_select %p160, %s159, 63
      %s162 = smul.addr %s161, 8
      %s163 = scalar_lea.vmem %s3, %s162
      %s164 = smul.u32 16, %s14
      %p165 = scmp.lt.s32.totalorder %s164, 63
      %s166 = scalar_select %p165, %s164, 63
      %s167 = smul.addr %s166, 5
      %s168 = smul.addr %s167, 4
      %s169 = scalar_lea.vmem %s0, %s168
      %s170 = smul.u32 16, %s14
      %s171 = smul.u32 16, %s14
      %p172 = scmp.lt.s32.totalorder %s171, 63
      %s173 = scalar_select %p172, %s171, 63
      %s174 = smul.addr %s173, 8
      %s175 = scalar_lea.vmem %s3, %s174
      %s176 = smul.u32 16, %s14
      %v177 = vld [vmem:[%s169] sm:$0xff]
      %v178 = vld [vmem:[%s169 + $0x8] sm:$0xff]
      %v179 = vld [vmem:[%s169 + $0x10] sm:$0xf]
      %v180 = vld [vmem:[%s169 + $0x14] sm:$0xff]
      %v181 = vld [vmem:[%s169 + $0x1c] sm:$0xff]
      %v182 = vld [vmem:[%s169 + $0x24] sm:$0xf]
      %v183 = vld [vmem:[%s169 + $0x28] sm:$0xff]
      %v184 = vld [vmem:[%s169 + $0x30] sm:$0xff]
      %v185 = vld [vmem:[%s169 + $0x38] sm:$0xf]
      %v186 = vld [vmem:[%s169 + $0x3c] sm:$0xff]
      %v187 = vld [vmem:[%s169 + $0x44] sm:$0xff]
      %v188 = vld [vmem:[%s169 + $0x4c] sm:$0xf]
      %v189 = vld [vmem:[%s169 + $0x50] sm:$0xff]
      %v190 = vld [vmem:[%s169 + $0x58] sm:$0xff]
      %v191 = vld [vmem:[%s169 + $0x60] sm:$0xf]
      %v192 = vld [vmem:[%s169 + $0x64] sm:$0xff]
      %v193 = vld [vmem:[%s169 + $0x6c] sm:$0xff]
      %v194 = vld [vmem:[%s169 + $0x74] sm:$0xf]
      %v195 = vld [vmem:[%s169 + $0x78] sm:$0xff]
      %v196 = vld [vmem:[%s169 + $0x80] sm:$0xff]
      %v197 = vld [vmem:[%s169 + $0x88] sm:$0xf]
      %v198 = vld [vmem:[%s169 + $0x8c] sm:$0xff]
      %v199 = vld [vmem:[%s169 + $0x94] sm:$0xff]
      %v200 = vld [vmem:[%s169 + $0x9c] sm:$0xf]
      %v201 = vld [vmem:[%s169 + $0xa0] sm:$0xff]
      %v202 = vld [vmem:[%s169 + $0xa8] sm:$0xff]
      %v203 = vld [vmem:[%s169 + $0xb0] sm:$0xf]
      %v204 = vld [vmem:[%s169 + $0xb4] sm:$0xff]
      %v205 = vld [vmem:[%s169 + $0xbc] sm:$0xff]
      %v206 = vld [vmem:[%s169 + $0xc4] sm:$0xf]
      %v207 = vld [vmem:[%s169 + $0xc8] sm:$0xff]
      %v208 = vld [vmem:[%s169 + $0xd0] sm:$0xff]
      %v209 = vld [vmem:[%s169 + $0xd8] sm:$0xf]
      %v210 = vld [vmem:[%s169 + $0xdc] sm:$0xff]
      %v211 = vld [vmem:[%s169 + $0xe4] sm:$0xff]
      %v212 = vld [vmem:[%s169 + $0xec] sm:$0xf]
      %v213 = vld [vmem:[%s169 + $0xf0] sm:$0xff]
      %v214 = vld [vmem:[%s169 + $0xf8] sm:$0xff]
      %v215 = vld [vmem:[%s169 + $0x100] sm:$0xf]
      %v216 = vld [vmem:[%s169 + $0x104] sm:$0xff]
      %v217 = vld [vmem:[%s169 + $0x10c] sm:$0xff]
      %v218 = vld [vmem:[%s169 + $0x114] sm:$0xf]
      %v219 = vld [vmem:[%s169 + $0x118] sm:$0xff]
      %v220 = vld [vmem:[%s169 + $0x120] sm:$0xff]
      %v221 = vld [vmem:[%s169 + $0x128] sm:$0xf]
      %v222 = vld [vmem:[%s169 + $0x12c] sm:$0xff]
      %v223 = vld [vmem:[%s169 + $0x134] sm:$0xff]
      %v224 = vld [vmem:[%s169 + $0x13c] sm:$0xf]
      %v225 = vld [vmem:[%s1] sm:$0xf]
      %v226 = vld [vmem:[%s1 + $0x4] sm:$0xf]
      %v227 = vld [vmem:[%s1 + $0x8] sm:$0xf]
      %v228 = vld [vmem:[%s1 + $0xc] sm:$0xf]
      %v229 = vld [vmem:[%s1 + $0x10] sm:$0xf]
      %v230 = vld [vmem:[%s1 + $0x14] sm:$0xf]
      %v231 = vld [vmem:[%s1 + $0x18] sm:$0xf]
      %v232 = vld [vmem:[%s1 + $0x1c] sm:$0xf]
      %v233 = vld [vmem:[%s1 + $0x20] sm:$0xf]
      %v234 = vld [vmem:[%s1 + $0x24] sm:$0xf]
      %v235 = vld [vmem:[%s1 + $0x28] sm:$0xf]
      %v236 = vld [vmem:[%s1 + $0x2c] sm:$0xf]
      %v237 = vld [vmem:[%s1 + $0x30] sm:$0xf]
      %v238 = vld [vmem:[%s1 + $0x34] sm:$0xf]
      %v239 = vld [vmem:[%s1 + $0x38] sm:$0xf]
      %v240 = vld [vmem:[%s1 + $0x3c] sm:$0xf]
      %v241 = vld [vmem:[%s1 + $0x40] sm:$0xf]
      %v242 = vld [vmem:[%s1 + $0x44] sm:$0xf]
      %v243 = vld [vmem:[%s1 + $0x48] sm:$0xf]
      %v244 = vld [vmem:[%s1 + $0x4c] sm:$0xf]
      %v245 = vld [vmem:[%s1 + $0x50] sm:$0xf]
      %v246 = vld [vmem:[%s1 + $0x54] sm:$0xf]
      %v247 = vld [vmem:[%s1 + $0x58] sm:$0xf]
      %v248 = vld [vmem:[%s1 + $0x5c] sm:$0xf]
      %v249 = vld [vmem:[%s1 + $0x60] sm:$0xf]
      %v250 = vld [vmem:[%s1 + $0x64] sm:$0xf]
      %v251 = vld [vmem:[%s1 + $0x68] sm:$0xf]
      %v252 = vld [vmem:[%s1 + $0x6c] sm:$0xf]
      %v253 = vld [vmem:[%s1 + $0x70] sm:$0xf]
      %v254 = vld [vmem:[%s1 + $0x74] sm:$0xf]
      %v255 = vld [vmem:[%s1 + $0x78] sm:$0xf]
      %v256 = vld [vmem:[%s1 + $0x7c] sm:$0xf]
      %v257 = vld [vmem:[%s1 + $0x80] sm:$0xf]
      %v258 = vld [vmem:[%s1 + $0x84] sm:$0xf]
      %v259 = vld [vmem:[%s1 + $0x88] sm:$0xf]
      %v260 = vld [vmem:[%s1 + $0x8c] sm:$0xf]
      %v261 = vld [vmem:[%s1 + $0x90] sm:$0xf]
      %v262 = vld [vmem:[%s1 + $0x94] sm:$0xf]
      %v263 = vld [vmem:[%s1 + $0x98] sm:$0xf]
      %v264 = vld [vmem:[%s1 + $0x9c] sm:$0xf]
      %v265 = vld [vmem:[%s1 + $0xa0] sm:$0xf]
      %v266 = vld [vmem:[%s1 + $0xa4] sm:$0xf]
      %v267 = vld [vmem:[%s1 + $0xa8] sm:$0xf]
      %v268 = vld [vmem:[%s1 + $0xac] sm:$0xf]
      %v269 = vld [vmem:[%s1 + $0xb0] sm:$0xf]
      %v270 = vld [vmem:[%s1 + $0xb4] sm:$0xf]
      %v271 = vld [vmem:[%s1 + $0xb8] sm:$0xf]
      %v272 = vld [vmem:[%s1 + $0xbc] sm:$0xf]
      %v273 = vld [vmem:[%s1 + $0xc0] sm:$0xf]
      %v274 = vld [vmem:[%s1 + $0xc4] sm:$0xf]
      %v275 = vld [vmem:[%s1 + $0xc8] sm:$0xf]
      %v276 = vld [vmem:[%s1 + $0xcc] sm:$0xf]
      %v277 = vld [vmem:[%s1 + $0xd0] sm:$0xf]
      %v278 = vld [vmem:[%s1 + $0xd4] sm:$0xf]
      %v279 = vld [vmem:[%s1 + $0xd8] sm:$0xf]
      %v280 = vld [vmem:[%s1 + $0xdc] sm:$0xf]
      %v281 = vld [vmem:[%s1 + $0xe0] sm:$0xf]
      %v282 = vld [vmem:[%s1 + $0xe4] sm:$0xf]
      %v283 = vld [vmem:[%s1 + $0xe8] sm:$0xf]
      %v284 = vld [vmem:[%s1 + $0xec] sm:$0xf]
      %v285 = vld [vmem:[%s1 + $0xf0] sm:$0xf]
      %v286 = vld [vmem:[%s1 + $0xf4] sm:$0xf]
      %v287 = vld [vmem:[%s1 + $0xf8] sm:$0xf]
      %v288 = vld [vmem:[%s1 + $0xfc] sm:$0xf]
      %v289 = vld [vmem:[%s1 + $0x100] sm:$0xf]
      %v290 = vld [vmem:[%s1 + $0x104] sm:$0xf]
      %v291 = vld [vmem:[%s1 + $0x108] sm:$0xf]
      %v292 = vld [vmem:[%s1 + $0x10c] sm:$0xf]
      %v293 = vld [vmem:[%s1 + $0x110] sm:$0xf]
      %v294 = vld [vmem:[%s1 + $0x114] sm:$0xf]
      %v295 = vld [vmem:[%s1 + $0x118] sm:$0xf]
      %v296 = vld [vmem:[%s1 + $0x11c] sm:$0xf]
      %v297 = vld [vmem:[%s1 + $0x120] sm:$0xf]
      %v298 = vld [vmem:[%s1 + $0x124] sm:$0xf]
      %v299 = vld [vmem:[%s1 + $0x128] sm:$0xf]
      %v300 = vld [vmem:[%s1 + $0x12c] sm:$0xf]
      %v301 = vld [vmem:[%s1 + $0x130] sm:$0xf]
      %v302 = vld [vmem:[%s1 + $0x134] sm:$0xf]
      %v303 = vld [vmem:[%s1 + $0x138] sm:$0xf]
      %v304 = vld [vmem:[%s1 + $0x13c] sm:$0xf]
      %v305 = vld [vmem:[%s2] sm:$0x1]
      %v307 = vperm.slane %v305, 0
      %v357 = vunpack.c.l.b16 %v177
      %v358 = vunpack.c.h.b16 %v177
      %v359 = vunpack.c.l.b16 %v178
      %v360 = vunpack.c.h.b16 %v178
      %v361 = vunpack.c.l.b16 %v179
      %v362 = vunpack.c.l.b16 %v180
      %v363 = vunpack.c.h.b16 %v180
      %v364 = vunpack.c.l.b16 %v181
      %v365 = vunpack.c.h.b16 %v181
      %v366 = vunpack.c.l.b16 %v182
      %v367 = vunpack.c.l.b16 %v183
      %v368 = vunpack.c.h.b16 %v183
      %v369 = vunpack.c.l.b16 %v184
      %v370 = vunpack.c.h.b16 %v184
      %v371 = vunpack.c.l.b16 %v185
      %v372 = vunpack.c.l.b16 %v186
      %v373 = vunpack.c.h.b16 %v186
      %v374 = vunpack.c.l.b16 %v187
      %v375 = vunpack.c.h.b16 %v187
      %v376 = vunpack.c.l.b16 %v188
      %v377 = vunpack.c.l.b16 %v189
      %v378 = vunpack.c.h.b16 %v189
      %v379 = vunpack.c.l.b16 %v190
      %v380 = vunpack.c.h.b16 %v190
      %v381 = vunpack.c.l.b16 %v191
      %v382 = vunpack.c.l.b16 %v192
      %v383 = vunpack.c.h.b16 %v192
      %v384 = vunpack.c.l.b16 %v193
      %v385 = vunpack.c.h.b16 %v193
      %v386 = vunpack.c.l.b16 %v194
      %v387 = vunpack.c.l.b16 %v195
      %v388 = vunpack.c.h.b16 %v195
      %v389 = vunpack.c.l.b16 %v196
      %v390 = vunpack.c.h.b16 %v196
      %v391 = vunpack.c.l.b16 %v197
      %v392 = vunpack.c.l.b16 %v198
      %v393 = vunpack.c.h.b16 %v198
      %v394 = vunpack.c.l.b16 %v199
      %v395 = vunpack.c.h.b16 %v199
      %v396 = vunpack.c.l.b16 %v200
      %v397 = vunpack.c.l.b16 %v201
      %v398 = vunpack.c.h.b16 %v201
      %v399 = vunpack.c.l.b16 %v202
      %v400 = vunpack.c.h.b16 %v202
      %v401 = vunpack.c.l.b16 %v203
      %v402 = vunpack.c.l.b16 %v204
      %v403 = vunpack.c.h.b16 %v204
      %v404 = vunpack.c.l.b16 %v205
      %v405 = vunpack.c.h.b16 %v205
      %v406 = vunpack.c.l.b16 %v206
      %v407 = vunpack.c.l.b16 %v207
      %v408 = vunpack.c.h.b16 %v207
      %v409 = vunpack.c.l.b16 %v208
      %v410 = vunpack.c.h.b16 %v208
      %v411 = vunpack.c.l.b16 %v209
      %v412 = vunpack.c.l.b16 %v210
      %v413 = vunpack.c.h.b16 %v210
      %v414 = vunpack.c.l.b16 %v211
      %v415 = vunpack.c.h.b16 %v211
      %v416 = vunpack.c.l.b16 %v212
      %v417 = vunpack.c.l.b16 %v213
      %v418 = vunpack.c.h.b16 %v213
      %v419 = vunpack.c.l.b16 %v214
      %v420 = vunpack.c.h.b16 %v214
      %v421 = vunpack.c.l.b16 %v215
      %v422 = vunpack.c.l.b16 %v216
      %v423 = vunpack.c.h.b16 %v216
      %v424 = vunpack.c.l.b16 %v217
      %v425 = vunpack.c.h.b16 %v217
      %v426 = vunpack.c.l.b16 %v218
      %v427 = vunpack.c.l.b16 %v219
      %v428 = vunpack.c.h.b16 %v219
      %v429 = vunpack.c.l.b16 %v220
      %v430 = vunpack.c.h.b16 %v220
      %v431 = vunpack.c.l.b16 %v221
      %v432 = vunpack.c.l.b16 %v222
      %v433 = vunpack.c.h.b16 %v222
      %v434 = vunpack.c.l.b16 %v223
      %v435 = vunpack.c.h.b16 %v223
      %v436 = vunpack.c.l.b16 %v224
      %v437 = vpack.c.b16 %v362, %v357
      %v438 = vpack.c.b16 %v363, %v358
      %v439 = vpack.c.b16 %v364, %v359
      %v440 = vpack.c.b16 %v365, %v360
      %v441 = vpack.c.b16 %v366, %v361
      %v442 = vpack.c.b16 %v372, %v367
      %v443 = vpack.c.b16 %v373, %v368
      %v444 = vpack.c.b16 %v374, %v369
      %v445 = vpack.c.b16 %v375, %v370
      %v446 = vpack.c.b16 %v376, %v371
      %v447 = vpack.c.b16 %v382, %v377
      %v448 = vpack.c.b16 %v383, %v378
      %v449 = vpack.c.b16 %v384, %v379
      %v450 = vpack.c.b16 %v385, %v380
      %v451 = vpack.c.b16 %v386, %v381
      %v452 = vpack.c.b16 %v392, %v387
      %v453 = vpack.c.b16 %v393, %v388
      %v454 = vpack.c.b16 %v394, %v389
      %v455 = vpack.c.b16 %v395, %v390
      %v456 = vpack.c.b16 %v396, %v391
      %v457 = vpack.c.b16 %v402, %v397
      %v458 = vpack.c.b16 %v403, %v398
      %v459 = vpack.c.b16 %v404, %v399
      %v460 = vpack.c.b16 %v405, %v400
      %v461 = vpack.c.b16 %v406, %v401
      %v462 = vpack.c.b16 %v412, %v407
      %v463 = vpack.c.b16 %v413, %v408
      %v464 = vpack.c.b16 %v414, %v409
      %v465 = vpack.c.b16 %v415, %v410
      %v466 = vpack.c.b16 %v416, %v411
      %v467 = vpack.c.b16 %v422, %v417
      %v468 = vpack.c.b16 %v423, %v418
      %v469 = vpack.c.b16 %v424, %v419
      %v470 = vpack.c.b16 %v425, %v420
      %v471 = vpack.c.b16 %v426, %v421
      %v472 = vpack.c.b16 %v432, %v427
      %v473 = vpack.c.b16 %v433, %v428
      %v474 = vpack.c.b16 %v434, %v429
      %v475 = vpack.c.b16 %v435, %v430
      %v476 = vpack.c.b16 %v436, %v431
      %v597 = vunpack.c.l.b16 %v225
      %v598 = vunpack.c.l.b16 %v226
      %v599 = vunpack.c.l.b16 %v227
      %v600 = vunpack.c.l.b16 %v228
      %v601 = vunpack.c.l.b16 %v229
      %v602 = vunpack.c.l.b16 %v230
      %v603 = vunpack.c.l.b16 %v231
      %v604 = vunpack.c.l.b16 %v232
      %v605 = vunpack.c.l.b16 %v233
      %v606 = vunpack.c.l.b16 %v234
      %v607 = vunpack.c.l.b16 %v235
      %v608 = vunpack.c.l.b16 %v236
      %v609 = vunpack.c.l.b16 %v237
      %v610 = vunpack.c.l.b16 %v238
      %v611 = vunpack.c.l.b16 %v239
      %v612 = vunpack.c.l.b16 %v240
      %v613 = vunpack.c.l.b16 %v241
      %v614 = vunpack.c.l.b16 %v242
      %v615 = vunpack.c.l.b16 %v243
      %v616 = vunpack.c.l.b16 %v244
      %v617 = vunpack.c.l.b16 %v245
      %v618 = vunpack.c.l.b16 %v246
      %v619 = vunpack.c.l.b16 %v247
      %v620 = vunpack.c.l.b16 %v248
      %v621 = vunpack.c.l.b16 %v249
      %v622 = vunpack.c.l.b16 %v250
      %v623 = vunpack.c.l.b16 %v251
      %v624 = vunpack.c.l.b16 %v252
      %v625 = vunpack.c.l.b16 %v253
      %v626 = vunpack.c.l.b16 %v254
      %v627 = vunpack.c.l.b16 %v255
      %v628 = vunpack.c.l.b16 %v256
      %v629 = vunpack.c.l.b16 %v257
      %v630 = vunpack.c.l.b16 %v258
      %v631 = vunpack.c.l.b16 %v259
      %v632 = vunpack.c.l.b16 %v260
      %v633 = vunpack.c.l.b16 %v261
      %v634 = vunpack.c.l.b16 %v262
      %v635 = vunpack.c.l.b16 %v263
      %v636 = vunpack.c.l.b16 %v264
      %v637 = vunpack.c.l.b16 %v265
      %v638 = vunpack.c.l.b16 %v266
      %v639 = vunpack.c.l.b16 %v267
      %v640 = vunpack.c.l.b16 %v268
      %v641 = vunpack.c.l.b16 %v269
      %v642 = vunpack.c.l.b16 %v270
      %v643 = vunpack.c.l.b16 %v271
      %v644 = vunpack.c.l.b16 %v272
      %v645 = vunpack.c.l.b16 %v273
      %v646 = vunpack.c.l.b16 %v274
      %v647 = vunpack.c.l.b16 %v275
      %v648 = vunpack.c.l.b16 %v276
      %v649 = vunpack.c.l.b16 %v277
      %v650 = vunpack.c.l.b16 %v278
      %v651 = vunpack.c.l.b16 %v279
      %v652 = vunpack.c.l.b16 %v280
      %v653 = vunpack.c.l.b16 %v281
      %v654 = vunpack.c.l.b16 %v282
      %v655 = vunpack.c.l.b16 %v283
      %v656 = vunpack.c.l.b16 %v284
      %v657 = vunpack.c.l.b16 %v285
      %v658 = vunpack.c.l.b16 %v286
      %v659 = vunpack.c.l.b16 %v287
      %v660 = vunpack.c.l.b16 %v288
      %v661 = vunpack.c.l.b16 %v289
      %v662 = vunpack.c.l.b16 %v290
      %v663 = vunpack.c.l.b16 %v291
      %v664 = vunpack.c.l.b16 %v292
      %v665 = vunpack.c.l.b16 %v293
      %v666 = vunpack.c.l.b16 %v294
      %v667 = vunpack.c.l.b16 %v295
      %v668 = vunpack.c.l.b16 %v296
      %v669 = vunpack.c.l.b16 %v297
      %v670 = vunpack.c.l.b16 %v298
      %v671 = vunpack.c.l.b16 %v299
      %v672 = vunpack.c.l.b16 %v300
      %v673 = vunpack.c.l.b16 %v301
      %v674 = vunpack.c.l.b16 %v302
      %v675 = vunpack.c.l.b16 %v303
      %v676 = vunpack.c.l.b16 %v304
      %v677 = vpack.c.b16 %v598, %v597
      %v678 = vpack.c.b16 %v600, %v599
      %v679 = vpack.c.b16 %v602, %v601
      %v680 = vpack.c.b16 %v604, %v603
      %v681 = vpack.c.b16 %v606, %v605
      %v682 = vpack.c.b16 %v608, %v607
      %v683 = vpack.c.b16 %v610, %v609
      %v684 = vpack.c.b16 %v612, %v611
      %v685 = vpack.c.b16 %v614, %v613
      %v686 = vpack.c.b16 %v616, %v615
      %v687 = vpack.c.b16 %v618, %v617
      %v688 = vpack.c.b16 %v620, %v619
      %v689 = vpack.c.b16 %v622, %v621
      %v690 = vpack.c.b16 %v624, %v623
      %v691 = vpack.c.b16 %v626, %v625
      %v692 = vpack.c.b16 %v628, %v627
      %v693 = vpack.c.b16 %v630, %v629
      %v694 = vpack.c.b16 %v632, %v631
      %v695 = vpack.c.b16 %v634, %v633
      %v696 = vpack.c.b16 %v636, %v635
      %v697 = vpack.c.b16 %v638, %v637
      %v698 = vpack.c.b16 %v640, %v639
      %v699 = vpack.c.b16 %v642, %v641
      %v700 = vpack.c.b16 %v644, %v643
      %v701 = vpack.c.b16 %v646, %v645
      %v702 = vpack.c.b16 %v648, %v647
      %v703 = vpack.c.b16 %v650, %v649
      %v704 = vpack.c.b16 %v652, %v651
      %v705 = vpack.c.b16 %v654, %v653
      %v706 = vpack.c.b16 %v656, %v655
      %v707 = vpack.c.b16 %v658, %v657
      %v708 = vpack.c.b16 %v660, %v659
      %v709 = vpack.c.b16 %v662, %v661
      %v710 = vpack.c.b16 %v664, %v663
      %v711 = vpack.c.b16 %v666, %v665
      %v712 = vpack.c.b16 %v668, %v667
      %v713 = vpack.c.b16 %v670, %v669
      %v714 = vpack.c.b16 %v672, %v671
      %v715 = vpack.c.b16 %v674, %v673
      %v716 = vpack.c.b16 %v676, %v675
      %757 = vmatpush.bf16.msra.mxu0 %v684
      %758 = vmatpush.bf16.msra.mxu0 %v683
      %759 = vmatpush.bf16.msra.mxu0 %v682
      %760 = vmatpush.bf16.msra.mxu0 %v681
      %761 = vmatpush.bf16.msra.mxu0 %v680
      %762 = vmatpush.bf16.msra.mxu0 %v679
      %763 = vmatpush.bf16.msra.mxu0 %v678
      %764 = vmatpush.bf16.msra.mxu0 %v677
      %765 = vmatmul.bf16.gmra.mxu0 %v437
      %v766 = vpop.f32.mrf.mxu0
      %v767 = vadd.f32 %v307, %v766
      %v768 = vpop.f32.mrf.mxu0
      %v769 = vadd.f32 %v307, %v768
      %770 = vmatmul.bf16.gmra.mxu0 %v442
      %v771 = vpop.f32.mrf.mxu0
      %v772 = vadd.f32 %v307, %v771
      %v773 = vpop.f32.mrf.mxu0
      %v774 = vadd.f32 %v307, %v773
      %775 = vmatmul.bf16.gmra.mxu0 %v447
      %v776 = vpop.f32.mrf.mxu0
      %v777 = vadd.f32 %v307, %v776
      %v778 = vpop.f32.mrf.mxu0
      %v779 = vadd.f32 %v307, %v778
      %780 = vmatmul.bf16.gmra.mxu0 %v452
      %v781 = vpop.f32.mrf.mxu0
      %v782 = vadd.f32 %v307, %v781
      %v783 = vpop.f32.mrf.mxu0
      %v784 = vadd.f32 %v307, %v783
      %785 = vmatmul.bf16.gmra.mxu0 %v457
      %v786 = vpop.f32.mrf.mxu0
      %v787 = vadd.f32 %v307, %v786
      %v788 = vpop.f32.mrf.mxu0
      %v789 = vadd.f32 %v307, %v788
      %790 = vmatmul.bf16.gmra.mxu0 %v462
      %v791 = vpop.f32.mrf.mxu0
      %v792 = vadd.f32 %v307, %v791
      %v793 = vpop.f32.mrf.mxu0
      %v794 = vadd.f32 %v307, %v793
      %795 = vmatmul.bf16.gmra.mxu0 %v467
      %v796 = vpop.f32.mrf.mxu0
      %v797 = vadd.f32 %v307, %v796
      %v798 = vpop.f32.mrf.mxu0
      %v799 = vadd.f32 %v307, %v798
      %800 = vmatmul.bf16.gmra.mxu0 %v472
      %v801 = vpop.f32.mrf.mxu0
      %v802 = vadd.f32 %v307, %v801
      %v803 = vpop.f32.mrf.mxu0
      %v804 = vadd.f32 %v307, %v803
      %805 = vdwg.mxu0
      %806 = vmatpush.bf16.msra.mxu0 %v692
      %807 = vmatpush.bf16.msra.mxu0 %v691
      %808 = vmatpush.bf16.msra.mxu0 %v690
      %809 = vmatpush.bf16.msra.mxu0 %v689
      %810 = vmatpush.bf16.msra.mxu0 %v688
      %811 = vmatpush.bf16.msra.mxu0 %v687
      %812 = vmatpush.bf16.msra.mxu0 %v686
      %813 = vmatpush.bf16.msra.mxu0 %v685
      %814 = vmatmul.bf16.gmra.mxu0 %v438
      %v815 = vpop.f32.mrf.mxu0
      %v816 = vadd.f32 %v767, %v815
      %v817 = vpop.f32.mrf.mxu0
      %v818 = vadd.f32 %v769, %v817
      %819 = vmatmul.bf16.gmra.mxu0 %v443
      %v820 = vpop.f32.mrf.mxu0
      %v821 = vadd.f32 %v772, %v820
      %v822 = vpop.f32.mrf.mxu0
      %v823 = vadd.f32 %v774, %v822
      %824 = vmatmul.bf16.gmra.mxu0 %v448
      %v825 = vpop.f32.mrf.mxu0
      %v826 = vadd.f32 %v777, %v825
      %v827 = vpop.f32.mrf.mxu0
      %v828 = vadd.f32 %v779, %v827
      %829 = vmatmul.bf16.gmra.mxu0 %v453
      %v830 = vpop.f32.mrf.mxu0
      %v831 = vadd.f32 %v782, %v830
      %v832 = vpop.f32.mrf.mxu0
      %v833 = vadd.f32 %v784, %v832
      %834 = vmatmul.bf16.gmra.mxu0 %v458
      %v835 = vpop.f32.mrf.mxu0
      %v836 = vadd.f32 %v787, %v835
      %v837 = vpop.f32.mrf.mxu0
      %v838 = vadd.f32 %v789, %v837
      %839 = vmatmul.bf16.gmra.mxu0 %v463
      %v840 = vpop.f32.mrf.mxu0
      %v841 = vadd.f32 %v792, %v840
      %v842 = vpop.f32.mrf.mxu0
      %v843 = vadd.f32 %v794, %v842
      %844 = vmatmul.bf16.gmra.mxu0 %v468
      %v845 = vpop.f32.mrf.mxu0
      %v846 = vadd.f32 %v797, %v845
      %v847 = vpop.f32.mrf.mxu0
      %v848 = vadd.f32 %v799, %v847
      %849 = vmatmul.bf16.gmra.mxu0 %v473
      %v850 = vpop.f32.mrf.mxu0
      %v851 = vadd.f32 %v802, %v850
      %v852 = vpop.f32.mrf.mxu0
      %v853 = vadd.f32 %v804, %v852
      %854 = vdwg.mxu0
      %855 = vmatpush.bf16.msra.mxu0 %v700
      %856 = vmatpush.bf16.msra.mxu0 %v699
      %857 = vmatpush.bf16.msra.mxu0 %v698
      %858 = vmatpush.bf16.msra.mxu0 %v697
      %859 = vmatpush.bf16.msra.mxu0 %v696
      %860 = vmatpush.bf16.msra.mxu0 %v695
      %861 = vmatpush.bf16.msra.mxu0 %v694
      %862 = vmatpush.bf16.msra.mxu0 %v693
      %863 = vmatmul.bf16.gmra.mxu0 %v439
      %v864 = vpop.f32.mrf.mxu0
      %v865 = vadd.f32 %v816, %v864
      %v866 = vpop.f32.mrf.mxu0
      %v867 = vadd.f32 %v818, %v866
      %868 = vmatmul.bf16.gmra.mxu0 %v444
      %v869 = vpop.f32.mrf.mxu0
      %v870 = vadd.f32 %v821, %v869
      %v871 = vpop.f32.mrf.mxu0
      %v872 = vadd.f32 %v823, %v871
      %873 = vmatmul.bf16.gmra.mxu0 %v449
      %v874 = vpop.f32.mrf.mxu0
      %v875 = vadd.f32 %v826, %v874
      %v876 = vpop.f32.mrf.mxu0
      %v877 = vadd.f32 %v828, %v876
      %878 = vmatmul.bf16.gmra.mxu0 %v454
      %v879 = vpop.f32.mrf.mxu0
      %v880 = vadd.f32 %v831, %v879
      %v881 = vpop.f32.mrf.mxu0
      %v882 = vadd.f32 %v833, %v881
      %883 = vmatmul.bf16.gmra.mxu0 %v459
      %v884 = vpop.f32.mrf.mxu0
      %v885 = vadd.f32 %v836, %v884
      %v886 = vpop.f32.mrf.mxu0
      %v887 = vadd.f32 %v838, %v886
      %888 = vmatmul.bf16.gmra.mxu0 %v464
      %v889 = vpop.f32.mrf.mxu0
      %v890 = vadd.f32 %v841, %v889
      %v891 = vpop.f32.mrf.mxu0
      %v892 = vadd.f32 %v843, %v891
      %893 = vmatmul.bf16.gmra.mxu0 %v469
      %v894 = vpop.f32.mrf.mxu0
      %v895 = vadd.f32 %v846, %v894
      %v896 = vpop.f32.mrf.mxu0
      %v897 = vadd.f32 %v848, %v896
      %898 = vmatmul.bf16.gmra.mxu0 %v474
      %v899 = vpop.f32.mrf.mxu0
      %v900 = vadd.f32 %v851, %v899
      %v901 = vpop.f32.mrf.mxu0
      %v902 = vadd.f32 %v853, %v901
      %903 = vdwg.mxu0
      %904 = vmatpush.bf16.msra.mxu0 %v708
      %905 = vmatpush.bf16.msra.mxu0 %v707
      %906 = vmatpush.bf16.msra.mxu0 %v706
      %907 = vmatpush.bf16.msra.mxu0 %v705
      %908 = vmatpush.bf16.msra.mxu0 %v704
      %909 = vmatpush.bf16.msra.mxu0 %v703
      %910 = vmatpush.bf16.msra.mxu0 %v702
      %911 = vmatpush.bf16.msra.mxu0 %v701
      %912 = vmatmul.bf16.gmra.mxu0 %v440
      %v913 = vpop.f32.mrf.mxu0
      %v914 = vadd.f32 %v865, %v913
      %v915 = vpop.f32.mrf.mxu0
      %v916 = vadd.f32 %v867, %v915
      %917 = vmatmul.bf16.gmra.mxu0 %v445
      %v918 = vpop.f32.mrf.mxu0
      %v919 = vadd.f32 %v870, %v918
      %v920 = vpop.f32.mrf.mxu0
      %v921 = vadd.f32 %v872, %v920
      %922 = vmatmul.bf16.gmra.mxu0 %v450
      %v923 = vpop.f32.mrf.mxu0
      %v924 = vadd.f32 %v875, %v923
      %v925 = vpop.f32.mrf.mxu0
      %v926 = vadd.f32 %v877, %v925
      %927 = vmatmul.bf16.gmra.mxu0 %v455
      %v928 = vpop.f32.mrf.mxu0
      %v929 = vadd.f32 %v880, %v928
      %v930 = vpop.f32.mrf.mxu0
      %v931 = vadd.f32 %v882, %v930
      %932 = vmatmul.bf16.gmra.mxu0 %v460
      %v933 = vpop.f32.mrf.mxu0
      %v934 = vadd.f32 %v885, %v933
      %v935 = vpop.f32.mrf.mxu0
      %v936 = vadd.f32 %v887, %v935
      %937 = vmatmul.bf16.gmra.mxu0 %v465
      %v938 = vpop.f32.mrf.mxu0
      %v939 = vadd.f32 %v890, %v938
      %v940 = vpop.f32.mrf.mxu0
      %v941 = vadd.f32 %v892, %v940
      %942 = vmatmul.bf16.gmra.mxu0 %v470
      %v943 = vpop.f32.mrf.mxu0
      %v944 = vadd.f32 %v895, %v943
      %v945 = vpop.f32.mrf.mxu0
      %v946 = vadd.f32 %v897, %v945
      %947 = vmatmul.bf16.gmra.mxu0 %v475
      %v948 = vpop.f32.mrf.mxu0
      %v949 = vadd.f32 %v900, %v948
      %v950 = vpop.f32.mrf.mxu0
      %v951 = vadd.f32 %v902, %v950
      %952 = vdwg.mxu0
      %953 = vmatpush.bf16.msra.mxu0 %v716
      %954 = vmatpush.bf16.msra.mxu0 %v715
      %955 = vmatpush.bf16.msra.mxu0 %v714
      %956 = vmatpush.bf16.msra.mxu0 %v713
      %957 = vmatpush.bf16.msra.mxu0 %v712
      %958 = vmatpush.bf16.msra.mxu0 %v711
      %959 = vmatpush.bf16.msra.mxu0 %v710
      %960 = vmatpush.bf16.msra.mxu0 %v709
      %961 = vmatmul.bf16.gmra.mxu0 %v441
      %v962 = vpop.f32.mrf.mxu0
      %v963 = vadd.f32 %v914, %v962
      %v964 = vpop.f32.mrf.mxu0
      %v965 = vadd.f32 %v916, %v964
      %966 = vmatmul.bf16.gmra.mxu0 %v446
      %v967 = vpop.f32.mrf.mxu0
      %v968 = vadd.f32 %v919, %v967
      %v969 = vpop.f32.mrf.mxu0
      %v970 = vadd.f32 %v921, %v969
      %971 = vmatmul.bf16.gmra.mxu0 %v451
      %v972 = vpop.f32.mrf.mxu0
      %v973 = vadd.f32 %v924, %v972
      %v974 = vpop.f32.mrf.mxu0
      %v975 = vadd.f32 %v926, %v974
      %976 = vmatmul.bf16.gmra.mxu0 %v456
      %v977 = vpop.f32.mrf.mxu0
      %v978 = vadd.f32 %v929, %v977
      %v979 = vpop.f32.mrf.mxu0
      %v980 = vadd.f32 %v931, %v979
      %981 = vmatmul.bf16.gmra.mxu0 %v461
      %v982 = vpop.f32.mrf.mxu0
      %v983 = vadd.f32 %v934, %v982
      %v984 = vpop.f32.mrf.mxu0
      %v985 = vadd.f32 %v936, %v984
      %986 = vmatmul.bf16.gmra.mxu0 %v466
      %v987 = vpop.f32.mrf.mxu0
      %v988 = vadd.f32 %v939, %v987
      %v989 = vpop.f32.mrf.mxu0
      %v990 = vadd.f32 %v941, %v989
      %991 = vmatmul.bf16.gmra.mxu0 %v471
      %v992 = vpop.f32.mrf.mxu0
      %v993 = vadd.f32 %v944, %v992
      %v994 = vpop.f32.mrf.mxu0
      %v995 = vadd.f32 %v946, %v994
      %996 = vmatmul.bf16.gmra.mxu0 %v476
      %v997 = vpop.f32.mrf.mxu0
      %v998 = vadd.f32 %v949, %v997
      %v999 = vpop.f32.mrf.mxu0
      %v1000 = vadd.f32 %v951, %v999
      %1001 = vdwg.mxu0
      %v1002 = vtanh.pop %v963
      %v1003 = vtanh.pop %v965
      %v1004 = vtanh.pop %v968
      %v1005 = vtanh.pop %v970
      %v1006 = vtanh.pop %v973
      %v1007 = vtanh.pop %v975
      %v1008 = vtanh.pop %v978
      %v1009 = vtanh.pop %v980
      %v1010 = vtanh.pop %v983
      %v1011 = vtanh.pop %v985
      %v1012 = vtanh.pop %v988
      %v1013 = vtanh.pop %v990
      %v1014 = vtanh.pop %v993
      %v1015 = vtanh.pop %v995
      %v1016 = vtanh.pop %v998
      %v1017 = vtanh.pop %v1000
      %1018 = vst [vmem:[%s175] sm:$0xff] %v1002
      %1019 = vst [vmem:[%s175 + $0x8] sm:$0xff] %v1003
      %1020 = vst [vmem:[%s175 + $0x10] sm:$0xff] %v1004
      %1021 = vst [vmem:[%s175 + $0x18] sm:$0xff] %v1005
      %1022 = vst [vmem:[%s175 + $0x20] sm:$0xff] %v1006
      %1023 = vst [vmem:[%s175 + $0x28] sm:$0xff] %v1007
      %1024 = vst [vmem:[%s175 + $0x30] sm:$0xff] %v1008
      %1025 = vst [vmem:[%s175 + $0x38] sm:$0xff] %v1009
      %1026 = vst [vmem:[%s175 + $0x40] sm:$0xff] %v1010
      %1027 = vst [vmem:[%s175 + $0x48] sm:$0xff] %v1011
      %1028 = vst [vmem:[%s175 + $0x50] sm:$0xff] %v1012
      %1029 = vst [vmem:[%s175 + $0x58] sm:$0xff] %v1013
      %1030 = vst [vmem:[%s175 + $0x60] sm:$0xff] %v1014
      %1031 = vst [vmem:[%s175 + $0x68] sm:$0xff] %v1015
      %1032 = vst [vmem:[%s175 + $0x70] sm:$0xff] %v1016
      %1033 = vst [vmem:[%s175 + $0x78] sm:$0xff] %v1017
      %s1034 = smul.u32 16, %s14
      %p1035 = scmp.lt.s32.totalorder %s1034, 63
      %s1036 = scalar_select %p1035, %s1034, 63
      %s1037 = smul.addr %s1036, 8
      %s1038 = scalar_lea.vmem %s3, %s1037
      // Predicated region
      $region33: #{_lambda_.7} parent=31 // pred_check
        %p1039 = pneg %p100
      $region34: #{_lambda_.7} parent=31 // pred_check_branch
        %1041 = sbr.rel (%p1039) target = $region36
      $region35: #{_lambda_.7} parent=31 // pred_region
        %s1042 = smul.u32 16, %s14
      $region36: #{_lambda_.7} parent=31 // pred_fallthru
        _
    $region32: #{_lambda_.7} parent=5 // pred_fallthru
      _
    %p1043 = scmp.le.s32.totalorder 2, %s9
    // Predicated region
    $region37: #{_lambda_.7} parent=5 // pred_check
      %p1044 = pneg %p1043
    $region38: #{_lambda_.7} parent=5 // pred_check_branch
      %1046 = sbr.rel (%p1044) target = $region40
    $region39: #{_lambda_.7} parent=5 // pred_region
      %s1047 = ssub.s32 %s9, 2
      // Predicated region
      $region41: #{_lambda_.7} parent=39 // pred_check
        %p1048 = pneg %p106
      $region42: #{_lambda_.7} parent=39 // pred_check_branch
        %1050 = sbr.rel (%p1048) target = $region44
      $region43: #{_lambda_.7} parent=39 // pred_region
        %s1051 = smul.u32 16, %s15
        %p1052 = scmp.lt.s32.totalorder %s1051, 63
        %s1053 = scalar_select %p1052, %s1051, 63
        %s1054 = smul.addr %s1053, 8
        %s1055 = scalar_lea.vmem %s3, %s1054
      $region44: #{_lambda_.7} parent=39 // pred_fallthru
        _
    $region40: #{_lambda_.7} parent=5 // pred_fallthru
      _
  $region6: #{_lambda_.7} parent=0 // loop_footer
    %s13 = sadd.s32 1, %s9
  $region7: #{_lambda_.7} parent=0 // loop_footer_branch
    %8 = sbr.rel target = $region3
  $region8: #{_lambda_.7} parent=0 // loop_exit
    _

</llo_original>
